<compile_context>
chip_gen: v5e
topology: v5e:2x2
jax: 0.10.0
libtpu: 0.0.40
codegen_flags: <defaults>
</compile_context>

<pallas_src>
import numpy as np
import jax
import jax.numpy as jnp
from jax.experimental import pallas as pl
from jax.experimental.pallas import tpu as pltpu

EPS = 1e-5


# ----------------------------------------------------------------------------
# Bilinear 2x upsample matrix (align_corners=True), built with numpy.
# ----------------------------------------------------------------------------
def bilinear_matrix(n_in):
    n_out = 2 * n_in
    a = np.zeros((n_out, n_in), np.float32)
    if n_in == 1:
        a[:, 0] = 1.0
        return a
    scale = (n_in - 1) / (n_out - 1)
    for i in range(n_out):
        src = i * scale
        h0 = min(int(np.floor(src)), n_in - 1)
        f = src - h0
        h1 = min(h0 + 1, n_in - 1)
        a[i, h0] += 1.0 - f
        a[i, h1] += f
    return a


# ----------------------------------------------------------------------------
# Fused up-block kernel: conv3x3 + BN(batch stats) + ReLU + bilinear 2x upsample
# (+ optional 1x1 conv + sigmoid for the last block).
# ----------------------------------------------------------------------------
def _make_block_kernel(n, cin, cout, h, w, apply_final):
    hp = h + 2          # padded height
    w2 = 2 * w

    def kernel(*refs):
        if apply_final:
            (x_ref, wc_ref, b_ref, g_ref, bt_ref, avg_ref, awt_ref, ah_ref,
             wf_ref, bf_ref, o_ref) = refs
        else:
            (x_ref, wc_ref, b_ref, g_ref, bt_ref, avg_ref, awt_ref, ah_ref,
             o_ref) = refs

        # --- build conv RHS in VMEM: (3*Cin*Hp, N*W), no HBM im2col blowup ---
        # rows: (dw, cin, padded-row), lanes: (batch, col)
        cols = []
        for b_i in range(n):                      # static, tiny batch
            xb = x_ref[b_i]                       # (Cin*Hp, Wp)
            cols.append(jnp.concatenate(
                [xb[:, dw:dw + w] for dw in range(3)], axis=0))
        r = jnp.concatenate(cols, axis=1) if n > 1 else cols[0]   # (3CinHp, N*W)

        # --- 3x3 conv as a single banded matmul + bias ---
        y = jnp.dot(wc_ref[...], r,
                    preferred_element_type=jnp.float32) + b_ref[...]  # (CoutH, N*W)

        # --- BatchNorm2d (training mode: batch stats, biased var), one pass ---
        s1 = jnp.sum(y, axis=1, keepdims=True)                    # (CoutH, 1)
        s2 = jnp.sum(y * y, axis=1, keepdims=True)
        stats = jnp.concatenate([s1, s2], axis=1)                  # (CoutH, 2)
        blk = jnp.dot(avg_ref[...], stats,
                      preferred_element_type=jnp.float32)          # per-channel mean/E[x^2]
        mean = blk[:, 0:1]
        var = jnp.maximum(blk[:, 1:2] - mean * mean, 0.0)
        scale = g_ref[...] * jax.lax.rsqrt(var + EPS)
        shift = bt_ref[...] - mean * scale
        z = jnp.maximum(y * scale + shift, 0.0)                    # ReLU, (CoutH, N*W)

        # --- bilinear 2x upsample (align_corners=True): two block-diag matmuls
        t1 = jnp.dot(z, awt_ref[...],
                     preferred_element_type=jnp.float32)           # (CoutH, N*2W)
        out = jnp.dot(ah_ref[...], t1,
                      preferred_element_type=jnp.float32)          # (Cout*2H, N*2W)

        if apply_final:
            # fused final 1x1 conv (1->1 channel) + sigmoid (exp on EUP + recip)
            zf = out * wf_ref[0] + bf_ref[0]
            out = pl.reciprocal(1.0 + jnp.exp(-zf), approx=True)

        o_ref[...] = out                                           # lane-dense store

    return kernel


def up_block(x, w, b, g, bt, final=None):
    """x: (N, Cin, H, W)  ->  (N, Cout, 2H, 2W)."""
    n, cin, h, wd = x.shape
    cout = w.shape[0]
    hp, wp = h + 2, wd + 2
    h2, w2 = 2 * h, 2 * wd

    # padded input, flattened to (N, Cin*Hp, Wp) -- pure row-major reshape.
    xpad = jnp.pad(x, ((0, 0), (0, 0), (1, 1), (1, 1))).reshape(n, cin * hp, wp)

    # banded conv weight (Cout*H, 3*Cin*Hp): dh folded into the row band,
    # dw blocks concatenated along K.
    blocks = []
    for dw in range(3):
        m = None
        for dh in range(3):
            e = jnp.asarray(np.eye(h, hp, k=dh, dtype=np.float32))
            term = jnp.kron(w[:, :, dh, dw], e)          # (Cout*H, Cin*Hp)
            m = term if m is None else m + term
        blocks.append(m)
    wcat = jnp.concatenate(blocks, axis=1)               # (Cout*H, 3*Cin*Hp)

    b_rows = jnp.repeat(b, h).reshape(cout * h, 1)
    g_rows = jnp.repeat(g, h).reshape(cout * h, 1)
    bt_rows = jnp.repeat(bt, h).reshape(cout * h, 1)

    # per-channel block-average operator (constant), and block-diagonal
    # bilinear interpolation matrices (constant).
    avg = jnp.asarray(np.kron(np.eye(cout, dtype=np.float32),
                              np.ones((h, h), np.float32)) / float(n * h * wd))
    awtbig = jnp.asarray(np.kron(np.eye(n, dtype=np.float32),
                                 bilinear_matrix(wd).T))      # (N*W, N*2W)
    ahbig = jnp.asarray(np.kron(np.eye(cout, dtype=np.float32),
                                bilinear_matrix(h)))          # (Cout*2H, Cout*H)

    vmem = pl.BlockSpec(memory_space=pltpu.MemorySpace.VMEM)
    smem = pl.BlockSpec(memory_space=pltpu.MemorySpace.SMEM)

    args = [xpad, wcat, b_rows, g_rows, bt_rows, avg, awtbig, ahbig]
    in_specs = [vmem] * 8
    if final is not None:
        wf, bf = final
        args += [wf.reshape(1), bf.reshape(1)]
        in_specs += [smem, smem]

    res = pl.pallas_call(
        _make_block_kernel(n, cin, cout, h, wd, final is not None),
        out_shape=jax.ShapeDtypeStruct((cout * h2, n * w2), jnp.float32),
        in_specs=in_specs,
        out_specs=vmem,
    )(*args)

    # (Cout*2H, N*2W) -> (N, Cout, 2H, 2W)  (cheap XLA layout plumbing; fuses
    # with the next layer's pad).
    return jnp.transpose(res.reshape(cout, h2, n, w2), (2, 0, 1, 3))


# ----------------------------------------------------------------------------
# DIP forward (Pallas) and pure-JAX reference
# ----------------------------------------------------------------------------
def dip_forward(x, params):
    for i in range(4):
        w, b, g, bt = params[f"up{i + 1}"]
        fin = params["final"] if i == 3 else None
        x = up_block(x, w, b, g, bt, final=fin)
    return x


def dip_reference(x, params):
    hi = jax.lax.Precision.HIGHEST
    for i in range(4):
        w, b, g, bt = params[f"up{i + 1}"]
        y = jax.lax.conv_general_dilated(
            x, w, (1, 1), ((1, 1), (1, 1)),
            dimension_numbers=("NCHW", "OIHW", "NCHW"),
            precision=hi) + b[None, :, None, None]
        mean = y.mean(axis=(0, 2, 3), keepdims=True)
        var = y.var(axis=(0, 2, 3), keepdims=True)          # biased
        y = (y - mean) * jax.lax.rsqrt(var + EPS)
        y = y * g[None, :, None, None] + bt[None, :, None, None]
        y = jnp.maximum(y, 0.0)
        _, _, h, w_ = y.shape
        ah = jnp.asarray(bilinear_matrix(h))
        aw = jnp.asarray(bilinear_matrix(w_))
        x = jnp.einsum("ih,nchw,jw->ncij", ah, y, aw, precision=hi)
    wf, bf = params["final"]
    return jax.nn.sigmoid(x * wf[0, 0, 0, 0] + bf[0])


def init_params(key, depth_vec):
    params = {}
    chans = [(depth_vec[0], depth_vec[1]), (depth_vec[1], depth_vec[2]),
             (depth_vec[2], depth_vec[3]), (depth_vec[3], 1)]
    for i, (cin, cout) in enumerate(chans):
        key, k1, k2 = jax.random.split(key, 3)
        fan_in = cin * 9
        w = jax.random.normal(k1, (cout, cin, 3, 3), jnp.float32) / np.sqrt(fan_in)
        b = jax.random.normal(k2, (cout,), jnp.float32) * 0.01
        g = jnp.ones((cout,), jnp.float32)
        bt = jnp.zeros((cout,), jnp.float32)
        params[f"up{i + 1}"] = (w, b, g, bt)
    key, k1, k2 = jax.random.split(key, 3)
    wf = jax.random.normal(k1, (1, 1, 1, 1), jnp.float32)
    bf = jax.random.normal(k2, (1,), jnp.float32) * 0.01
    params["final"] = (wf, bf)
    return params


if __name__ == "__main__":
    depth_vec = [4, 8, 8, 4]
    key = jax.random.PRNGKey(0)
    key, kx, kp = jax.random.split(key, 3)
    x = jax.random.normal(kx, (2, depth_vec[0], 8, 8), jnp.float32)
    params = init_params(kp, depth_vec)

    out = jax.block_until_ready(jax.jit(dip_forward)(x, params))
    assert out.shape == (2, 1, 128, 128), out.shape

    ref = jax.block_until_ready(dip_reference(x, params))
    np.testing.assert_allclose(np.asarray(out), np.asarray(ref),
                               rtol=2e-3, atol=2e-3)
    print("KERNEL_OK")
</pallas_src>

<mosaic_0001>
module attributes {stable_mosaic.version = 11 : i64} {
  func.func @kernel(%arg0: memref<2x40x10xf32, #tpu.memory_space<vmem>>, %arg1: memref<64x120xf32, #tpu.memory_space<vmem>>, %arg2: memref<64x1xf32, #tpu.memory_space<vmem>>, %arg3: memref<64x1xf32, #tpu.memory_space<vmem>>, %arg4: memref<64x1xf32, #tpu.memory_space<vmem>>, %arg5: memref<64x64xf32, #tpu.memory_space<vmem>>, %arg6: memref<16x32xf32, #tpu.memory_space<vmem>>, %arg7: memref<128x64xf32, #tpu.memory_space<vmem>>, %arg8: memref<128x32xf32, #tpu.memory_space<vmem>>) attributes {dimension_semantics = [], scalar_prefetch = 0 : i64, scratch_operands = 0 : i64, tpu.core_type = #tpu.core_type<tc>} {
    %c0 = arith.constant 0 : index
    %c0_0 = arith.constant 0 : index
    %c0_1 = arith.constant 0 : index
    %0 = vector.load %arg0[%c0, %c0_0, %c0_1] : memref<2x40x10xf32, #tpu.memory_space<vmem>>, vector<1x40x10xf32>
    %1 = vector.shape_cast %0 : vector<1x40x10xf32> to vector<40x10xf32>
    %2 = vector.extract_strided_slice %1 {offsets = [0, 0], sizes = [40, 8], strides = [1, 1]} : vector<40x10xf32> to vector<40x8xf32>
    %3 = vector.extract_strided_slice %1 {offsets = [0, 1], sizes = [40, 8], strides = [1, 1]} : vector<40x10xf32> to vector<40x8xf32>
    %4 = vector.extract_strided_slice %1 {offsets = [0, 2], sizes = [40, 8], strides = [1, 1]} : vector<40x10xf32> to vector<40x8xf32>
    %5 = tpu.concatenate %2, %3, %4 in 0 : vector<40x8xf32>, vector<40x8xf32>, vector<40x8xf32> -> vector<120x8xf32>
    %c1 = arith.constant 1 : index
    %c0_2 = arith.constant 0 : index
    %c0_3 = arith.constant 0 : index
    %6 = vector.load %arg0[%c1, %c0_2, %c0_3] : memref<2x40x10xf32, #tpu.memory_space<vmem>>, vector<1x40x10xf32>
    %7 = vector.shape_cast %6 : vector<1x40x10xf32> to vector<40x10xf32>
    %8 = vector.extract_strided_slice %7 {offsets = [0, 0], sizes = [40, 8], strides = [1, 1]} : vector<40x10xf32> to vector<40x8xf32>
    %9 = vector.extract_strided_slice %7 {offsets = [0, 1], sizes = [40, 8], strides = [1, 1]} : vector<40x10xf32> to vector<40x8xf32>
    %10 = vector.extract_strided_slice %7 {offsets = [0, 2], sizes = [40, 8], strides = [1, 1]} : vector<40x10xf32> to vector<40x8xf32>
    %11 = tpu.concatenate %8, %9, %10 in 0 : vector<40x8xf32>, vector<40x8xf32>, vector<40x8xf32> -> vector<120x8xf32>
    %12 = tpu.concatenate %5, %11 in 1 : vector<120x8xf32>, vector<120x8xf32> -> vector<120x16xf32>
    %c0_4 = arith.constant 0 : index
    %c0_5 = arith.constant 0 : index
    %13 = vector.load %arg1[%c0_4, %c0_5] : memref<64x120xf32, #tpu.memory_space<vmem>>, vector<64x120xf32>
    %cst = arith.constant dense<0.000000e+00> : vector<64x16xf32>
    %14 = tpu.matmul %13, %12, %cst {dimension_numbers = #tpu.dot_dimension_numbers<[1], [0], [0], [1], [0, 0, 1, 1], [], []>} : vector<64x120xf32>, vector<120x16xf32>, vector<64x16xf32> -> vector<64x16xf32>
    %c0_6 = arith.constant 0 : index
    %c0_7 = arith.constant 0 : index
    %15 = vector.load %arg2[%c0_6, %c0_7] : memref<64x1xf32, #tpu.memory_space<vmem>>, vector<64x1xf32>
    %16 = vector.broadcast %15 : vector<64x1xf32> to vector<64x16xf32>
    %17 = arith.addf %14, %16 : vector<64x16xf32>
    %cst_8 = arith.constant dense<0.000000e+00> : vector<64xf32>
    %18 = vector.multi_reduction <add>, %17, %cst_8 [1] : vector<64x16xf32> to vector<64xf32>
    %19 = vector.shape_cast %18 : vector<64xf32> to vector<64x1xf32>
    %20 = arith.mulf %17, %17 : vector<64x16xf32>
    %cst_9 = arith.constant dense<0.000000e+00> : vector<64xf32>
    %21 = vector.multi_reduction <add>, %20, %cst_9 [1] : vector<64x16xf32> to vector<64xf32>
    %22 = vector.shape_cast %21 : vector<64xf32> to vector<64x1xf32>
    %23 = tpu.concatenate %19, %22 in 1 : vector<64x1xf32>, vector<64x1xf32> -> vector<64x2xf32>
    %c0_10 = arith.constant 0 : index
    %c0_11 = arith.constant 0 : index
    %24 = vector.load %arg5[%c0_10, %c0_11] : memref<64x64xf32, #tpu.memory_space<vmem>>, vector<64x64xf32>
    %cst_12 = arith.constant dense<0.000000e+00> : vector<64x2xf32>
    %25 = tpu.matmul %24, %23, %cst_12 {dimension_numbers = #tpu.dot_dimension_numbers<[1], [0], [0], [1], [0, 0, 1, 1], [], []>} : vector<64x64xf32>, vector<64x2xf32>, vector<64x2xf32> -> vector<64x2xf32>
    %26 = vector.extract_strided_slice %25 {offsets = [0, 0], sizes = [64, 1], strides = [1, 1]} : vector<64x2xf32> to vector<64x1xf32>
    %27 = vector.extract_strided_slice %25 {offsets = [0, 1], sizes = [64, 1], strides = [1, 1]} : vector<64x2xf32> to vector<64x1xf32>
    %28 = arith.mulf %26, %26 : vector<64x1xf32>
    %29 = arith.subf %27, %28 : vector<64x1xf32>
    %cst_13 = arith.constant 0.000000e+00 : f32
    %30 = vector.broadcast %cst_13 : f32 to vector<64x1xf32>
    %31 = arith.maximumf %29, %30 : vector<64x1xf32>
    %c0_14 = arith.constant 0 : index
    %c0_15 = arith.constant 0 : index
    %32 = vector.load %arg3[%c0_14, %c0_15] : memref<64x1xf32, #tpu.memory_space<vmem>>, vector<64x1xf32>
    %cst_16 = arith.constant 9.99999974E-6 : f32
    %33 = vector.broadcast %cst_16 : f32 to vector<64x1xf32>
    %34 = arith.addf %31, %33 : vector<64x1xf32>
    %35 = math.rsqrt %34 : vector<64x1xf32>
    %36 = arith.mulf %32, %35 : vector<64x1xf32>
    %c0_17 = arith.constant 0 : index
    %c0_18 = arith.constant 0 : index
    %37 = vector.load %arg4[%c0_17, %c0_18] : memref<64x1xf32, #tpu.memory_space<vmem>>, vector<64x1xf32>
    %38 = arith.mulf %26, %36 : vector<64x1xf32>
    %39 = arith.subf %37, %38 : vector<64x1xf32>
    %40 = vector.broadcast %36 : vector<64x1xf32> to vector<64x16xf32>
    %41 = arith.mulf %17, %40 : vector<64x16xf32>
    %42 = vector.broadcast %39 : vector<64x1xf32> to vector<64x16xf32>
    %43 = arith.addf %41, %42 : vector<64x16xf32>
    %cst_19 = arith.constant 0.000000e+00 : f32
    %44 = vector.broadcast %cst_19 : f32 to vector<64x16xf32>
    %45 = arith.maximumf %43, %44 : vector<64x16xf32>
    %c0_20 = arith.constant 0 : index
    %c0_21 = arith.constant 0 : index
    %46 = vector.load %arg6[%c0_20, %c0_21] : memref<16x32xf32, #tpu.memory_space<vmem>>, vector<16x32xf32>
    %cst_22 = arith.constant dense<0.000000e+00> : vector<64x32xf32>
    %47 = tpu.matmul %45, %46, %cst_22 {dimension_numbers = #tpu.dot_dimension_numbers<[1], [0], [0], [1], [0, 0, 1, 1], [], []>} : vector<64x16xf32>, vector<16x32xf32>, vector<64x32xf32> -> vector<64x32xf32>
    %c0_23 = arith.constant 0 : index
    %c0_24 = arith.constant 0 : index
    %48 = vector.load %arg7[%c0_23, %c0_24] : memref<128x64xf32, #tpu.memory_space<vmem>>, vector<128x64xf32>
    %cst_25 = arith.constant dense<0.000000e+00> : vector<128x32xf32>
    %49 = tpu.matmul %48, %47, %cst_25 {dimension_numbers = #tpu.dot_dimension_numbers<[1], [0], [0], [1], [0, 0, 1, 1], [], []>} : vector<128x64xf32>, vector<64x32xf32>, vector<128x32xf32> -> vector<128x32xf32>
    %c0_26 = arith.constant 0 : index
    %c0_27 = arith.constant 0 : index
    %50 = vector.load %arg8[%c0_26, %c0_27] : memref<128x32xf32, #tpu.memory_space<vmem>>, vector<128x32xf32>
    tpu.vector_store %arg8[%c0_26, %c0_27], %49 {strides = array<i32>} : memref<128x32xf32, #tpu.memory_space<vmem>>, vector<128x32xf32>,
    return
  }
}

module attributes {stable_mosaic.version = 11 : i64} {
  func.func @kernel(%arg0: memref<2x144x18xf32, #tpu.memory_space<vmem>>, %arg1: memref<128x432xf32, #tpu.memory_space<vmem>>, %arg2: memref<128x1xf32, #tpu.memory_space<vmem>>, %arg3: memref<128x1xf32, #tpu.memory_space<vmem>>, %arg4: memref<128x1xf32, #tpu.memory_space<vmem>>, %arg5: memref<128x128xf32, #tpu.memory_space<vmem>>, %arg6: memref<32x64xf32, #tpu.memory_space<vmem>>, %arg7: memref<256x128xf32, #tpu.memory_space<vmem>>, %arg8: memref<256x64xf32, #tpu.memory_space<vmem>>) attributes {dimension_semantics = [], scalar_prefetch = 0 : i64, scratch_operands = 0 : i64, tpu.core_type = #tpu.core_type<tc>} {
    %c0 = arith.constant 0 : index
    %c0_0 = arith.constant 0 : index
    %c0_1 = arith.constant 0 : index
    %0 = vector.load %arg0[%c0, %c0_0, %c0_1] : memref<2x144x18xf32, #tpu.memory_space<vmem>>, vector<1x144x18xf32>
    %1 = vector.shape_cast %0 : vector<1x144x18xf32> to vector<144x18xf32>
    %2 = vector.extract_strided_slice %1 {offsets = [0, 0], sizes = [144, 16], strides = [1, 1]} : vector<144x18xf32> to vector<144x16xf32>
    %3 = vector.extract_strided_slice %1 {offsets = [0, 1], sizes = [144, 16], strides = [1, 1]} : vector<144x18xf32> to vector<144x16xf32>
    %4 = vector.extract_strided_slice %1 {offsets = [0, 2], sizes = [144, 16], strides = [1, 1]} : vector<144x18xf32> to vector<144x16xf32>
    %5 = tpu.concatenate %2, %3, %4 in 0 : vector<144x16xf32>, vector<144x16xf32>, vector<144x16xf32> -> vector<432x16xf32>
    %c1 = arith.constant 1 : index
    %c0_2 = arith.constant 0 : index
    %c0_3 = arith.constant 0 : index
    %6 = vector.load %arg0[%c1, %c0_2, %c0_3] : memref<2x144x18xf32, #tpu.memory_space<vmem>>, vector<1x144x18xf32>
    %7 = vector.shape_cast %6 : vector<1x144x18xf32> to vector<144x18xf32>
    %8 = vector.extract_strided_slice %7 {offsets = [0, 0], sizes = [144, 16], strides = [1, 1]} : vector<144x18xf32> to vector<144x16xf32>
    %9 = vector.extract_strided_slice %7 {offsets = [0, 1], sizes = [144, 16], strides = [1, 1]} : vector<144x18xf32> to vector<144x16xf32>
    %10 = vector.extract_strided_slice %7 {offsets = [0, 2], sizes = [144, 16], strides = [1, 1]} : vector<144x18xf32> to vector<144x16xf32>
    %11 = tpu.concatenate %8, %9, %10 in 0 : vector<144x16xf32>, vector<144x16xf32>, vector<144x16xf32> -> vector<432x16xf32>
    %12 = tpu.concatenate %5, %11 in 1 : vector<432x16xf32>, vector<432x16xf32> -> vector<432x32xf32>
    %c0_4 = arith.constant 0 : index
    %c0_5 = arith.constant 0 : index
    %13 = vector.load %arg1[%c0_4, %c0_5] : memref<128x432xf32, #tpu.memory_space<vmem>>, vector<128x432xf32>
    %cst = arith.constant dense<0.000000e+00> : vector<128x32xf32>
    %14 = tpu.matmul %13, %12, %cst {dimension_numbers = #tpu.dot_dimension_numbers<[1], [0], [0], [1], [0, 0, 1, 1], [], []>} : vector<128x432xf32>, vector<432x32xf32>, vector<128x32xf32> -> vector<128x32xf32>
    %c0_6 = arith.constant 0 : index
    %c0_7 = arith.constant 0 : index
    %15 = vector.load %arg2[%c0_6, %c0_7] : memref<128x1xf32, #tpu.memory_space<vmem>>, vector<128x1xf32>
    %16 = vector.broadcast %15 : vector<128x1xf32> to vector<128x32xf32>
    %17 = arith.addf %14, %16 : vector<128x32xf32>
    %cst_8 = arith.constant dense<0.000000e+00> : vector<128xf32>
    %18 = vector.multi_reduction <add>, %17, %cst_8 [1] : vector<128x32xf32> to vector<128xf32>
    %19 = vector.shape_cast %18 : vector<128xf32> to vector<128x1xf32>
    %20 = arith.mulf %17, %17 : vector<128x32xf32>
    %cst_9 = arith.constant dense<0.000000e+00> : vector<128xf32>
    %21 = vector.multi_reduction <add>, %20, %cst_9 [1] : vector<128x32xf32> to vector<128xf32>
    %22 = vector.shape_cast %21 : vector<128xf32> to vector<128x1xf32>
    %23 = tpu.concatenate %19, %22 in 1 : vector<128x1xf32>, vector<128x1xf32> -> vector<128x2xf32>
    %c0_10 = arith.constant 0 : index
    %c0_11 = arith.constant 0 : index
    %24 = vector.load %arg5[%c0_10, %c0_11] : memref<128x128xf32, #tpu.memory_space<vmem>>, vector<128x128xf32>
    %cst_12 = arith.constant dense<0.000000e+00> : vector<128x2xf32>
    %25 = tpu.matmul %24, %23, %cst_12 {dimension_numbers = #tpu.dot_dimension_numbers<[1], [0], [0], [1], [0, 0, 1, 1], [], []>} : vector<128x128xf32>, vector<128x2xf32>, vector<128x2xf32> -> vector<128x2xf32>
    %26 = vector.extract_strided_slice %25 {offsets = [0, 0], sizes = [128, 1], strides = [1, 1]} : vector<128x2xf32> to vector<128x1xf32>
    %27 = vector.extract_strided_slice %25 {offsets = [0, 1], sizes = [128, 1], strides = [1, 1]} : vector<128x2xf32> to vector<128x1xf32>
    %28 = arith.mulf %26, %26 : vector<128x1xf32>
    %29 = arith.subf %27, %28 : vector<128x1xf32>
    %cst_13 = arith.constant 0.000000e+00 : f32
    %30 = vector.broadcast %cst_13 : f32 to vector<128x1xf32>
    %31 = arith.maximumf %29, %30 : vector<128x1xf32>
    %c0_14 = arith.constant 0 : index
    %c0_15 = arith.constant 0 : index
    %32 = vector.load %arg3[%c0_14, %c0_15] : memref<128x1xf32, #tpu.memory_space<vmem>>, vector<128x1xf32>
    %cst_16 = arith.constant 9.99999974E-6 : f32
    %33 = vector.broadcast %cst_16 : f32 to vector<128x1xf32>
    %34 = arith.addf %31, %33 : vector<128x1xf32>
    %35 = math.rsqrt %34 : vector<128x1xf32>
    %36 = arith.mulf %32, %35 : vector<128x1xf32>
    %c0_17 = arith.constant 0 : index
    %c0_18 = arith.constant 0 : index
    %37 = vector.load %arg4[%c0_17, %c0_18] : memref<128x1xf32, #tpu.memory_space<vmem>>, vector<128x1xf32>
    %38 = arith.mulf %26, %36 : vector<128x1xf32>
    %39 = arith.subf %37, %38 : vector<128x1xf32>
    %40 = vector.broadcast %36 : vector<128x1xf32> to vector<128x32xf32>
    %41 = arith.mulf %17, %40 : vector<128x32xf32>
    %42 = vector.broadcast %39 : vector<128x1xf32> to vector<128x32xf32>
    %43 = arith.addf %41, %42 : vector<128x32xf32>
    %cst_19 = arith.constant 0.000000e+00 : f32
    %44 = vector.broadcast %cst_19 : f32 to vector<128x32xf32>
    %45 = arith.maximumf %43, %44 : vector<128x32xf32>
    %c0_20 = arith.constant 0 : index
    %c0_21 = arith.constant 0 : index
    %46 = vector.load %arg6[%c0_20, %c0_21] : memref<32x64xf32, #tpu.memory_space<vmem>>, vector<32x64xf32>
    %cst_22 = arith.constant dense<0.000000e+00> : vector<128x64xf32>
    %47 = tpu.matmul %45, %46, %cst_22 {dimension_numbers = #tpu.dot_dimension_numbers<[1], [0], [0], [1], [0, 0, 1, 1], [], []>} : vector<128x32xf32>, vector<32x64xf32>, vector<128x64xf32> -> vector<128x64xf32>
    %c0_23 = arith.constant 0 : index
    %c0_24 = arith.constant 0 : index
    %48 = vector.load %arg7[%c0_23, %c0_24] : memref<256x128xf32, #tpu.memory_space<vmem>>, vector<256x128xf32>
    %cst_25 = arith.constant dense<0.000000e+00> : vector<256x64xf32>
    %49 = tpu.matmul %48, %47, %cst_25 {dimension_numbers = #tpu.dot_dimension_numbers<[1], [0], [0], [1], [0, 0, 1, 1], [], []>} : vector<256x128xf32>, vector<128x64xf32>, vector<256x64xf32> -> vector<256x64xf32>
    %c0_26 = arith.constant 0 : index
    %c0_27 = arith.constant 0 : index
    %50 = vector.load %arg8[%c0_26, %c0_27] : memref<256x64xf32, #tpu.memory_space<vmem>>, vector<256x64xf32>
    tpu.vector_store %arg8[%c0_26, %c0_27], %49 {strides = array<i32>} : memref<256x64xf32, #tpu.memory_space<vmem>>, vector<256x64xf32>,
    return
  }
}

module attributes {stable_mosaic.version = 11 : i64} {
  func.func @kernel(%arg0: memref<2x272x34xf32, #tpu.memory_space<vmem>>, %arg1: memref<128x816xf32, #tpu.memory_space<vmem>>, %arg2: memref<128x1xf32, #tpu.memory_space<vmem>>, %arg3: memref<128x1xf32, #tpu.memory_space<vmem>>, %arg4: memref<128x1xf32, #tpu.memory_space<vmem>>, %arg5: memref<128x128xf32, #tpu.memory_space<vmem>>, %arg6: memref<64x128xf32, #tpu.memory_space<vmem>>, %arg7: memref<256x128xf32, #tpu.memory_space<vmem>>, %arg8: memref<256x128xf32, #tpu.memory_space<vmem>>) attributes {dimension_semantics = [], scalar_prefetch = 0 : i64, scratch_operands = 0 : i64, tpu.core_type = #tpu.core_type<tc>} {
    %c0 = arith.constant 0 : index
    %c0_0 = arith.constant 0 : index
    %c0_1 = arith.constant 0 : index
    %0 = vector.load %arg0[%c0, %c0_0, %c0_1] : memref<2x272x34xf32, #tpu.memory_space<vmem>>, vector<1x272x34xf32>
    %1 = vector.shape_cast %0 : vector<1x272x34xf32> to vector<272x34xf32>
    %2 = vector.extract_strided_slice %1 {offsets = [0, 0], sizes = [272, 32], strides = [1, 1]} : vector<272x34xf32> to vector<272x32xf32>
    %3 = vector.extract_strided_slice %1 {offsets = [0, 1], sizes = [272, 32], strides = [1, 1]} : vector<272x34xf32> to vector<272x32xf32>
    %4 = vector.extract_strided_slice %1 {offsets = [0, 2], sizes = [272, 32], strides = [1, 1]} : vector<272x34xf32> to vector<272x32xf32>
    %5 = tpu.concatenate %2, %3, %4 in 0 : vector<272x32xf32>, vector<272x32xf32>, vector<272x32xf32> -> vector<816x32xf32>
    %c1 = arith.constant 1 : index
    %c0_2 = arith.constant 0 : index
    %c0_3 = arith.constant 0 : index
    %6 = vector.load %arg0[%c1, %c0_2, %c0_3] : memref<2x272x34xf32, #tpu.memory_space<vmem>>, vector<1x272x34xf32>
    %7 = vector.shape_cast %6 : vector<1x272x34xf32> to vector<272x34xf32>
    %8 = vector.extract_strided_slice %7 {offsets = [0, 0], sizes = [272, 32], strides = [1, 1]} : vector<272x34xf32> to vector<272x32xf32>
    %9 = vector.extract_strided_slice %7 {offsets = [0, 1], sizes = [272, 32], strides = [1, 1]} : vector<272x34xf32> to vector<272x32xf32>
    %10 = vector.extract_strided_slice %7 {offsets = [0, 2], sizes = [272, 32], strides = [1, 1]} : vector<272x34xf32> to vector<272x32xf32>
    %11 = tpu.concatenate %8, %9, %10 in 0 : vector<272x32xf32>, vector<272x32xf32>, vector<272x32xf32> -> vector<816x32xf32>
    %12 = tpu.concatenate %5, %11 in 1 : vector<816x32xf32>, vector<816x32xf32> -> vector<816x64xf32>
    %c0_4 = arith.constant 0 : index
    %c0_5 = arith.constant 0 : index
    %13 = vector.load %arg1[%c0_4, %c0_5] : memref<128x816xf32, #tpu.memory_space<vmem>>, vector<128x816xf32>
    %cst = arith.constant dense<0.000000e+00> : vector<128x64xf32>
    %14 = tpu.matmul %13, %12, %cst {dimension_numbers = #tpu.dot_dimension_numbers<[1], [0], [0], [1], [0, 0, 1, 1], [], []>} : vector<128x816xf32>, vector<816x64xf32>, vector<128x64xf32> -> vector<128x64xf32>
    %c0_6 = arith.constant 0 : index
    %c0_7 = arith.constant 0 : index
    %15 = vector.load %arg2[%c0_6, %c0_7] : memref<128x1xf32, #tpu.memory_space<vmem>>, vector<128x1xf32>
    %16 = vector.broadcast %15 : vector<128x1xf32> to vector<128x64xf32>
    %17 = arith.addf %14, %16 : vector<128x64xf32>
    %cst_8 = arith.constant dense<0.000000e+00> : vector<128xf32>
    %18 = vector.multi_reduction <add>, %17, %cst_8 [1] : vector<128x64xf32> to vector<128xf32>
    %19 = vector.shape_cast %18 : vector<128xf32> to vector<128x1xf32>
    %20 = arith.mulf %17, %17 : vector<128x64xf32>
    %cst_9 = arith.constant dense<0.000000e+00> : vector<128xf32>
    %21 = vector.multi_reduction <add>, %20, %cst_9 [1] : vector<128x64xf32> to vector<128xf32>
    %22 = vector.shape_cast %21 : vector<128xf32> to vector<128x1xf32>
    %23 = tpu.concatenate %19, %22 in 1 : vector<128x1xf32>, vector<128x1xf32> -> vector<128x2xf32>
    %c0_10 = arith.constant 0 : index
    %c0_11 = arith.constant 0 : index
    %24 = vector.load %arg5[%c0_10, %c0_11] : memref<128x128xf32, #tpu.memory_space<vmem>>, vector<128x128xf32>
    %cst_12 = arith.constant dense<0.000000e+00> : vector<128x2xf32>
    %25 = tpu.matmul %24, %23, %cst_12 {dimension_numbers = #tpu.dot_dimension_numbers<[1], [0], [0], [1], [0, 0, 1, 1], [], []>} : vector<128x128xf32>, vector<128x2xf32>, vector<128x2xf32> -> vector<128x2xf32>
    %26 = vector.extract_strided_slice %25 {offsets = [0, 0], sizes = [128, 1], strides = [1, 1]} : vector<128x2xf32> to vector<128x1xf32>
    %27 = vector.extract_strided_slice %25 {offsets = [0, 1], sizes = [128, 1], strides = [1, 1]} : vector<128x2xf32> to vector<128x1xf32>
    %28 = arith.mulf %26, %26 : vector<128x1xf32>
    %29 = arith.subf %27, %28 : vector<128x1xf32>
    %cst_13 = arith.constant 0.000000e+00 : f32
    %30 = vector.broadcast %cst_13 : f32 to vector<128x1xf32>
    %31 = arith.maximumf %29, %30 : vector<128x1xf32>
    %c0_14 = arith.constant 0 : index
    %c0_15 = arith.constant 0 : index
    %32 = vector.load %arg3[%c0_14, %c0_15] : memref<128x1xf32, #tpu.memory_space<vmem>>, vector<128x1xf32>
    %cst_16 = arith.constant 9.99999974E-6 : f32
    %33 = vector.broadcast %cst_16 : f32 to vector<128x1xf32>
    %34 = arith.addf %31, %33 : vector<128x1xf32>
    %35 = math.rsqrt %34 : vector<128x1xf32>
    %36 = arith.mulf %32, %35 : vector<128x1xf32>
    %c0_17 = arith.constant 0 : index
    %c0_18 = arith.constant 0 : index
    %37 = vector.load %arg4[%c0_17, %c0_18] : memref<128x1xf32, #tpu.memory_space<vmem>>, vector<128x1xf32>
    %38 = arith.mulf %26, %36 : vector<128x1xf32>
    %39 = arith.subf %37, %38 : vector<128x1xf32>
    %40 = vector.broadcast %36 : vector<128x1xf32> to vector<128x64xf32>
    %41 = arith.mulf %17, %40 : vector<128x64xf32>
    %42 = vector.broadcast %39 : vector<128x1xf32> to vector<128x64xf32>
    %43 = arith.addf %41, %42 : vector<128x64xf32>
    %cst_19 = arith.constant 0.000000e+00 : f32
    %44 = vector.broadcast %cst_19 : f32 to vector<128x64xf32>
    %45 = arith.maximumf %43, %44 : vector<128x64xf32>
    %c0_20 = arith.constant 0 : index
    %c0_21 = arith.constant 0 : index
    %46 = vector.load %arg6[%c0_20, %c0_21] : memref<64x128xf32, #tpu.memory_space<vmem>>, vector<64x128xf32>
    %cst_22 = arith.constant dense<0.000000e+00> : vector<128x128xf32>
    %47 = tpu.matmul %45, %46, %cst_22 {dimension_numbers = #tpu.dot_dimension_numbers<[1], [0], [0], [1], [0, 0, 1, 1], [], []>} : vector<128x64xf32>, vector<64x128xf32>, vector<128x128xf32> -> vector<128x128xf32>
    %c0_23 = arith.constant 0 : index
    %c0_24 = arith.constant 0 : index
    %48 = vector.load %arg7[%c0_23, %c0_24] : memref<256x128xf32, #tpu.memory_space<vmem>>, vector<256x128xf32>
    %cst_25 = arith.constant dense<0.000000e+00> : vector<256x128xf32>
    %49 = tpu.matmul %48, %47, %cst_25 {dimension_numbers = #tpu.dot_dimension_numbers<[1], [0], [0], [1], [0, 0, 1, 1], [], []>} : vector<256x128xf32>, vector<128x128xf32>, vector<256x128xf32> -> vector<256x128xf32>
    %c0_26 = arith.constant 0 : index
    %c0_27 = arith.constant 0 : index
    %50 = vector.load %arg8[%c0_26, %c0_27] : memref<256x128xf32, #tpu.memory_space<vmem>>, vector<256x128xf32>
    tpu.vector_store %arg8[%c0_26, %c0_27], %49 {strides = array<i32>} : memref<256x128xf32, #tpu.memory_space<vmem>>, vector<256x128xf32>,
    return
  }
}

module attributes {stable_mosaic.version = 11 : i64} {
  func.func @kernel(%arg0: memref<2x264x66xf32, #tpu.memory_space<vmem>>, %arg1: memref<64x792xf32, #tpu.memory_space<vmem>>, %arg2: memref<64x1xf32, #tpu.memory_space<vmem>>, %arg3: memref<64x1xf32, #tpu.memory_space<vmem>>, %arg4: memref<64x1xf32, #tpu.memory_space<vmem>>, %arg5: memref<64x64xf32, #tpu.memory_space<vmem>>, %arg6: memref<128x256xf32, #tpu.memory_space<vmem>>, %arg7: memref<128x64xf32, #tpu.memory_space<vmem>>, %arg8: memref<1xf32, #tpu.memory_space<smem>>, %arg9: memref<1xf32, #tpu.memory_space<smem>>, %arg10: memref<128x256xf32, #tpu.memory_space<vmem>>) attributes {dimension_semantics = [], scalar_prefetch = 0 : i64, scratch_operands = 0 : i64, tpu.core_type = #tpu.core_type<tc>} {
    %c0 = arith.constant 0 : index
    %c0_0 = arith.constant 0 : index
    %c0_1 = arith.constant 0 : index
    %0 = vector.load %arg0[%c0, %c0_0, %c0_1] : memref<2x264x66xf32, #tpu.memory_space<vmem>>, vector<1x264x66xf32>
    %1 = vector.shape_cast %0 : vector<1x264x66xf32> to vector<264x66xf32>
    %2 = vector.extract_strided_slice %1 {offsets = [0, 0], sizes = [264, 64], strides = [1, 1]} : vector<264x66xf32> to vector<264x64xf32>
    %3 = vector.extract_strided_slice %1 {offsets = [0, 1], sizes = [264, 64], strides = [1, 1]} : vector<264x66xf32> to vector<264x64xf32>
    %4 = vector.extract_strided_slice %1 {offsets = [0, 2], sizes = [264, 64], strides = [1, 1]} : vector<264x66xf32> to vector<264x64xf32>
    %5 = tpu.concatenate %2, %3, %4 in 0 : vector<264x64xf32>, vector<264x64xf32>, vector<264x64xf32> -> vector<792x64xf32>
    %c1 = arith.constant 1 : index
    %c0_2 = arith.constant 0 : index
    %c0_3 = arith.constant 0 : index
    %6 = vector.load %arg0[%c1, %c0_2, %c0_3] : memref<2x264x66xf32, #tpu.memory_space<vmem>>, vector<1x264x66xf32>
    %7 = vector.shape_cast %6 : vector<1x264x66xf32> to vector<264x66xf32>
    %8 = vector.extract_strided_slice %7 {offsets = [0, 0], sizes = [264, 64], strides = [1, 1]} : vector<264x66xf32> to vector<264x64xf32>
    %9 = vector.extract_strided_slice %7 {offsets = [0, 1], sizes = [264, 64], strides = [1, 1]} : vector<264x66xf32> to vector<264x64xf32>
    %10 = vector.extract_strided_slice %7 {offsets = [0, 2], sizes = [264, 64], strides = [1, 1]} : vector<264x66xf32> to vector<264x64xf32>
    %11 = tpu.concatenate %8, %9, %10 in 0 : vector<264x64xf32>, vector<264x64xf32>, vector<264x64xf32> -> vector<792x64xf32>
    %12 = tpu.concatenate %5, %11 in 1 : vector<792x64xf32>, vector<792x64xf32> -> vector<792x128xf32>
    %c0_4 = arith.constant 0 : index
    %c0_5 = arith.constant 0 : index
    %13 = vector.load %arg1[%c0_4, %c0_5] : memref<64x792xf32, #tpu.memory_space<vmem>>, vector<64x792xf32>
    %cst = arith.constant dense<0.000000e+00> : vector<64x128xf32>
    %14 = tpu.matmul %13, %12, %cst {dimension_numbers = #tpu.dot_dimension_numbers<[1], [0], [0], [1], [0, 0, 1, 1], [], []>} : vector<64x792xf32>, vector<792x128xf32>, vector<64x128xf32> -> vector<64x128xf32>
    %c0_6 = arith.constant 0 : index
    %c0_7 = arith.constant 0 : index
    %15 = vector.load %arg2[%c0_6, %c0_7] : memref<64x1xf32, #tpu.memory_space<vmem>>, vector<64x1xf32>
    %16 = vector.broadcast %15 : vector<64x1xf32> to vector<64x128xf32>
    %17 = arith.addf %14, %16 : vector<64x128xf32>
    %cst_8 = arith.constant dense<0.000000e+00> : vector<64xf32>
    %18 = vector.multi_reduction <add>, %17, %cst_8 [1] : vector<64x128xf32> to vector<64xf32>
    %19 = vector.shape_cast %18 : vector<64xf32> to vector<64x1xf32>
    %20 = arith.mulf %17, %17 : vector<64x128xf32>
    %cst_9 = arith.constant dense<0.000000e+00> : vector<64xf32>
    %21 = vector.multi_reduction <add>, %20, %cst_9 [1] : vector<64x128xf32> to vector<64xf32>
    %22 = vector.shape_cast %21 : vector<64xf32> to vector<64x1xf32>
    %23 = tpu.concatenate %19, %22 in 1 : vector<64x1xf32>, vector<64x1xf32> -> vector<64x2xf32>
    %c0_10 = arith.constant 0 : index
    %c0_11 = arith.constant 0 : index
    %24 = vector.load %arg5[%c0_10, %c0_11] : memref<64x64xf32, #tpu.memory_space<vmem>>, vector<64x64xf32>
    %cst_12 = arith.constant dense<0.000000e+00> : vector<64x2xf32>
    %25 = tpu.matmul %24, %23, %cst_12 {dimension_numbers = #tpu.dot_dimension_numbers<[1], [0], [0], [1], [0, 0, 1, 1], [], []>} : vector<64x64xf32>, vector<64x2xf32>, vector<64x2xf32> -> vector<64x2xf32>
    %26 = vector.extract_strided_slice %25 {offsets = [0, 0], sizes = [64, 1], strides = [1, 1]} : vector<64x2xf32> to vector<64x1xf32>
    %27 = vector.extract_strided_slice %25 {offsets = [0, 1], sizes = [64, 1], strides = [1, 1]} : vector<64x2xf32> to vector<64x1xf32>
    %28 = arith.mulf %26, %26 : vector<64x1xf32>
    %29 = arith.subf %27, %28 : vector<64x1xf32>
    %cst_13 = arith.constant 0.000000e+00 : f32
    %30 = vector.broadcast %cst_13 : f32 to vector<64x1xf32>
    %31 = arith.maximumf %29, %30 : vector<64x1xf32>
    %c0_14 = arith.constant 0 : index
    %c0_15 = arith.constant 0 : index
    %32 = vector.load %arg3[%c0_14, %c0_15] : memref<64x1xf32, #tpu.memory_space<vmem>>, vector<64x1xf32>
    %cst_16 = arith.constant 9.99999974E-6 : f32
    %33 = vector.broadcast %cst_16 : f32 to vector<64x1xf32>
    %34 = arith.addf %31, %33 : vector<64x1xf32>
    %35 = math.rsqrt %34 : vector<64x1xf32>
    %36 = arith.mulf %32, %35 : vector<64x1xf32>
    %c0_17 = arith.constant 0 : index
    %c0_18 = arith.constant 0 : index
    %37 = vector.load %arg4[%c0_17, %c0_18] : memref<64x1xf32, #tpu.memory_space<vmem>>, vector<64x1xf32>
    %38 = arith.mulf %26, %36 : vector<64x1xf32>
    %39 = arith.subf %37, %38 : vector<64x1xf32>
    %40 = vector.broadcast %36 : vector<64x1xf32> to vector<64x128xf32>
    %41 = arith.mulf %17, %40 : vector<64x128xf32>
    %42 = vector.broadcast %39 : vector<64x1xf32> to vector<64x128xf32>
    %43 = arith.addf %41, %42 : vector<64x128xf32>
    %cst_19 = arith.constant 0.000000e+00 : f32
    %44 = vector.broadcast %cst_19 : f32 to vector<64x128xf32>
    %45 = arith.maximumf %43, %44 : vector<64x128xf32>
    %c0_20 = arith.constant 0 : index
    %c0_21 = arith.constant 0 : index
    %46 = vector.load %arg6[%c0_20, %c0_21] : memref<128x256xf32, #tpu.memory_space<vmem>>, vector<128x256xf32>
    %cst_22 = arith.constant dense<0.000000e+00> : vector<64x256xf32>
    %47 = tpu.matmul %45, %46, %cst_22 {dimension_numbers = #tpu.dot_dimension_numbers<[1], [0], [0], [1], [0, 0, 1, 1], [], []>} : vector<64x128xf32>, vector<128x256xf32>, vector<64x256xf32> -> vector<64x256xf32>
    %c0_23 = arith.constant 0 : index
    %c0_24 = arith.constant 0 : index
    %48 = vector.load %arg7[%c0_23, %c0_24] : memref<128x64xf32, #tpu.memory_space<vmem>>, vector<128x64xf32>
    %cst_25 = arith.constant dense<0.000000e+00> : vector<128x256xf32>
    %49 = tpu.matmul %48, %47, %cst_25 {dimension_numbers = #tpu.dot_dimension_numbers<[1], [0], [0], [1], [0, 0, 1, 1], [], []>} : vector<128x64xf32>, vector<64x256xf32>, vector<128x256xf32> -> vector<128x256xf32>
    %c0_26 = arith.constant 0 : index
    %50 = memref.load %arg8[%c0_26] : memref<1xf32, #tpu.memory_space<smem>>
    %51 = vector.broadcast %50 : f32 to vector<128x256xf32>
    %52 = arith.mulf %49, %51 : vector<128x256xf32>
    %c0_27 = arith.constant 0 : index
    %53 = memref.load %arg9[%c0_27] : memref<1xf32, #tpu.memory_space<smem>>
    %54 = vector.broadcast %53 : f32 to vector<128x256xf32>
    %55 = arith.addf %52, %54 : vector<128x256xf32>
    %cst_28 = arith.constant 0.000000e+00 : f32
    %56 = vector.broadcast %cst_28 : f32 to vector<128x256xf32>
    %57 = arith.subf %56, %55 : vector<128x256xf32>
    %58 = math.exp %57 : vector<128x256xf32>
    %cst_29 = arith.constant 1.000000e+00 : f32
    %59 = vector.broadcast %cst_29 : f32 to vector<128x256xf32>
    %60 = arith.addf %59, %58 : vector<128x256xf32>
    %61 = tpu.reciprocal %60 {approx = true} : vector<128x256xf32> -> vector<128x256xf32>
    %c0_30 = arith.constant 0 : index
    %c0_31 = arith.constant 0 : index
    %62 = vector.load %arg10[%c0_30, %c0_31] : memref<128x256xf32, #tpu.memory_space<vmem>>, vector<128x256xf32>
    tpu.vector_store %arg10[%c0_30, %c0_31], %61 {strides = array<i32>} : memref<128x256xf32, #tpu.memory_space<vmem>>, vector<128x256xf32>,
    return
  }
}

</mosaic_0001>

<llo_original>
// kernel: dip_forward.4
$region0: #{dip_forward.4}
  #allocation0 [shape = 'u32[]', space=smem, size = 0x4, offset = 0x4, fixed_abs, tag = 'smem constant byte address 0x4 - core index']
  #allocation1 [shape = 'u32[72,128]{1,0:T(1,128)}', space=vmem, size = 0x9000, scoped, tag = 'internal scratch']
  %s0 = inlined_call_operand.vmem [shape: f32[2,40,10], index: 0, kind: input, shape index: {}]
  %s1 = inlined_call_operand.vmem [shape: f32[64,120], index: 1, kind: input, shape index: {}]
  %s2 = inlined_call_operand.vmem [shape: f32[64,1], index: 2, kind: input, shape index: {}]
  %s3 = inlined_call_operand.vmem [shape: f32[64,1], index: 3, kind: input, shape index: {}]
  %s4 = inlined_call_operand.vmem [shape: f32[64,1], index: 4, kind: input, shape index: {}]
  %s5 = inlined_call_operand.vmem [shape: f32[64,64], index: 5, kind: input, shape index: {}]
  %s6 = inlined_call_operand.vmem [shape: f32[16,32], index: 6, kind: input, shape index: {}]
  %s7 = inlined_call_operand.vmem [shape: f32[128,64], index: 7, kind: input, shape index: {}]
  %s8 = inlined_call_operand.vmem [shape: f32[128,32], index: 8, kind: output, shape index: {}]
  %s9 = sld [smem:[#allocation0]]
  $region42: #{dip_forward.4} parent=0
    _
  %s11 = ssub.s32 1, %s9
  %s12 = scalar_select 0, %s11, %s9
  // Predicated region
  $region2: #{dip_forward.4} parent=0 // pred_check
    _
  $region3: #{dip_forward.4} parent=0 // pred_check_branch
    %14 = sbr.rel (0) target = $region5
  $region4: #{dip_forward.4} parent=0 // pred_region
    _
  $region5: #{dip_forward.4} parent=0 // pred_fallthru
    _
  // Predicated region
  $region6: #{dip_forward.4} parent=0 // pred_check
    _
  $region7: #{dip_forward.4} parent=0 // pred_check_branch
    %16 = sbr.rel (0) target = $region9
  $region8: #{dip_forward.4} parent=0 // pred_region
    _
  $region9: #{dip_forward.4} parent=0 // pred_fallthru
    _
  // Predicated region
  $region10: #{dip_forward.4} parent=0 // pred_check
    _
  $region11: #{dip_forward.4} parent=0 // pred_check_branch
    %18 = sbr.rel (0) target = $region13
  $region12: #{dip_forward.4} parent=0 // pred_region
    _
  $region13: #{dip_forward.4} parent=0 // pred_fallthru
    _
  // Predicated region
  $region14: #{dip_forward.4} parent=0 // pred_check
    _
  $region15: #{dip_forward.4} parent=0 // pred_check_branch
    %20 = sbr.rel (0) target = $region17
  $region16: #{dip_forward.4} parent=0 // pred_region
    _
  $region17: #{dip_forward.4} parent=0 // pred_fallthru
    _
  // Predicated region
  $region18: #{dip_forward.4} parent=0 // pred_check
    _
  $region19: #{dip_forward.4} parent=0 // pred_check_branch
    %22 = sbr.rel (0) target = $region21
  $region20: #{dip_forward.4} parent=0 // pred_region
    _
  $region21: #{dip_forward.4} parent=0 // pred_fallthru
    _
  // Predicated region
  $region22: #{dip_forward.4} parent=0 // pred_check
    _
  $region23: #{dip_forward.4} parent=0 // pred_check_branch
    %24 = sbr.rel (0) target = $region25
  $region24: #{dip_forward.4} parent=0 // pred_region
    _
  $region25: #{dip_forward.4} parent=0 // pred_fallthru
    _
  // Predicated region
  $region26: #{dip_forward.4} parent=0 // pred_check
    _
  $region27: #{dip_forward.4} parent=0 // pred_check_branch
    %26 = sbr.rel (0) target = $region29
  $region28: #{dip_forward.4} parent=0 // pred_region
    _
  $region29: #{dip_forward.4} parent=0 // pred_fallthru
    _
  // Predicated region
  $region30: #{dip_forward.4} parent=0 // pred_check
    _
  $region31: #{dip_forward.4} parent=0 // pred_check_branch
    %28 = sbr.rel (0) target = $region33
  $region32: #{dip_forward.4} parent=0 // pred_region
    _
  $region33: #{dip_forward.4} parent=0 // pred_fallthru
    _
  %v29 = vld [vmem:[%s0] sm:$0xff]
  %v30 = vld [vmem:[%s0 + $0x8] sm:$0xff]
  %v31 = vld [vmem:[%s0 + $0x10] sm:$0xff]
  %v32 = vld [vmem:[%s0 + $0x18] sm:$0xff]
  %v33 = vld [vmem:[%s0 + $0x20] sm:$0xff]
  %39 = vrot.lane.b32.xlu0 %v29, 127
  %v40 = vpop.permute.xlu0 %39
  %41 = vrot.lane.b32.xlu0 %v30, 127
  %v42 = vpop.permute.xlu0 %41
  %43 = vrot.lane.b32.xlu0 %v31, 127
  %v44 = vpop.permute.xlu0 %43
  %45 = vrot.lane.b32.xlu0 %v32, 127
  %v46 = vpop.permute.xlu0 %45
  %47 = vrot.lane.b32.xlu0 %v33, 127
  %v48 = vpop.permute.xlu0 %47
  %54 = vrot.lane.b32.xlu0 %v29, 126
  %v55 = vpop.permute.xlu0 %54
  %56 = vrot.lane.b32.xlu0 %v30, 126
  %v57 = vpop.permute.xlu0 %56
  %58 = vrot.lane.b32.xlu0 %v31, 126
  %v59 = vpop.permute.xlu0 %58
  %60 = vrot.lane.b32.xlu0 %v32, 126
  %v61 = vpop.permute.xlu0 %60
  %62 = vrot.lane.b32.xlu0 %v33, 126
  %v63 = vpop.permute.xlu0 %62
  %s69 = scalar_lea.vmem %s0, 40
  %v70 = vld [vmem:[%s69] sm:$0xff]
  %v71 = vld [vmem:[%s69 + $0x8] sm:$0xff]
  %v72 = vld [vmem:[%s69 + $0x10] sm:$0xff]
  %v73 = vld [vmem:[%s69 + $0x18] sm:$0xff]
  %v74 = vld [vmem:[%s69 + $0x20] sm:$0xff]
  %80 = vrot.lane.b32.xlu0 %v70, 127
  %v81 = vpop.permute.xlu0 %80
  %82 = vrot.lane.b32.xlu0 %v71, 127
  %v83 = vpop.permute.xlu0 %82
  %84 = vrot.lane.b32.xlu0 %v72, 127
  %v85 = vpop.permute.xlu0 %84
  %86 = vrot.lane.b32.xlu0 %v73, 127
  %v87 = vpop.permute.xlu0 %86
  %88 = vrot.lane.b32.xlu0 %v74, 127
  %v89 = vpop.permute.xlu0 %88
  %90 = vrot.lane.b32.xlu0 %v70, 126
  %v91 = vpop.permute.xlu0 %90
  %92 = vrot.lane.b32.xlu0 %v71, 126
  %v93 = vpop.permute.xlu0 %92
  %94 = vrot.lane.b32.xlu0 %v72, 126
  %v95 = vpop.permute.xlu0 %94
  %96 = vrot.lane.b32.xlu0 %v73, 126
  %v97 = vpop.permute.xlu0 %96
  %98 = vrot.lane.b32.xlu0 %v74, 126
  %v99 = vpop.permute.xlu0 %98
  %100 = vrot.lane.b32.xlu0 %v70, 8
  %v101 = vpop.permute.xlu0 %100
  %102 = vrot.lane.b32.xlu0 %v71, 8
  %v103 = vpop.permute.xlu0 %102
  %104 = vrot.lane.b32.xlu0 %v72, 8
  %v105 = vpop.permute.xlu0 %104
  %106 = vrot.lane.b32.xlu0 %v73, 8
  %v107 = vpop.permute.xlu0 %106
  %108 = vrot.lane.b32.xlu0 %v74, 8
  %v109 = vpop.permute.xlu0 %108
  %110 = vrot.lane.b32.xlu0 %v81, 8
  %v111 = vpop.permute.xlu0 %110
  %112 = vrot.lane.b32.xlu0 %v83, 8
  %v113 = vpop.permute.xlu0 %112
  %114 = vrot.lane.b32.xlu0 %v85, 8
  %v115 = vpop.permute.xlu0 %114
  %116 = vrot.lane.b32.xlu0 %v87, 8
  %v117 = vpop.permute.xlu0 %116
  %118 = vrot.lane.b32.xlu0 %v89, 8
  %v119 = vpop.permute.xlu0 %118
  %120 = vrot.lane.b32.xlu0 %v91, 8
  %v121 = vpop.permute.xlu0 %120
  %122 = vrot.lane.b32.xlu0 %v93, 8
  %v123 = vpop.permute.xlu0 %122
  %124 = vrot.lane.b32.xlu0 %v95, 8
  %v125 = vpop.permute.xlu0 %124
  %126 = vrot.lane.b32.xlu0 %v97, 8
  %v127 = vpop.permute.xlu0 %126
  %128 = vrot.lane.b32.xlu0 %v99, 8
  %v129 = vpop.permute.xlu0 %128
  %vm145 = vcmask 64512
  %v146 = vsel %vm145, %v29, %v101
  %v147 = vsel %vm145, %v30, %v103
  %v148 = vsel %vm145, %v31, %v105
  %v149 = vsel %vm145, %v32, %v107
  %v150 = vsel %vm145, %v33, %v109
  %v151 = vsel %vm145, %v40, %v111
  %v152 = vsel %vm145, %v42, %v113
  %v153 = vsel %vm145, %v44, %v115
  %v154 = vsel %vm145, %v46, %v117
  %v155 = vsel %vm145, %v48, %v119
  %v156 = vsel %vm145, %v55, %v121
  %v157 = vsel %vm145, %v57, %v123
  %v158 = vsel %vm145, %v59, %v125
  %v159 = vsel %vm145, %v61, %v127
  %v160 = vsel %vm145, %v63, %v129
  %v161 = vld [vmem:[%s1] sm:$0xff]
  %v162 = vld [vmem:[%s1 + $0x8] sm:$0xff]
  %v163 = vld [vmem:[%s1 + $0x10] sm:$0xff]
  %v164 = vld [vmem:[%s1 + $0x18] sm:$0xff]
  %v165 = vld [vmem:[%s1 + $0x20] sm:$0xff]
  %v166 = vld [vmem:[%s1 + $0x28] sm:$0xff]
  %v167 = vld [vmem:[%s1 + $0x30] sm:$0xff]
  %v168 = vld [vmem:[%s1 + $0x38] sm:$0xff]
  %v169 = vld [vmem:[%s2] sm:$0xff]
  %v170 = vld [vmem:[%s2 + $0x8] sm:$0xff]
  %v171 = vld [vmem:[%s2 + $0x10] sm:$0xff]
  %v172 = vld [vmem:[%s2 + $0x18] sm:$0xff]
  %v173 = vld [vmem:[%s2 + $0x20] sm:$0xff]
  %v174 = vld [vmem:[%s2 + $0x28] sm:$0xff]
  %v175 = vld [vmem:[%s2 + $0x30] sm:$0xff]
  %v176 = vld [vmem:[%s2 + $0x38] sm:$0xff]
  %178 = vset.pattern.permute.xlu0 0
  %179 = vperm.xlu0 %178, %v169
  %v180 = vpop.permute.xlu0 %179
  %183 = vset.pattern.permute.xlu0 0
  %184 = vperm.xlu0 %183, %v170
  %v185 = vpop.permute.xlu0 %184
  %188 = vset.pattern.permute.xlu0 0
  %189 = vperm.xlu0 %188, %v171
  %v190 = vpop.permute.xlu0 %189
  %193 = vset.pattern.permute.xlu0 0
  %194 = vperm.xlu0 %193, %v172
  %v195 = vpop.permute.xlu0 %194
  %198 = vset.pattern.permute.xlu0 0
  %199 = vperm.xlu0 %198, %v173
  %v200 = vpop.permute.xlu0 %199
  %203 = vset.pattern.permute.xlu0 0
  %204 = vperm.xlu0 %203, %v174
  %v205 = vpop.permute.xlu0 %204
  %208 = vset.pattern.permute.xlu0 0
  %209 = vperm.xlu0 %208, %v175
  %v210 = vpop.permute.xlu0 %209
  %213 = vset.pattern.permute.xlu0 0
  %214 = vperm.xlu0 %213, %v176
  %v215 = vpop.permute.xlu0 %214
  %vm217 = vcmask 982016
  %v219 = vsel %vm217, %v161, 0
  %v222 = vsel %vm217, %v162, 0
  %v225 = vsel %vm217, %v163, 0
  %v228 = vsel %vm217, %v164, 0
  %v231 = vsel %vm217, %v165, 0
  %v234 = vsel %vm217, %v166, 0
  %v237 = vsel %vm217, %v167, 0
  %v240 = vsel %vm217, %v168, 0
  %242 = vmatpush.msra.mxu0 0.0
  %243 = vmatpush.msra.mxu0 %v160
  %244 = vmatpush.msra.mxu0 %v159
  %245 = vmatpush.msra.mxu0 %v158
  %246 = vmatpush.msra.mxu0 %v157
  %247 = vmatpush.msra.mxu0 %v156
  %248 = vmatpush.msra.mxu0 %v155
  %249 = vmatpush.msra.mxu0 %v154
  %250 = vmatpush.msra.mxu0 %v153
  %251 = vmatpush.msra.mxu0 %v152
  %252 = vmatpush.msra.mxu0 %v151
  %253 = vmatpush.msra.mxu0 %v150
  %254 = vmatpush.msra.mxu0 %v149
  %255 = vmatpush.msra.mxu0 %v148
  %256 = vmatpush.msra.mxu0 %v147
  %257 = vmatpush.msra.mxu0 %v146
  %258 = vmatmul.f32.gmra.mxu0 %v219
  %v259 = vpop.f32.mrf.mxu0
  %v260 = vadd.f32 %v180, %v259
  %261 = vmatmul.f32.gmra.mxu0 %v222
  %v262 = vpop.f32.mrf.mxu0
  %v263 = vadd.f32 %v185, %v262
  %264 = vmatmul.f32.gmra.mxu0 %v225
  %v265 = vpop.f32.mrf.mxu0
  %v266 = vadd.f32 %v190, %v265
  %267 = vmatmul.f32.gmra.mxu0 %v228
  %v268 = vpop.f32.mrf.mxu0
  %v269 = vadd.f32 %v195, %v268
  %270 = vmatmul.f32.gmra.mxu0 %v231
  %v271 = vpop.f32.mrf.mxu0
  %v272 = vadd.f32 %v200, %v271
  %273 = vmatmul.f32.gmra.mxu0 %v234
  %v274 = vpop.f32.mrf.mxu0
  %v275 = vadd.f32 %v205, %v274
  %276 = vmatmul.f32.gmra.mxu0 %v237
  %v277 = vpop.f32.mrf.mxu0
  %v278 = vadd.f32 %v210, %v277
  %279 = vmatmul.f32.gmra.mxu0 %v240
  %v280 = vpop.f32.mrf.mxu0
  %v281 = vadd.f32 %v215, %v280
  %282 = vdwg.mxu0
  %vm283 = vcmask 130048
  %v284 = vsel %vm283, %v260, 0.0
  %285 = vadd.xlane.f32.xlu0 %v284
  %v286 = vpop.xlane.xlu0 %285
  %v287 = vsel %vm283, %v263, 0.0
  %288 = vadd.xlane.f32.xlu0 %v287
  %v289 = vpop.xlane.xlu0 %288
  %v290 = vsel %vm283, %v266, 0.0
  %291 = vadd.xlane.f32.xlu0 %v290
  %v292 = vpop.xlane.xlu0 %291
  %v293 = vsel %vm283, %v269, 0.0
  %294 = vadd.xlane.f32.xlu0 %v293
  %v295 = vpop.xlane.xlu0 %294
  %v296 = vsel %vm283, %v272, 0.0
  %297 = vadd.xlane.f32.xlu0 %v296
  %v298 = vpop.xlane.xlu0 %297
  %v299 = vsel %vm283, %v275, 0.0
  %300 = vadd.xlane.f32.xlu0 %v299
  %v301 = vpop.xlane.xlu0 %300
  %v302 = vsel %vm283, %v278, 0.0
  %303 = vadd.xlane.f32.xlu0 %v302
  %v304 = vpop.xlane.xlu0 %303
  %v305 = vsel %vm283, %v281, 0.0
  %306 = vadd.xlane.f32.xlu0 %v305
  %v307 = vpop.xlane.xlu0 %306
  %v308 = vmul.f32 %v260, %v260
  %v309 = vmul.f32 %v263, %v263
  %v310 = vmul.f32 %v266, %v266
  %v311 = vmul.f32 %v269, %v269
  %v312 = vmul.f32 %v272, %v272
  %v313 = vmul.f32 %v275, %v275
  %v314 = vmul.f32 %v278, %v278
  %v315 = vmul.f32 %v281, %v281
  %v316 = vsel %vm283, %v308, 0.0
  %317 = vadd.xlane.f32.xlu0 %v316
  %v318 = vpop.xlane.xlu0 %317
  %v319 = vsel %vm283, %v309, 0.0
  %320 = vadd.xlane.f32.xlu0 %v319
  %v321 = vpop.xlane.xlu0 %320
  %v322 = vsel %vm283, %v310, 0.0
  %323 = vadd.xlane.f32.xlu0 %v322
  %v324 = vpop.xlane.xlu0 %323
  %v325 = vsel %vm283, %v311, 0.0
  %326 = vadd.xlane.f32.xlu0 %v325
  %v327 = vpop.xlane.xlu0 %326
  %v328 = vsel %vm283, %v312, 0.0
  %329 = vadd.xlane.f32.xlu0 %v328
  %v330 = vpop.xlane.xlu0 %329
  %v331 = vsel %vm283, %v313, 0.0
  %332 = vadd.xlane.f32.xlu0 %v331
  %v333 = vpop.xlane.xlu0 %332
  %v334 = vsel %vm283, %v314, 0.0
  %335 = vadd.xlane.f32.xlu0 %v334
  %v336 = vpop.xlane.xlu0 %335
  %v337 = vsel %vm283, %v315, 0.0
  %338 = vadd.xlane.f32.xlu0 %v337
  %v339 = vpop.xlane.xlu0 %338
  %vm340 = vcmask 7168
  %v341 = vsel %vm340, %v286, %v318
  %v342 = vsel %vm340, %v289, %v321
  %v343 = vsel %vm340, %v292, %v324
  %v344 = vsel %vm340, %v295, %v327
  %v345 = vsel %vm340, %v298, %v330
  %v346 = vsel %vm340, %v301, %v333
  %v347 = vsel %vm340, %v304, %v336
  %v348 = vsel %vm340, %v307, %v339
  %v349 = vld [vmem:[%s5] sm:$0xff]
  %v350 = vld [vmem:[%s5 + $0x8] sm:$0xff]
  %v351 = vld [vmem:[%s5 + $0x10] sm:$0xff]
  %v352 = vld [vmem:[%s5 + $0x18] sm:$0xff]
  %v353 = vld [vmem:[%s5 + $0x20] sm:$0xff]
  %v354 = vld [vmem:[%s5 + $0x28] sm:$0xff]
  %v355 = vld [vmem:[%s5 + $0x30] sm:$0xff]
  %v356 = vld [vmem:[%s5 + $0x38] sm:$0xff]
  %vm357 = vcmask 523264
  %v359 = vsel %vm357, %v349, 0
  %v362 = vsel %vm357, %v350, 0
  %v365 = vsel %vm357, %v351, 0
  %v368 = vsel %vm357, %v352, 0
  %v371 = vsel %vm357, %v353, 0
  %v374 = vsel %vm357, %v354, 0
  %v377 = vsel %vm357, %v355, 0
  %v380 = vsel %vm357, %v356, 0
  %382 = vmatpush.msra.mxu0 0.0
  %383 = vmatpush.msra.mxu0 0.0
  %384 = vmatpush.msra.mxu0 0.0
  %385 = vmatpush.msra.mxu0 0.0
  %386 = vmatpush.msra.mxu0 0.0
  %387 = vmatpush.msra.mxu0 0.0
  %388 = vmatpush.msra.mxu0 0.0
  %389 = vmatpush.msra.mxu0 0.0
  %390 = vmatpush.msra.mxu0 %v348
  %391 = vmatpush.msra.mxu0 %v347
  %392 = vmatpush.msra.mxu0 %v346
  %393 = vmatpush.msra.mxu0 %v345
  %394 = vmatpush.msra.mxu0 %v344
  %395 = vmatpush.msra.mxu0 %v343
  %396 = vmatpush.msra.mxu0 %v342
  %397 = vmatpush.msra.mxu0 %v341
  %398 = vmatmul.f32.gmra.mxu0 %v359
  %v399 = vpop.f32.mrf.mxu0
  %v400 = vadd.f32 0.0, %v399
  %401 = vmatmul.f32.gmra.mxu0 %v362
  %v402 = vpop.f32.mrf.mxu0
  %v403 = vadd.f32 0.0, %v402
  %404 = vmatmul.f32.gmra.mxu0 %v365
  %v405 = vpop.f32.mrf.mxu0
  %v406 = vadd.f32 0.0, %v405
  %407 = vmatmul.f32.gmra.mxu0 %v368
  %v408 = vpop.f32.mrf.mxu0
  %v409 = vadd.f32 0.0, %v408
  %410 = vmatmul.f32.gmra.mxu0 %v371
  %v411 = vpop.f32.mrf.mxu0
  %v412 = vadd.f32 0.0, %v411
  %413 = vmatmul.f32.gmra.mxu0 %v374
  %v414 = vpop.f32.mrf.mxu0
  %v415 = vadd.f32 0.0, %v414
  %416 = vmatmul.f32.gmra.mxu0 %v377
  %v417 = vpop.f32.mrf.mxu0
  %v418 = vadd.f32 0.0, %v417
  %419 = vmatmul.f32.gmra.mxu0 %v380
  %v420 = vpop.f32.mrf.mxu0
  %v421 = vadd.f32 0.0, %v420
  %422 = vdwg.mxu0
  %v423 = vmul.f32 %v400, %v400
  %v424 = vmul.f32 %v403, %v403
  %v425 = vmul.f32 %v406, %v406
  %v426 = vmul.f32 %v409, %v409
  %v427 = vmul.f32 %v412, %v412
  %v428 = vmul.f32 %v415, %v415
  %v429 = vmul.f32 %v418, %v418
  %v430 = vmul.f32 %v421, %v421
  %439 = vrot.lane.b32.xlu0 %v423, 1
  %v440 = vpop.permute.xlu0 %439
  %441 = vrot.lane.b32.xlu0 %v424, 1
  %v442 = vpop.permute.xlu0 %441
  %443 = vrot.lane.b32.xlu0 %v425, 1
  %v444 = vpop.permute.xlu0 %443
  %445 = vrot.lane.b32.xlu0 %v426, 1
  %v446 = vpop.permute.xlu0 %445
  %447 = vrot.lane.b32.xlu0 %v427, 1
  %v448 = vpop.permute.xlu0 %447
  %449 = vrot.lane.b32.xlu0 %v428, 1
  %v450 = vpop.permute.xlu0 %449
  %451 = vrot.lane.b32.xlu0 %v429, 1
  %v452 = vpop.permute.xlu0 %451
  %453 = vrot.lane.b32.xlu0 %v430, 1
  %v454 = vpop.permute.xlu0 %453
  %v463 = vsub.f32 %v400, %v440
  %v464 = vsub.f32 %v403, %v442
  %v465 = vsub.f32 %v406, %v444
  %v466 = vsub.f32 %v409, %v446
  %v467 = vsub.f32 %v412, %v448
  %v468 = vsub.f32 %v415, %v450
  %v469 = vsub.f32 %v418, %v452
  %v470 = vsub.f32 %v421, %v454
  %v471 = vmax.f32 %v463, 0.0
  %v472 = vmax.f32 %v464, 0.0
  %v473 = vmax.f32 %v465, 0.0
  %v474 = vmax.f32 %v466, 0.0
  %v475 = vmax.f32 %v467, 0.0
  %v476 = vmax.f32 %v468, 0.0
  %v477 = vmax.f32 %v469, 0.0
  %v478 = vmax.f32 %v470, 0.0
  %v479 = vld [vmem:[%s3] sm:$0xff]
  %v480 = vld [vmem:[%s3 + $0x8] sm:$0xff]
  %v481 = vld [vmem:[%s3 + $0x10] sm:$0xff]
  %v482 = vld [vmem:[%s3 + $0x18] sm:$0xff]
  %v483 = vld [vmem:[%s3 + $0x20] sm:$0xff]
  %v484 = vld [vmem:[%s3 + $0x28] sm:$0xff]
  %v485 = vld [vmem:[%s3 + $0x30] sm:$0xff]
  %v486 = vld [vmem:[%s3 + $0x38] sm:$0xff]
  %v487 = vadd.f32 %v471, 1e-05
  %v488 = vadd.f32 %v472, 1e-05
  %v489 = vadd.f32 %v473, 1e-05
  %v490 = vadd.f32 %v474, 1e-05
  %v491 = vadd.f32 %v475, 1e-05
  %v492 = vadd.f32 %v476, 1e-05
  %v493 = vadd.f32 %v477, 1e-05
  %v494 = vadd.f32 %v478, 1e-05
  %v495 = vrsqrt.pop %v487
  %v496 = vmul.f32 %v495, %v487
  %v497 = vmul.f32 %v496, %v495
  %v498 = vmul.f32 0.5, %v497
  %v499 = vsub.f32 1.5, %v498
  %v500 = vmul.f32 %v495, %v499
  %vm501 = vweird.f32 %v487
  %vm502 = vweird.f32 %v495
  %vm503 = vmor %vm501, %vm502
  %v504 = vsel %vm503, %v495, %v500
  %v505 = vrsqrt.pop %v488
  %v506 = vmul.f32 %v505, %v488
  %v507 = vmul.f32 %v506, %v505
  %v508 = vmul.f32 0.5, %v507
  %v509 = vsub.f32 1.5, %v508
  %v510 = vmul.f32 %v505, %v509
  %vm511 = vweird.f32 %v488
  %vm512 = vweird.f32 %v505
  %vm513 = vmor %vm511, %vm512
  %v514 = vsel %vm513, %v505, %v510
  %v515 = vrsqrt.pop %v489
  %v516 = vmul.f32 %v515, %v489
  %v517 = vmul.f32 %v516, %v515
  %v518 = vmul.f32 0.5, %v517
  %v519 = vsub.f32 1.5, %v518
  %v520 = vmul.f32 %v515, %v519
  %vm521 = vweird.f32 %v489
  %vm522 = vweird.f32 %v515
  %vm523 = vmor %vm521, %vm522
  %v524 = vsel %vm523, %v515, %v520
  %v525 = vrsqrt.pop %v490
  %v526 = vmul.f32 %v525, %v490
  %v527 = vmul.f32 %v526, %v525
  %v528 = vmul.f32 0.5, %v527
  %v529 = vsub.f32 1.5, %v528
  %v530 = vmul.f32 %v525, %v529
  %vm531 = vweird.f32 %v490
  %vm532 = vweird.f32 %v525
  %vm533 = vmor %vm531, %vm532
  %v534 = vsel %vm533, %v525, %v530
  %v535 = vrsqrt.pop %v491
  %v536 = vmul.f32 %v535, %v491
  %v537 = vmul.f32 %v536, %v535
  %v538 = vmul.f32 0.5, %v537
  %v539 = vsub.f32 1.5, %v538
  %v540 = vmul.f32 %v535, %v539
  %vm541 = vweird.f32 %v491
  %vm542 = vweird.f32 %v535
  %vm543 = vmor %vm541, %vm542
  %v544 = vsel %vm543, %v535, %v540
  %v545 = vrsqrt.pop %v492
  %v546 = vmul.f32 %v545, %v492
  %v547 = vmul.f32 %v546, %v545
  %v548 = vmul.f32 0.5, %v547
  %v549 = vsub.f32 1.5, %v548
  %v550 = vmul.f32 %v545, %v549
  %vm551 = vweird.f32 %v492
  %vm552 = vweird.f32 %v545
  %vm553 = vmor %vm551, %vm552
  %v554 = vsel %vm553, %v545, %v550
  %v555 = vrsqrt.pop %v493
  %v556 = vmul.f32 %v555, %v493
  %v557 = vmul.f32 %v556, %v555
  %v558 = vmul.f32 0.5, %v557
  %v559 = vsub.f32 1.5, %v558
  %v560 = vmul.f32 %v555, %v559
  %vm561 = vweird.f32 %v493
  %vm562 = vweird.f32 %v555
  %vm563 = vmor %vm561, %vm562
  %v564 = vsel %vm563, %v555, %v560
  %v565 = vrsqrt.pop %v494
  %v566 = vmul.f32 %v565, %v494
  %v567 = vmul.f32 %v566, %v565
  %v568 = vmul.f32 0.5, %v567
  %v569 = vsub.f32 1.5, %v568
  %v570 = vmul.f32 %v565, %v569
  %vm571 = vweird.f32 %v494
  %vm572 = vweird.f32 %v565
  %vm573 = vmor %vm571, %vm572
  %v574 = vsel %vm573, %v565, %v570
  %583 = vrot.lane.b32.xlu0 %v504, 127
  %v584 = vpop.permute.xlu0 %583
  %585 = vrot.lane.b32.xlu0 %v514, 127
  %v586 = vpop.permute.xlu0 %585
  %587 = vrot.lane.b32.xlu0 %v524, 127
  %v588 = vpop.permute.xlu0 %587
  %589 = vrot.lane.b32.xlu0 %v534, 127
  %v590 = vpop.permute.xlu0 %589
  %591 = vrot.lane.b32.xlu0 %v544, 127
  %v592 = vpop.permute.xlu0 %591
  %593 = vrot.lane.b32.xlu0 %v554, 127
  %v594 = vpop.permute.xlu0 %593
  %595 = vrot.lane.b32.xlu0 %v564, 127
  %v596 = vpop.permute.xlu0 %595
  %597 = vrot.lane.b32.xlu0 %v574, 127
  %v598 = vpop.permute.xlu0 %597
  %v607 = vmul.f32 %v479, %v584
  %v608 = vmul.f32 %v480, %v586
  %v609 = vmul.f32 %v481, %v588
  %v610 = vmul.f32 %v482, %v590
  %v611 = vmul.f32 %v483, %v592
  %v612 = vmul.f32 %v484, %v594
  %v613 = vmul.f32 %v485, %v596
  %v614 = vmul.f32 %v486, %v598
  %v615 = vld [vmem:[%s4] sm:$0xff]
  %v616 = vld [vmem:[%s4 + $0x8] sm:$0xff]
  %v617 = vld [vmem:[%s4 + $0x10] sm:$0xff]
  %v618 = vld [vmem:[%s4 + $0x18] sm:$0xff]
  %v619 = vld [vmem:[%s4 + $0x20] sm:$0xff]
  %v620 = vld [vmem:[%s4 + $0x28] sm:$0xff]
  %v621 = vld [vmem:[%s4 + $0x30] sm:$0xff]
  %v622 = vld [vmem:[%s4 + $0x38] sm:$0xff]
  %v623 = vmul.f32 %v400, %v607
  %v624 = vmul.f32 %v403, %v608
  %v625 = vmul.f32 %v406, %v609
  %v626 = vmul.f32 %v409, %v610
  %v627 = vmul.f32 %v412, %v611
  %v628 = vmul.f32 %v415, %v612
  %v629 = vmul.f32 %v418, %v613
  %v630 = vmul.f32 %v421, %v614
  %v631 = vsub.f32 %v615, %v623
  %v632 = vsub.f32 %v616, %v624
  %v633 = vsub.f32 %v617, %v625
  %v634 = vsub.f32 %v618, %v626
  %v635 = vsub.f32 %v619, %v627
  %v636 = vsub.f32 %v620, %v628
  %v637 = vsub.f32 %v621, %v629
  %v638 = vsub.f32 %v622, %v630
  %640 = vset.pattern.permute.xlu0 0
  %641 = vperm.xlu0 %640, %v607
  %v642 = vpop.permute.xlu0 %641
  %645 = vset.pattern.permute.xlu0 0
  %646 = vperm.xlu0 %645, %v608
  %v647 = vpop.permute.xlu0 %646
  %650 = vset.pattern.permute.xlu0 0
  %651 = vperm.xlu0 %650, %v609
  %v652 = vpop.permute.xlu0 %651
  %655 = vset.pattern.permute.xlu0 0
  %656 = vperm.xlu0 %655, %v610
  %v657 = vpop.permute.xlu0 %656
  %660 = vset.pattern.permute.xlu0 0
  %661 = vperm.xlu0 %660, %v611
  %v662 = vpop.permute.xlu0 %661
  %665 = vset.pattern.permute.xlu0 0
  %666 = vperm.xlu0 %665, %v612
  %v667 = vpop.permute.xlu0 %666
  %670 = vset.pattern.permute.xlu0 0
  %671 = vperm.xlu0 %670, %v613
  %v672 = vpop.permute.xlu0 %671
  %675 = vset.pattern.permute.xlu0 0
  %676 = vperm.xlu0 %675, %v614
  %v677 = vpop.permute.xlu0 %676
  %v679 = vmul.f32 %v260, %v642
  %v680 = vmul.f32 %v263, %v647
  %v681 = vmul.f32 %v266, %v652
  %v682 = vmul.f32 %v269, %v657
  %v683 = vmul.f32 %v272, %v662
  %v684 = vmul.f32 %v275, %v667
  %v685 = vmul.f32 %v278, %v672
  %v686 = vmul.f32 %v281, %v677
  %688 = vset.pattern.permute.xlu0 0
  %689 = vperm.xlu0 %688, %v631
  %v690 = vpop.permute.xlu0 %689
  %693 = vset.pattern.permute.xlu0 0
  %694 = vperm.xlu0 %693, %v632
  %v695 = vpop.permute.xlu0 %694
  %698 = vset.pattern.permute.xlu0 0
  %699 = vperm.xlu0 %698, %v633
  %v700 = vpop.permute.xlu0 %699
  %703 = vset.pattern.permute.xlu0 0
  %704 = vperm.xlu0 %703, %v634
  %v705 = vpop.permute.xlu0 %704
  %708 = vset.pattern.permute.xlu0 0
  %709 = vperm.xlu0 %708, %v635
  %v710 = vpop.permute.xlu0 %709
  %713 = vset.pattern.permute.xlu0 0
  %714 = vperm.xlu0 %713, %v636
  %v715 = vpop.permute.xlu0 %714
  %718 = vset.pattern.permute.xlu0 0
  %719 = vperm.xlu0 %718, %v637
  %v720 = vpop.permute.xlu0 %719
  %723 = vset.pattern.permute.xlu0 0
  %724 = vperm.xlu0 %723, %v638
  %v725 = vpop.permute.xlu0 %724
  %v727 = vadd.f32 %v679, %v690
  %v728 = vadd.f32 %v680, %v695
  %v729 = vadd.f32 %v681, %v700
  %v730 = vadd.f32 %v682, %v705
  %v731 = vadd.f32 %v683, %v710
  %v732 = vadd.f32 %v684, %v715
  %v733 = vadd.f32 %v685, %v720
  %v734 = vadd.f32 %v686, %v725
  %v735 = vmax.f32 %v727, 0.0
  %v736 = vmax.f32 %v728, 0.0
  %v737 = vmax.f32 %v729, 0.0
  %v738 = vmax.f32 %v730, 0.0
  %v739 = vmax.f32 %v731, 0.0
  %v740 = vmax.f32 %v732, 0.0
  %v741 = vmax.f32 %v733, 0.0
  %v742 = vmax.f32 %v734, 0.0
  %v743 = vld [vmem:[%s6] sm:$0xff]
  %v744 = vld [vmem:[%s6 + $0x8] sm:$0xff]
  %v746 = vsel %vm283, %v735, 0
  %v749 = vsel %vm283, %v736, 0
  %v752 = vsel %vm283, %v737, 0
  %v755 = vsel %vm283, %v738, 0
  %v758 = vsel %vm283, %v739, 0
  %v761 = vsel %vm283, %v740, 0
  %v764 = vsel %vm283, %v741, 0
  %v767 = vsel %vm283, %v742, 0
  %769 = vmatpush.msra.mxu0 0.0
  %770 = vmatpush.msra.mxu0 0.0
  %771 = vmatpush.msra.mxu0 0.0
  %772 = vmatpush.msra.mxu0 0.0
  %773 = vmatpush.msra.mxu0 0.0
  %774 = vmatpush.msra.mxu0 0.0
  %775 = vmatpush.msra.mxu0 0.0
  %776 = vmatpush.msra.mxu0 0.0
  %777 = vmatpush.msra.mxu0 0.0
  %778 = vmatpush.msra.mxu0 0.0
  %779 = vmatpush.msra.mxu0 0.0
  %780 = vmatpush.msra.mxu0 0.0
  %781 = vmatpush.msra.mxu0 0.0
  %782 = vmatpush.msra.mxu0 0.0
  %783 = vmatpush.msra.mxu0 %v744
  %784 = vmatpush.msra.mxu0 %v743
  %785 = vmatmul.f32.gmra.mxu0 %v746
  %v786 = vpop.f32.mrf.mxu0
  %v787 = vadd.f32 0.0, %v786
  %788 = vmatmul.f32.gmra.mxu0 %v749
  %v789 = vpop.f32.mrf.mxu0
  %v790 = vadd.f32 0.0, %v789
  %791 = vmatmul.f32.gmra.mxu0 %v752
  %v792 = vpop.f32.mrf.mxu0
  %v793 = vadd.f32 0.0, %v792
  %794 = vmatmul.f32.gmra.mxu0 %v755
  %v795 = vpop.f32.mrf.mxu0
  %v796 = vadd.f32 0.0, %v795
  %797 = vmatmul.f32.gmra.mxu0 %v758
  %v798 = vpop.f32.mrf.mxu0
  %v799 = vadd.f32 0.0, %v798
  %800 = vmatmul.f32.gmra.mxu0 %v761
  %v801 = vpop.f32.mrf.mxu0
  %v802 = vadd.f32 0.0, %v801
  %803 = vmatmul.f32.gmra.mxu0 %v764
  %v804 = vpop.f32.mrf.mxu0
  %v805 = vadd.f32 0.0, %v804
  %806 = vmatmul.f32.gmra.mxu0 %v767
  %v807 = vpop.f32.mrf.mxu0
  %v808 = vadd.f32 0.0, %v807
  %809 = vdwg.mxu0
  %v810 = vld [vmem:[%s7] sm:$0xff]
  %v811 = vld [vmem:[%s7 + $0x8] sm:$0xff]
  %v812 = vld [vmem:[%s7 + $0x10] sm:$0xff]
  %v813 = vld [vmem:[%s7 + $0x18] sm:$0xff]
  %v814 = vld [vmem:[%s7 + $0x20] sm:$0xff]
  %v815 = vld [vmem:[%s7 + $0x28] sm:$0xff]
  %v816 = vld [vmem:[%s7 + $0x30] sm:$0xff]
  %v817 = vld [vmem:[%s7 + $0x38] sm:$0xff]
  %v818 = vld [vmem:[%s7 + $0x40] sm:$0xff]
  %v819 = vld [vmem:[%s7 + $0x48] sm:$0xff]
  %v820 = vld [vmem:[%s7 + $0x50] sm:$0xff]
  %v821 = vld [vmem:[%s7 + $0x58] sm:$0xff]
  %v822 = vld [vmem:[%s7 + $0x60] sm:$0xff]
  %v823 = vld [vmem:[%s7 + $0x68] sm:$0xff]
  %v824 = vld [vmem:[%s7 + $0x70] sm:$0xff]
  %v825 = vld [vmem:[%s7 + $0x78] sm:$0xff]
  %v827 = vsel %vm357, %v810, 0
  %v830 = vsel %vm357, %v811, 0
  %v833 = vsel %vm357, %v812, 0
  %v836 = vsel %vm357, %v813, 0
  %v839 = vsel %vm357, %v814, 0
  %v842 = vsel %vm357, %v815, 0
  %v845 = vsel %vm357, %v816, 0
  %v848 = vsel %vm357, %v817, 0
  %v851 = vsel %vm357, %v818, 0
  %v854 = vsel %vm357, %v819, 0
  %v857 = vsel %vm357, %v820, 0
  %v860 = vsel %vm357, %v821, 0
  %v863 = vsel %vm357, %v822, 0
  %v866 = vsel %vm357, %v823, 0
  %v869 = vsel %vm357, %v824, 0
  %v872 = vsel %vm357, %v825, 0
  %874 = vmatpush.msra.mxu0 0.0
  %875 = vmatpush.msra.mxu0 0.0
  %876 = vmatpush.msra.mxu0 0.0
  %877 = vmatpush.msra.mxu0 0.0
  %878 = vmatpush.msra.mxu0 0.0
  %879 = vmatpush.msra.mxu0 0.0
  %880 = vmatpush.msra.mxu0 0.0
  %881 = vmatpush.msra.mxu0 0.0
  %882 = vmatpush.msra.mxu0 %v808
  %883 = vmatpush.msra.mxu0 %v805
  %884 = vmatpush.msra.mxu0 %v802
  %885 = vmatpush.msra.mxu0 %v799
  %886 = vmatpush.msra.mxu0 %v796
  %887 = vmatpush.msra.mxu0 %v793
  %888 = vmatpush.msra.mxu0 %v790
  %889 = vmatpush.msra.mxu0 %v787
  %890 = vmatmul.f32.gmra.mxu0 %v827
  %v891 = vpop.f32.mrf.mxu0
  %v892 = vadd.f32 0.0, %v891
  %893 = vmatmul.f32.gmra.mxu0 %v830
  %v894 = vpop.f32.mrf.mxu0
  %v895 = vadd.f32 0.0, %v894
  %896 = vmatmul.f32.gmra.mxu0 %v833
  %v897 = vpop.f32.mrf.mxu0
  %v898 = vadd.f32 0.0, %v897
  %899 = vmatmul.f32.gmra.mxu0 %v836
  %v900 = vpop.f32.mrf.mxu0
  %v901 = vadd.f32 0.0, %v900
  %902 = vmatmul.f32.gmra.mxu0 %v839
  %v903 = vpop.f32.mrf.mxu0
  %v904 = vadd.f32 0.0, %v903
  %905 = vmatmul.f32.gmra.mxu0 %v842
  %v906 = vpop.f32.mrf.mxu0
  %v907 = vadd.f32 0.0, %v906
  %908 = vmatmul.f32.gmra.mxu0 %v845
  %v909 = vpop.f32.mrf.mxu0
  %v910 = vadd.f32 0.0, %v909
  %911 = vmatmul.f32.gmra.mxu0 %v848
  %v912 = vpop.f32.mrf.mxu0
  %v913 = vadd.f32 0.0, %v912
  %914 = vmatmul.f32.gmra.mxu0 %v851
  %v915 = vpop.f32.mrf.mxu0
  %v916 = vadd.f32 0.0, %v915
  %917 = vmatmul.f32.gmra.mxu0 %v854
  %v918 = vpop.f32.mrf.mxu0
  %v919 = vadd.f32 0.0, %v918
  %920 = vmatmul.f32.gmra.mxu0 %v857
  %v921 = vpop.f32.mrf.mxu0
  %v922 = vadd.f32 0.0, %v921
  %923 = vmatmul.f32.gmra.mxu0 %v860
  %v924 = vpop.f32.mrf.mxu0
  %v925 = vadd.f32 0.0, %v924
  %926 = vmatmul.f32.gmra.mxu0 %v863
  %v927 = vpop.f32.mrf.mxu0
  %v928 = vadd.f32 0.0, %v927
  %929 = vmatmul.f32.gmra.mxu0 %v866
  %v930 = vpop.f32.mrf.mxu0
  %v931 = vadd.f32 0.0, %v930
  %932 = vmatmul.f32.gmra.mxu0 %v869
  %v933 = vpop.f32.mrf.mxu0
  %v934 = vadd.f32 0.0, %v933
  %935 = vmatmul.f32.gmra.mxu0 %v872
  %v936 = vpop.f32.mrf.mxu0
  %v937 = vadd.f32 0.0, %v936
  %938 = vdwg.mxu0
  %vm939 = vcmask 261120
  %940 = vst.msk [vmem:[%s8] sm:$0xff] %vm939, %v892
  %941 = vst.msk [vmem:[%s8 + $0x8] sm:$0xff] %vm939, %v895
  %942 = vst.msk [vmem:[%s8 + $0x10] sm:$0xff] %vm939, %v898
  %943 = vst.msk [vmem:[%s8 + $0x18] sm:$0xff] %vm939, %v901
  %944 = vst.msk [vmem:[%s8 + $0x20] sm:$0xff] %vm939, %v904
  %945 = vst.msk [vmem:[%s8 + $0x28] sm:$0xff] %vm939, %v907
  %946 = vst.msk [vmem:[%s8 + $0x30] sm:$0xff] %vm939, %v910
  %947 = vst.msk [vmem:[%s8 + $0x38] sm:$0xff] %vm939, %v913
  %948 = vst.msk [vmem:[%s8 + $0x40] sm:$0xff] %vm939, %v916
  %949 = vst.msk [vmem:[%s8 + $0x48] sm:$0xff] %vm939, %v919
  %950 = vst.msk [vmem:[%s8 + $0x50] sm:$0xff] %vm939, %v922
  %951 = vst.msk [vmem:[%s8 + $0x58] sm:$0xff] %vm939, %v925
  %952 = vst.msk [vmem:[%s8 + $0x60] sm:$0xff] %vm939, %v928
  %953 = vst.msk [vmem:[%s8 + $0x68] sm:$0xff] %vm939, %v931
  %954 = vst.msk [vmem:[%s8 + $0x70] sm:$0xff] %vm939, %v934
  %955 = vst.msk [vmem:[%s8 + $0x78] sm:$0xff] %vm939, %v937
  // Predicated region
  $region34: #{dip_forward.4} parent=0 // pred_check
    _
  $region35: #{dip_forward.4} parent=0 // pred_check_branch
    %957 = sbr.rel (0) target = $region37
  $region36: #{dip_forward.4} parent=0 // pred_region
    _
  $region37: #{dip_forward.4} parent=0 // pred_fallthru
    _
  // Predicated region
  $region38: #{dip_forward.4} parent=0 // pred_check
    _
  $region39: #{dip_forward.4} parent=0 // pred_check_branch
    %959 = sbr.rel (0) target = $region41
  $region40: #{dip_forward.4} parent=0 // pred_region
    _
  $region41: #{dip_forward.4} parent=0 // pred_fallthru
    _

// kernel: dip_forward.5
$region0: #{dip_forward.5}
  #allocation0 [shape = 'u32[]', space=smem, size = 0x4, offset = 0x4, fixed_abs, tag = 'smem constant byte address 0x4 - core index']
  #allocation1 [shape = 'u32[72,128]{1,0:T(1,128)}', space=vmem, size = 0x9000, scoped, tag = 'internal scratch']
  %s0 = inlined_call_operand.vmem [shape: f32[2,144,18], index: 0, kind: input, shape index: {}]
  %s1 = inlined_call_operand.vmem [shape: f32[128,432], index: 1, kind: input, shape index: {}]
  %s2 = inlined_call_operand.vmem [shape: f32[128,1], index: 2, kind: input, shape index: {}]
  %s3 = inlined_call_operand.vmem [shape: f32[128,1], index: 3, kind: input, shape index: {}]
  %s4 = inlined_call_operand.vmem [shape: f32[128,1], index: 4, kind: input, shape index: {}]
  %s5 = inlined_call_operand.vmem [shape: f32[128,128], index: 5, kind: input, shape index: {}]
  %s6 = inlined_call_operand.vmem [shape: f32[32,64], index: 6, kind: input, shape index: {}]
  %s7 = inlined_call_operand.vmem [shape: f32[256,128], index: 7, kind: input, shape index: {}]
  %s8 = inlined_call_operand.vmem [shape: f32[256,64], index: 8, kind: output, shape index: {}]
  %s9 = sld [smem:[#allocation0]]
  $region42: #{dip_forward.5} parent=0
    _
  %s11 = ssub.s32 1, %s9
  %s12 = scalar_select 0, %s11, %s9
  // Predicated region
  $region2: #{dip_forward.5} parent=0 // pred_check
    _
  $region3: #{dip_forward.5} parent=0 // pred_check_branch
    %14 = sbr.rel (0) target = $region5
  $region4: #{dip_forward.5} parent=0 // pred_region
    _
  $region5: #{dip_forward.5} parent=0 // pred_fallthru
    _
  // Predicated region
  $region6: #{dip_forward.5} parent=0 // pred_check
    _
  $region7: #{dip_forward.5} parent=0 // pred_check_branch
    %16 = sbr.rel (0) target = $region9
  $region8: #{dip_forward.5} parent=0 // pred_region
    _
  $region9: #{dip_forward.5} parent=0 // pred_fallthru
    _
  // Predicated region
  $region10: #{dip_forward.5} parent=0 // pred_check
    _
  $region11: #{dip_forward.5} parent=0 // pred_check_branch
    %18 = sbr.rel (0) target = $region13
  $region12: #{dip_forward.5} parent=0 // pred_region
    _
  $region13: #{dip_forward.5} parent=0 // pred_fallthru
    _
  // Predicated region
  $region14: #{dip_forward.5} parent=0 // pred_check
    _
  $region15: #{dip_forward.5} parent=0 // pred_check_branch
    %20 = sbr.rel (0) target = $region17
  $region16: #{dip_forward.5} parent=0 // pred_region
    _
  $region17: #{dip_forward.5} parent=0 // pred_fallthru
    _
  // Predicated region
  $region18: #{dip_forward.5} parent=0 // pred_check
    _
  $region19: #{dip_forward.5} parent=0 // pred_check_branch
    %22 = sbr.rel (0) target = $region21
  $region20: #{dip_forward.5} parent=0 // pred_region
    _
  $region21: #{dip_forward.5} parent=0 // pred_fallthru
    _
  // Predicated region
  $region22: #{dip_forward.5} parent=0 // pred_check
    _
  $region23: #{dip_forward.5} parent=0 // pred_check_branch
    %24 = sbr.rel (0) target = $region25
  $region24: #{dip_forward.5} parent=0 // pred_region
    _
  $region25: #{dip_forward.5} parent=0 // pred_fallthru
    _
  // Predicated region
  $region26: #{dip_forward.5} parent=0 // pred_check
    _
  $region27: #{dip_forward.5} parent=0 // pred_check_branch
    %26 = sbr.rel (0) target = $region29
  $region28: #{dip_forward.5} parent=0 // pred_region
    _
  $region29: #{dip_forward.5} parent=0 // pred_fallthru
    _
  // Predicated region
  $region30: #{dip_forward.5} parent=0 // pred_check
    _
  $region31: #{dip_forward.5} parent=0 // pred_check_branch
    %28 = sbr.rel (0) target = $region33
  $region32: #{dip_forward.5} parent=0 // pred_region
    _
  $region33: #{dip_forward.5} parent=0 // pred_fallthru
    _
  %v29 = vld [vmem:[%s0] sm:$0xff]
  %v30 = vld [vmem:[%s0 + $0x8] sm:$0xff]
  %v31 = vld [vmem:[%s0 + $0x10] sm:$0xff]
  %v32 = vld [vmem:[%s0 + $0x18] sm:$0xff]
  %v33 = vld [vmem:[%s0 + $0x20] sm:$0xff]
  %v34 = vld [vmem:[%s0 + $0x28] sm:$0xff]
  %v35 = vld [vmem:[%s0 + $0x30] sm:$0xff]
  %v36 = vld [vmem:[%s0 + $0x38] sm:$0xff]
  %v37 = vld [vmem:[%s0 + $0x40] sm:$0xff]
  %v38 = vld [vmem:[%s0 + $0x48] sm:$0xff]
  %v39 = vld [vmem:[%s0 + $0x50] sm:$0xff]
  %v40 = vld [vmem:[%s0 + $0x58] sm:$0xff]
  %v41 = vld [vmem:[%s0 + $0x60] sm:$0xff]
  %v42 = vld [vmem:[%s0 + $0x68] sm:$0xff]
  %v43 = vld [vmem:[%s0 + $0x70] sm:$0xff]
  %v44 = vld [vmem:[%s0 + $0x78] sm:$0xff]
  %v45 = vld [vmem:[%s0 + $0x80] sm:$0xff]
  %v46 = vld [vmem:[%s0 + $0x88] sm:$0xff]
  %65 = vrot.lane.b32.xlu0 %v29, 127
  %v66 = vpop.permute.xlu0 %65
  %67 = vrot.lane.b32.xlu0 %v30, 127
  %v68 = vpop.permute.xlu0 %67
  %69 = vrot.lane.b32.xlu0 %v31, 127
  %v70 = vpop.permute.xlu0 %69
  %71 = vrot.lane.b32.xlu0 %v32, 127
  %v72 = vpop.permute.xlu0 %71
  %73 = vrot.lane.b32.xlu0 %v33, 127
  %v74 = vpop.permute.xlu0 %73
  %75 = vrot.lane.b32.xlu0 %v34, 127
  %v76 = vpop.permute.xlu0 %75
  %77 = vrot.lane.b32.xlu0 %v35, 127
  %v78 = vpop.permute.xlu0 %77
  %79 = vrot.lane.b32.xlu0 %v36, 127
  %v80 = vpop.permute.xlu0 %79
  %81 = vrot.lane.b32.xlu0 %v37, 127
  %v82 = vpop.permute.xlu0 %81
  %83 = vrot.lane.b32.xlu0 %v38, 127
  %v84 = vpop.permute.xlu0 %83
  %85 = vrot.lane.b32.xlu0 %v39, 127
  %v86 = vpop.permute.xlu0 %85
  %87 = vrot.lane.b32.xlu0 %v40, 127
  %v88 = vpop.permute.xlu0 %87
  %89 = vrot.lane.b32.xlu0 %v41, 127
  %v90 = vpop.permute.xlu0 %89
  %91 = vrot.lane.b32.xlu0 %v42, 127
  %v92 = vpop.permute.xlu0 %91
  %93 = vrot.lane.b32.xlu0 %v43, 127
  %v94 = vpop.permute.xlu0 %93
  %95 = vrot.lane.b32.xlu0 %v44, 127
  %v96 = vpop.permute.xlu0 %95
  %97 = vrot.lane.b32.xlu0 %v45, 127
  %v98 = vpop.permute.xlu0 %97
  %99 = vrot.lane.b32.xlu0 %v46, 127
  %v100 = vpop.permute.xlu0 %99
  %119 = vrot.lane.b32.xlu0 %v29, 126
  %v120 = vpop.permute.xlu0 %119
  %121 = vrot.lane.b32.xlu0 %v30, 126
  %v122 = vpop.permute.xlu0 %121
  %123 = vrot.lane.b32.xlu0 %v31, 126
  %v124 = vpop.permute.xlu0 %123
  %125 = vrot.lane.b32.xlu0 %v32, 126
  %v126 = vpop.permute.xlu0 %125
  %127 = vrot.lane.b32.xlu0 %v33, 126
  %v128 = vpop.permute.xlu0 %127
  %129 = vrot.lane.b32.xlu0 %v34, 126
  %v130 = vpop.permute.xlu0 %129
  %131 = vrot.lane.b32.xlu0 %v35, 126
  %v132 = vpop.permute.xlu0 %131
  %133 = vrot.lane.b32.xlu0 %v36, 126
  %v134 = vpop.permute.xlu0 %133
  %135 = vrot.lane.b32.xlu0 %v37, 126
  %v136 = vpop.permute.xlu0 %135
  %137 = vrot.lane.b32.xlu0 %v38, 126
  %v138 = vpop.permute.xlu0 %137
  %139 = vrot.lane.b32.xlu0 %v39, 126
  %v140 = vpop.permute.xlu0 %139
  %141 = vrot.lane.b32.xlu0 %v40, 126
  %v142 = vpop.permute.xlu0 %141
  %143 = vrot.lane.b32.xlu0 %v41, 126
  %v144 = vpop.permute.xlu0 %143
  %145 = vrot.lane.b32.xlu0 %v42, 126
  %v146 = vpop.permute.xlu0 %145
  %147 = vrot.lane.b32.xlu0 %v43, 126
  %v148 = vpop.permute.xlu0 %147
  %149 = vrot.lane.b32.xlu0 %v44, 126
  %v150 = vpop.permute.xlu0 %149
  %151 = vrot.lane.b32.xlu0 %v45, 126
  %v152 = vpop.permute.xlu0 %151
  %153 = vrot.lane.b32.xlu0 %v46, 126
  %v154 = vpop.permute.xlu0 %153
  %s173 = scalar_lea.vmem %s0, 144
  %v174 = vld [vmem:[%s173] sm:$0xff]
  %v175 = vld [vmem:[%s173 + $0x8] sm:$0xff]
  %v176 = vld [vmem:[%s173 + $0x10] sm:$0xff]
  %v177 = vld [vmem:[%s173 + $0x18] sm:$0xff]
  %v178 = vld [vmem:[%s173 + $0x20] sm:$0xff]
  %v179 = vld [vmem:[%s173 + $0x28] sm:$0xff]
  %v180 = vld [vmem:[%s173 + $0x30] sm:$0xff]
  %v181 = vld [vmem:[%s173 + $0x38] sm:$0xff]
  %v182 = vld [vmem:[%s173 + $0x40] sm:$0xff]
  %v183 = vld [vmem:[%s173 + $0x48] sm:$0xff]
  %v184 = vld [vmem:[%s173 + $0x50] sm:$0xff]
  %v185 = vld [vmem:[%s173 + $0x58] sm:$0xff]
  %v186 = vld [vmem:[%s173 + $0x60] sm:$0xff]
  %v187 = vld [vmem:[%s173 + $0x68] sm:$0xff]
  %v188 = vld [vmem:[%s173 + $0x70] sm:$0xff]
  %v189 = vld [vmem:[%s173 + $0x78] sm:$0xff]
  %v190 = vld [vmem:[%s173 + $0x80] sm:$0xff]
  %v191 = vld [vmem:[%s173 + $0x88] sm:$0xff]
  %210 = vrot.lane.b32.xlu0 %v174, 127
  %v211 = vpop.permute.xlu0 %210
  %212 = vrot.lane.b32.xlu0 %v175, 127
  %v213 = vpop.permute.xlu0 %212
  %214 = vrot.lane.b32.xlu0 %v176, 127
  %v215 = vpop.permute.xlu0 %214
  %216 = vrot.lane.b32.xlu0 %v177, 127
  %v217 = vpop.permute.xlu0 %216
  %218 = vrot.lane.b32.xlu0 %v178, 127
  %v219 = vpop.permute.xlu0 %218
  %220 = vrot.lane.b32.xlu0 %v179, 127
  %v221 = vpop.permute.xlu0 %220
  %222 = vrot.lane.b32.xlu0 %v180, 127
  %v223 = vpop.permute.xlu0 %222
  %224 = vrot.lane.b32.xlu0 %v181, 127
  %v225 = vpop.permute.xlu0 %224
  %226 = vrot.lane.b32.xlu0 %v182, 127
  %v227 = vpop.permute.xlu0 %226
  %228 = vrot.lane.b32.xlu0 %v183, 127
  %v229 = vpop.permute.xlu0 %228
  %230 = vrot.lane.b32.xlu0 %v184, 127
  %v231 = vpop.permute.xlu0 %230
  %232 = vrot.lane.b32.xlu0 %v185, 127
  %v233 = vpop.permute.xlu0 %232
  %234 = vrot.lane.b32.xlu0 %v186, 127
  %v235 = vpop.permute.xlu0 %234
  %236 = vrot.lane.b32.xlu0 %v187, 127
  %v237 = vpop.permute.xlu0 %236
  %238 = vrot.lane.b32.xlu0 %v188, 127
  %v239 = vpop.permute.xlu0 %238
  %240 = vrot.lane.b32.xlu0 %v189, 127
  %v241 = vpop.permute.xlu0 %240
  %242 = vrot.lane.b32.xlu0 %v190, 127
  %v243 = vpop.permute.xlu0 %242
  %244 = vrot.lane.b32.xlu0 %v191, 127
  %v245 = vpop.permute.xlu0 %244
  %246 = vrot.lane.b32.xlu0 %v174, 126
  %v247 = vpop.permute.xlu0 %246
  %248 = vrot.lane.b32.xlu0 %v175, 126
  %v249 = vpop.permute.xlu0 %248
  %250 = vrot.lane.b32.xlu0 %v176, 126
  %v251 = vpop.permute.xlu0 %250
  %252 = vrot.lane.b32.xlu0 %v177, 126
  %v253 = vpop.permute.xlu0 %252
  %254 = vrot.lane.b32.xlu0 %v178, 126
  %v255 = vpop.permute.xlu0 %254
  %256 = vrot.lane.b32.xlu0 %v179, 126
  %v257 = vpop.permute.xlu0 %256
  %258 = vrot.lane.b32.xlu0 %v180, 126
  %v259 = vpop.permute.xlu0 %258
  %260 = vrot.lane.b32.xlu0 %v181, 126
  %v261 = vpop.permute.xlu0 %260
  %262 = vrot.lane.b32.xlu0 %v182, 126
  %v263 = vpop.permute.xlu0 %262
  %264 = vrot.lane.b32.xlu0 %v183, 126
  %v265 = vpop.permute.xlu0 %264
  %266 = vrot.lane.b32.xlu0 %v184, 126
  %v267 = vpop.permute.xlu0 %266
  %268 = vrot.lane.b32.xlu0 %v185, 126
  %v269 = vpop.permute.xlu0 %268
  %270 = vrot.lane.b32.xlu0 %v186, 126
  %v271 = vpop.permute.xlu0 %270
  %272 = vrot.lane.b32.xlu0 %v187, 126
  %v273 = vpop.permute.xlu0 %272
  %274 = vrot.lane.b32.xlu0 %v188, 126
  %v275 = vpop.permute.xlu0 %274
  %276 = vrot.lane.b32.xlu0 %v189, 126
  %v277 = vpop.permute.xlu0 %276
  %278 = vrot.lane.b32.xlu0 %v190, 126
  %v279 = vpop.permute.xlu0 %278
  %280 = vrot.lane.b32.xlu0 %v191, 126
  %v281 = vpop.permute.xlu0 %280
  %282 = vrot.lane.b32.xlu0 %v174, 16
  %v283 = vpop.permute.xlu0 %282
  %284 = vrot.lane.b32.xlu0 %v175, 16
  %v285 = vpop.permute.xlu0 %284
  %286 = vrot.lane.b32.xlu0 %v176, 16
  %v287 = vpop.permute.xlu0 %286
  %288 = vrot.lane.b32.xlu0 %v177, 16
  %v289 = vpop.permute.xlu0 %288
  %290 = vrot.lane.b32.xlu0 %v178, 16
  %v291 = vpop.permute.xlu0 %290
  %292 = vrot.lane.b32.xlu0 %v179, 16
  %v293 = vpop.permute.xlu0 %292
  %294 = vrot.lane.b32.xlu0 %v180, 16
  %v295 = vpop.permute.xlu0 %294
  %296 = vrot.lane.b32.xlu0 %v181, 16
  %v297 = vpop.permute.xlu0 %296
  %298 = vrot.lane.b32.xlu0 %v182, 16
  %v299 = vpop.permute.xlu0 %298
  %300 = vrot.lane.b32.xlu0 %v183, 16
  %v301 = vpop.permute.xlu0 %300
  %302 = vrot.lane.b32.xlu0 %v184, 16
  %v303 = vpop.permute.xlu0 %302
  %304 = vrot.lane.b32.xlu0 %v185, 16
  %v305 = vpop.permute.xlu0 %304
  %306 = vrot.lane.b32.xlu0 %v186, 16
  %v307 = vpop.permute.xlu0 %306
  %308 = vrot.lane.b32.xlu0 %v187, 16
  %v309 = vpop.permute.xlu0 %308
  %310 = vrot.lane.b32.xlu0 %v188, 16
  %v311 = vpop.permute.xlu0 %310
  %312 = vrot.lane.b32.xlu0 %v189, 16
  %v313 = vpop.permute.xlu0 %312
  %314 = vrot.lane.b32.xlu0 %v190, 16
  %v315 = vpop.permute.xlu0 %314
  %316 = vrot.lane.b32.xlu0 %v191, 16
  %v317 = vpop.permute.xlu0 %316
  %318 = vrot.lane.b32.xlu0 %v211, 16
  %v319 = vpop.permute.xlu0 %318
  %320 = vrot.lane.b32.xlu0 %v213, 16
  %v321 = vpop.permute.xlu0 %320
  %322 = vrot.lane.b32.xlu0 %v215, 16
  %v323 = vpop.permute.xlu0 %322
  %324 = vrot.lane.b32.xlu0 %v217, 16
  %v325 = vpop.permute.xlu0 %324
  %326 = vrot.lane.b32.xlu0 %v219, 16
  %v327 = vpop.permute.xlu0 %326
  %328 = vrot.lane.b32.xlu0 %v221, 16
  %v329 = vpop.permute.xlu0 %328
  %330 = vrot.lane.b32.xlu0 %v223, 16
  %v331 = vpop.permute.xlu0 %330
  %332 = vrot.lane.b32.xlu0 %v225, 16
  %v333 = vpop.permute.xlu0 %332
  %334 = vrot.lane.b32.xlu0 %v227, 16
  %v335 = vpop.permute.xlu0 %334
  %336 = vrot.lane.b32.xlu0 %v229, 16
  %v337 = vpop.permute.xlu0 %336
  %338 = vrot.lane.b32.xlu0 %v231, 16
  %v339 = vpop.permute.xlu0 %338
  %340 = vrot.lane.b32.xlu0 %v233, 16
  %v341 = vpop.permute.xlu0 %340
  %342 = vrot.lane.b32.xlu0 %v235, 16
  %v343 = vpop.permute.xlu0 %342
  %344 = vrot.lane.b32.xlu0 %v237, 16
  %v345 = vpop.permute.xlu0 %344
  %346 = vrot.lane.b32.xlu0 %v239, 16
  %v347 = vpop.permute.xlu0 %346
  %348 = vrot.lane.b32.xlu0 %v241, 16
  %v349 = vpop.permute.xlu0 %348
  %350 = vrot.lane.b32.xlu0 %v243, 16
  %v351 = vpop.permute.xlu0 %350
  %352 = vrot.lane.b32.xlu0 %v245, 16
  %v353 = vpop.permute.xlu0 %352
  %354 = vrot.lane.b32.xlu0 %v247, 16
  %v355 = vpop.permute.xlu0 %354
  %356 = vrot.lane.b32.xlu0 %v249, 16
  %v357 = vpop.permute.xlu0 %356
  %358 = vrot.lane.b32.xlu0 %v251, 16
  %v359 = vpop.permute.xlu0 %358
  %360 = vrot.lane.b32.xlu0 %v253, 16
  %v361 = vpop.permute.xlu0 %360
  %362 = vrot.lane.b32.xlu0 %v255, 16
  %v363 = vpop.permute.xlu0 %362
  %364 = vrot.lane.b32.xlu0 %v257, 16
  %v365 = vpop.permute.xlu0 %364
  %366 = vrot.lane.b32.xlu0 %v259, 16
  %v367 = vpop.permute.xlu0 %366
  %368 = vrot.lane.b32.xlu0 %v261, 16
  %v369 = vpop.permute.xlu0 %368
  %370 = vrot.lane.b32.xlu0 %v263, 16
  %v371 = vpop.permute.xlu0 %370
  %372 = vrot.lane.b32.xlu0 %v265, 16
  %v373 = vpop.permute.xlu0 %372
  %374 = vrot.lane.b32.xlu0 %v267, 16
  %v375 = vpop.permute.xlu0 %374
  %376 = vrot.lane.b32.xlu0 %v269, 16
  %v377 = vpop.permute.xlu0 %376
  %378 = vrot.lane.b32.xlu0 %v271, 16
  %v379 = vpop.permute.xlu0 %378
  %380 = vrot.lane.b32.xlu0 %v273, 16
  %v381 = vpop.permute.xlu0 %380
  %382 = vrot.lane.b32.xlu0 %v275, 16
  %v383 = vpop.permute.xlu0 %382
  %384 = vrot.lane.b32.xlu0 %v277, 16
  %v385 = vpop.permute.xlu0 %384
  %386 = vrot.lane.b32.xlu0 %v279, 16
  %v387 = vpop.permute.xlu0 %386
  %388 = vrot.lane.b32.xlu0 %v281, 16
  %v389 = vpop.permute.xlu0 %388
  %vm444 = vcmask 130048
  %v445 = vsel %vm444, %v29, %v283
  %v446 = vsel %vm444, %v30, %v285
  %v447 = vsel %vm444, %v31, %v287
  %v448 = vsel %vm444, %v32, %v289
  %v449 = vsel %vm444, %v33, %v291
  %v450 = vsel %vm444, %v34, %v293
  %v451 = vsel %vm444, %v35, %v295
  %v452 = vsel %vm444, %v36, %v297
  %v453 = vsel %vm444, %v37, %v299
  %v454 = vsel %vm444, %v38, %v301
  %v455 = vsel %vm444, %v39, %v303
  %v456 = vsel %vm444, %v40, %v305
  %v457 = vsel %vm444, %v41, %v307
  %v458 = vsel %vm444, %v42, %v309
  %v459 = vsel %vm444, %v43, %v311
  %v460 = vsel %vm444, %v44, %v313
  %v461 = vsel %vm444, %v45, %v315
  %v462 = vsel %vm444, %v46, %v317
  %v463 = vsel %vm444, %v66, %v319
  %v464 = vsel %vm444, %v68, %v321
  %v465 = vsel %vm444, %v70, %v323
  %v466 = vsel %vm444, %v72, %v325
  %v467 = vsel %vm444, %v74, %v327
  %v468 = vsel %vm444, %v76, %v329
  %v469 = vsel %vm444, %v78, %v331
  %v470 = vsel %vm444, %v80, %v333
  %v471 = vsel %vm444, %v82, %v335
  %v472 = vsel %vm444, %v84, %v337
  %v473 = vsel %vm444, %v86, %v339
  %v474 = vsel %vm444, %v88, %v341
  %v475 = vsel %vm444, %v90, %v343
  %v476 = vsel %vm444, %v92, %v345
  %v477 = vsel %vm444, %v94, %v347
  %v478 = vsel %vm444, %v96, %v349
  %v479 = vsel %vm444, %v98, %v351
  %v480 = vsel %vm444, %v100, %v353
  %v481 = vsel %vm444, %v120, %v355
  %v482 = vsel %vm444, %v122, %v357
  %v483 = vsel %vm444, %v124, %v359
  %v484 = vsel %vm444, %v126, %v361
  %v485 = vsel %vm444, %v128, %v363
  %v486 = vsel %vm444, %v130, %v365
  %v487 = vsel %vm444, %v132, %v367
  %v488 = vsel %vm444, %v134, %v369
  %v489 = vsel %vm444, %v136, %v371
  %v490 = vsel %vm444, %v138, %v373
  %v491 = vsel %vm444, %v140, %v375
  %v492 = vsel %vm444, %v142, %v377
  %v493 = vsel %vm444, %v144, %v379
  %v494 = vsel %vm444, %v146, %v381
  %v495 = vsel %vm444, %v148, %v383
  %v496 = vsel %vm444, %v150, %v385
  %v497 = vsel %vm444, %v152, %v387
  %v498 = vsel %vm444, %v154, %v389
  %v499 = vld [vmem:[%s1] sm:$0xff]
  %v500 = vld [vmem:[%s1 + $0x8] sm:$0xff]
  %v501 = vld [vmem:[%s1 + $0x10] sm:$0xff]
  %v502 = vld [vmem:[%s1 + $0x18] sm:$0xff]
  %v503 = vld [vmem:[%s1 + $0x20] sm:$0xff]
  %v504 = vld [vmem:[%s1 + $0x28] sm:$0xff]
  %v505 = vld [vmem:[%s1 + $0x30] sm:$0xff]
  %v506 = vld [vmem:[%s1 + $0x38] sm:$0xff]
  %v507 = vld [vmem:[%s1 + $0x40] sm:$0xff]
  %v508 = vld [vmem:[%s1 + $0x48] sm:$0xff]
  %v509 = vld [vmem:[%s1 + $0x50] sm:$0xff]
  %v510 = vld [vmem:[%s1 + $0x58] sm:$0xff]
  %v511 = vld [vmem:[%s1 + $0x60] sm:$0xff]
  %v512 = vld [vmem:[%s1 + $0x68] sm:$0xff]
  %v513 = vld [vmem:[%s1 + $0x70] sm:$0xff]
  %v514 = vld [vmem:[%s1 + $0x78] sm:$0xff]
  %v515 = vld [vmem:[%s1 + $0x80] sm:$0xff]
  %v516 = vld [vmem:[%s1 + $0x88] sm:$0xff]
  %v517 = vld [vmem:[%s1 + $0x90] sm:$0xff]
  %v518 = vld [vmem:[%s1 + $0x98] sm:$0xff]
  %v519 = vld [vmem:[%s1 + $0xa0] sm:$0xff]
  %v520 = vld [vmem:[%s1 + $0xa8] sm:$0xff]
  %v521 = vld [vmem:[%s1 + $0xb0] sm:$0xff]
  %v522 = vld [vmem:[%s1 + $0xb8] sm:$0xff]
  %v523 = vld [vmem:[%s1 + $0xc0] sm:$0xff]
  %v524 = vld [vmem:[%s1 + $0xc8] sm:$0xff]
  %v525 = vld [vmem:[%s1 + $0xd0] sm:$0xff]
  %v526 = vld [vmem:[%s1 + $0xd8] sm:$0xff]
  %v527 = vld [vmem:[%s1 + $0xe0] sm:$0xff]
  %v528 = vld [vmem:[%s1 + $0xe8] sm:$0xff]
  %v529 = vld [vmem:[%s1 + $0xf0] sm:$0xff]
  %v530 = vld [vmem:[%s1 + $0xf8] sm:$0xff]
  %v531 = vld [vmem:[%s1 + $0x100] sm:$0xff]
  %v532 = vld [vmem:[%s1 + $0x108] sm:$0xff]
  %v533 = vld [vmem:[%s1 + $0x110] sm:$0xff]
  %v534 = vld [vmem:[%s1 + $0x118] sm:$0xff]
  %v535 = vld [vmem:[%s1 + $0x120] sm:$0xff]
  %v536 = vld [vmem:[%s1 + $0x128] sm:$0xff]
  %v537 = vld [vmem:[%s1 + $0x130] sm:$0xff]
  %v538 = vld [vmem:[%s1 + $0x138] sm:$0xff]
  %v539 = vld [vmem:[%s1 + $0x140] sm:$0xff]
  %v540 = vld [vmem:[%s1 + $0x148] sm:$0xff]
  %v541 = vld [vmem:[%s1 + $0x150] sm:$0xff]
  %v542 = vld [vmem:[%s1 + $0x158] sm:$0xff]
  %v543 = vld [vmem:[%s1 + $0x160] sm:$0xff]
  %v544 = vld [vmem:[%s1 + $0x168] sm:$0xff]
  %v545 = vld [vmem:[%s1 + $0x170] sm:$0xff]
  %v546 = vld [vmem:[%s1 + $0x178] sm:$0xff]
  %v547 = vld [vmem:[%s1 + $0x180] sm:$0xff]
  %v548 = vld [vmem:[%s1 + $0x188] sm:$0xff]
  %v549 = vld [vmem:[%s1 + $0x190] sm:$0xff]
  %v550 = vld [vmem:[%s1 + $0x198] sm:$0xff]
  %v551 = vld [vmem:[%s1 + $0x1a0] sm:$0xff]
  %v552 = vld [vmem:[%s1 + $0x1a8] sm:$0xff]
  %v553 = vld [vmem:[%s1 + $0x1b0] sm:$0xff]
  %v554 = vld [vmem:[%s1 + $0x1b8] sm:$0xff]
  %v555 = vld [vmem:[%s1 + $0x1c0] sm:$0xff]
  %v556 = vld [vmem:[%s1 + $0x1c8] sm:$0xff]
  %v557 = vld [vmem:[%s1 + $0x1d0] sm:$0xff]
  %v558 = vld [vmem:[%s1 + $0x1d8] sm:$0xff]
  %v559 = vld [vmem:[%s1 + $0x1e0] sm:$0xff]
  %v560 = vld [vmem:[%s1 + $0x1e8] sm:$0xff]
  %v561 = vld [vmem:[%s1 + $0x1f0] sm:$0xff]
  %v562 = vld [vmem:[%s1 + $0x1f8] sm:$0xff]
  %v563 = vld [vmem:[%s2] sm:$0xff]
  %v564 = vld [vmem:[%s2 + $0x8] sm:$0xff]
  %v565 = vld [vmem:[%s2 + $0x10] sm:$0xff]
  %v566 = vld [vmem:[%s2 + $0x18] sm:$0xff]
  %v567 = vld [vmem:[%s2 + $0x20] sm:$0xff]
  %v568 = vld [vmem:[%s2 + $0x28] sm:$0xff]
  %v569 = vld [vmem:[%s2 + $0x30] sm:$0xff]
  %v570 = vld [vmem:[%s2 + $0x38] sm:$0xff]
  %v571 = vld [vmem:[%s2 + $0x40] sm:$0xff]
  %v572 = vld [vmem:[%s2 + $0x48] sm:$0xff]
  %v573 = vld [vmem:[%s2 + $0x50] sm:$0xff]
  %v574 = vld [vmem:[%s2 + $0x58] sm:$0xff]
  %v575 = vld [vmem:[%s2 + $0x60] sm:$0xff]
  %v576 = vld [vmem:[%s2 + $0x68] sm:$0xff]
  %v577 = vld [vmem:[%s2 + $0x70] sm:$0xff]
  %v578 = vld [vmem:[%s2 + $0x78] sm:$0xff]
  %580 = vset.pattern.permute.xlu0 0
  %581 = vperm.xlu0 %580, %v563
  %v582 = vpop.permute.xlu0 %581
  %585 = vset.pattern.permute.xlu0 0
  %586 = vperm.xlu0 %585, %v564
  %v587 = vpop.permute.xlu0 %586
  %590 = vset.pattern.permute.xlu0 0
  %591 = vperm.xlu0 %590, %v565
  %v592 = vpop.permute.xlu0 %591
  %595 = vset.pattern.permute.xlu0 0
  %596 = vperm.xlu0 %595, %v566
  %v597 = vpop.permute.xlu0 %596
  %600 = vset.pattern.permute.xlu0 0
  %601 = vperm.xlu0 %600, %v567
  %v602 = vpop.permute.xlu0 %601
  %605 = vset.pattern.permute.xlu0 0
  %606 = vperm.xlu0 %605, %v568
  %v607 = vpop.permute.xlu0 %606
  %610 = vset.pattern.permute.xlu0 0
  %611 = vperm.xlu0 %610, %v569
  %v612 = vpop.permute.xlu0 %611
  %615 = vset.pattern.permute.xlu0 0
  %616 = vperm.xlu0 %615, %v570
  %v617 = vpop.permute.xlu0 %616
  %620 = vset.pattern.permute.xlu0 0
  %621 = vperm.xlu0 %620, %v571
  %v622 = vpop.permute.xlu0 %621
  %625 = vset.pattern.permute.xlu0 0
  %626 = vperm.xlu0 %625, %v572
  %v627 = vpop.permute.xlu0 %626
  %630 = vset.pattern.permute.xlu0 0
  %631 = vperm.xlu0 %630, %v573
  %v632 = vpop.permute.xlu0 %631
  %635 = vset.pattern.permute.xlu0 0
  %636 = vperm.xlu0 %635, %v574
  %v637 = vpop.permute.xlu0 %636
  %640 = vset.pattern.permute.xlu0 0
  %641 = vperm.xlu0 %640, %v575
  %v642 = vpop.permute.xlu0 %641
  %645 = vset.pattern.permute.xlu0 0
  %646 = vperm.xlu0 %645, %v576
  %v647 = vpop.permute.xlu0 %646
  %650 = vset.pattern.permute.xlu0 0
  %651 = vperm.xlu0 %650, %v577
  %v652 = vpop.permute.xlu0 %651
  %655 = vset.pattern.permute.xlu0 0
  %656 = vperm.xlu0 %655, %v578
  %v657 = vpop.permute.xlu0 %656
  %vm659 = vcmask 392192
  %v661 = vsel %vm659, %v502, 0
  %v664 = vsel %vm659, %v506, 0
  %v667 = vsel %vm659, %v510, 0
  %v670 = vsel %vm659, %v514, 0
  %v673 = vsel %vm659, %v518, 0
  %v676 = vsel %vm659, %v522, 0
  %v679 = vsel %vm659, %v526, 0
  %v682 = vsel %vm659, %v530, 0
  %v685 = vsel %vm659, %v534, 0
  %v688 = vsel %vm659, %v538, 0
  %v691 = vsel %vm659, %v542, 0
  %v694 = vsel %vm659, %v546, 0
  %v697 = vsel %vm659, %v550, 0
  %v700 = vsel %vm659, %v554, 0
  %v703 = vsel %vm659, %v558, 0
  %v706 = vsel %vm659, %v562, 0
  %708 = vmatpush.msra.mxu0 %v460
  %709 = vmatpush.msra.mxu0 %v459
  %710 = vmatpush.msra.mxu0 %v458
  %711 = vmatpush.msra.mxu0 %v457
  %712 = vmatpush.msra.mxu0 %v456
  %713 = vmatpush.msra.mxu0 %v455
  %714 = vmatpush.msra.mxu0 %v454
  %715 = vmatpush.msra.mxu0 %v453
  %716 = vmatpush.msra.mxu0 %v452
  %717 = vmatpush.msra.mxu0 %v451
  %718 = vmatpush.msra.mxu0 %v450
  %719 = vmatpush.msra.mxu0 %v449
  %720 = vmatpush.msra.mxu0 %v448
  %721 = vmatpush.msra.mxu0 %v447
  %722 = vmatpush.msra.mxu0 %v446
  %723 = vmatpush.msra.mxu0 %v445
  %724 = vmatmul.f32.gmra.mxu0 %v499
  %v725 = vpop.f32.mrf.mxu0
  %v726 = vadd.f32 %v582, %v725
  %727 = vmatmul.f32.gmra.mxu0 %v503
  %v728 = vpop.f32.mrf.mxu0
  %v729 = vadd.f32 %v587, %v728
  %730 = vmatmul.f32.gmra.mxu0 %v507
  %v731 = vpop.f32.mrf.mxu0
  %v732 = vadd.f32 %v592, %v731
  %733 = vmatmul.f32.gmra.mxu0 %v511
  %v734 = vpop.f32.mrf.mxu0
  %v735 = vadd.f32 %v597, %v734
  %736 = vmatmul.f32.gmra.mxu0 %v515
  %v737 = vpop.f32.mrf.mxu0
  %v738 = vadd.f32 %v602, %v737
  %739 = vmatmul.f32.gmra.mxu0 %v519
  %v740 = vpop.f32.mrf.mxu0
  %v741 = vadd.f32 %v607, %v740
  %742 = vmatmul.f32.gmra.mxu0 %v523
  %v743 = vpop.f32.mrf.mxu0
  %v744 = vadd.f32 %v612, %v743
  %745 = vmatmul.f32.gmra.mxu0 %v527
  %v746 = vpop.f32.mrf.mxu0
  %v747 = vadd.f32 %v617, %v746
  %748 = vmatmul.f32.gmra.mxu0 %v531
  %v749 = vpop.f32.mrf.mxu0
  %v750 = vadd.f32 %v622, %v749
  %751 = vmatmul.f32.gmra.mxu0 %v535
  %v752 = vpop.f32.mrf.mxu0
  %v753 = vadd.f32 %v627, %v752
  %754 = vmatmul.f32.gmra.mxu0 %v539
  %v755 = vpop.f32.mrf.mxu0
  %v756 = vadd.f32 %v632, %v755
  %757 = vmatmul.f32.gmra.mxu0 %v543
  %v758 = vpop.f32.mrf.mxu0
  %v759 = vadd.f32 %v637, %v758
  %760 = vmatmul.f32.gmra.mxu0 %v547
  %v761 = vpop.f32.mrf.mxu0
  %v762 = vadd.f32 %v642, %v761
  %763 = vmatmul.f32.gmra.mxu0 %v551
  %v764 = vpop.f32.mrf.mxu0
  %v765 = vadd.f32 %v647, %v764
  %766 = vmatmul.f32.gmra.mxu0 %v555
  %v767 = vpop.f32.mrf.mxu0
  %v768 = vadd.f32 %v652, %v767
  %769 = vmatmul.f32.gmra.mxu0 %v559
  %v770 = vpop.f32.mrf.mxu0
  %v771 = vadd.f32 %v657, %v770
  %772 = vdwg.mxu0
  %773 = vmatpush.msra.mxu0 %v476
  %774 = vmatpush.msra.mxu0 %v475
  %775 = vmatpush.msra.mxu0 %v474
  %776 = vmatpush.msra.mxu0 %v473
  %777 = vmatpush.msra.mxu0 %v472
  %778 = vmatpush.msra.mxu0 %v471
  %779 = vmatpush.msra.mxu0 %v470
  %780 = vmatpush.msra.mxu0 %v469
  %781 = vmatpush.msra.mxu0 %v468
  %782 = vmatpush.msra.mxu0 %v467
  %783 = vmatpush.msra.mxu0 %v466
  %784 = vmatpush.msra.mxu0 %v465
  %785 = vmatpush.msra.mxu0 %v464
  %786 = vmatpush.msra.mxu0 %v463
  %787 = vmatpush.msra.mxu0 %v462
  %788 = vmatpush.msra.mxu0 %v461
  %789 = vmatmul.f32.gmra.mxu0 %v500
  %v790 = vpop.f32.mrf.mxu0
  %v791 = vadd.f32 %v726, %v790
  %792 = vmatmul.f32.gmra.mxu0 %v504
  %v793 = vpop.f32.mrf.mxu0
  %v794 = vadd.f32 %v729, %v793
  %795 = vmatmul.f32.gmra.mxu0 %v508
  %v796 = vpop.f32.mrf.mxu0
  %v797 = vadd.f32 %v732, %v796
  %798 = vmatmul.f32.gmra.mxu0 %v512
  %v799 = vpop.f32.mrf.mxu0
  %v800 = vadd.f32 %v735, %v799
  %801 = vmatmul.f32.gmra.mxu0 %v516
  %v802 = vpop.f32.mrf.mxu0
  %v803 = vadd.f32 %v738, %v802
  %804 = vmatmul.f32.gmra.mxu0 %v520
  %v805 = vpop.f32.mrf.mxu0
  %v806 = vadd.f32 %v741, %v805
  %807 = vmatmul.f32.gmra.mxu0 %v524
  %v808 = vpop.f32.mrf.mxu0
  %v809 = vadd.f32 %v744, %v808
  %810 = vmatmul.f32.gmra.mxu0 %v528
  %v811 = vpop.f32.mrf.mxu0
  %v812 = vadd.f32 %v747, %v811
  %813 = vmatmul.f32.gmra.mxu0 %v532
  %v814 = vpop.f32.mrf.mxu0
  %v815 = vadd.f32 %v750, %v814
  %816 = vmatmul.f32.gmra.mxu0 %v536
  %v817 = vpop.f32.mrf.mxu0
  %v818 = vadd.f32 %v753, %v817
  %819 = vmatmul.f32.gmra.mxu0 %v540
  %v820 = vpop.f32.mrf.mxu0
  %v821 = vadd.f32 %v756, %v820
  %822 = vmatmul.f32.gmra.mxu0 %v544
  %v823 = vpop.f32.mrf.mxu0
  %v824 = vadd.f32 %v759, %v823
  %825 = vmatmul.f32.gmra.mxu0 %v548
  %v826 = vpop.f32.mrf.mxu0
  %v827 = vadd.f32 %v762, %v826
  %828 = vmatmul.f32.gmra.mxu0 %v552
  %v829 = vpop.f32.mrf.mxu0
  %v830 = vadd.f32 %v765, %v829
  %831 = vmatmul.f32.gmra.mxu0 %v556
  %v832 = vpop.f32.mrf.mxu0
  %v833 = vadd.f32 %v768, %v832
  %834 = vmatmul.f32.gmra.mxu0 %v560
  %v835 = vpop.f32.mrf.mxu0
  %v836 = vadd.f32 %v771, %v835
  %837 = vdwg.mxu0
  %838 = vmatpush.msra.mxu0 %v492
  %839 = vmatpush.msra.mxu0 %v491
  %840 = vmatpush.msra.mxu0 %v490
  %841 = vmatpush.msra.mxu0 %v489
  %842 = vmatpush.msra.mxu0 %v488
  %843 = vmatpush.msra.mxu0 %v487
  %844 = vmatpush.msra.mxu0 %v486
  %845 = vmatpush.msra.mxu0 %v485
  %846 = vmatpush.msra.mxu0 %v484
  %847 = vmatpush.msra.mxu0 %v483
  %848 = vmatpush.msra.mxu0 %v482
  %849 = vmatpush.msra.mxu0 %v481
  %850 = vmatpush.msra.mxu0 %v480
  %851 = vmatpush.msra.mxu0 %v479
  %852 = vmatpush.msra.mxu0 %v478
  %853 = vmatpush.msra.mxu0 %v477
  %854 = vmatmul.f32.gmra.mxu0 %v501
  %v855 = vpop.f32.mrf.mxu0
  %v856 = vadd.f32 %v791, %v855
  %857 = vmatmul.f32.gmra.mxu0 %v505
  %v858 = vpop.f32.mrf.mxu0
  %v859 = vadd.f32 %v794, %v858
  %860 = vmatmul.f32.gmra.mxu0 %v509
  %v861 = vpop.f32.mrf.mxu0
  %v862 = vadd.f32 %v797, %v861
  %863 = vmatmul.f32.gmra.mxu0 %v513
  %v864 = vpop.f32.mrf.mxu0
  %v865 = vadd.f32 %v800, %v864
  %866 = vmatmul.f32.gmra.mxu0 %v517
  %v867 = vpop.f32.mrf.mxu0
  %v868 = vadd.f32 %v803, %v867
  %869 = vmatmul.f32.gmra.mxu0 %v521
  %v870 = vpop.f32.mrf.mxu0
  %v871 = vadd.f32 %v806, %v870
  %872 = vmatmul.f32.gmra.mxu0 %v525
  %v873 = vpop.f32.mrf.mxu0
  %v874 = vadd.f32 %v809, %v873
  %875 = vmatmul.f32.gmra.mxu0 %v529
  %v876 = vpop.f32.mrf.mxu0
  %v877 = vadd.f32 %v812, %v876
  %878 = vmatmul.f32.gmra.mxu0 %v533
  %v879 = vpop.f32.mrf.mxu0
  %v880 = vadd.f32 %v815, %v879
  %881 = vmatmul.f32.gmra.mxu0 %v537
  %v882 = vpop.f32.mrf.mxu0
  %v883 = vadd.f32 %v818, %v882
  %884 = vmatmul.f32.gmra.mxu0 %v541
  %v885 = vpop.f32.mrf.mxu0
  %v886 = vadd.f32 %v821, %v885
  %887 = vmatmul.f32.gmra.mxu0 %v545
  %v888 = vpop.f32.mrf.mxu0
  %v889 = vadd.f32 %v824, %v888
  %890 = vmatmul.f32.gmra.mxu0 %v549
  %v891 = vpop.f32.mrf.mxu0
  %v892 = vadd.f32 %v827, %v891
  %893 = vmatmul.f32.gmra.mxu0 %v553
  %v894 = vpop.f32.mrf.mxu0
  %v895 = vadd.f32 %v830, %v894
  %896 = vmatmul.f32.gmra.mxu0 %v557
  %v897 = vpop.f32.mrf.mxu0
  %v898 = vadd.f32 %v833, %v897
  %899 = vmatmul.f32.gmra.mxu0 %v561
  %v900 = vpop.f32.mrf.mxu0
  %v901 = vadd.f32 %v836, %v900
  %902 = vdwg.mxu0
  %903 = vmatpush.msra.mxu0 0.0
  %904 = vmatpush.msra.mxu0 0.0
  %905 = vmatpush.msra.mxu0 0.0
  %906 = vmatpush.msra.mxu0 0.0
  %907 = vmatpush.msra.mxu0 0.0
  %908 = vmatpush.msra.mxu0 0.0
  %909 = vmatpush.msra.mxu0 0.0
  %910 = vmatpush.msra.mxu0 0.0
  %911 = vmatpush.msra.mxu0 0.0
  %912 = vmatpush.msra.mxu0 0.0
  %913 = vmatpush.msra.mxu0 %v498
  %914 = vmatpush.msra.mxu0 %v497
  %915 = vmatpush.msra.mxu0 %v496
  %916 = vmatpush.msra.mxu0 %v495
  %917 = vmatpush.msra.mxu0 %v494
  %918 = vmatpush.msra.mxu0 %v493
  %919 = vmatmul.f32.gmra.mxu0 %v661
  %v920 = vpop.f32.mrf.mxu0
  %v921 = vadd.f32 %v856, %v920
  %922 = vmatmul.f32.gmra.mxu0 %v664
  %v923 = vpop.f32.mrf.mxu0
  %v924 = vadd.f32 %v859, %v923
  %925 = vmatmul.f32.gmra.mxu0 %v667
  %v926 = vpop.f32.mrf.mxu0
  %v927 = vadd.f32 %v862, %v926
  %928 = vmatmul.f32.gmra.mxu0 %v670
  %v929 = vpop.f32.mrf.mxu0
  %v930 = vadd.f32 %v865, %v929
  %931 = vmatmul.f32.gmra.mxu0 %v673
  %v932 = vpop.f32.mrf.mxu0
  %v933 = vadd.f32 %v868, %v932
  %934 = vmatmul.f32.gmra.mxu0 %v676
  %v935 = vpop.f32.mrf.mxu0
  %v936 = vadd.f32 %v871, %v935
  %937 = vmatmul.f32.gmra.mxu0 %v679
  %v938 = vpop.f32.mrf.mxu0
  %v939 = vadd.f32 %v874, %v938
  %940 = vmatmul.f32.gmra.mxu0 %v682
  %v941 = vpop.f32.mrf.mxu0
  %v942 = vadd.f32 %v877, %v941
  %943 = vmatmul.f32.gmra.mxu0 %v685
  %v944 = vpop.f32.mrf.mxu0
  %v945 = vadd.f32 %v880, %v944
  %946 = vmatmul.f32.gmra.mxu0 %v688
  %v947 = vpop.f32.mrf.mxu0
  %v948 = vadd.f32 %v883, %v947
  %949 = vmatmul.f32.gmra.mxu0 %v691
  %v950 = vpop.f32.mrf.mxu0
  %v951 = vadd.f32 %v886, %v950
  %952 = vmatmul.f32.gmra.mxu0 %v694
  %v953 = vpop.f32.mrf.mxu0
  %v954 = vadd.f32 %v889, %v953
  %955 = vmatmul.f32.gmra.mxu0 %v697
  %v956 = vpop.f32.mrf.mxu0
  %v957 = vadd.f32 %v892, %v956
  %958 = vmatmul.f32.gmra.mxu0 %v700
  %v959 = vpop.f32.mrf.mxu0
  %v960 = vadd.f32 %v895, %v959
  %961 = vmatmul.f32.gmra.mxu0 %v703
  %v962 = vpop.f32.mrf.mxu0
  %v963 = vadd.f32 %v898, %v962
  %964 = vmatmul.f32.gmra.mxu0 %v706
  %v965 = vpop.f32.mrf.mxu0
  %v966 = vadd.f32 %v901, %v965
  %967 = vdwg.mxu0
  %vm968 = vcmask 261120
  %v969 = vsel %vm968, %v921, 0.0
  %970 = vadd.xlane.f32.xlu0 %v969
  %v971 = vpop.xlane.xlu0 %970
  %v972 = vsel %vm968, %v924, 0.0
  %973 = vadd.xlane.f32.xlu0 %v972
  %v974 = vpop.xlane.xlu0 %973
  %v975 = vsel %vm968, %v927, 0.0
  %976 = vadd.xlane.f32.xlu0 %v975
  %v977 = vpop.xlane.xlu0 %976
  %v978 = vsel %vm968, %v930, 0.0
  %979 = vadd.xlane.f32.xlu0 %v978
  %v980 = vpop.xlane.xlu0 %979
  %v981 = vsel %vm968, %v933, 0.0
  %982 = vadd.xlane.f32.xlu0 %v981
  %v983 = vpop.xlane.xlu0 %982
  %v984 = vsel %vm968, %v936, 0.0
  %985 = vadd.xlane.f32.xlu0 %v984
  %v986 = vpop.xlane.xlu0 %985
  %v987 = vsel %vm968, %v939, 0.0
  %988 = vadd.xlane.f32.xlu0 %v987
  %v989 = vpop.xlane.xlu0 %988
  %v990 = vsel %vm968, %v942, 0.0
  %991 = vadd.xlane.f32.xlu0 %v990
  %v992 = vpop.xlane.xlu0 %991
  %v993 = vsel %vm968, %v945, 0.0
  %994 = vadd.xlane.f32.xlu0 %v993
  %v995 = vpop.xlane.xlu0 %994
  %v996 = vsel %vm968, %v948, 0.0
  %997 = vadd.xlane.f32.xlu0 %v996
  %v998 = vpop.xlane.xlu0 %997
  %v999 = vsel %vm968, %v951, 0.0
  %1000 = vadd.xlane.f32.xlu0 %v999
  %v1001 = vpop.xlane.xlu0 %1000
  %v1002 = vsel %vm968, %v954, 0.0
  %1003 = vadd.xlane.f32.xlu0 %v1002
  %v1004 = vpop.xlane.xlu0 %1003
  %v1005 = vsel %vm968, %v957, 0.0
  %1006 = vadd.xlane.f32.xlu0 %v1005
  %v1007 = vpop.xlane.xlu0 %1006
  %v1008 = vsel %vm968, %v960, 0.0
  %1009 = vadd.xlane.f32.xlu0 %v1008
  %v1010 = vpop.xlane.xlu0 %1009
  %v1011 = vsel %vm968, %v963, 0.0
  %1012 = vadd.xlane.f32.xlu0 %v1011
  %v1013 = vpop.xlane.xlu0 %1012
  %v1014 = vsel %vm968, %v966, 0.0
  %1015 = vadd.xlane.f32.xlu0 %v1014
  %v1016 = vpop.xlane.xlu0 %1015
  %v1017 = vmul.f32 %v921, %v921
  %v1018 = vmul.f32 %v924, %v924
  %v1019 = vmul.f32 %v927, %v927
  %v1020 = vmul.f32 %v930, %v930
  %v1021 = vmul.f32 %v933, %v933
  %v1022 = vmul.f32 %v936, %v936
  %v1023 = vmul.f32 %v939, %v939
  %v1024 = vmul.f32 %v942, %v942
  %v1025 = vmul.f32 %v945, %v945
  %v1026 = vmul.f32 %v948, %v948
  %v1027 = vmul.f32 %v951, %v951
  %v1028 = vmul.f32 %v954, %v954
  %v1029 = vmul.f32 %v957, %v957
  %v1030 = vmul.f32 %v960, %v960
  %v1031 = vmul.f32 %v963, %v963
  %v1032 = vmul.f32 %v966, %v966
  %v1033 = vsel %vm968, %v1017, 0.0
  %1034 = vadd.xlane.f32.xlu0 %v1033
  %v1035 = vpop.xlane.xlu0 %1034
  %v1036 = vsel %vm968, %v1018, 0.0
  %1037 = vadd.xlane.f32.xlu0 %v1036
  %v1038 = vpop.xlane.xlu0 %1037
  %v1039 = vsel %vm968, %v1019, 0.0
  %1040 = vadd.xlane.f32.xlu0 %v1039
  %v1041 = vpop.xlane.xlu0 %1040
  %v1042 = vsel %vm968, %v1020, 0.0
  %1043 = vadd.xlane.f32.xlu0 %v1042
  %v1044 = vpop.xlane.xlu0 %1043
  %v1045 = vsel %vm968, %v1021, 0.0
  %1046 = vadd.xlane.f32.xlu0 %v1045
  %v1047 = vpop.xlane.xlu0 %1046
  %v1048 = vsel %vm968, %v1022, 0.0
  %1049 = vadd.xlane.f32.xlu0 %v1048
  %v1050 = vpop.xlane.xlu0 %1049
  %v1051 = vsel %vm968, %v1023, 0.0
  %1052 = vadd.xlane.f32.xlu0 %v1051
  %v1053 = vpop.xlane.xlu0 %1052
  %v1054 = vsel %vm968, %v1024, 0.0
  %1055 = vadd.xlane.f32.xlu0 %v1054
  %v1056 = vpop.xlane.xlu0 %1055
  %v1057 = vsel %vm968, %v1025, 0.0
  %1058 = vadd.xlane.f32.xlu0 %v1057
  %v1059 = vpop.xlane.xlu0 %1058
  %v1060 = vsel %vm968, %v1026, 0.0
  %1061 = vadd.xlane.f32.xlu0 %v1060
  %v1062 = vpop.xlane.xlu0 %1061
  %v1063 = vsel %vm968, %v1027, 0.0
  %1064 = vadd.xlane.f32.xlu0 %v1063
  %v1065 = vpop.xlane.xlu0 %1064
  %v1066 = vsel %vm968, %v1028, 0.0
  %1067 = vadd.xlane.f32.xlu0 %v1066
  %v1068 = vpop.xlane.xlu0 %1067
  %v1069 = vsel %vm968, %v1029, 0.0
  %1070 = vadd.xlane.f32.xlu0 %v1069
  %v1071 = vpop.xlane.xlu0 %1070
  %v1072 = vsel %vm968, %v1030, 0.0
  %1073 = vadd.xlane.f32.xlu0 %v1072
  %v1074 = vpop.xlane.xlu0 %1073
  %v1075 = vsel %vm968, %v1031, 0.0
  %1076 = vadd.xlane.f32.xlu0 %v1075
  %v1077 = vpop.xlane.xlu0 %1076
  %v1078 = vsel %vm968, %v1032, 0.0
  %1079 = vadd.xlane.f32.xlu0 %v1078
  %v1080 = vpop.xlane.xlu0 %1079
  %vm1081 = vcmask 7168
  %v1082 = vsel %vm1081, %v971, %v1035
  %v1083 = vsel %vm1081, %v974, %v1038
  %v1084 = vsel %vm1081, %v977, %v1041
  %v1085 = vsel %vm1081, %v980, %v1044
  %v1086 = vsel %vm1081, %v983, %v1047
  %v1087 = vsel %vm1081, %v986, %v1050
  %v1088 = vsel %vm1081, %v989, %v1053
  %v1089 = vsel %vm1081, %v992, %v1056
  %v1090 = vsel %vm1081, %v995, %v1059
  %v1091 = vsel %vm1081, %v998, %v1062
  %v1092 = vsel %vm1081, %v1001, %v1065
  %v1093 = vsel %vm1081, %v1004, %v1068
  %v1094 = vsel %vm1081, %v1007, %v1071
  %v1095 = vsel %vm1081, %v1010, %v1074
  %v1096 = vsel %vm1081, %v1013, %v1077
  %v1097 = vsel %vm1081, %v1016, %v1080
  %v1098 = vld [vmem:[%s5] sm:$0xff]
  %v1099 = vld [vmem:[%s5 + $0x8] sm:$0xff]
  %v1100 = vld [vmem:[%s5 + $0x10] sm:$0xff]
  %v1101 = vld [vmem:[%s5 + $0x18] sm:$0xff]
  %v1102 = vld [vmem:[%s5 + $0x20] sm:$0xff]
  %v1103 = vld [vmem:[%s5 + $0x28] sm:$0xff]
  %v1104 = vld [vmem:[%s5 + $0x30] sm:$0xff]
  %v1105 = vld [vmem:[%s5 + $0x38] sm:$0xff]
  %v1106 = vld [vmem:[%s5 + $0x40] sm:$0xff]
  %v1107 = vld [vmem:[%s5 + $0x48] sm:$0xff]
  %v1108 = vld [vmem:[%s5 + $0x50] sm:$0xff]
  %v1109 = vld [vmem:[%s5 + $0x58] sm:$0xff]
  %v1110 = vld [vmem:[%s5 + $0x60] sm:$0xff]
  %v1111 = vld [vmem:[%s5 + $0x68] sm:$0xff]
  %v1112 = vld [vmem:[%s5 + $0x70] sm:$0xff]
  %v1113 = vld [vmem:[%s5 + $0x78] sm:$0xff]
  %1114 = vmatpush.msra.mxu0 %v1097
  %1115 = vmatpush.msra.mxu0 %v1096
  %1116 = vmatpush.msra.mxu0 %v1095
  %1117 = vmatpush.msra.mxu0 %v1094
  %1118 = vmatpush.msra.mxu0 %v1093
  %1119 = vmatpush.msra.mxu0 %v1092
  %1120 = vmatpush.msra.mxu0 %v1091
  %1121 = vmatpush.msra.mxu0 %v1090
  %1122 = vmatpush.msra.mxu0 %v1089
  %1123 = vmatpush.msra.mxu0 %v1088
  %1124 = vmatpush.msra.mxu0 %v1087
  %1125 = vmatpush.msra.mxu0 %v1086
  %1126 = vmatpush.msra.mxu0 %v1085
  %1127 = vmatpush.msra.mxu0 %v1084
  %1128 = vmatpush.msra.mxu0 %v1083
  %1129 = vmatpush.msra.mxu0 %v1082
  %1130 = vmatmul.f32.gmra.mxu0 %v1098
  %v1131 = vpop.f32.mrf.mxu0
  %v1132 = vadd.f32 0.0, %v1131
  %1133 = vmatmul.f32.gmra.mxu0 %v1099
  %v1134 = vpop.f32.mrf.mxu0
  %v1135 = vadd.f32 0.0, %v1134
  %1136 = vmatmul.f32.gmra.mxu0 %v1100
  %v1137 = vpop.f32.mrf.mxu0
  %v1138 = vadd.f32 0.0, %v1137
  %1139 = vmatmul.f32.gmra.mxu0 %v1101
  %v1140 = vpop.f32.mrf.mxu0
  %v1141 = vadd.f32 0.0, %v1140
  %1142 = vmatmul.f32.gmra.mxu0 %v1102
  %v1143 = vpop.f32.mrf.mxu0
  %v1144 = vadd.f32 0.0, %v1143
  %1145 = vmatmul.f32.gmra.mxu0 %v1103
  %v1146 = vpop.f32.mrf.mxu0
  %v1147 = vadd.f32 0.0, %v1146
  %1148 = vmatmul.f32.gmra.mxu0 %v1104
  %v1149 = vpop.f32.mrf.mxu0
  %v1150 = vadd.f32 0.0, %v1149
  %1151 = vmatmul.f32.gmra.mxu0 %v1105
  %v1152 = vpop.f32.mrf.mxu0
  %v1153 = vadd.f32 0.0, %v1152
  %1154 = vmatmul.f32.gmra.mxu0 %v1106
  %v1155 = vpop.f32.mrf.mxu0
  %v1156 = vadd.f32 0.0, %v1155
  %1157 = vmatmul.f32.gmra.mxu0 %v1107
  %v1158 = vpop.f32.mrf.mxu0
  %v1159 = vadd.f32 0.0, %v1158
  %1160 = vmatmul.f32.gmra.mxu0 %v1108
  %v1161 = vpop.f32.mrf.mxu0
  %v1162 = vadd.f32 0.0, %v1161
  %1163 = vmatmul.f32.gmra.mxu0 %v1109
  %v1164 = vpop.f32.mrf.mxu0
  %v1165 = vadd.f32 0.0, %v1164
  %1166 = vmatmul.f32.gmra.mxu0 %v1110
  %v1167 = vpop.f32.mrf.mxu0
  %v1168 = vadd.f32 0.0, %v1167
  %1169 = vmatmul.f32.gmra.mxu0 %v1111
  %v1170 = vpop.f32.mrf.mxu0
  %v1171 = vadd.f32 0.0, %v1170
  %1172 = vmatmul.f32.gmra.mxu0 %v1112
  %v1173 = vpop.f32.mrf.mxu0
  %v1174 = vadd.f32 0.0, %v1173
  %1175 = vmatmul.f32.gmra.mxu0 %v1113
  %v1176 = vpop.f32.mrf.mxu0
  %v1177 = vadd.f32 0.0, %v1176
  %1178 = vdwg.mxu0
  %v1179 = vmul.f32 %v1132, %v1132
  %v1180 = vmul.f32 %v1135, %v1135
  %v1181 = vmul.f32 %v1138, %v1138
  %v1182 = vmul.f32 %v1141, %v1141
  %v1183 = vmul.f32 %v1144, %v1144
  %v1184 = vmul.f32 %v1147, %v1147
  %v1185 = vmul.f32 %v1150, %v1150
  %v1186 = vmul.f32 %v1153, %v1153
  %v1187 = vmul.f32 %v1156, %v1156
  %v1188 = vmul.f32 %v1159, %v1159
  %v1189 = vmul.f32 %v1162, %v1162
  %v1190 = vmul.f32 %v1165, %v1165
  %v1191 = vmul.f32 %v1168, %v1168
  %v1192 = vmul.f32 %v1171, %v1171
  %v1193 = vmul.f32 %v1174, %v1174
  %v1194 = vmul.f32 %v1177, %v1177
  %1211 = vrot.lane.b32.xlu0 %v1179, 1
  %v1212 = vpop.permute.xlu0 %1211
  %1213 = vrot.lane.b32.xlu0 %v1180, 1
  %v1214 = vpop.permute.xlu0 %1213
  %1215 = vrot.lane.b32.xlu0 %v1181, 1
  %v1216 = vpop.permute.xlu0 %1215
  %1217 = vrot.lane.b32.xlu0 %v1182, 1
  %v1218 = vpop.permute.xlu0 %1217
  %1219 = vrot.lane.b32.xlu0 %v1183, 1
  %v1220 = vpop.permute.xlu0 %1219
  %1221 = vrot.lane.b32.xlu0 %v1184, 1
  %v1222 = vpop.permute.xlu0 %1221
  %1223 = vrot.lane.b32.xlu0 %v1185, 1
  %v1224 = vpop.permute.xlu0 %1223
  %1225 = vrot.lane.b32.xlu0 %v1186, 1
  %v1226 = vpop.permute.xlu0 %1225
  %1227 = vrot.lane.b32.xlu0 %v1187, 1
  %v1228 = vpop.permute.xlu0 %1227
  %1229 = vrot.lane.b32.xlu0 %v1188, 1
  %v1230 = vpop.permute.xlu0 %1229
  %1231 = vrot.lane.b32.xlu0 %v1189, 1
  %v1232 = vpop.permute.xlu0 %1231
  %1233 = vrot.lane.b32.xlu0 %v1190, 1
  %v1234 = vpop.permute.xlu0 %1233
  %1235 = vrot.lane.b32.xlu0 %v1191, 1
  %v1236 = vpop.permute.xlu0 %1235
  %1237 = vrot.lane.b32.xlu0 %v1192, 1
  %v1238 = vpop.permute.xlu0 %1237
  %1239 = vrot.lane.b32.xlu0 %v1193, 1
  %v1240 = vpop.permute.xlu0 %1239
  %1241 = vrot.lane.b32.xlu0 %v1194, 1
  %v1242 = vpop.permute.xlu0 %1241
  %v1259 = vsub.f32 %v1132, %v1212
  %v1260 = vsub.f32 %v1135, %v1214
  %v1261 = vsub.f32 %v1138, %v1216
  %v1262 = vsub.f32 %v1141, %v1218
  %v1263 = vsub.f32 %v1144, %v1220
  %v1264 = vsub.f32 %v1147, %v1222
  %v1265 = vsub.f32 %v1150, %v1224
  %v1266 = vsub.f32 %v1153, %v1226
  %v1267 = vsub.f32 %v1156, %v1228
  %v1268 = vsub.f32 %v1159, %v1230
  %v1269 = vsub.f32 %v1162, %v1232
  %v1270 = vsub.f32 %v1165, %v1234
  %v1271 = vsub.f32 %v1168, %v1236
  %v1272 = vsub.f32 %v1171, %v1238
  %v1273 = vsub.f32 %v1174, %v1240
  %v1274 = vsub.f32 %v1177, %v1242
  %v1275 = vmax.f32 %v1259, 0.0
  %v1276 = vmax.f32 %v1260, 0.0
  %v1277 = vmax.f32 %v1261, 0.0
  %v1278 = vmax.f32 %v1262, 0.0
  %v1279 = vmax.f32 %v1263, 0.0
  %v1280 = vmax.f32 %v1264, 0.0
  %v1281 = vmax.f32 %v1265, 0.0
  %v1282 = vmax.f32 %v1266, 0.0
  %v1283 = vmax.f32 %v1267, 0.0
  %v1284 = vmax.f32 %v1268, 0.0
  %v1285 = vmax.f32 %v1269, 0.0
  %v1286 = vmax.f32 %v1270, 0.0
  %v1287 = vmax.f32 %v1271, 0.0
  %v1288 = vmax.f32 %v1272, 0.0
  %v1289 = vmax.f32 %v1273, 0.0
  %v1290 = vmax.f32 %v1274, 0.0
  %v1291 = vld [vmem:[%s3] sm:$0xff]
  %v1292 = vld [vmem:[%s3 + $0x8] sm:$0xff]
  %v1293 = vld [vmem:[%s3 + $0x10] sm:$0xff]
  %v1294 = vld [vmem:[%s3 + $0x18] sm:$0xff]
  %v1295 = vld [vmem:[%s3 + $0x20] sm:$0xff]
  %v1296 = vld [vmem:[%s3 + $0x28] sm:$0xff]
  %v1297 = vld [vmem:[%s3 + $0x30] sm:$0xff]
  %v1298 = vld [vmem:[%s3 + $0x38] sm:$0xff]
  %v1299 = vld [vmem:[%s3 + $0x40] sm:$0xff]
  %v1300 = vld [vmem:[%s3 + $0x48] sm:$0xff]
  %v1301 = vld [vmem:[%s3 + $0x50] sm:$0xff]
  %v1302 = vld [vmem:[%s3 + $0x58] sm:$0xff]
  %v1303 = vld [vmem:[%s3 + $0x60] sm:$0xff]
  %v1304 = vld [vmem:[%s3 + $0x68] sm:$0xff]
  %v1305 = vld [vmem:[%s3 + $0x70] sm:$0xff]
  %v1306 = vld [vmem:[%s3 + $0x78] sm:$0xff]
  %v1307 = vadd.f32 %v1275, 1e-05
  %v1308 = vadd.f32 %v1276, 1e-05
  %v1309 = vadd.f32 %v1277, 1e-05
  %v1310 = vadd.f32 %v1278, 1e-05
  %v1311 = vadd.f32 %v1279, 1e-05
  %v1312 = vadd.f32 %v1280, 1e-05
  %v1313 = vadd.f32 %v1281, 1e-05
  %v1314 = vadd.f32 %v1282, 1e-05
  %v1315 = vadd.f32 %v1283, 1e-05
  %v1316 = vadd.f32 %v1284, 1e-05
  %v1317 = vadd.f32 %v1285, 1e-05
  %v1318 = vadd.f32 %v1286, 1e-05
  %v1319 = vadd.f32 %v1287, 1e-05
  %v1320 = vadd.f32 %v1288, 1e-05
  %v1321 = vadd.f32 %v1289, 1e-05
  %v1322 = vadd.f32 %v1290, 1e-05
  %v1323 = vrsqrt.pop %v1307
  %v1324 = vmul.f32 %v1323, %v1307
  %v1325 = vmul.f32 %v1324, %v1323
  %v1326 = vmul.f32 0.5, %v1325
  %v1327 = vsub.f32 1.5, %v1326
  %v1328 = vmul.f32 %v1323, %v1327
  %vm1329 = vweird.f32 %v1307
  %vm1330 = vweird.f32 %v1323
  %vm1331 = vmor %vm1329, %vm1330
  %v1332 = vsel %vm1331, %v1323, %v1328
  %v1333 = vrsqrt.pop %v1308
  %v1334 = vmul.f32 %v1333, %v1308
  %v1335 = vmul.f32 %v1334, %v1333
  %v1336 = vmul.f32 0.5, %v1335
  %v1337 = vsub.f32 1.5, %v1336
  %v1338 = vmul.f32 %v1333, %v1337
  %vm1339 = vweird.f32 %v1308
  %vm1340 = vweird.f32 %v1333
  %vm1341 = vmor %vm1339, %vm1340
  %v1342 = vsel %vm1341, %v1333, %v1338
  %v1343 = vrsqrt.pop %v1309
  %v1344 = vmul.f32 %v1343, %v1309
  %v1345 = vmul.f32 %v1344, %v1343
  %v1346 = vmul.f32 0.5, %v1345
  %v1347 = vsub.f32 1.5, %v1346
  %v1348 = vmul.f32 %v1343, %v1347
  %vm1349 = vweird.f32 %v1309
  %vm1350 = vweird.f32 %v1343
  %vm1351 = vmor %vm1349, %vm1350
  %v1352 = vsel %vm1351, %v1343, %v1348
  %v1353 = vrsqrt.pop %v1310
  %v1354 = vmul.f32 %v1353, %v1310
  %v1355 = vmul.f32 %v1354, %v1353
  %v1356 = vmul.f32 0.5, %v1355
  %v1357 = vsub.f32 1.5, %v1356
  %v1358 = vmul.f32 %v1353, %v1357
  %vm1359 = vweird.f32 %v1310
  %vm1360 = vweird.f32 %v1353
  %vm1361 = vmor %vm1359, %vm1360
  %v1362 = vsel %vm1361, %v1353, %v1358
  %v1363 = vrsqrt.pop %v1311
  %v1364 = vmul.f32 %v1363, %v1311
  %v1365 = vmul.f32 %v1364, %v1363
  %v1366 = vmul.f32 0.5, %v1365
  %v1367 = vsub.f32 1.5, %v1366
  %v1368 = vmul.f32 %v1363, %v1367
  %vm1369 = vweird.f32 %v1311
  %vm1370 = vweird.f32 %v1363
  %vm1371 = vmor %vm1369, %vm1370
  %v1372 = vsel %vm1371, %v1363, %v1368
  %v1373 = vrsqrt.pop %v1312
  %v1374 = vmul.f32 %v1373, %v1312
  %v1375 = vmul.f32 %v1374, %v1373
  %v1376 = vmul.f32 0.5, %v1375
  %v1377 = vsub.f32 1.5, %v1376
  %v1378 = vmul.f32 %v1373, %v1377
  %vm1379 = vweird.f32 %v1312
  %vm1380 = vweird.f32 %v1373
  %vm1381 = vmor %vm1379, %vm1380
  %v1382 = vsel %vm1381, %v1373, %v1378
  %v1383 = vrsqrt.pop %v1313
  %v1384 = vmul.f32 %v1383, %v1313
  %v1385 = vmul.f32 %v1384, %v1383
  %v1386 = vmul.f32 0.5, %v1385
  %v1387 = vsub.f32 1.5, %v1386
  %v1388 = vmul.f32 %v1383, %v1387
  %vm1389 = vweird.f32 %v1313
  %vm1390 = vweird.f32 %v1383
  %vm1391 = vmor %vm1389, %vm1390
  %v1392 = vsel %vm1391, %v1383, %v1388
  %v1393 = vrsqrt.pop %v1314
  %v1394 = vmul.f32 %v1393, %v1314
  %v1395 = vmul.f32 %v1394, %v1393
  %v1396 = vmul.f32 0.5, %v1395
  %v1397 = vsub.f32 1.5, %v1396
  %v1398 = vmul.f32 %v1393, %v1397
  %vm1399 = vweird.f32 %v1314
  %vm1400 = vweird.f32 %v1393
  %vm1401 = vmor %vm1399, %vm1400
  %v1402 = vsel %vm1401, %v1393, %v1398
  %v1403 = vrsqrt.pop %v1315
  %v1404 = vmul.f32 %v1403, %v1315
  %v1405 = vmul.f32 %v1404, %v1403
  %v1406 = vmul.f32 0.5, %v1405
  %v1407 = vsub.f32 1.5, %v1406
  %v1408 = vmul.f32 %v1403, %v1407
  %vm1409 = vweird.f32 %v1315
  %vm1410 = vweird.f32 %v1403
  %vm1411 = vmor %vm1409, %vm1410
  %v1412 = vsel %vm1411, %v1403, %v1408
  %v1413 = vrsqrt.pop %v1316
  %v1414 = vmul.f32 %v1413, %v1316
  %v1415 = vmul.f32 %v1414, %v1413
  %v1416 = vmul.f32 0.5, %v1415
  %v1417 = vsub.f32 1.5, %v1416
  %v1418 = vmul.f32 %v1413, %v1417
  %vm1419 = vweird.f32 %v1316
  %vm1420 = vweird.f32 %v1413
  %vm1421 = vmor %vm1419, %vm1420
  %v1422 = vsel %vm1421, %v1413, %v1418
  %v1423 = vrsqrt.pop %v1317
  %v1424 = vmul.f32 %v1423, %v1317
  %v1425 = vmul.f32 %v1424, %v1423
  %v1426 = vmul.f32 0.5, %v1425
  %v1427 = vsub.f32 1.5, %v1426
  %v1428 = vmul.f32 %v1423, %v1427
  %vm1429 = vweird.f32 %v1317
  %vm1430 = vweird.f32 %v1423
  %vm1431 = vmor %vm1429, %vm1430
  %v1432 = vsel %vm1431, %v1423, %v1428
  %v1433 = vrsqrt.pop %v1318
  %v1434 = vmul.f32 %v1433, %v1318
  %v1435 = vmul.f32 %v1434, %v1433
  %v1436 = vmul.f32 0.5, %v1435
  %v1437 = vsub.f32 1.5, %v1436
  %v1438 = vmul.f32 %v1433, %v1437
  %vm1439 = vweird.f32 %v1318
  %vm1440 = vweird.f32 %v1433
  %vm1441 = vmor %vm1439, %vm1440
  %v1442 = vsel %vm1441, %v1433, %v1438
  %v1443 = vrsqrt.pop %v1319
  %v1444 = vmul.f32 %v1443, %v1319
  %v1445 = vmul.f32 %v1444, %v1443
  %v1446 = vmul.f32 0.5, %v1445
  %v1447 = vsub.f32 1.5, %v1446
  %v1448 = vmul.f32 %v1443, %v1447
  %vm1449 = vweird.f32 %v1319
  %vm1450 = vweird.f32 %v1443
  %vm1451 = vmor %vm1449, %vm1450
  %v1452 = vsel %vm1451, %v1443, %v1448
  %v1453 = vrsqrt.pop %v1320
  %v1454 = vmul.f32 %v1453, %v1320
  %v1455 = vmul.f32 %v1454, %v1453
  %v1456 = vmul.f32 0.5, %v1455
  %v1457 = vsub.f32 1.5, %v1456
  %v1458 = vmul.f32 %v1453, %v1457
  %vm1459 = vweird.f32 %v1320
  %vm1460 = vweird.f32 %v1453
  %vm1461 = vmor %vm1459, %vm1460
  %v1462 = vsel %vm1461, %v1453, %v1458
  %v1463 = vrsqrt.pop %v1321
  %v1464 = vmul.f32 %v1463, %v1321
  %v1465 = vmul.f32 %v1464, %v1463
  %v1466 = vmul.f32 0.5, %v1465
  %v1467 = vsub.f32 1.5, %v1466
  %v1468 = vmul.f32 %v1463, %v1467
  %vm1469 = vweird.f32 %v1321
  %vm1470 = vweird.f32 %v1463
  %vm1471 = vmor %vm1469, %vm1470
  %v1472 = vsel %vm1471, %v1463, %v1468
  %v1473 = vrsqrt.pop %v1322
  %v1474 = vmul.f32 %v1473, %v1322
  %v1475 = vmul.f32 %v1474, %v1473
  %v1476 = vmul.f32 0.5, %v1475
  %v1477 = vsub.f32 1.5, %v1476
  %v1478 = vmul.f32 %v1473, %v1477
  %vm1479 = vweird.f32 %v1322
  %vm1480 = vweird.f32 %v1473
  %vm1481 = vmor %vm1479, %vm1480
  %v1482 = vsel %vm1481, %v1473, %v1478
  %1499 = vrot.lane.b32.xlu0 %v1332, 127
  %v1500 = vpop.permute.xlu0 %1499
  %1501 = vrot.lane.b32.xlu0 %v1342, 127
  %v1502 = vpop.permute.xlu0 %1501
  %1503 = vrot.lane.b32.xlu0 %v1352, 127
  %v1504 = vpop.permute.xlu0 %1503
  %1505 = vrot.lane.b32.xlu0 %v1362, 127
  %v1506 = vpop.permute.xlu0 %1505
  %1507 = vrot.lane.b32.xlu0 %v1372, 127
  %v1508 = vpop.permute.xlu0 %1507
  %1509 = vrot.lane.b32.xlu0 %v1382, 127
  %v1510 = vpop.permute.xlu0 %1509
  %1511 = vrot.lane.b32.xlu0 %v1392, 127
  %v1512 = vpop.permute.xlu0 %1511
  %1513 = vrot.lane.b32.xlu0 %v1402, 127
  %v1514 = vpop.permute.xlu0 %1513
  %1515 = vrot.lane.b32.xlu0 %v1412, 127
  %v1516 = vpop.permute.xlu0 %1515
  %1517 = vrot.lane.b32.xlu0 %v1422, 127
  %v1518 = vpop.permute.xlu0 %1517
  %1519 = vrot.lane.b32.xlu0 %v1432, 127
  %v1520 = vpop.permute.xlu0 %1519
  %1521 = vrot.lane.b32.xlu0 %v1442, 127
  %v1522 = vpop.permute.xlu0 %1521
  %1523 = vrot.lane.b32.xlu0 %v1452, 127
  %v1524 = vpop.permute.xlu0 %1523
  %1525 = vrot.lane.b32.xlu0 %v1462, 127
  %v1526 = vpop.permute.xlu0 %1525
  %1527 = vrot.lane.b32.xlu0 %v1472, 127
  %v1528 = vpop.permute.xlu0 %1527
  %1529 = vrot.lane.b32.xlu0 %v1482, 127
  %v1530 = vpop.permute.xlu0 %1529
  %v1547 = vmul.f32 %v1291, %v1500
  %v1548 = vmul.f32 %v1292, %v1502
  %v1549 = vmul.f32 %v1293, %v1504
  %v1550 = vmul.f32 %v1294, %v1506
  %v1551 = vmul.f32 %v1295, %v1508
  %v1552 = vmul.f32 %v1296, %v1510
  %v1553 = vmul.f32 %v1297, %v1512
  %v1554 = vmul.f32 %v1298, %v1514
  %v1555 = vmul.f32 %v1299, %v1516
  %v1556 = vmul.f32 %v1300, %v1518
  %v1557 = vmul.f32 %v1301, %v1520
  %v1558 = vmul.f32 %v1302, %v1522
  %v1559 = vmul.f32 %v1303, %v1524
  %v1560 = vmul.f32 %v1304, %v1526
  %v1561 = vmul.f32 %v1305, %v1528
  %v1562 = vmul.f32 %v1306, %v1530
  %v1563 = vld [vmem:[%s4] sm:$0xff]
  %v1564 = vld [vmem:[%s4 + $0x8] sm:$0xff]
  %v1565 = vld [vmem:[%s4 + $0x10] sm:$0xff]
  %v1566 = vld [vmem:[%s4 + $0x18] sm:$0xff]
  %v1567 = vld [vmem:[%s4 + $0x20] sm:$0xff]
  %v1568 = vld [vmem:[%s4 + $0x28] sm:$0xff]
  %v1569 = vld [vmem:[%s4 + $0x30] sm:$0xff]
  %v1570 = vld [vmem:[%s4 + $0x38] sm:$0xff]
  %v1571 = vld [vmem:[%s4 + $0x40] sm:$0xff]
  %v1572 = vld [vmem:[%s4 + $0x48] sm:$0xff]
  %v1573 = vld [vmem:[%s4 + $0x50] sm:$0xff]
  %v1574 = vld [vmem:[%s4 + $0x58] sm:$0xff]
  %v1575 = vld [vmem:[%s4 + $0x60] sm:$0xff]
  %v1576 = vld [vmem:[%s4 + $0x68] sm:$0xff]
  %v1577 = vld [vmem:[%s4 + $0x70] sm:$0xff]
  %v1578 = vld [vmem:[%s4 + $0x78] sm:$0xff]
  %v1579 = vmul.f32 %v1132, %v1547
  %v1580 = vmul.f32 %v1135, %v1548
  %v1581 = vmul.f32 %v1138, %v1549
  %v1582 = vmul.f32 %v1141, %v1550
  %v1583 = vmul.f32 %v1144, %v1551
  %v1584 = vmul.f32 %v1147, %v1552
  %v1585 = vmul.f32 %v1150, %v1553
  %v1586 = vmul.f32 %v1153, %v1554
  %v1587 = vmul.f32 %v1156, %v1555
  %v1588 = vmul.f32 %v1159, %v1556
  %v1589 = vmul.f32 %v1162, %v1557
  %v1590 = vmul.f32 %v1165, %v1558
  %v1591 = vmul.f32 %v1168, %v1559
  %v1592 = vmul.f32 %v1171, %v1560
  %v1593 = vmul.f32 %v1174, %v1561
  %v1594 = vmul.f32 %v1177, %v1562
  %v1595 = vsub.f32 %v1563, %v1579
  %v1596 = vsub.f32 %v1564, %v1580
  %v1597 = vsub.f32 %v1565, %v1581
  %v1598 = vsub.f32 %v1566, %v1582
  %v1599 = vsub.f32 %v1567, %v1583
  %v1600 = vsub.f32 %v1568, %v1584
  %v1601 = vsub.f32 %v1569, %v1585
  %v1602 = vsub.f32 %v1570, %v1586
  %v1603 = vsub.f32 %v1571, %v1587
  %v1604 = vsub.f32 %v1572, %v1588
  %v1605 = vsub.f32 %v1573, %v1589
  %v1606 = vsub.f32 %v1574, %v1590
  %v1607 = vsub.f32 %v1575, %v1591
  %v1608 = vsub.f32 %v1576, %v1592
  %v1609 = vsub.f32 %v1577, %v1593
  %v1610 = vsub.f32 %v1578, %v1594
  %1612 = vset.pattern.permute.xlu0 0
  %1613 = vperm.xlu0 %1612, %v1547
  %v1614 = vpop.permute.xlu0 %1613
  %1617 = vset.pattern.permute.xlu0 0
  %1618 = vperm.xlu0 %1617, %v1548
  %v1619 = vpop.permute.xlu0 %1618
  %1622 = vset.pattern.permute.xlu0 0
  %1623 = vperm.xlu0 %1622, %v1549
  %v1624 = vpop.permute.xlu0 %1623
  %1627 = vset.pattern.permute.xlu0 0
  %1628 = vperm.xlu0 %1627, %v1550
  %v1629 = vpop.permute.xlu0 %1628
  %1632 = vset.pattern.permute.xlu0 0
  %1633 = vperm.xlu0 %1632, %v1551
  %v1634 = vpop.permute.xlu0 %1633
  %1637 = vset.pattern.permute.xlu0 0
  %1638 = vperm.xlu0 %1637, %v1552
  %v1639 = vpop.permute.xlu0 %1638
  %1642 = vset.pattern.permute.xlu0 0
  %1643 = vperm.xlu0 %1642, %v1553
  %v1644 = vpop.permute.xlu0 %1643
  %1647 = vset.pattern.permute.xlu0 0
  %1648 = vperm.xlu0 %1647, %v1554
  %v1649 = vpop.permute.xlu0 %1648
  %1652 = vset.pattern.permute.xlu0 0
  %1653 = vperm.xlu0 %1652, %v1555
  %v1654 = vpop.permute.xlu0 %1653
  %1657 = vset.pattern.permute.xlu0 0
  %1658 = vperm.xlu0 %1657, %v1556
  %v1659 = vpop.permute.xlu0 %1658
  %1662 = vset.pattern.permute.xlu0 0
  %1663 = vperm.xlu0 %1662, %v1557
  %v1664 = vpop.permute.xlu0 %1663
  %1667 = vset.pattern.permute.xlu0 0
  %1668 = vperm.xlu0 %1667, %v1558
  %v1669 = vpop.permute.xlu0 %1668
  %1672 = vset.pattern.permute.xlu0 0
  %1673 = vperm.xlu0 %1672, %v1559
  %v1674 = vpop.permute.xlu0 %1673
  %1677 = vset.pattern.permute.xlu0 0
  %1678 = vperm.xlu0 %1677, %v1560
  %v1679 = vpop.permute.xlu0 %1678
  %1682 = vset.pattern.permute.xlu0 0
  %1683 = vperm.xlu0 %1682, %v1561
  %v1684 = vpop.permute.xlu0 %1683
  %1687 = vset.pattern.permute.xlu0 0
  %1688 = vperm.xlu0 %1687, %v1562
  %v1689 = vpop.permute.xlu0 %1688
  %v1691 = vmul.f32 %v921, %v1614
  %v1692 = vmul.f32 %v924, %v1619
  %v1693 = vmul.f32 %v927, %v1624
  %v1694 = vmul.f32 %v930, %v1629
  %v1695 = vmul.f32 %v933, %v1634
  %v1696 = vmul.f32 %v936, %v1639
  %v1697 = vmul.f32 %v939, %v1644
  %v1698 = vmul.f32 %v942, %v1649
  %v1699 = vmul.f32 %v945, %v1654
  %v1700 = vmul.f32 %v948, %v1659
  %v1701 = vmul.f32 %v951, %v1664
  %v1702 = vmul.f32 %v954, %v1669
  %v1703 = vmul.f32 %v957, %v1674
  %v1704 = vmul.f32 %v960, %v1679
  %v1705 = vmul.f32 %v963, %v1684
  %v1706 = vmul.f32 %v966, %v1689
  %1708 = vset.pattern.permute.xlu0 0
  %1709 = vperm.xlu0 %1708, %v1595
  %v1710 = vpop.permute.xlu0 %1709
  %1713 = vset.pattern.permute.xlu0 0
  %1714 = vperm.xlu0 %1713, %v1596
  %v1715 = vpop.permute.xlu0 %1714
  %1718 = vset.pattern.permute.xlu0 0
  %1719 = vperm.xlu0 %1718, %v1597
  %v1720 = vpop.permute.xlu0 %1719
  %1723 = vset.pattern.permute.xlu0 0
  %1724 = vperm.xlu0 %1723, %v1598
  %v1725 = vpop.permute.xlu0 %1724
  %1728 = vset.pattern.permute.xlu0 0
  %1729 = vperm.xlu0 %1728, %v1599
  %v1730 = vpop.permute.xlu0 %1729
  %1733 = vset.pattern.permute.xlu0 0
  %1734 = vperm.xlu0 %1733, %v1600
  %v1735 = vpop.permute.xlu0 %1734
  %1738 = vset.pattern.permute.xlu0 0
  %1739 = vperm.xlu0 %1738, %v1601
  %v1740 = vpop.permute.xlu0 %1739
  %1743 = vset.pattern.permute.xlu0 0
  %1744 = vperm.xlu0 %1743, %v1602
  %v1745 = vpop.permute.xlu0 %1744
  %1748 = vset.pattern.permute.xlu0 0
  %1749 = vperm.xlu0 %1748, %v1603
  %v1750 = vpop.permute.xlu0 %1749
  %1753 = vset.pattern.permute.xlu0 0
  %1754 = vperm.xlu0 %1753, %v1604
  %v1755 = vpop.permute.xlu0 %1754
  %1758 = vset.pattern.permute.xlu0 0
  %1759 = vperm.xlu0 %1758, %v1605
  %v1760 = vpop.permute.xlu0 %1759
  %1763 = vset.pattern.permute.xlu0 0
  %1764 = vperm.xlu0 %1763, %v1606
  %v1765 = vpop.permute.xlu0 %1764
  %1768 = vset.pattern.permute.xlu0 0
  %1769 = vperm.xlu0 %1768, %v1607
  %v1770 = vpop.permute.xlu0 %1769
  %1773 = vset.pattern.permute.xlu0 0
  %1774 = vperm.xlu0 %1773, %v1608
  %v1775 = vpop.permute.xlu0 %1774
  %1778 = vset.pattern.permute.xlu0 0
  %1779 = vperm.xlu0 %1778, %v1609
  %v1780 = vpop.permute.xlu0 %1779
  %1783 = vset.pattern.permute.xlu0 0
  %1784 = vperm.xlu0 %1783, %v1610
  %v1785 = vpop.permute.xlu0 %1784
  %v1787 = vadd.f32 %v1691, %v1710
  %v1788 = vadd.f32 %v1692, %v1715
  %v1789 = vadd.f32 %v1693, %v1720
  %v1790 = vadd.f32 %v1694, %v1725
  %v1791 = vadd.f32 %v1695, %v1730
  %v1792 = vadd.f32 %v1696, %v1735
  %v1793 = vadd.f32 %v1697, %v1740
  %v1794 = vadd.f32 %v1698, %v1745
  %v1795 = vadd.f32 %v1699, %v1750
  %v1796 = vadd.f32 %v1700, %v1755
  %v1797 = vadd.f32 %v1701, %v1760
  %v1798 = vadd.f32 %v1702, %v1765
  %v1799 = vadd.f32 %v1703, %v1770
  %v1800 = vadd.f32 %v1704, %v1775
  %v1801 = vadd.f32 %v1705, %v1780
  %v1802 = vadd.f32 %v1706, %v1785
  %v1803 = vmax.f32 %v1787, 0.0
  %v1804 = vmax.f32 %v1788, 0.0
  %v1805 = vmax.f32 %v1789, 0.0
  %v1806 = vmax.f32 %v1790, 0.0
  %v1807 = vmax.f32 %v1791, 0.0
  %v1808 = vmax.f32 %v1792, 0.0
  %v1809 = vmax.f32 %v1793, 0.0
  %v1810 = vmax.f32 %v1794, 0.0
  %v1811 = vmax.f32 %v1795, 0.0
  %v1812 = vmax.f32 %v1796, 0.0
  %v1813 = vmax.f32 %v1797, 0.0
  %v1814 = vmax.f32 %v1798, 0.0
  %v1815 = vmax.f32 %v1799, 0.0
  %v1816 = vmax.f32 %v1800, 0.0
  %v1817 = vmax.f32 %v1801, 0.0
  %v1818 = vmax.f32 %v1802, 0.0
  %v1819 = vld [vmem:[%s6] sm:$0xff]
  %v1820 = vld [vmem:[%s6 + $0x8] sm:$0xff]
  %v1821 = vld [vmem:[%s6 + $0x10] sm:$0xff]
  %v1822 = vld [vmem:[%s6 + $0x18] sm:$0xff]
  %v1824 = vsel %vm968, %v1803, 0
  %v1827 = vsel %vm968, %v1804, 0
  %v1830 = vsel %vm968, %v1805, 0
  %v1833 = vsel %vm968, %v1806, 0
  %v1836 = vsel %vm968, %v1807, 0
  %v1839 = vsel %vm968, %v1808, 0
  %v1842 = vsel %vm968, %v1809, 0
  %v1845 = vsel %vm968, %v1810, 0
  %v1848 = vsel %vm968, %v1811, 0
  %v1851 = vsel %vm968, %v1812, 0
  %v1854 = vsel %vm968, %v1813, 0
  %v1857 = vsel %vm968, %v1814, 0
  %v1860 = vsel %vm968, %v1815, 0
  %v1863 = vsel %vm968, %v1816, 0
  %v1866 = vsel %vm968, %v1817, 0
  %v1869 = vsel %vm968, %v1818, 0
  %1871 = vmatpush.msra.mxu0 0.0
  %1872 = vmatpush.msra.mxu0 0.0
  %1873 = vmatpush.msra.mxu0 0.0
  %1874 = vmatpush.msra.mxu0 0.0
  %1875 = vmatpush.msra.mxu0 0.0
  %1876 = vmatpush.msra.mxu0 0.0
  %1877 = vmatpush.msra.mxu0 0.0
  %1878 = vmatpush.msra.mxu0 0.0
  %1879 = vmatpush.msra.mxu0 0.0
  %1880 = vmatpush.msra.mxu0 0.0
  %1881 = vmatpush.msra.mxu0 0.0
  %1882 = vmatpush.msra.mxu0 0.0
  %1883 = vmatpush.msra.mxu0 %v1822
  %1884 = vmatpush.msra.mxu0 %v1821
  %1885 = vmatpush.msra.mxu0 %v1820
  %1886 = vmatpush.msra.mxu0 %v1819
  %1887 = vmatmul.f32.gmra.mxu0 %v1824
  %v1888 = vpop.f32.mrf.mxu0
  %v1889 = vadd.f32 0.0, %v1888
  %1890 = vmatmul.f32.gmra.mxu0 %v1827
  %v1891 = vpop.f32.mrf.mxu0
  %v1892 = vadd.f32 0.0, %v1891
  %1893 = vmatmul.f32.gmra.mxu0 %v1830
  %v1894 = vpop.f32.mrf.mxu0
  %v1895 = vadd.f32 0.0, %v1894
  %1896 = vmatmul.f32.gmra.mxu0 %v1833
  %v1897 = vpop.f32.mrf.mxu0
  %v1898 = vadd.f32 0.0, %v1897
  %1899 = vmatmul.f32.gmra.mxu0 %v1836
  %v1900 = vpop.f32.mrf.mxu0
  %v1901 = vadd.f32 0.0, %v1900
  %1902 = vmatmul.f32.gmra.mxu0 %v1839
  %v1903 = vpop.f32.mrf.mxu0
  %v1904 = vadd.f32 0.0, %v1903
  %1905 = vmatmul.f32.gmra.mxu0 %v1842
  %v1906 = vpop.f32.mrf.mxu0
  %v1907 = vadd.f32 0.0, %v1906
  %1908 = vmatmul.f32.gmra.mxu0 %v1845
  %v1909 = vpop.f32.mrf.mxu0
  %v1910 = vadd.f32 0.0, %v1909
  %1911 = vmatmul.f32.gmra.mxu0 %v1848
  %v1912 = vpop.f32.mrf.mxu0
  %v1913 = vadd.f32 0.0, %v1912
  %1914 = vmatmul.f32.gmra.mxu0 %v1851
  %v1915 = vpop.f32.mrf.mxu0
  %v1916 = vadd.f32 0.0, %v1915
  %1917 = vmatmul.f32.gmra.mxu0 %v1854
  %v1918 = vpop.f32.mrf.mxu0
  %v1919 = vadd.f32 0.0, %v1918
  %1920 = vmatmul.f32.gmra.mxu0 %v1857
  %v1921 = vpop.f32.mrf.mxu0
  %v1922 = vadd.f32 0.0, %v1921
  %1923 = vmatmul.f32.gmra.mxu0 %v1860
  %v1924 = vpop.f32.mrf.mxu0
  %v1925 = vadd.f32 0.0, %v1924
  %1926 = vmatmul.f32.gmra.mxu0 %v1863
  %v1927 = vpop.f32.mrf.mxu0
  %v1928 = vadd.f32 0.0, %v1927
  %1929 = vmatmul.f32.gmra.mxu0 %v1866
  %v1930 = vpop.f32.mrf.mxu0
  %v1931 = vadd.f32 0.0, %v1930
  %1932 = vmatmul.f32.gmra.mxu0 %v1869
  %v1933 = vpop.f32.mrf.mxu0
  %v1934 = vadd.f32 0.0, %v1933
  %1935 = vdwg.mxu0
  %v1936 = vld [vmem:[%s7] sm:$0xff]
  %v1937 = vld [vmem:[%s7 + $0x8] sm:$0xff]
  %v1938 = vld [vmem:[%s7 + $0x10] sm:$0xff]
  %v1939 = vld [vmem:[%s7 + $0x18] sm:$0xff]
  %v1940 = vld [vmem:[%s7 + $0x20] sm:$0xff]
  %v1941 = vld [vmem:[%s7 + $0x28] sm:$0xff]
  %v1942 = vld [vmem:[%s7 + $0x30] sm:$0xff]
  %v1943 = vld [vmem:[%s7 + $0x38] sm:$0xff]
  %v1944 = vld [vmem:[%s7 + $0x40] sm:$0xff]
  %v1945 = vld [vmem:[%s7 + $0x48] sm:$0xff]
  %v1946 = vld [vmem:[%s7 + $0x50] sm:$0xff]
  %v1947 = vld [vmem:[%s7 + $0x58] sm:$0xff]
  %v1948 = vld [vmem:[%s7 + $0x60] sm:$0xff]
  %v1949 = vld [vmem:[%s7 + $0x68] sm:$0xff]
  %v1950 = vld [vmem:[%s7 + $0x70] sm:$0xff]
  %v1951 = vld [vmem:[%s7 + $0x78] sm:$0xff]
  %v1952 = vld [vmem:[%s7 + $0x80] sm:$0xff]
  %v1953 = vld [vmem:[%s7 + $0x88] sm:$0xff]
  %v1954 = vld [vmem:[%s7 + $0x90] sm:$0xff]
  %v1955 = vld [vmem:[%s7 + $0x98] sm:$0xff]
  %v1956 = vld [vmem:[%s7 + $0xa0] sm:$0xff]
  %v1957 = vld [vmem:[%s7 + $0xa8] sm:$0xff]
  %v1958 = vld [vmem:[%s7 + $0xb0] sm:$0xff]
  %v1959 = vld [vmem:[%s7 + $0xb8] sm:$0xff]
  %v1960 = vld [vmem:[%s7 + $0xc0] sm:$0xff]
  %v1961 = vld [vmem:[%s7 + $0xc8] sm:$0xff]
  %v1962 = vld [vmem:[%s7 + $0xd0] sm:$0xff]
  %v1963 = vld [vmem:[%s7 + $0xd8] sm:$0xff]
  %v1964 = vld [vmem:[%s7 + $0xe0] sm:$0xff]
  %v1965 = vld [vmem:[%s7 + $0xe8] sm:$0xff]
  %v1966 = vld [vmem:[%s7 + $0xf0] sm:$0xff]
  %v1967 = vld [vmem:[%s7 + $0xf8] sm:$0xff]
  %1968 = vmatpush.msra.mxu0 %v1934
  %1969 = vmatpush.msra.mxu0 %v1931
  %1970 = vmatpush.msra.mxu0 %v1928
  %1971 = vmatpush.msra.mxu0 %v1925
  %1972 = vmatpush.msra.mxu0 %v1922
  %1973 = vmatpush.msra.mxu0 %v1919
  %1974 = vmatpush.msra.mxu0 %v1916
  %1975 = vmatpush.msra.mxu0 %v1913
  %1976 = vmatpush.msra.mxu0 %v1910
  %1977 = vmatpush.msra.mxu0 %v1907
  %1978 = vmatpush.msra.mxu0 %v1904
  %1979 = vmatpush.msra.mxu0 %v1901
  %1980 = vmatpush.msra.mxu0 %v1898
  %1981 = vmatpush.msra.mxu0 %v1895
  %1982 = vmatpush.msra.mxu0 %v1892
  %1983 = vmatpush.msra.mxu0 %v1889
  %1984 = vmatmul.f32.gmra.mxu0 %v1936
  %v1985 = vpop.f32.mrf.mxu0
  %v1986 = vadd.f32 0.0, %v1985
  %1987 = vmatmul.f32.gmra.mxu0 %v1937
  %v1988 = vpop.f32.mrf.mxu0
  %v1989 = vadd.f32 0.0, %v1988
  %1990 = vmatmul.f32.gmra.mxu0 %v1938
  %v1991 = vpop.f32.mrf.mxu0
  %v1992 = vadd.f32 0.0, %v1991
  %1993 = vmatmul.f32.gmra.mxu0 %v1939
  %v1994 = vpop.f32.mrf.mxu0
  %v1995 = vadd.f32 0.0, %v1994
  %1996 = vmatmul.f32.gmra.mxu0 %v1940
  %v1997 = vpop.f32.mrf.mxu0
  %v1998 = vadd.f32 0.0, %v1997
  %1999 = vmatmul.f32.gmra.mxu0 %v1941
  %v2000 = vpop.f32.mrf.mxu0
  %v2001 = vadd.f32 0.0, %v2000
  %2002 = vmatmul.f32.gmra.mxu0 %v1942
  %v2003 = vpop.f32.mrf.mxu0
  %v2004 = vadd.f32 0.0, %v2003
  %2005 = vmatmul.f32.gmra.mxu0 %v1943
  %v2006 = vpop.f32.mrf.mxu0
  %v2007 = vadd.f32 0.0, %v2006
  %2008 = vmatmul.f32.gmra.mxu0 %v1944
  %v2009 = vpop.f32.mrf.mxu0
  %v2010 = vadd.f32 0.0, %v2009
  %2011 = vmatmul.f32.gmra.mxu0 %v1945
  %v2012 = vpop.f32.mrf.mxu0
  %v2013 = vadd.f32 0.0, %v2012
  %2014 = vmatmul.f32.gmra.mxu0 %v1946
  %v2015 = vpop.f32.mrf.mxu0
  %v2016 = vadd.f32 0.0, %v2015
  %2017 = vmatmul.f32.gmra.mxu0 %v1947
  %v2018 = vpop.f32.mrf.mxu0
  %v2019 = vadd.f32 0.0, %v2018
  %2020 = vmatmul.f32.gmra.mxu0 %v1948
  %v2021 = vpop.f32.mrf.mxu0
  %v2022 = vadd.f32 0.0, %v2021
  %2023 = vmatmul.f32.gmra.mxu0 %v1949
  %v2024 = vpop.f32.mrf.mxu0
  %v2025 = vadd.f32 0.0, %v2024
  %2026 = vmatmul.f32.gmra.mxu0 %v1950
  %v2027 = vpop.f32.mrf.mxu0
  %v2028 = vadd.f32 0.0, %v2027
  %2029 = vmatmul.f32.gmra.mxu0 %v1951
  %v2030 = vpop.f32.mrf.mxu0
  %v2031 = vadd.f32 0.0, %v2030
  %2032 = vmatmul.f32.gmra.mxu0 %v1952
  %v2033 = vpop.f32.mrf.mxu0
  %v2034 = vadd.f32 0.0, %v2033
  %2035 = vmatmul.f32.gmra.mxu0 %v1953
  %v2036 = vpop.f32.mrf.mxu0
  %v2037 = vadd.f32 0.0, %v2036
  %2038 = vmatmul.f32.gmra.mxu0 %v1954
  %v2039 = vpop.f32.mrf.mxu0
  %v2040 = vadd.f32 0.0, %v2039
  %2041 = vmatmul.f32.gmra.mxu0 %v1955
  %v2042 = vpop.f32.mrf.mxu0
  %v2043 = vadd.f32 0.0, %v2042
  %2044 = vmatmul.f32.gmra.mxu0 %v1956
  %v2045 = vpop.f32.mrf.mxu0
  %v2046 = vadd.f32 0.0, %v2045
  %2047 = vmatmul.f32.gmra.mxu0 %v1957
  %v2048 = vpop.f32.mrf.mxu0
  %v2049 = vadd.f32 0.0, %v2048
  %2050 = vmatmul.f32.gmra.mxu0 %v1958
  %v2051 = vpop.f32.mrf.mxu0
  %v2052 = vadd.f32 0.0, %v2051
  %2053 = vmatmul.f32.gmra.mxu0 %v1959
  %v2054 = vpop.f32.mrf.mxu0
  %v2055 = vadd.f32 0.0, %v2054
  %2056 = vmatmul.f32.gmra.mxu0 %v1960
  %v2057 = vpop.f32.mrf.mxu0
  %v2058 = vadd.f32 0.0, %v2057
  %2059 = vmatmul.f32.gmra.mxu0 %v1961
  %v2060 = vpop.f32.mrf.mxu0
  %v2061 = vadd.f32 0.0, %v2060
  %2062 = vmatmul.f32.gmra.mxu0 %v1962
  %v2063 = vpop.f32.mrf.mxu0
  %v2064 = vadd.f32 0.0, %v2063
  %2065 = vmatmul.f32.gmra.mxu0 %v1963
  %v2066 = vpop.f32.mrf.mxu0
  %v2067 = vadd.f32 0.0, %v2066
  %2068 = vmatmul.f32.gmra.mxu0 %v1964
  %v2069 = vpop.f32.mrf.mxu0
  %v2070 = vadd.f32 0.0, %v2069
  %2071 = vmatmul.f32.gmra.mxu0 %v1965
  %v2072 = vpop.f32.mrf.mxu0
  %v2073 = vadd.f32 0.0, %v2072
  %2074 = vmatmul.f32.gmra.mxu0 %v1966
  %v2075 = vpop.f32.mrf.mxu0
  %v2076 = vadd.f32 0.0, %v2075
  %2077 = vmatmul.f32.gmra.mxu0 %v1967
  %v2078 = vpop.f32.mrf.mxu0
  %v2079 = vadd.f32 0.0, %v2078
  %2080 = vdwg.mxu0
  %vm2081 = vcmask 523264
  %2082 = vst.msk [vmem:[%s8] sm:$0xff] %vm2081, %v1986
  %2083 = vst.msk [vmem:[%s8 + $0x8] sm:$0xff] %vm2081, %v1989
  %2084 = vst.msk [vmem:[%s8 + $0x10] sm:$0xff] %vm2081, %v1992
  %2085 = vst.msk [vmem:[%s8 + $0x18] sm:$0xff] %vm2081, %v1995
  %2086 = vst.msk [vmem:[%s8 + $0x20] sm:$0xff] %vm2081, %v1998
  %2087 = vst.msk [vmem:[%s8 + $0x28] sm:$0xff] %vm2081, %v2001
  %2088 = vst.msk [vmem:[%s8 + $0x30] sm:$0xff] %vm2081, %v2004
  %2089 = vst.msk [vmem:[%s8 + $0x38] sm:$0xff] %vm2081, %v2007
  %2090 = vst.msk [vmem:[%s8 + $0x40] sm:$0xff] %vm2081, %v2010
  %2091 = vst.msk [vmem:[%s8 + $0x48] sm:$0xff] %vm2081, %v2013
  %2092 = vst.msk [vmem:[%s8 + $0x50] sm:$0xff] %vm2081, %v2016
  %2093 = vst.msk [vmem:[%s8 + $0x58] sm:$0xff] %vm2081, %v2019
  %2094 = vst.msk [vmem:[%s8 + $0x60] sm:$0xff] %vm2081, %v2022
  %2095 = vst.msk [vmem:[%s8 + $0x68] sm:$0xff] %vm2081, %v2025
  %2096 = vst.msk [vmem:[%s8 + $0x70] sm:$0xff] %vm2081, %v2028
  %2097 = vst.msk [vmem:[%s8 + $0x78] sm:$0xff] %vm2081, %v2031
  %2098 = vst.msk [vmem:[%s8 + $0x80] sm:$0xff] %vm2081, %v2034
  %2099 = vst.msk [vmem:[%s8 + $0x88] sm:$0xff] %vm2081, %v2037
  %2100 = vst.msk [vmem:[%s8 + $0x90] sm:$0xff] %vm2081, %v2040
  %2101 = vst.msk [vmem:[%s8 + $0x98] sm:$0xff] %vm2081, %v2043
  %2102 = vst.msk [vmem:[%s8 + $0xa0] sm:$0xff] %vm2081, %v2046
  %2103 = vst.msk [vmem:[%s8 + $0xa8] sm:$0xff] %vm2081, %v2049
  %2104 = vst.msk [vmem:[%s8 + $0xb0] sm:$0xff] %vm2081, %v2052
  %2105 = vst.msk [vmem:[%s8 + $0xb8] sm:$0xff] %vm2081, %v2055
  %2106 = vst.msk [vmem:[%s8 + $0xc0] sm:$0xff] %vm2081, %v2058
  %2107 = vst.msk [vmem:[%s8 + $0xc8] sm:$0xff] %vm2081, %v2061
  %2108 = vst.msk [vmem:[%s8 + $0xd0] sm:$0xff] %vm2081, %v2064
  %2109 = vst.msk [vmem:[%s8 + $0xd8] sm:$0xff] %vm2081, %v2067
  %2110 = vst.msk [vmem:[%s8 + $0xe0] sm:$0xff] %vm2081, %v2070
  %2111 = vst.msk [vmem:[%s8 + $0xe8] sm:$0xff] %vm2081, %v2073
  %2112 = vst.msk [vmem:[%s8 + $0xf0] sm:$0xff] %vm2081, %v2076
  %2113 = vst.msk [vmem:[%s8 + $0xf8] sm:$0xff] %vm2081, %v2079
  // Predicated region
  $region34: #{dip_forward.5} parent=0 // pred_check
    _
  $region35: #{dip_forward.5} parent=0 // pred_check_branch
    %2115 = sbr.rel (0) target = $region37
  $region36: #{dip_forward.5} parent=0 // pred_region
    _
  $region37: #{dip_forward.5} parent=0 // pred_fallthru
    _
  // Predicated region
  $region38: #{dip_forward.5} parent=0 // pred_check
    _
  $region39: #{dip_forward.5} parent=0 // pred_check_branch
    %2117 = sbr.rel (0) target = $region41
  $region40: #{dip_forward.5} parent=0 // pred_region
    _
  $region41: #{dip_forward.5} parent=0 // pred_fallthru
    _

// kernel: dip_forward.6
$region0: #{dip_forward.6}
  #allocation0 [shape = 'u32[]', space=smem, size = 0x4, offset = 0x4, fixed_abs, tag = 'smem constant byte address 0x4 - core index']
  #allocation1 [shape = 'u32[72,128]{1,0:T(1,128)}', space=vmem, size = 0x9000, scoped, tag = 'internal scratch']
  %s0 = inlined_call_operand.vmem [shape: f32[2,272,34], index: 0, kind: input, shape index: {}]
  %s1 = inlined_call_operand.vmem [shape: f32[128,816], index: 1, kind: input, shape index: {}]
  %s2 = inlined_call_operand.vmem [shape: f32[128,1], index: 2, kind: input, shape index: {}]
  %s3 = inlined_call_operand.vmem [shape: f32[128,1], index: 3, kind: input, shape index: {}]
  %s4 = inlined_call_operand.vmem [shape: f32[128,1], index: 4, kind: input, shape index: {}]
  %s5 = inlined_call_operand.vmem [shape: f32[128,128], index: 5, kind: input, shape index: {}]
  %s6 = inlined_call_operand.vmem [shape: f32[64,128], index: 6, kind: input, shape index: {}]
  %s7 = inlined_call_operand.vmem [shape: f32[256,128], index: 7, kind: input, shape index: {}]
  %s8 = inlined_call_operand.vmem [shape: f32[256,128], index: 8, kind: output, shape index: {}]
  %s9 = sld [smem:[#allocation0]]
  $region42: #{dip_forward.6} parent=0
    _
  %s11 = ssub.s32 1, %s9
  %s12 = scalar_select 0, %s11, %s9
  // Predicated region
  $region2: #{dip_forward.6} parent=0 // pred_check
    _
  $region3: #{dip_forward.6} parent=0 // pred_check_branch
    %14 = sbr.rel (0) target = $region5
  $region4: #{dip_forward.6} parent=0 // pred_region
    _
  $region5: #{dip_forward.6} parent=0 // pred_fallthru
    _
  // Predicated region
  $region6: #{dip_forward.6} parent=0 // pred_check
    _
  $region7: #{dip_forward.6} parent=0 // pred_check_branch
    %16 = sbr.rel (0) target = $region9
  $region8: #{dip_forward.6} parent=0 // pred_region
    _
  $region9: #{dip_forward.6} parent=0 // pred_fallthru
    _
  // Predicated region
  $region10: #{dip_forward.6} parent=0 // pred_check
    _
  $region11: #{dip_forward.6} parent=0 // pred_check_branch
    %18 = sbr.rel (0) target = $region13
  $region12: #{dip_forward.6} parent=0 // pred_region
    _
  $region13: #{dip_forward.6} parent=0 // pred_fallthru
    _
  // Predicated region
  $region14: #{dip_forward.6} parent=0 // pred_check
    _
  $region15: #{dip_forward.6} parent=0 // pred_check_branch
    %20 = sbr.rel (0) target = $region17
  $region16: #{dip_forward.6} parent=0 // pred_region
    _
  $region17: #{dip_forward.6} parent=0 // pred_fallthru
    _
  // Predicated region
  $region18: #{dip_forward.6} parent=0 // pred_check
    _
  $region19: #{dip_forward.6} parent=0 // pred_check_branch
    %22 = sbr.rel (0) target = $region21
  $region20: #{dip_forward.6} parent=0 // pred_region
    _
  $region21: #{dip_forward.6} parent=0 // pred_fallthru
    _
  // Predicated region
  $region22: #{dip_forward.6} parent=0 // pred_check
    _
  $region23: #{dip_forward.6} parent=0 // pred_check_branch
    %24 = sbr.rel (0) target = $region25
  $region24: #{dip_forward.6} parent=0 // pred_region
    _
  $region25: #{dip_forward.6} parent=0 // pred_fallthru
    _
  // Predicated region
  $region26: #{dip_forward.6} parent=0 // pred_check
    _
  $region27: #{dip_forward.6} parent=0 // pred_check_branch
    %26 = sbr.rel (0) target = $region29
  $region28: #{dip_forward.6} parent=0 // pred_region
    _
  $region29: #{dip_forward.6} parent=0 // pred_fallthru
    _
  // Predicated region
  $region30: #{dip_forward.6} parent=0 // pred_check
    _
  $region31: #{dip_forward.6} parent=0 // pred_check_branch
    %28 = sbr.rel (0) target = $region33
  $region32: #{dip_forward.6} parent=0 // pred_region
    _
  $region33: #{dip_forward.6} parent=0 // pred_fallthru
    _
  %v29 = vld [vmem:[%s0] sm:$0xff]
  %v30 = vld [vmem:[%s0 + $0x8] sm:$0xff]
  %v31 = vld [vmem:[%s0 + $0x10] sm:$0xff]
  %v32 = vld [vmem:[%s0 + $0x18] sm:$0xff]
  %v33 = vld [vmem:[%s0 + $0x20] sm:$0xff]
  %v34 = vld [vmem:[%s0 + $0x28] sm:$0xff]
  %v35 = vld [vmem:[%s0 + $0x30] sm:$0xff]
  %v36 = vld [vmem:[%s0 + $0x38] sm:$0xff]
  %v37 = vld [vmem:[%s0 + $0x40] sm:$0xff]
  %v38 = vld [vmem:[%s0 + $0x48] sm:$0xff]
  %v39 = vld [vmem:[%s0 + $0x50] sm:$0xff]
  %v40 = vld [vmem:[%s0 + $0x58] sm:$0xff]
  %v41 = vld [vmem:[%s0 + $0x60] sm:$0xff]
  %v42 = vld [vmem:[%s0 + $0x68] sm:$0xff]
  %v43 = vld [vmem:[%s0 + $0x70] sm:$0xff]
  %v44 = vld [vmem:[%s0 + $0x78] sm:$0xff]
  %v45 = vld [vmem:[%s0 + $0x80] sm:$0xff]
  %v46 = vld [vmem:[%s0 + $0x88] sm:$0xff]
  %v47 = vld [vmem:[%s0 + $0x90] sm:$0xff]
  %v48 = vld [vmem:[%s0 + $0x98] sm:$0xff]
  %v49 = vld [vmem:[%s0 + $0xa0] sm:$0xff]
  %v50 = vld [vmem:[%s0 + $0xa8] sm:$0xff]
  %v51 = vld [vmem:[%s0 + $0xb0] sm:$0xff]
  %v52 = vld [vmem:[%s0 + $0xb8] sm:$0xff]
  %v53 = vld [vmem:[%s0 + $0xc0] sm:$0xff]
  %v54 = vld [vmem:[%s0 + $0xc8] sm:$0xff]
  %v55 = vld [vmem:[%s0 + $0xd0] sm:$0xff]
  %v56 = vld [vmem:[%s0 + $0xd8] sm:$0xff]
  %v57 = vld [vmem:[%s0 + $0xe0] sm:$0xff]
  %v58 = vld [vmem:[%s0 + $0xe8] sm:$0xff]
  %v59 = vld [vmem:[%s0 + $0xf0] sm:$0xff]
  %v60 = vld [vmem:[%s0 + $0xf8] sm:$0xff]
  %v61 = vld [vmem:[%s0 + $0x100] sm:$0xff]
  %v62 = vld [vmem:[%s0 + $0x108] sm:$0xff]
  %97 = vrot.lane.b32.xlu0 %v29, 127
  %v98 = vpop.permute.xlu0 %97
  %99 = vrot.lane.b32.xlu0 %v30, 127
  %v100 = vpop.permute.xlu0 %99
  %101 = vrot.lane.b32.xlu0 %v31, 127
  %v102 = vpop.permute.xlu0 %101
  %103 = vrot.lane.b32.xlu0 %v32, 127
  %v104 = vpop.permute.xlu0 %103
  %105 = vrot.lane.b32.xlu0 %v33, 127
  %v106 = vpop.permute.xlu0 %105
  %107 = vrot.lane.b32.xlu0 %v34, 127
  %v108 = vpop.permute.xlu0 %107
  %109 = vrot.lane.b32.xlu0 %v35, 127
  %v110 = vpop.permute.xlu0 %109
  %111 = vrot.lane.b32.xlu0 %v36, 127
  %v112 = vpop.permute.xlu0 %111
  %113 = vrot.lane.b32.xlu0 %v37, 127
  %v114 = vpop.permute.xlu0 %113
  %115 = vrot.lane.b32.xlu0 %v38, 127
  %v116 = vpop.permute.xlu0 %115
  %117 = vrot.lane.b32.xlu0 %v39, 127
  %v118 = vpop.permute.xlu0 %117
  %119 = vrot.lane.b32.xlu0 %v40, 127
  %v120 = vpop.permute.xlu0 %119
  %121 = vrot.lane.b32.xlu0 %v41, 127
  %v122 = vpop.permute.xlu0 %121
  %123 = vrot.lane.b32.xlu0 %v42, 127
  %v124 = vpop.permute.xlu0 %123
  %125 = vrot.lane.b32.xlu0 %v43, 127
  %v126 = vpop.permute.xlu0 %125
  %127 = vrot.lane.b32.xlu0 %v44, 127
  %v128 = vpop.permute.xlu0 %127
  %129 = vrot.lane.b32.xlu0 %v45, 127
  %v130 = vpop.permute.xlu0 %129
  %131 = vrot.lane.b32.xlu0 %v46, 127
  %v132 = vpop.permute.xlu0 %131
  %133 = vrot.lane.b32.xlu0 %v47, 127
  %v134 = vpop.permute.xlu0 %133
  %135 = vrot.lane.b32.xlu0 %v48, 127
  %v136 = vpop.permute.xlu0 %135
  %137 = vrot.lane.b32.xlu0 %v49, 127
  %v138 = vpop.permute.xlu0 %137
  %139 = vrot.lane.b32.xlu0 %v50, 127
  %v140 = vpop.permute.xlu0 %139
  %141 = vrot.lane.b32.xlu0 %v51, 127
  %v142 = vpop.permute.xlu0 %141
  %143 = vrot.lane.b32.xlu0 %v52, 127
  %v144 = vpop.permute.xlu0 %143
  %145 = vrot.lane.b32.xlu0 %v53, 127
  %v146 = vpop.permute.xlu0 %145
  %147 = vrot.lane.b32.xlu0 %v54, 127
  %v148 = vpop.permute.xlu0 %147
  %149 = vrot.lane.b32.xlu0 %v55, 127
  %v150 = vpop.permute.xlu0 %149
  %151 = vrot.lane.b32.xlu0 %v56, 127
  %v152 = vpop.permute.xlu0 %151
  %153 = vrot.lane.b32.xlu0 %v57, 127
  %v154 = vpop.permute.xlu0 %153
  %155 = vrot.lane.b32.xlu0 %v58, 127
  %v156 = vpop.permute.xlu0 %155
  %157 = vrot.lane.b32.xlu0 %v59, 127
  %v158 = vpop.permute.xlu0 %157
  %159 = vrot.lane.b32.xlu0 %v60, 127
  %v160 = vpop.permute.xlu0 %159
  %161 = vrot.lane.b32.xlu0 %v61, 127
  %v162 = vpop.permute.xlu0 %161
  %163 = vrot.lane.b32.xlu0 %v62, 127
  %v164 = vpop.permute.xlu0 %163
  %199 = vrot.lane.b32.xlu0 %v29, 126
  %v200 = vpop.permute.xlu0 %199
  %201 = vrot.lane.b32.xlu0 %v30, 126
  %v202 = vpop.permute.xlu0 %201
  %203 = vrot.lane.b32.xlu0 %v31, 126
  %v204 = vpop.permute.xlu0 %203
  %205 = vrot.lane.b32.xlu0 %v32, 126
  %v206 = vpop.permute.xlu0 %205
  %207 = vrot.lane.b32.xlu0 %v33, 126
  %v208 = vpop.permute.xlu0 %207
  %209 = vrot.lane.b32.xlu0 %v34, 126
  %v210 = vpop.permute.xlu0 %209
  %211 = vrot.lane.b32.xlu0 %v35, 126
  %v212 = vpop.permute.xlu0 %211
  %213 = vrot.lane.b32.xlu0 %v36, 126
  %v214 = vpop.permute.xlu0 %213
  %215 = vrot.lane.b32.xlu0 %v37, 126
  %v216 = vpop.permute.xlu0 %215
  %217 = vrot.lane.b32.xlu0 %v38, 126
  %v218 = vpop.permute.xlu0 %217
  %219 = vrot.lane.b32.xlu0 %v39, 126
  %v220 = vpop.permute.xlu0 %219
  %221 = vrot.lane.b32.xlu0 %v40, 126
  %v222 = vpop.permute.xlu0 %221
  %223 = vrot.lane.b32.xlu0 %v41, 126
  %v224 = vpop.permute.xlu0 %223
  %225 = vrot.lane.b32.xlu0 %v42, 126
  %v226 = vpop.permute.xlu0 %225
  %227 = vrot.lane.b32.xlu0 %v43, 126
  %v228 = vpop.permute.xlu0 %227
  %229 = vrot.lane.b32.xlu0 %v44, 126
  %v230 = vpop.permute.xlu0 %229
  %231 = vrot.lane.b32.xlu0 %v45, 126
  %v232 = vpop.permute.xlu0 %231
  %233 = vrot.lane.b32.xlu0 %v46, 126
  %v234 = vpop.permute.xlu0 %233
  %235 = vrot.lane.b32.xlu0 %v47, 126
  %v236 = vpop.permute.xlu0 %235
  %237 = vrot.lane.b32.xlu0 %v48, 126
  %v238 = vpop.permute.xlu0 %237
  %239 = vrot.lane.b32.xlu0 %v49, 126
  %v240 = vpop.permute.xlu0 %239
  %241 = vrot.lane.b32.xlu0 %v50, 126
  %v242 = vpop.permute.xlu0 %241
  %243 = vrot.lane.b32.xlu0 %v51, 126
  %v244 = vpop.permute.xlu0 %243
  %245 = vrot.lane.b32.xlu0 %v52, 126
  %v246 = vpop.permute.xlu0 %245
  %247 = vrot.lane.b32.xlu0 %v53, 126
  %v248 = vpop.permute.xlu0 %247
  %249 = vrot.lane.b32.xlu0 %v54, 126
  %v250 = vpop.permute.xlu0 %249
  %251 = vrot.lane.b32.xlu0 %v55, 126
  %v252 = vpop.permute.xlu0 %251
  %253 = vrot.lane.b32.xlu0 %v56, 126
  %v254 = vpop.permute.xlu0 %253
  %255 = vrot.lane.b32.xlu0 %v57, 126
  %v256 = vpop.permute.xlu0 %255
  %257 = vrot.lane.b32.xlu0 %v58, 126
  %v258 = vpop.permute.xlu0 %257
  %259 = vrot.lane.b32.xlu0 %v59, 126
  %v260 = vpop.permute.xlu0 %259
  %261 = vrot.lane.b32.xlu0 %v60, 126
  %v262 = vpop.permute.xlu0 %261
  %263 = vrot.lane.b32.xlu0 %v61, 126
  %v264 = vpop.permute.xlu0 %263
  %265 = vrot.lane.b32.xlu0 %v62, 126
  %v266 = vpop.permute.xlu0 %265
  %s301 = scalar_lea.vmem %s0, 272
  %v302 = vld [vmem:[%s301] sm:$0xff]
  %v303 = vld [vmem:[%s301 + $0x8] sm:$0xff]
  %v304 = vld [vmem:[%s301 + $0x10] sm:$0xff]
  %v305 = vld [vmem:[%s301 + $0x18] sm:$0xff]
  %v306 = vld [vmem:[%s301 + $0x20] sm:$0xff]
  %v307 = vld [vmem:[%s301 + $0x28] sm:$0xff]
  %v308 = vld [vmem:[%s301 + $0x30] sm:$0xff]
  %v309 = vld [vmem:[%s301 + $0x38] sm:$0xff]
  %v310 = vld [vmem:[%s301 + $0x40] sm:$0xff]
  %v311 = vld [vmem:[%s301 + $0x48] sm:$0xff]
  %v312 = vld [vmem:[%s301 + $0x50] sm:$0xff]
  %v313 = vld [vmem:[%s301 + $0x58] sm:$0xff]
  %v314 = vld [vmem:[%s301 + $0x60] sm:$0xff]
  %v315 = vld [vmem:[%s301 + $0x68] sm:$0xff]
  %v316 = vld [vmem:[%s301 + $0x70] sm:$0xff]
  %v317 = vld [vmem:[%s301 + $0x78] sm:$0xff]
  %v318 = vld [vmem:[%s301 + $0x80] sm:$0xff]
  %v319 = vld [vmem:[%s301 + $0x88] sm:$0xff]
  %v320 = vld [vmem:[%s301 + $0x90] sm:$0xff]
  %v321 = vld [vmem:[%s301 + $0x98] sm:$0xff]
  %v322 = vld [vmem:[%s301 + $0xa0] sm:$0xff]
  %v323 = vld [vmem:[%s301 + $0xa8] sm:$0xff]
  %v324 = vld [vmem:[%s301 + $0xb0] sm:$0xff]
  %v325 = vld [vmem:[%s301 + $0xb8] sm:$0xff]
  %v326 = vld [vmem:[%s301 + $0xc0] sm:$0xff]
  %v327 = vld [vmem:[%s301 + $0xc8] sm:$0xff]
  %v328 = vld [vmem:[%s301 + $0xd0] sm:$0xff]
  %v329 = vld [vmem:[%s301 + $0xd8] sm:$0xff]
  %v330 = vld [vmem:[%s301 + $0xe0] sm:$0xff]
  %v331 = vld [vmem:[%s301 + $0xe8] sm:$0xff]
  %v332 = vld [vmem:[%s301 + $0xf0] sm:$0xff]
  %v333 = vld [vmem:[%s301 + $0xf8] sm:$0xff]
  %v334 = vld [vmem:[%s301 + $0x100] sm:$0xff]
  %v335 = vld [vmem:[%s301 + $0x108] sm:$0xff]
  %370 = vrot.lane.b32.xlu0 %v302, 127
  %v371 = vpop.permute.xlu0 %370
  %372 = vrot.lane.b32.xlu0 %v303, 127
  %v373 = vpop.permute.xlu0 %372
  %374 = vrot.lane.b32.xlu0 %v304, 127
  %v375 = vpop.permute.xlu0 %374
  %376 = vrot.lane.b32.xlu0 %v305, 127
  %v377 = vpop.permute.xlu0 %376
  %378 = vrot.lane.b32.xlu0 %v306, 127
  %v379 = vpop.permute.xlu0 %378
  %380 = vrot.lane.b32.xlu0 %v307, 127
  %v381 = vpop.permute.xlu0 %380
  %382 = vrot.lane.b32.xlu0 %v308, 127
  %v383 = vpop.permute.xlu0 %382
  %384 = vrot.lane.b32.xlu0 %v309, 127
  %v385 = vpop.permute.xlu0 %384
  %386 = vrot.lane.b32.xlu0 %v310, 127
  %v387 = vpop.permute.xlu0 %386
  %388 = vrot.lane.b32.xlu0 %v311, 127
  %v389 = vpop.permute.xlu0 %388
  %390 = vrot.lane.b32.xlu0 %v312, 127
  %v391 = vpop.permute.xlu0 %390
  %392 = vrot.lane.b32.xlu0 %v313, 127
  %v393 = vpop.permute.xlu0 %392
  %394 = vrot.lane.b32.xlu0 %v314, 127
  %v395 = vpop.permute.xlu0 %394
  %396 = vrot.lane.b32.xlu0 %v315, 127
  %v397 = vpop.permute.xlu0 %396
  %398 = vrot.lane.b32.xlu0 %v316, 127
  %v399 = vpop.permute.xlu0 %398
  %400 = vrot.lane.b32.xlu0 %v317, 127
  %v401 = vpop.permute.xlu0 %400
  %402 = vrot.lane.b32.xlu0 %v318, 127
  %v403 = vpop.permute.xlu0 %402
  %404 = vrot.lane.b32.xlu0 %v319, 127
  %v405 = vpop.permute.xlu0 %404
  %406 = vrot.lane.b32.xlu0 %v320, 127
  %v407 = vpop.permute.xlu0 %406
  %408 = vrot.lane.b32.xlu0 %v321, 127
  %v409 = vpop.permute.xlu0 %408
  %410 = vrot.lane.b32.xlu0 %v322, 127
  %v411 = vpop.permute.xlu0 %410
  %412 = vrot.lane.b32.xlu0 %v323, 127
  %v413 = vpop.permute.xlu0 %412
  %414 = vrot.lane.b32.xlu0 %v324, 127
  %v415 = vpop.permute.xlu0 %414
  %416 = vrot.lane.b32.xlu0 %v325, 127
  %v417 = vpop.permute.xlu0 %416
  %418 = vrot.lane.b32.xlu0 %v326, 127
  %v419 = vpop.permute.xlu0 %418
  %420 = vrot.lane.b32.xlu0 %v327, 127
  %v421 = vpop.permute.xlu0 %420
  %422 = vrot.lane.b32.xlu0 %v328, 127
  %v423 = vpop.permute.xlu0 %422
  %424 = vrot.lane.b32.xlu0 %v329, 127
  %v425 = vpop.permute.xlu0 %424
  %426 = vrot.lane.b32.xlu0 %v330, 127
  %v427 = vpop.permute.xlu0 %426
  %428 = vrot.lane.b32.xlu0 %v331, 127
  %v429 = vpop.permute.xlu0 %428
  %430 = vrot.lane.b32.xlu0 %v332, 127
  %v431 = vpop.permute.xlu0 %430
  %432 = vrot.lane.b32.xlu0 %v333, 127
  %v433 = vpop.permute.xlu0 %432
  %434 = vrot.lane.b32.xlu0 %v334, 127
  %v435 = vpop.permute.xlu0 %434
  %436 = vrot.lane.b32.xlu0 %v335, 127
  %v437 = vpop.permute.xlu0 %436
  %438 = vrot.lane.b32.xlu0 %v302, 126
  %v439 = vpop.permute.xlu0 %438
  %440 = vrot.lane.b32.xlu0 %v303, 126
  %v441 = vpop.permute.xlu0 %440
  %442 = vrot.lane.b32.xlu0 %v304, 126
  %v443 = vpop.permute.xlu0 %442
  %444 = vrot.lane.b32.xlu0 %v305, 126
  %v445 = vpop.permute.xlu0 %444
  %446 = vrot.lane.b32.xlu0 %v306, 126
  %v447 = vpop.permute.xlu0 %446
  %448 = vrot.lane.b32.xlu0 %v307, 126
  %v449 = vpop.permute.xlu0 %448
  %450 = vrot.lane.b32.xlu0 %v308, 126
  %v451 = vpop.permute.xlu0 %450
  %452 = vrot.lane.b32.xlu0 %v309, 126
  %v453 = vpop.permute.xlu0 %452
  %454 = vrot.lane.b32.xlu0 %v310, 126
  %v455 = vpop.permute.xlu0 %454
  %456 = vrot.lane.b32.xlu0 %v311, 126
  %v457 = vpop.permute.xlu0 %456
  %458 = vrot.lane.b32.xlu0 %v312, 126
  %v459 = vpop.permute.xlu0 %458
  %460 = vrot.lane.b32.xlu0 %v313, 126
  %v461 = vpop.permute.xlu0 %460
  %462 = vrot.lane.b32.xlu0 %v314, 126
  %v463 = vpop.permute.xlu0 %462
  %464 = vrot.lane.b32.xlu0 %v315, 126
  %v465 = vpop.permute.xlu0 %464
  %466 = vrot.lane.b32.xlu0 %v316, 126
  %v467 = vpop.permute.xlu0 %466
  %468 = vrot.lane.b32.xlu0 %v317, 126
  %v469 = vpop.permute.xlu0 %468
  %470 = vrot.lane.b32.xlu0 %v318, 126
  %v471 = vpop.permute.xlu0 %470
  %472 = vrot.lane.b32.xlu0 %v319, 126
  %v473 = vpop.permute.xlu0 %472
  %474 = vrot.lane.b32.xlu0 %v320, 126
  %v475 = vpop.permute.xlu0 %474
  %476 = vrot.lane.b32.xlu0 %v321, 126
  %v477 = vpop.permute.xlu0 %476
  %478 = vrot.lane.b32.xlu0 %v322, 126
  %v479 = vpop.permute.xlu0 %478
  %480 = vrot.lane.b32.xlu0 %v323, 126
  %v481 = vpop.permute.xlu0 %480
  %482 = vrot.lane.b32.xlu0 %v324, 126
  %v483 = vpop.permute.xlu0 %482
  %484 = vrot.lane.b32.xlu0 %v325, 126
  %v485 = vpop.permute.xlu0 %484
  %486 = vrot.lane.b32.xlu0 %v326, 126
  %v487 = vpop.permute.xlu0 %486
  %488 = vrot.lane.b32.xlu0 %v327, 126
  %v489 = vpop.permute.xlu0 %488
  %490 = vrot.lane.b32.xlu0 %v328, 126
  %v491 = vpop.permute.xlu0 %490
  %492 = vrot.lane.b32.xlu0 %v329, 126
  %v493 = vpop.permute.xlu0 %492
  %494 = vrot.lane.b32.xlu0 %v330, 126
  %v495 = vpop.permute.xlu0 %494
  %496 = vrot.lane.b32.xlu0 %v331, 126
  %v497 = vpop.permute.xlu0 %496
  %498 = vrot.lane.b32.xlu0 %v332, 126
  %v499 = vpop.permute.xlu0 %498
  %500 = vrot.lane.b32.xlu0 %v333, 126
  %v501 = vpop.permute.xlu0 %500
  %502 = vrot.lane.b32.xlu0 %v334, 126
  %v503 = vpop.permute.xlu0 %502
  %504 = vrot.lane.b32.xlu0 %v335, 126
  %v505 = vpop.permute.xlu0 %504
  %506 = vrot.lane.b32.xlu0 %v302, 32
  %v507 = vpop.permute.xlu0 %506
  %508 = vrot.lane.b32.xlu0 %v303, 32
  %v509 = vpop.permute.xlu0 %508
  %510 = vrot.lane.b32.xlu0 %v304, 32
  %v511 = vpop.permute.xlu0 %510
  %512 = vrot.lane.b32.xlu0 %v305, 32
  %v513 = vpop.permute.xlu0 %512
  %514 = vrot.lane.b32.xlu0 %v306, 32
  %v515 = vpop.permute.xlu0 %514
  %516 = vrot.lane.b32.xlu0 %v307, 32
  %v517 = vpop.permute.xlu0 %516
  %518 = vrot.lane.b32.xlu0 %v308, 32
  %v519 = vpop.permute.xlu0 %518
  %520 = vrot.lane.b32.xlu0 %v309, 32
  %v521 = vpop.permute.xlu0 %520
  %522 = vrot.lane.b32.xlu0 %v310, 32
  %v523 = vpop.permute.xlu0 %522
  %524 = vrot.lane.b32.xlu0 %v311, 32
  %v525 = vpop.permute.xlu0 %524
  %526 = vrot.lane.b32.xlu0 %v312, 32
  %v527 = vpop.permute.xlu0 %526
  %528 = vrot.lane.b32.xlu0 %v313, 32
  %v529 = vpop.permute.xlu0 %528
  %530 = vrot.lane.b32.xlu0 %v314, 32
  %v531 = vpop.permute.xlu0 %530
  %532 = vrot.lane.b32.xlu0 %v315, 32
  %v533 = vpop.permute.xlu0 %532
  %534 = vrot.lane.b32.xlu0 %v316, 32
  %v535 = vpop.permute.xlu0 %534
  %536 = vrot.lane.b32.xlu0 %v317, 32
  %v537 = vpop.permute.xlu0 %536
  %538 = vrot.lane.b32.xlu0 %v318, 32
  %v539 = vpop.permute.xlu0 %538
  %540 = vrot.lane.b32.xlu0 %v319, 32
  %v541 = vpop.permute.xlu0 %540
  %542 = vrot.lane.b32.xlu0 %v320, 32
  %v543 = vpop.permute.xlu0 %542
  %544 = vrot.lane.b32.xlu0 %v321, 32
  %v545 = vpop.permute.xlu0 %544
  %546 = vrot.lane.b32.xlu0 %v322, 32
  %v547 = vpop.permute.xlu0 %546
  %548 = vrot.lane.b32.xlu0 %v323, 32
  %v549 = vpop.permute.xlu0 %548
  %550 = vrot.lane.b32.xlu0 %v324, 32
  %v551 = vpop.permute.xlu0 %550
  %552 = vrot.lane.b32.xlu0 %v325, 32
  %v553 = vpop.permute.xlu0 %552
  %554 = vrot.lane.b32.xlu0 %v326, 32
  %v555 = vpop.permute.xlu0 %554
  %556 = vrot.lane.b32.xlu0 %v327, 32
  %v557 = vpop.permute.xlu0 %556
  %558 = vrot.lane.b32.xlu0 %v328, 32
  %v559 = vpop.permute.xlu0 %558
  %560 = vrot.lane.b32.xlu0 %v329, 32
  %v561 = vpop.permute.xlu0 %560
  %562 = vrot.lane.b32.xlu0 %v330, 32
  %v563 = vpop.permute.xlu0 %562
  %564 = vrot.lane.b32.xlu0 %v331, 32
  %v565 = vpop.permute.xlu0 %564
  %566 = vrot.lane.b32.xlu0 %v332, 32
  %v567 = vpop.permute.xlu0 %566
  %568 = vrot.lane.b32.xlu0 %v333, 32
  %v569 = vpop.permute.xlu0 %568
  %570 = vrot.lane.b32.xlu0 %v334, 32
  %v571 = vpop.permute.xlu0 %570
  %572 = vrot.lane.b32.xlu0 %v335, 32
  %v573 = vpop.permute.xlu0 %572
  %574 = vrot.lane.b32.xlu0 %v371, 32
  %v575 = vpop.permute.xlu0 %574
  %576 = vrot.lane.b32.xlu0 %v373, 32
  %v577 = vpop.permute.xlu0 %576
  %578 = vrot.lane.b32.xlu0 %v375, 32
  %v579 = vpop.permute.xlu0 %578
  %580 = vrot.lane.b32.xlu0 %v377, 32
  %v581 = vpop.permute.xlu0 %580
  %582 = vrot.lane.b32.xlu0 %v379, 32
  %v583 = vpop.permute.xlu0 %582
  %584 = vrot.lane.b32.xlu0 %v381, 32
  %v585 = vpop.permute.xlu0 %584
  %586 = vrot.lane.b32.xlu0 %v383, 32
  %v587 = vpop.permute.xlu0 %586
  %588 = vrot.lane.b32.xlu0 %v385, 32
  %v589 = vpop.permute.xlu0 %588
  %590 = vrot.lane.b32.xlu0 %v387, 32
  %v591 = vpop.permute.xlu0 %590
  %592 = vrot.lane.b32.xlu0 %v389, 32
  %v593 = vpop.permute.xlu0 %592
  %594 = vrot.lane.b32.xlu0 %v391, 32
  %v595 = vpop.permute.xlu0 %594
  %596 = vrot.lane.b32.xlu0 %v393, 32
  %v597 = vpop.permute.xlu0 %596
  %598 = vrot.lane.b32.xlu0 %v395, 32
  %v599 = vpop.permute.xlu0 %598
  %600 = vrot.lane.b32.xlu0 %v397, 32
  %v601 = vpop.permute.xlu0 %600
  %602 = vrot.lane.b32.xlu0 %v399, 32
  %v603 = vpop.permute.xlu0 %602
  %604 = vrot.lane.b32.xlu0 %v401, 32
  %v605 = vpop.permute.xlu0 %604
  %606 = vrot.lane.b32.xlu0 %v403, 32
  %v607 = vpop.permute.xlu0 %606
  %608 = vrot.lane.b32.xlu0 %v405, 32
  %v609 = vpop.permute.xlu0 %608
  %610 = vrot.lane.b32.xlu0 %v407, 32
  %v611 = vpop.permute.xlu0 %610
  %612 = vrot.lane.b32.xlu0 %v409, 32
  %v613 = vpop.permute.xlu0 %612
  %614 = vrot.lane.b32.xlu0 %v411, 32
  %v615 = vpop.permute.xlu0 %614
  %616 = vrot.lane.b32.xlu0 %v413, 32
  %v617 = vpop.permute.xlu0 %616
  %618 = vrot.lane.b32.xlu0 %v415, 32
  %v619 = vpop.permute.xlu0 %618
  %620 = vrot.lane.b32.xlu0 %v417, 32
  %v621 = vpop.permute.xlu0 %620
  %622 = vrot.lane.b32.xlu0 %v419, 32
  %v623 = vpop.permute.xlu0 %622
  %624 = vrot.lane.b32.xlu0 %v421, 32
  %v625 = vpop.permute.xlu0 %624
  %626 = vrot.lane.b32.xlu0 %v423, 32
  %v627 = vpop.permute.xlu0 %626
  %628 = vrot.lane.b32.xlu0 %v425, 32
  %v629 = vpop.permute.xlu0 %628
  %630 = vrot.lane.b32.xlu0 %v427, 32
  %v631 = vpop.permute.xlu0 %630
  %632 = vrot.lane.b32.xlu0 %v429, 32
  %v633 = vpop.permute.xlu0 %632
  %634 = vrot.lane.b32.xlu0 %v431, 32
  %v635 = vpop.permute.xlu0 %634
  %636 = vrot.lane.b32.xlu0 %v433, 32
  %v637 = vpop.permute.xlu0 %636
  %638 = vrot.lane.b32.xlu0 %v435, 32
  %v639 = vpop.permute.xlu0 %638
  %640 = vrot.lane.b32.xlu0 %v437, 32
  %v641 = vpop.permute.xlu0 %640
  %642 = vrot.lane.b32.xlu0 %v439, 32
  %v643 = vpop.permute.xlu0 %642
  %644 = vrot.lane.b32.xlu0 %v441, 32
  %v645 = vpop.permute.xlu0 %644
  %646 = vrot.lane.b32.xlu0 %v443, 32
  %v647 = vpop.permute.xlu0 %646
  %648 = vrot.lane.b32.xlu0 %v445, 32
  %v649 = vpop.permute.xlu0 %648
  %650 = vrot.lane.b32.xlu0 %v447, 32
  %v651 = vpop.permute.xlu0 %650
  %652 = vrot.lane.b32.xlu0 %v449, 32
  %v653 = vpop.permute.xlu0 %652
  %654 = vrot.lane.b32.xlu0 %v451, 32
  %v655 = vpop.permute.xlu0 %654
  %656 = vrot.lane.b32.xlu0 %v453, 32
  %v657 = vpop.permute.xlu0 %656
  %658 = vrot.lane.b32.xlu0 %v455, 32
  %v659 = vpop.permute.xlu0 %658
  %660 = vrot.lane.b32.xlu0 %v457, 32
  %v661 = vpop.permute.xlu0 %660
  %662 = vrot.lane.b32.xlu0 %v459, 32
  %v663 = vpop.permute.xlu0 %662
  %664 = vrot.lane.b32.xlu0 %v461, 32
  %v665 = vpop.permute.xlu0 %664
  %666 = vrot.lane.b32.xlu0 %v463, 32
  %v667 = vpop.permute.xlu0 %666
  %668 = vrot.lane.b32.xlu0 %v465, 32
  %v669 = vpop.permute.xlu0 %668
  %670 = vrot.lane.b32.xlu0 %v467, 32
  %v671 = vpop.permute.xlu0 %670
  %672 = vrot.lane.b32.xlu0 %v469, 32
  %v673 = vpop.permute.xlu0 %672
  %674 = vrot.lane.b32.xlu0 %v471, 32
  %v675 = vpop.permute.xlu0 %674
  %676 = vrot.lane.b32.xlu0 %v473, 32
  %v677 = vpop.permute.xlu0 %676
  %678 = vrot.lane.b32.xlu0 %v475, 32
  %v679 = vpop.permute.xlu0 %678
  %680 = vrot.lane.b32.xlu0 %v477, 32
  %v681 = vpop.permute.xlu0 %680
  %682 = vrot.lane.b32.xlu0 %v479, 32
  %v683 = vpop.permute.xlu0 %682
  %684 = vrot.lane.b32.xlu0 %v481, 32
  %v685 = vpop.permute.xlu0 %684
  %686 = vrot.lane.b32.xlu0 %v483, 32
  %v687 = vpop.permute.xlu0 %686
  %688 = vrot.lane.b32.xlu0 %v485, 32
  %v689 = vpop.permute.xlu0 %688
  %690 = vrot.lane.b32.xlu0 %v487, 32
  %v691 = vpop.permute.xlu0 %690
  %692 = vrot.lane.b32.xlu0 %v489, 32
  %v693 = vpop.permute.xlu0 %692
  %694 = vrot.lane.b32.xlu0 %v491, 32
  %v695 = vpop.permute.xlu0 %694
  %696 = vrot.lane.b32.xlu0 %v493, 32
  %v697 = vpop.permute.xlu0 %696
  %698 = vrot.lane.b32.xlu0 %v495, 32
  %v699 = vpop.permute.xlu0 %698
  %700 = vrot.lane.b32.xlu0 %v497, 32
  %v701 = vpop.permute.xlu0 %700
  %702 = vrot.lane.b32.xlu0 %v499, 32
  %v703 = vpop.permute.xlu0 %702
  %704 = vrot.lane.b32.xlu0 %v501, 32
  %v705 = vpop.permute.xlu0 %704
  %706 = vrot.lane.b32.xlu0 %v503, 32
  %v707 = vpop.permute.xlu0 %706
  %708 = vrot.lane.b32.xlu0 %v505, 32
  %v709 = vpop.permute.xlu0 %708
  %vm812 = vcmask 261120
  %v813 = vsel %vm812, %v29, %v507
  %v814 = vsel %vm812, %v30, %v509
  %v815 = vsel %vm812, %v31, %v511
  %v816 = vsel %vm812, %v32, %v513
  %v817 = vsel %vm812, %v33, %v515
  %v818 = vsel %vm812, %v34, %v517
  %v819 = vsel %vm812, %v35, %v519
  %v820 = vsel %vm812, %v36, %v521
  %v821 = vsel %vm812, %v37, %v523
  %v822 = vsel %vm812, %v38, %v525
  %v823 = vsel %vm812, %v39, %v527
  %v824 = vsel %vm812, %v40, %v529
  %v825 = vsel %vm812, %v41, %v531
  %v826 = vsel %vm812, %v42, %v533
  %v827 = vsel %vm812, %v43, %v535
  %v828 = vsel %vm812, %v44, %v537
  %v829 = vsel %vm812, %v45, %v539
  %v830 = vsel %vm812, %v46, %v541
  %v831 = vsel %vm812, %v47, %v543
  %v832 = vsel %vm812, %v48, %v545
  %v833 = vsel %vm812, %v49, %v547
  %v834 = vsel %vm812, %v50, %v549
  %v835 = vsel %vm812, %v51, %v551
  %v836 = vsel %vm812, %v52, %v553
  %v837 = vsel %vm812, %v53, %v555
  %v838 = vsel %vm812, %v54, %v557
  %v839 = vsel %vm812, %v55, %v559
  %v840 = vsel %vm812, %v56, %v561
  %v841 = vsel %vm812, %v57, %v563
  %v842 = vsel %vm812, %v58, %v565
  %v843 = vsel %vm812, %v59, %v567
  %v844 = vsel %vm812, %v60, %v569
  %v845 = vsel %vm812, %v61, %v571
  %v846 = vsel %vm812, %v62, %v573
  %v847 = vsel %vm812, %v98, %v575
  %v848 = vsel %vm812, %v100, %v577
  %v849 = vsel %vm812, %v102, %v579
  %v850 = vsel %vm812, %v104, %v581
  %v851 = vsel %vm812, %v106, %v583
  %v852 = vsel %vm812, %v108, %v585
  %v853 = vsel %vm812, %v110, %v587
  %v854 = vsel %vm812, %v112, %v589
  %v855 = vsel %vm812, %v114, %v591
  %v856 = vsel %vm812, %v116, %v593
  %v857 = vsel %vm812, %v118, %v595
  %v858 = vsel %vm812, %v120, %v597
  %v859 = vsel %vm812, %v122, %v599
  %v860 = vsel %vm812, %v124, %v601
  %v861 = vsel %vm812, %v126, %v603
  %v862 = vsel %vm812, %v128, %v605
  %v863 = vsel %vm812, %v130, %v607
  %v864 = vsel %vm812, %v132, %v609
  %v865 = vsel %vm812, %v134, %v611
  %v866 = vsel %vm812, %v136, %v613
  %v867 = vsel %vm812, %v138, %v615
  %v868 = vsel %vm812, %v140, %v617
  %v869 = vsel %vm812, %v142, %v619
  %v870 = vsel %vm812, %v144, %v621
  %v871 = vsel %vm812, %v146, %v623
  %v872 = vsel %vm812, %v148, %v625
  %v873 = vsel %vm812, %v150, %v627
  %v874 = vsel %vm812, %v152, %v629
  %v875 = vsel %vm812, %v154, %v631
  %v876 = vsel %vm812, %v156, %v633
  %v877 = vsel %vm812, %v158, %v635
  %v878 = vsel %vm812, %v160, %v637
  %v879 = vsel %vm812, %v162, %v639
  %v880 = vsel %vm812, %v164, %v641
  %v881 = vsel %vm812, %v200, %v643
  %v882 = vsel %vm812, %v202, %v645
  %v883 = vsel %vm812, %v204, %v647
  %v884 = vsel %vm812, %v206, %v649
  %v885 = vsel %vm812, %v208, %v651
  %v886 = vsel %vm812, %v210, %v653
  %v887 = vsel %vm812, %v212, %v655
  %v888 = vsel %vm812, %v214, %v657
  %v889 = vsel %vm812, %v216, %v659
  %v890 = vsel %vm812, %v218, %v661
  %v891 = vsel %vm812, %v220, %v663
  %v892 = vsel %vm812, %v222, %v665
  %v893 = vsel %vm812, %v224, %v667
  %v894 = vsel %vm812, %v226, %v669
  %v895 = vsel %vm812, %v228, %v671
  %v896 = vsel %vm812, %v230, %v673
  %v897 = vsel %vm812, %v232, %v675
  %v898 = vsel %vm812, %v234, %v677
  %v899 = vsel %vm812, %v236, %v679
  %v900 = vsel %vm812, %v238, %v681
  %v901 = vsel %vm812, %v240, %v683
  %v902 = vsel %vm812, %v242, %v685
  %v903 = vsel %vm812, %v244, %v687
  %v904 = vsel %vm812, %v246, %v689
  %v905 = vsel %vm812, %v248, %v691
  %v906 = vsel %vm812, %v250, %v693
  %v907 = vsel %vm812, %v252, %v695
  %v908 = vsel %vm812, %v254, %v697
  %v909 = vsel %vm812, %v256, %v699
  %v910 = vsel %vm812, %v258, %v701
  %v911 = vsel %vm812, %v260, %v703
  %v912 = vsel %vm812, %v262, %v705
  %v913 = vsel %vm812, %v264, %v707
  %v914 = vsel %vm812, %v266, %v709
  %v915 = vld [vmem:[%s1] sm:$0xff]
  %v916 = vld [vmem:[%s1 + $0x8] sm:$0xff]
  %v917 = vld [vmem:[%s1 + $0x10] sm:$0xff]
  %v918 = vld [vmem:[%s1 + $0x18] sm:$0xff]
  %v919 = vld [vmem:[%s1 + $0x20] sm:$0xff]
  %v920 = vld [vmem:[%s1 + $0x28] sm:$0xff]
  %v921 = vld [vmem:[%s1 + $0x30] sm:$0xff]
  %v922 = vld [vmem:[%s1 + $0x38] sm:$0xff]
  %v923 = vld [vmem:[%s1 + $0x40] sm:$0xff]
  %v924 = vld [vmem:[%s1 + $0x48] sm:$0xff]
  %v925 = vld [vmem:[%s1 + $0x50] sm:$0xff]
  %v926 = vld [vmem:[%s1 + $0x58] sm:$0xff]
  %v927 = vld [vmem:[%s1 + $0x60] sm:$0xff]
  %v928 = vld [vmem:[%s1 + $0x68] sm:$0xff]
  %v929 = vld [vmem:[%s1 + $0x70] sm:$0xff]
  %v930 = vld [vmem:[%s1 + $0x78] sm:$0xff]
  %v931 = vld [vmem:[%s1 + $0x80] sm:$0xff]
  %v932 = vld [vmem:[%s1 + $0x88] sm:$0xff]
  %v933 = vld [vmem:[%s1 + $0x90] sm:$0xff]
  %v934 = vld [vmem:[%s1 + $0x98] sm:$0xff]
  %v935 = vld [vmem:[%s1 + $0xa0] sm:$0xff]
  %v936 = vld [vmem:[%s1 + $0xa8] sm:$0xff]
  %v937 = vld [vmem:[%s1 + $0xb0] sm:$0xff]
  %v938 = vld [vmem:[%s1 + $0xb8] sm:$0xff]
  %v939 = vld [vmem:[%s1 + $0xc0] sm:$0xff]
  %v940 = vld [vmem:[%s1 + $0xc8] sm:$0xff]
  %v941 = vld [vmem:[%s1 + $0xd0] sm:$0xff]
  %v942 = vld [vmem:[%s1 + $0xd8] sm:$0xff]
  %v943 = vld [vmem:[%s1 + $0xe0] sm:$0xff]
  %v944 = vld [vmem:[%s1 + $0xe8] sm:$0xff]
  %v945 = vld [vmem:[%s1 + $0xf0] sm:$0xff]
  %v946 = vld [vmem:[%s1 + $0xf8] sm:$0xff]
  %v947 = vld [vmem:[%s1 + $0x100] sm:$0xff]
  %v948 = vld [vmem:[%s1 + $0x108] sm:$0xff]
  %v949 = vld [vmem:[%s1 + $0x110] sm:$0xff]
  %v950 = vld [vmem:[%s1 + $0x118] sm:$0xff]
  %v951 = vld [vmem:[%s1 + $0x120] sm:$0xff]
  %v952 = vld [vmem:[%s1 + $0x128] sm:$0xff]
  %v953 = vld [vmem:[%s1 + $0x130] sm:$0xff]
  %v954 = vld [vmem:[%s1 + $0x138] sm:$0xff]
  %v955 = vld [vmem:[%s1 + $0x140] sm:$0xff]
  %v956 = vld [vmem:[%s1 + $0x148] sm:$0xff]
  %v957 = vld [vmem:[%s1 + $0x150] sm:$0xff]
  %v958 = vld [vmem:[%s1 + $0x158] sm:$0xff]
  %v959 = vld [vmem:[%s1 + $0x160] sm:$0xff]
  %v960 = vld [vmem:[%s1 + $0x168] sm:$0xff]
  %v961 = vld [vmem:[%s1 + $0x170] sm:$0xff]
  %v962 = vld [vmem:[%s1 + $0x178] sm:$0xff]
  %v963 = vld [vmem:[%s1 + $0x180] sm:$0xff]
  %v964 = vld [vmem:[%s1 + $0x188] sm:$0xff]
  %v965 = vld [vmem:[%s1 + $0x190] sm:$0xff]
  %v966 = vld [vmem:[%s1 + $0x198] sm:$0xff]
  %v967 = vld [vmem:[%s1 + $0x1a0] sm:$0xff]
  %v968 = vld [vmem:[%s1 + $0x1a8] sm:$0xff]
  %v969 = vld [vmem:[%s1 + $0x1b0] sm:$0xff]
  %v970 = vld [vmem:[%s1 + $0x1b8] sm:$0xff]
  %v971 = vld [vmem:[%s1 + $0x1c0] sm:$0xff]
  %v972 = vld [vmem:[%s1 + $0x1c8] sm:$0xff]
  %v973 = vld [vmem:[%s1 + $0x1d0] sm:$0xff]
  %v974 = vld [vmem:[%s1 + $0x1d8] sm:$0xff]
  %v975 = vld [vmem:[%s1 + $0x1e0] sm:$0xff]
  %v976 = vld [vmem:[%s1 + $0x1e8] sm:$0xff]
  %v977 = vld [vmem:[%s1 + $0x1f0] sm:$0xff]
  %v978 = vld [vmem:[%s1 + $0x1f8] sm:$0xff]
  %v979 = vld [vmem:[%s1 + $0x200] sm:$0xff]
  %v980 = vld [vmem:[%s1 + $0x208] sm:$0xff]
  %v981 = vld [vmem:[%s1 + $0x210] sm:$0xff]
  %v982 = vld [vmem:[%s1 + $0x218] sm:$0xff]
  %v983 = vld [vmem:[%s1 + $0x220] sm:$0xff]
  %v984 = vld [vmem:[%s1 + $0x228] sm:$0xff]
  %v985 = vld [vmem:[%s1 + $0x230] sm:$0xff]
  %v986 = vld [vmem:[%s1 + $0x238] sm:$0xff]
  %v987 = vld [vmem:[%s1 + $0x240] sm:$0xff]
  %v988 = vld [vmem:[%s1 + $0x248] sm:$0xff]
  %v989 = vld [vmem:[%s1 + $0x250] sm:$0xff]
  %v990 = vld [vmem:[%s1 + $0x258] sm:$0xff]
  %v991 = vld [vmem:[%s1 + $0x260] sm:$0xff]
  %v992 = vld [vmem:[%s1 + $0x268] sm:$0xff]
  %v993 = vld [vmem:[%s1 + $0x270] sm:$0xff]
  %v994 = vld [vmem:[%s1 + $0x278] sm:$0xff]
  %v995 = vld [vmem:[%s1 + $0x280] sm:$0xff]
  %v996 = vld [vmem:[%s1 + $0x288] sm:$0xff]
  %v997 = vld [vmem:[%s1 + $0x290] sm:$0xff]
  %v998 = vld [vmem:[%s1 + $0x298] sm:$0xff]
  %v999 = vld [vmem:[%s1 + $0x2a0] sm:$0xff]
  %v1000 = vld [vmem:[%s1 + $0x2a8] sm:$0xff]
  %v1001 = vld [vmem:[%s1 + $0x2b0] sm:$0xff]
  %v1002 = vld [vmem:[%s1 + $0x2b8] sm:$0xff]
  %v1003 = vld [vmem:[%s1 + $0x2c0] sm:$0xff]
  %v1004 = vld [vmem:[%s1 + $0x2c8] sm:$0xff]
  %v1005 = vld [vmem:[%s1 + $0x2d0] sm:$0xff]
  %v1006 = vld [vmem:[%s1 + $0x2d8] sm:$0xff]
  %v1007 = vld [vmem:[%s1 + $0x2e0] sm:$0xff]
  %v1008 = vld [vmem:[%s1 + $0x2e8] sm:$0xff]
  %v1009 = vld [vmem:[%s1 + $0x2f0] sm:$0xff]
  %v1010 = vld [vmem:[%s1 + $0x2f8] sm:$0xff]
  %v1011 = vld [vmem:[%s1 + $0x300] sm:$0xff]
  %v1012 = vld [vmem:[%s1 + $0x308] sm:$0xff]
  %v1013 = vld [vmem:[%s1 + $0x310] sm:$0xff]
  %v1014 = vld [vmem:[%s1 + $0x318] sm:$0xff]
  %v1015 = vld [vmem:[%s1 + $0x320] sm:$0xff]
  %v1016 = vld [vmem:[%s1 + $0x328] sm:$0xff]
  %v1017 = vld [vmem:[%s1 + $0x330] sm:$0xff]
  %v1018 = vld [vmem:[%s1 + $0x338] sm:$0xff]
  %v1019 = vld [vmem:[%s1 + $0x340] sm:$0xff]
  %v1020 = vld [vmem:[%s1 + $0x348] sm:$0xff]
  %v1021 = vld [vmem:[%s1 + $0x350] sm:$0xff]
  %v1022 = vld [vmem:[%s1 + $0x358] sm:$0xff]
  %v1023 = vld [vmem:[%s1 + $0x360] sm:$0xff]
  %v1024 = vld [vmem:[%s1 + $0x368] sm:$0xff]
  %v1025 = vld [vmem:[%s1 + $0x370] sm:$0xff]
  %v1026 = vld [vmem:[%s1 + $0x378] sm:$0xff]
  %v1027 = vld [vmem:[%s2] sm:$0xff]
  %v1028 = vld [vmem:[%s2 + $0x8] sm:$0xff]
  %v1029 = vld [vmem:[%s2 + $0x10] sm:$0xff]
  %v1030 = vld [vmem:[%s2 + $0x18] sm:$0xff]
  %v1031 = vld [vmem:[%s2 + $0x20] sm:$0xff]
  %v1032 = vld [vmem:[%s2 + $0x28] sm:$0xff]
  %v1033 = vld [vmem:[%s2 + $0x30] sm:$0xff]
  %v1034 = vld [vmem:[%s2 + $0x38] sm:$0xff]
  %v1035 = vld [vmem:[%s2 + $0x40] sm:$0xff]
  %v1036 = vld [vmem:[%s2 + $0x48] sm:$0xff]
  %v1037 = vld [vmem:[%s2 + $0x50] sm:$0xff]
  %v1038 = vld [vmem:[%s2 + $0x58] sm:$0xff]
  %v1039 = vld [vmem:[%s2 + $0x60] sm:$0xff]
  %v1040 = vld [vmem:[%s2 + $0x68] sm:$0xff]
  %v1041 = vld [vmem:[%s2 + $0x70] sm:$0xff]
  %v1042 = vld [vmem:[%s2 + $0x78] sm:$0xff]
  %1044 = vset.pattern.permute.xlu0 0
  %1045 = vperm.xlu0 %1044, %v1027
  %v1046 = vpop.permute.xlu0 %1045
  %1049 = vset.pattern.permute.xlu0 0
  %1050 = vperm.xlu0 %1049, %v1028
  %v1051 = vpop.permute.xlu0 %1050
  %1054 = vset.pattern.permute.xlu0 0
  %1055 = vperm.xlu0 %1054, %v1029
  %v1056 = vpop.permute.xlu0 %1055
  %1059 = vset.pattern.permute.xlu0 0
  %1060 = vperm.xlu0 %1059, %v1030
  %v1061 = vpop.permute.xlu0 %1060
  %1064 = vset.pattern.permute.xlu0 0
  %1065 = vperm.xlu0 %1064, %v1031
  %v1066 = vpop.permute.xlu0 %1065
  %1069 = vset.pattern.permute.xlu0 0
  %1070 = vperm.xlu0 %1069, %v1032
  %v1071 = vpop.permute.xlu0 %1070
  %1074 = vset.pattern.permute.xlu0 0
  %1075 = vperm.xlu0 %1074, %v1033
  %v1076 = vpop.permute.xlu0 %1075
  %1079 = vset.pattern.permute.xlu0 0
  %1080 = vperm.xlu0 %1079, %v1034
  %v1081 = vpop.permute.xlu0 %1080
  %1084 = vset.pattern.permute.xlu0 0
  %1085 = vperm.xlu0 %1084, %v1035
  %v1086 = vpop.permute.xlu0 %1085
  %1089 = vset.pattern.permute.xlu0 0
  %1090 = vperm.xlu0 %1089, %v1036
  %v1091 = vpop.permute.xlu0 %1090
  %1094 = vset.pattern.permute.xlu0 0
  %1095 = vperm.xlu0 %1094, %v1037
  %v1096 = vpop.permute.xlu0 %1095
  %1099 = vset.pattern.permute.xlu0 0
  %1100 = vperm.xlu0 %1099, %v1038
  %v1101 = vpop.permute.xlu0 %1100
  %1104 = vset.pattern.permute.xlu0 0
  %1105 = vperm.xlu0 %1104, %v1039
  %v1106 = vpop.permute.xlu0 %1105
  %1109 = vset.pattern.permute.xlu0 0
  %1110 = vperm.xlu0 %1109, %v1040
  %v1111 = vpop.permute.xlu0 %1110
  %1114 = vset.pattern.permute.xlu0 0
  %1115 = vperm.xlu0 %1114, %v1041
  %v1116 = vpop.permute.xlu0 %1115
  %1119 = vset.pattern.permute.xlu0 0
  %1120 = vperm.xlu0 %1119, %v1042
  %v1121 = vpop.permute.xlu0 %1120
  %vm1123 = vcmask 392192
  %v1125 = vsel %vm1123, %v921, 0
  %v1128 = vsel %vm1123, %v928, 0
  %v1131 = vsel %vm1123, %v935, 0
  %v1134 = vsel %vm1123, %v942, 0
  %v1137 = vsel %vm1123, %v949, 0
  %v1140 = vsel %vm1123, %v956, 0
  %v1143 = vsel %vm1123, %v963, 0
  %v1146 = vsel %vm1123, %v970, 0
  %v1149 = vsel %vm1123, %v977, 0
  %v1152 = vsel %vm1123, %v984, 0
  %v1155 = vsel %vm1123, %v991, 0
  %v1158 = vsel %vm1123, %v998, 0
  %v1161 = vsel %vm1123, %v1005, 0
  %v1164 = vsel %vm1123, %v1012, 0
  %v1167 = vsel %vm1123, %v1019, 0
  %v1170 = vsel %vm1123, %v1026, 0
  %1172 = vmatpush.msra.mxu0 %v828
  %1173 = vmatpush.msra.mxu0 %v827
  %1174 = vmatpush.msra.mxu0 %v826
  %1175 = vmatpush.msra.mxu0 %v825
  %1176 = vmatpush.msra.mxu0 %v824
  %1177 = vmatpush.msra.mxu0 %v823
  %1178 = vmatpush.msra.mxu0 %v822
  %1179 = vmatpush.msra.mxu0 %v821
  %1180 = vmatpush.msra.mxu0 %v820
  %1181 = vmatpush.msra.mxu0 %v819
  %1182 = vmatpush.msra.mxu0 %v818
  %1183 = vmatpush.msra.mxu0 %v817
  %1184 = vmatpush.msra.mxu0 %v816
  %1185 = vmatpush.msra.mxu0 %v815
  %1186 = vmatpush.msra.mxu0 %v814
  %1187 = vmatpush.msra.mxu0 %v813
  %1188 = vmatmul.f32.gmra.mxu0 %v915
  %v1189 = vpop.f32.mrf.mxu0
  %v1190 = vadd.f32 %v1046, %v1189
  %1191 = vmatmul.f32.gmra.mxu0 %v922
  %v1192 = vpop.f32.mrf.mxu0
  %v1193 = vadd.f32 %v1051, %v1192
  %1194 = vmatmul.f32.gmra.mxu0 %v929
  %v1195 = vpop.f32.mrf.mxu0
  %v1196 = vadd.f32 %v1056, %v1195
  %1197 = vmatmul.f32.gmra.mxu0 %v936
  %v1198 = vpop.f32.mrf.mxu0
  %v1199 = vadd.f32 %v1061, %v1198
  %1200 = vmatmul.f32.gmra.mxu0 %v943
  %v1201 = vpop.f32.mrf.mxu0
  %v1202 = vadd.f32 %v1066, %v1201
  %1203 = vmatmul.f32.gmra.mxu0 %v950
  %v1204 = vpop.f32.mrf.mxu0
  %v1205 = vadd.f32 %v1071, %v1204
  %1206 = vmatmul.f32.gmra.mxu0 %v957
  %v1207 = vpop.f32.mrf.mxu0
  %v1208 = vadd.f32 %v1076, %v1207
  %1209 = vmatmul.f32.gmra.mxu0 %v964
  %v1210 = vpop.f32.mrf.mxu0
  %v1211 = vadd.f32 %v1081, %v1210
  %1212 = vmatmul.f32.gmra.mxu0 %v971
  %v1213 = vpop.f32.mrf.mxu0
  %v1214 = vadd.f32 %v1086, %v1213
  %1215 = vmatmul.f32.gmra.mxu0 %v978
  %v1216 = vpop.f32.mrf.mxu0
  %v1217 = vadd.f32 %v1091, %v1216
  %1218 = vmatmul.f32.gmra.mxu0 %v985
  %v1219 = vpop.f32.mrf.mxu0
  %v1220 = vadd.f32 %v1096, %v1219
  %1221 = vmatmul.f32.gmra.mxu0 %v992
  %v1222 = vpop.f32.mrf.mxu0
  %v1223 = vadd.f32 %v1101, %v1222
  %1224 = vmatmul.f32.gmra.mxu0 %v999
  %v1225 = vpop.f32.mrf.mxu0
  %v1226 = vadd.f32 %v1106, %v1225
  %1227 = vmatmul.f32.gmra.mxu0 %v1006
  %v1228 = vpop.f32.mrf.mxu0
  %v1229 = vadd.f32 %v1111, %v1228
  %1230 = vmatmul.f32.gmra.mxu0 %v1013
  %v1231 = vpop.f32.mrf.mxu0
  %v1232 = vadd.f32 %v1116, %v1231
  %1233 = vmatmul.f32.gmra.mxu0 %v1020
  %v1234 = vpop.f32.mrf.mxu0
  %v1235 = vadd.f32 %v1121, %v1234
  %1236 = vdwg.mxu0
  %1237 = vmatpush.msra.mxu0 %v844
  %1238 = vmatpush.msra.mxu0 %v843
  %1239 = vmatpush.msra.mxu0 %v842
  %1240 = vmatpush.msra.mxu0 %v841
  %1241 = vmatpush.msra.mxu0 %v840
  %1242 = vmatpush.msra.mxu0 %v839
  %1243 = vmatpush.msra.mxu0 %v838
  %1244 = vmatpush.msra.mxu0 %v837
  %1245 = vmatpush.msra.mxu0 %v836
  %1246 = vmatpush.msra.mxu0 %v835
  %1247 = vmatpush.msra.mxu0 %v834
  %1248 = vmatpush.msra.mxu0 %v833
  %1249 = vmatpush.msra.mxu0 %v832
  %1250 = vmatpush.msra.mxu0 %v831
  %1251 = vmatpush.msra.mxu0 %v830
  %1252 = vmatpush.msra.mxu0 %v829
  %1253 = vmatmul.f32.gmra.mxu0 %v916
  %v1254 = vpop.f32.mrf.mxu0
  %v1255 = vadd.f32 %v1190, %v1254
  %1256 = vmatmul.f32.gmra.mxu0 %v923
  %v1257 = vpop.f32.mrf.mxu0
  %v1258 = vadd.f32 %v1193, %v1257
  %1259 = vmatmul.f32.gmra.mxu0 %v930
  %v1260 = vpop.f32.mrf.mxu0
  %v1261 = vadd.f32 %v1196, %v1260
  %1262 = vmatmul.f32.gmra.mxu0 %v937
  %v1263 = vpop.f32.mrf.mxu0
  %v1264 = vadd.f32 %v1199, %v1263
  %1265 = vmatmul.f32.gmra.mxu0 %v944
  %v1266 = vpop.f32.mrf.mxu0
  %v1267 = vadd.f32 %v1202, %v1266
  %1268 = vmatmul.f32.gmra.mxu0 %v951
  %v1269 = vpop.f32.mrf.mxu0
  %v1270 = vadd.f32 %v1205, %v1269
  %1271 = vmatmul.f32.gmra.mxu0 %v958
  %v1272 = vpop.f32.mrf.mxu0
  %v1273 = vadd.f32 %v1208, %v1272
  %1274 = vmatmul.f32.gmra.mxu0 %v965
  %v1275 = vpop.f32.mrf.mxu0
  %v1276 = vadd.f32 %v1211, %v1275
  %1277 = vmatmul.f32.gmra.mxu0 %v972
  %v1278 = vpop.f32.mrf.mxu0
  %v1279 = vadd.f32 %v1214, %v1278
  %1280 = vmatmul.f32.gmra.mxu0 %v979
  %v1281 = vpop.f32.mrf.mxu0
  %v1282 = vadd.f32 %v1217, %v1281
  %1283 = vmatmul.f32.gmra.mxu0 %v986
  %v1284 = vpop.f32.mrf.mxu0
  %v1285 = vadd.f32 %v1220, %v1284
  %1286 = vmatmul.f32.gmra.mxu0 %v993
  %v1287 = vpop.f32.mrf.mxu0
  %v1288 = vadd.f32 %v1223, %v1287
  %1289 = vmatmul.f32.gmra.mxu0 %v1000
  %v1290 = vpop.f32.mrf.mxu0
  %v1291 = vadd.f32 %v1226, %v1290
  %1292 = vmatmul.f32.gmra.mxu0 %v1007
  %v1293 = vpop.f32.mrf.mxu0
  %v1294 = vadd.f32 %v1229, %v1293
  %1295 = vmatmul.f32.gmra.mxu0 %v1014
  %v1296 = vpop.f32.mrf.mxu0
  %v1297 = vadd.f32 %v1232, %v1296
  %1298 = vmatmul.f32.gmra.mxu0 %v1021
  %v1299 = vpop.f32.mrf.mxu0
  %v1300 = vadd.f32 %v1235, %v1299
  %1301 = vdwg.mxu0
  %1302 = vmatpush.msra.mxu0 %v860
  %1303 = vmatpush.msra.mxu0 %v859
  %1304 = vmatpush.msra.mxu0 %v858
  %1305 = vmatpush.msra.mxu0 %v857
  %1306 = vmatpush.msra.mxu0 %v856
  %1307 = vmatpush.msra.mxu0 %v855
  %1308 = vmatpush.msra.mxu0 %v854
  %1309 = vmatpush.msra.mxu0 %v853
  %1310 = vmatpush.msra.mxu0 %v852
  %1311 = vmatpush.msra.mxu0 %v851
  %1312 = vmatpush.msra.mxu0 %v850
  %1313 = vmatpush.msra.mxu0 %v849
  %1314 = vmatpush.msra.mxu0 %v848
  %1315 = vmatpush.msra.mxu0 %v847
  %1316 = vmatpush.msra.mxu0 %v846
  %1317 = vmatpush.msra.mxu0 %v845
  %1318 = vmatmul.f32.gmra.mxu0 %v917
  %v1319 = vpop.f32.mrf.mxu0
  %v1320 = vadd.f32 %v1255, %v1319
  %1321 = vmatmul.f32.gmra.mxu0 %v924
  %v1322 = vpop.f32.mrf.mxu0
  %v1323 = vadd.f32 %v1258, %v1322
  %1324 = vmatmul.f32.gmra.mxu0 %v931
  %v1325 = vpop.f32.mrf.mxu0
  %v1326 = vadd.f32 %v1261, %v1325
  %1327 = vmatmul.f32.gmra.mxu0 %v938
  %v1328 = vpop.f32.mrf.mxu0
  %v1329 = vadd.f32 %v1264, %v1328
  %1330 = vmatmul.f32.gmra.mxu0 %v945
  %v1331 = vpop.f32.mrf.mxu0
  %v1332 = vadd.f32 %v1267, %v1331
  %1333 = vmatmul.f32.gmra.mxu0 %v952
  %v1334 = vpop.f32.mrf.mxu0
  %v1335 = vadd.f32 %v1270, %v1334
  %1336 = vmatmul.f32.gmra.mxu0 %v959
  %v1337 = vpop.f32.mrf.mxu0
  %v1338 = vadd.f32 %v1273, %v1337
  %1339 = vmatmul.f32.gmra.mxu0 %v966
  %v1340 = vpop.f32.mrf.mxu0
  %v1341 = vadd.f32 %v1276, %v1340
  %1342 = vmatmul.f32.gmra.mxu0 %v973
  %v1343 = vpop.f32.mrf.mxu0
  %v1344 = vadd.f32 %v1279, %v1343
  %1345 = vmatmul.f32.gmra.mxu0 %v980
  %v1346 = vpop.f32.mrf.mxu0
  %v1347 = vadd.f32 %v1282, %v1346
  %1348 = vmatmul.f32.gmra.mxu0 %v987
  %v1349 = vpop.f32.mrf.mxu0
  %v1350 = vadd.f32 %v1285, %v1349
  %1351 = vmatmul.f32.gmra.mxu0 %v994
  %v1352 = vpop.f32.mrf.mxu0
  %v1353 = vadd.f32 %v1288, %v1352
  %1354 = vmatmul.f32.gmra.mxu0 %v1001
  %v1355 = vpop.f32.mrf.mxu0
  %v1356 = vadd.f32 %v1291, %v1355
  %1357 = vmatmul.f32.gmra.mxu0 %v1008
  %v1358 = vpop.f32.mrf.mxu0
  %v1359 = vadd.f32 %v1294, %v1358
  %1360 = vmatmul.f32.gmra.mxu0 %v1015
  %v1361 = vpop.f32.mrf.mxu0
  %v1362 = vadd.f32 %v1297, %v1361
  %1363 = vmatmul.f32.gmra.mxu0 %v1022
  %v1364 = vpop.f32.mrf.mxu0
  %v1365 = vadd.f32 %v1300, %v1364
  %1366 = vdwg.mxu0
  %1367 = vmatpush.msra.mxu0 %v876
  %1368 = vmatpush.msra.mxu0 %v875
  %1369 = vmatpush.msra.mxu0 %v874
  %1370 = vmatpush.msra.mxu0 %v873
  %1371 = vmatpush.msra.mxu0 %v872
  %1372 = vmatpush.msra.mxu0 %v871
  %1373 = vmatpush.msra.mxu0 %v870
  %1374 = vmatpush.msra.mxu0 %v869
  %1375 = vmatpush.msra.mxu0 %v868
  %1376 = vmatpush.msra.mxu0 %v867
  %1377 = vmatpush.msra.mxu0 %v866
  %1378 = vmatpush.msra.mxu0 %v865
  %1379 = vmatpush.msra.mxu0 %v864
  %1380 = vmatpush.msra.mxu0 %v863
  %1381 = vmatpush.msra.mxu0 %v862
  %1382 = vmatpush.msra.mxu0 %v861
  %1383 = vmatmul.f32.gmra.mxu0 %v918
  %v1384 = vpop.f32.mrf.mxu0
  %v1385 = vadd.f32 %v1320, %v1384
  %1386 = vmatmul.f32.gmra.mxu0 %v925
  %v1387 = vpop.f32.mrf.mxu0
  %v1388 = vadd.f32 %v1323, %v1387
  %1389 = vmatmul.f32.gmra.mxu0 %v932
  %v1390 = vpop.f32.mrf.mxu0
  %v1391 = vadd.f32 %v1326, %v1390
  %1392 = vmatmul.f32.gmra.mxu0 %v939
  %v1393 = vpop.f32.mrf.mxu0
  %v1394 = vadd.f32 %v1329, %v1393
  %1395 = vmatmul.f32.gmra.mxu0 %v946
  %v1396 = vpop.f32.mrf.mxu0
  %v1397 = vadd.f32 %v1332, %v1396
  %1398 = vmatmul.f32.gmra.mxu0 %v953
  %v1399 = vpop.f32.mrf.mxu0
  %v1400 = vadd.f32 %v1335, %v1399
  %1401 = vmatmul.f32.gmra.mxu0 %v960
  %v1402 = vpop.f32.mrf.mxu0
  %v1403 = vadd.f32 %v1338, %v1402
  %1404 = vmatmul.f32.gmra.mxu0 %v967
  %v1405 = vpop.f32.mrf.mxu0
  %v1406 = vadd.f32 %v1341, %v1405
  %1407 = vmatmul.f32.gmra.mxu0 %v974
  %v1408 = vpop.f32.mrf.mxu0
  %v1409 = vadd.f32 %v1344, %v1408
  %1410 = vmatmul.f32.gmra.mxu0 %v981
  %v1411 = vpop.f32.mrf.mxu0
  %v1412 = vadd.f32 %v1347, %v1411
  %1413 = vmatmul.f32.gmra.mxu0 %v988
  %v1414 = vpop.f32.mrf.mxu0
  %v1415 = vadd.f32 %v1350, %v1414
  %1416 = vmatmul.f32.gmra.mxu0 %v995
  %v1417 = vpop.f32.mrf.mxu0
  %v1418 = vadd.f32 %v1353, %v1417
  %1419 = vmatmul.f32.gmra.mxu0 %v1002
  %v1420 = vpop.f32.mrf.mxu0
  %v1421 = vadd.f32 %v1356, %v1420
  %1422 = vmatmul.f32.gmra.mxu0 %v1009
  %v1423 = vpop.f32.mrf.mxu0
  %v1424 = vadd.f32 %v1359, %v1423
  %1425 = vmatmul.f32.gmra.mxu0 %v1016
  %v1426 = vpop.f32.mrf.mxu0
  %v1427 = vadd.f32 %v1362, %v1426
  %1428 = vmatmul.f32.gmra.mxu0 %v1023
  %v1429 = vpop.f32.mrf.mxu0
  %v1430 = vadd.f32 %v1365, %v1429
  %1431 = vdwg.mxu0
  %1432 = vmatpush.msra.mxu0 %v892
  %1433 = vmatpush.msra.mxu0 %v891
  %1434 = vmatpush.msra.mxu0 %v890
  %1435 = vmatpush.msra.mxu0 %v889
  %1436 = vmatpush.msra.mxu0 %v888
  %1437 = vmatpush.msra.mxu0 %v887
  %1438 = vmatpush.msra.mxu0 %v886
  %1439 = vmatpush.msra.mxu0 %v885
  %1440 = vmatpush.msra.mxu0 %v884
  %1441 = vmatpush.msra.mxu0 %v883
  %1442 = vmatpush.msra.mxu0 %v882
  %1443 = vmatpush.msra.mxu0 %v881
  %1444 = vmatpush.msra.mxu0 %v880
  %1445 = vmatpush.msra.mxu0 %v879
  %1446 = vmatpush.msra.mxu0 %v878
  %1447 = vmatpush.msra.mxu0 %v877
  %1448 = vmatmul.f32.gmra.mxu0 %v919
  %v1449 = vpop.f32.mrf.mxu0
  %v1450 = vadd.f32 %v1385, %v1449
  %1451 = vmatmul.f32.gmra.mxu0 %v926
  %v1452 = vpop.f32.mrf.mxu0
  %v1453 = vadd.f32 %v1388, %v1452
  %1454 = vmatmul.f32.gmra.mxu0 %v933
  %v1455 = vpop.f32.mrf.mxu0
  %v1456 = vadd.f32 %v1391, %v1455
  %1457 = vmatmul.f32.gmra.mxu0 %v940
  %v1458 = vpop.f32.mrf.mxu0
  %v1459 = vadd.f32 %v1394, %v1458
  %1460 = vmatmul.f32.gmra.mxu0 %v947
  %v1461 = vpop.f32.mrf.mxu0
  %v1462 = vadd.f32 %v1397, %v1461
  %1463 = vmatmul.f32.gmra.mxu0 %v954
  %v1464 = vpop.f32.mrf.mxu0
  %v1465 = vadd.f32 %v1400, %v1464
  %1466 = vmatmul.f32.gmra.mxu0 %v961
  %v1467 = vpop.f32.mrf.mxu0
  %v1468 = vadd.f32 %v1403, %v1467
  %1469 = vmatmul.f32.gmra.mxu0 %v968
  %v1470 = vpop.f32.mrf.mxu0
  %v1471 = vadd.f32 %v1406, %v1470
  %1472 = vmatmul.f32.gmra.mxu0 %v975
  %v1473 = vpop.f32.mrf.mxu0
  %v1474 = vadd.f32 %v1409, %v1473
  %1475 = vmatmul.f32.gmra.mxu0 %v982
  %v1476 = vpop.f32.mrf.mxu0
  %v1477 = vadd.f32 %v1412, %v1476
  %1478 = vmatmul.f32.gmra.mxu0 %v989
  %v1479 = vpop.f32.mrf.mxu0
  %v1480 = vadd.f32 %v1415, %v1479
  %1481 = vmatmul.f32.gmra.mxu0 %v996
  %v1482 = vpop.f32.mrf.mxu0
  %v1483 = vadd.f32 %v1418, %v1482
  %1484 = vmatmul.f32.gmra.mxu0 %v1003
  %v1485 = vpop.f32.mrf.mxu0
  %v1486 = vadd.f32 %v1421, %v1485
  %1487 = vmatmul.f32.gmra.mxu0 %v1010
  %v1488 = vpop.f32.mrf.mxu0
  %v1489 = vadd.f32 %v1424, %v1488
  %1490 = vmatmul.f32.gmra.mxu0 %v1017
  %v1491 = vpop.f32.mrf.mxu0
  %v1492 = vadd.f32 %v1427, %v1491
  %1493 = vmatmul.f32.gmra.mxu0 %v1024
  %v1494 = vpop.f32.mrf.mxu0
  %v1495 = vadd.f32 %v1430, %v1494
  %1496 = vdwg.mxu0
  %1497 = vmatpush.msra.mxu0 %v908
  %1498 = vmatpush.msra.mxu0 %v907
  %1499 = vmatpush.msra.mxu0 %v906
  %1500 = vmatpush.msra.mxu0 %v905
  %1501 = vmatpush.msra.mxu0 %v904
  %1502 = vmatpush.msra.mxu0 %v903
  %1503 = vmatpush.msra.mxu0 %v902
  %1504 = vmatpush.msra.mxu0 %v901
  %1505 = vmatpush.msra.mxu0 %v900
  %1506 = vmatpush.msra.mxu0 %v899
  %1507 = vmatpush.msra.mxu0 %v898
  %1508 = vmatpush.msra.mxu0 %v897
  %1509 = vmatpush.msra.mxu0 %v896
  %1510 = vmatpush.msra.mxu0 %v895
  %1511 = vmatpush.msra.mxu0 %v894
  %1512 = vmatpush.msra.mxu0 %v893
  %1513 = vmatmul.f32.gmra.mxu0 %v920
  %v1514 = vpop.f32.mrf.mxu0
  %v1515 = vadd.f32 %v1450, %v1514
  %1516 = vmatmul.f32.gmra.mxu0 %v927
  %v1517 = vpop.f32.mrf.mxu0
  %v1518 = vadd.f32 %v1453, %v1517
  %1519 = vmatmul.f32.gmra.mxu0 %v934
  %v1520 = vpop.f32.mrf.mxu0
  %v1521 = vadd.f32 %v1456, %v1520
  %1522 = vmatmul.f32.gmra.mxu0 %v941
  %v1523 = vpop.f32.mrf.mxu0
  %v1524 = vadd.f32 %v1459, %v1523
  %1525 = vmatmul.f32.gmra.mxu0 %v948
  %v1526 = vpop.f32.mrf.mxu0
  %v1527 = vadd.f32 %v1462, %v1526
  %1528 = vmatmul.f32.gmra.mxu0 %v955
  %v1529 = vpop.f32.mrf.mxu0
  %v1530 = vadd.f32 %v1465, %v1529
  %1531 = vmatmul.f32.gmra.mxu0 %v962
  %v1532 = vpop.f32.mrf.mxu0
  %v1533 = vadd.f32 %v1468, %v1532
  %1534 = vmatmul.f32.gmra.mxu0 %v969
  %v1535 = vpop.f32.mrf.mxu0
  %v1536 = vadd.f32 %v1471, %v1535
  %1537 = vmatmul.f32.gmra.mxu0 %v976
  %v1538 = vpop.f32.mrf.mxu0
  %v1539 = vadd.f32 %v1474, %v1538
  %1540 = vmatmul.f32.gmra.mxu0 %v983
  %v1541 = vpop.f32.mrf.mxu0
  %v1542 = vadd.f32 %v1477, %v1541
  %1543 = vmatmul.f32.gmra.mxu0 %v990
  %v1544 = vpop.f32.mrf.mxu0
  %v1545 = vadd.f32 %v1480, %v1544
  %1546 = vmatmul.f32.gmra.mxu0 %v997
  %v1547 = vpop.f32.mrf.mxu0
  %v1548 = vadd.f32 %v1483, %v1547
  %1549 = vmatmul.f32.gmra.mxu0 %v1004
  %v1550 = vpop.f32.mrf.mxu0
  %v1551 = vadd.f32 %v1486, %v1550
  %1552 = vmatmul.f32.gmra.mxu0 %v1011
  %v1553 = vpop.f32.mrf.mxu0
  %v1554 = vadd.f32 %v1489, %v1553
  %1555 = vmatmul.f32.gmra.mxu0 %v1018
  %v1556 = vpop.f32.mrf.mxu0
  %v1557 = vadd.f32 %v1492, %v1556
  %1558 = vmatmul.f32.gmra.mxu0 %v1025
  %v1559 = vpop.f32.mrf.mxu0
  %v1560 = vadd.f32 %v1495, %v1559
  %1561 = vdwg.mxu0
  %1562 = vmatpush.msra.mxu0 0.0
  %1563 = vmatpush.msra.mxu0 0.0
  %1564 = vmatpush.msra.mxu0 0.0
  %1565 = vmatpush.msra.mxu0 0.0
  %1566 = vmatpush.msra.mxu0 0.0
  %1567 = vmatpush.msra.mxu0 0.0
  %1568 = vmatpush.msra.mxu0 0.0
  %1569 = vmatpush.msra.mxu0 0.0
  %1570 = vmatpush.msra.mxu0 0.0
  %1571 = vmatpush.msra.mxu0 0.0
  %1572 = vmatpush.msra.mxu0 %v914
  %1573 = vmatpush.msra.mxu0 %v913
  %1574 = vmatpush.msra.mxu0 %v912
  %1575 = vmatpush.msra.mxu0 %v911
  %1576 = vmatpush.msra.mxu0 %v910
  %1577 = vmatpush.msra.mxu0 %v909
  %1578 = vmatmul.f32.gmra.mxu0 %v1125
  %v1579 = vpop.f32.mrf.mxu0
  %v1580 = vadd.f32 %v1515, %v1579
  %1581 = vmatmul.f32.gmra.mxu0 %v1128
  %v1582 = vpop.f32.mrf.mxu0
  %v1583 = vadd.f32 %v1518, %v1582
  %1584 = vmatmul.f32.gmra.mxu0 %v1131
  %v1585 = vpop.f32.mrf.mxu0
  %v1586 = vadd.f32 %v1521, %v1585
  %1587 = vmatmul.f32.gmra.mxu0 %v1134
  %v1588 = vpop.f32.mrf.mxu0
  %v1589 = vadd.f32 %v1524, %v1588
  %1590 = vmatmul.f32.gmra.mxu0 %v1137
  %v1591 = vpop.f32.mrf.mxu0
  %v1592 = vadd.f32 %v1527, %v1591
  %1593 = vmatmul.f32.gmra.mxu0 %v1140
  %v1594 = vpop.f32.mrf.mxu0
  %v1595 = vadd.f32 %v1530, %v1594
  %1596 = vmatmul.f32.gmra.mxu0 %v1143
  %v1597 = vpop.f32.mrf.mxu0
  %v1598 = vadd.f32 %v1533, %v1597
  %1599 = vmatmul.f32.gmra.mxu0 %v1146
  %v1600 = vpop.f32.mrf.mxu0
  %v1601 = vadd.f32 %v1536, %v1600
  %1602 = vmatmul.f32.gmra.mxu0 %v1149
  %v1603 = vpop.f32.mrf.mxu0
  %v1604 = vadd.f32 %v1539, %v1603
  %1605 = vmatmul.f32.gmra.mxu0 %v1152
  %v1606 = vpop.f32.mrf.mxu0
  %v1607 = vadd.f32 %v1542, %v1606
  %1608 = vmatmul.f32.gmra.mxu0 %v1155
  %v1609 = vpop.f32.mrf.mxu0
  %v1610 = vadd.f32 %v1545, %v1609
  %1611 = vmatmul.f32.gmra.mxu0 %v1158
  %v1612 = vpop.f32.mrf.mxu0
  %v1613 = vadd.f32 %v1548, %v1612
  %1614 = vmatmul.f32.gmra.mxu0 %v1161
  %v1615 = vpop.f32.mrf.mxu0
  %v1616 = vadd.f32 %v1551, %v1615
  %1617 = vmatmul.f32.gmra.mxu0 %v1164
  %v1618 = vpop.f32.mrf.mxu0
  %v1619 = vadd.f32 %v1554, %v1618
  %1620 = vmatmul.f32.gmra.mxu0 %v1167
  %v1621 = vpop.f32.mrf.mxu0
  %v1622 = vadd.f32 %v1557, %v1621
  %1623 = vmatmul.f32.gmra.mxu0 %v1170
  %v1624 = vpop.f32.mrf.mxu0
  %v1625 = vadd.f32 %v1560, %v1624
  %1626 = vdwg.mxu0
  %vm1627 = vcmask 523264
  %v1628 = vsel %vm1627, %v1580, 0.0
  %1629 = vadd.xlane.f32.xlu0 %v1628
  %v1630 = vpop.xlane.xlu0 %1629
  %v1631 = vsel %vm1627, %v1583, 0.0
  %1632 = vadd.xlane.f32.xlu0 %v1631
  %v1633 = vpop.xlane.xlu0 %1632
  %v1634 = vsel %vm1627, %v1586, 0.0
  %1635 = vadd.xlane.f32.xlu0 %v1634
  %v1636 = vpop.xlane.xlu0 %1635
  %v1637 = vsel %vm1627, %v1589, 0.0
  %1638 = vadd.xlane.f32.xlu0 %v1637
  %v1639 = vpop.xlane.xlu0 %1638
  %v1640 = vsel %vm1627, %v1592, 0.0
  %1641 = vadd.xlane.f32.xlu0 %v1640
  %v1642 = vpop.xlane.xlu0 %1641
  %v1643 = vsel %vm1627, %v1595, 0.0
  %1644 = vadd.xlane.f32.xlu0 %v1643
  %v1645 = vpop.xlane.xlu0 %1644
  %v1646 = vsel %vm1627, %v1598, 0.0
  %1647 = vadd.xlane.f32.xlu0 %v1646
  %v1648 = vpop.xlane.xlu0 %1647
  %v1649 = vsel %vm1627, %v1601, 0.0
  %1650 = vadd.xlane.f32.xlu0 %v1649
  %v1651 = vpop.xlane.xlu0 %1650
  %v1652 = vsel %vm1627, %v1604, 0.0
  %1653 = vadd.xlane.f32.xlu0 %v1652
  %v1654 = vpop.xlane.xlu0 %1653
  %v1655 = vsel %vm1627, %v1607, 0.0
  %1656 = vadd.xlane.f32.xlu0 %v1655
  %v1657 = vpop.xlane.xlu0 %1656
  %v1658 = vsel %vm1627, %v1610, 0.0
  %1659 = vadd.xlane.f32.xlu0 %v1658
  %v1660 = vpop.xlane.xlu0 %1659
  %v1661 = vsel %vm1627, %v1613, 0.0
  %1662 = vadd.xlane.f32.xlu0 %v1661
  %v1663 = vpop.xlane.xlu0 %1662
  %v1664 = vsel %vm1627, %v1616, 0.0
  %1665 = vadd.xlane.f32.xlu0 %v1664
  %v1666 = vpop.xlane.xlu0 %1665
  %v1667 = vsel %vm1627, %v1619, 0.0
  %1668 = vadd.xlane.f32.xlu0 %v1667
  %v1669 = vpop.xlane.xlu0 %1668
  %v1670 = vsel %vm1627, %v1622, 0.0
  %1671 = vadd.xlane.f32.xlu0 %v1670
  %v1672 = vpop.xlane.xlu0 %1671
  %v1673 = vsel %vm1627, %v1625, 0.0
  %1674 = vadd.xlane.f32.xlu0 %v1673
  %v1675 = vpop.xlane.xlu0 %1674
  %v1676 = vmul.f32 %v1580, %v1580
  %v1677 = vmul.f32 %v1583, %v1583
  %v1678 = vmul.f32 %v1586, %v1586
  %v1679 = vmul.f32 %v1589, %v1589
  %v1680 = vmul.f32 %v1592, %v1592
  %v1681 = vmul.f32 %v1595, %v1595
  %v1682 = vmul.f32 %v1598, %v1598
  %v1683 = vmul.f32 %v1601, %v1601
  %v1684 = vmul.f32 %v1604, %v1604
  %v1685 = vmul.f32 %v1607, %v1607
  %v1686 = vmul.f32 %v1610, %v1610
  %v1687 = vmul.f32 %v1613, %v1613
  %v1688 = vmul.f32 %v1616, %v1616
  %v1689 = vmul.f32 %v1619, %v1619
  %v1690 = vmul.f32 %v1622, %v1622
  %v1691 = vmul.f32 %v1625, %v1625
  %v1692 = vsel %vm1627, %v1676, 0.0
  %1693 = vadd.xlane.f32.xlu0 %v1692
  %v1694 = vpop.xlane.xlu0 %1693
  %v1695 = vsel %vm1627, %v1677, 0.0
  %1696 = vadd.xlane.f32.xlu0 %v1695
  %v1697 = vpop.xlane.xlu0 %1696
  %v1698 = vsel %vm1627, %v1678, 0.0
  %1699 = vadd.xlane.f32.xlu0 %v1698
  %v1700 = vpop.xlane.xlu0 %1699
  %v1701 = vsel %vm1627, %v1679, 0.0
  %1702 = vadd.xlane.f32.xlu0 %v1701
  %v1703 = vpop.xlane.xlu0 %1702
  %v1704 = vsel %vm1627, %v1680, 0.0
  %1705 = vadd.xlane.f32.xlu0 %v1704
  %v1706 = vpop.xlane.xlu0 %1705
  %v1707 = vsel %vm1627, %v1681, 0.0
  %1708 = vadd.xlane.f32.xlu0 %v1707
  %v1709 = vpop.xlane.xlu0 %1708
  %v1710 = vsel %vm1627, %v1682, 0.0
  %1711 = vadd.xlane.f32.xlu0 %v1710
  %v1712 = vpop.xlane.xlu0 %1711
  %v1713 = vsel %vm1627, %v1683, 0.0
  %1714 = vadd.xlane.f32.xlu0 %v1713
  %v1715 = vpop.xlane.xlu0 %1714
  %v1716 = vsel %vm1627, %v1684, 0.0
  %1717 = vadd.xlane.f32.xlu0 %v1716
  %v1718 = vpop.xlane.xlu0 %1717
  %v1719 = vsel %vm1627, %v1685, 0.0
  %1720 = vadd.xlane.f32.xlu0 %v1719
  %v1721 = vpop.xlane.xlu0 %1720
  %v1722 = vsel %vm1627, %v1686, 0.0
  %1723 = vadd.xlane.f32.xlu0 %v1722
  %v1724 = vpop.xlane.xlu0 %1723
  %v1725 = vsel %vm1627, %v1687, 0.0
  %1726 = vadd.xlane.f32.xlu0 %v1725
  %v1727 = vpop.xlane.xlu0 %1726
  %v1728 = vsel %vm1627, %v1688, 0.0
  %1729 = vadd.xlane.f32.xlu0 %v1728
  %v1730 = vpop.xlane.xlu0 %1729
  %v1731 = vsel %vm1627, %v1689, 0.0
  %1732 = vadd.xlane.f32.xlu0 %v1731
  %v1733 = vpop.xlane.xlu0 %1732
  %v1734 = vsel %vm1627, %v1690, 0.0
  %1735 = vadd.xlane.f32.xlu0 %v1734
  %v1736 = vpop.xlane.xlu0 %1735
  %v1737 = vsel %vm1627, %v1691, 0.0
  %1738 = vadd.xlane.f32.xlu0 %v1737
  %v1739 = vpop.xlane.xlu0 %1738
  %vm1740 = vcmask 7168
  %v1741 = vsel %vm1740, %v1630, %v1694
  %v1742 = vsel %vm1740, %v1633, %v1697
  %v1743 = vsel %vm1740, %v1636, %v1700
  %v1744 = vsel %vm1740, %v1639, %v1703
  %v1745 = vsel %vm1740, %v1642, %v1706
  %v1746 = vsel %vm1740, %v1645, %v1709
  %v1747 = vsel %vm1740, %v1648, %v1712
  %v1748 = vsel %vm1740, %v1651, %v1715
  %v1749 = vsel %vm1740, %v1654, %v1718
  %v1750 = vsel %vm1740, %v1657, %v1721
  %v1751 = vsel %vm1740, %v1660, %v1724
  %v1752 = vsel %vm1740, %v1663, %v1727
  %v1753 = vsel %vm1740, %v1666, %v1730
  %v1754 = vsel %vm1740, %v1669, %v1733
  %v1755 = vsel %vm1740, %v1672, %v1736
  %v1756 = vsel %vm1740, %v1675, %v1739
  %v1757 = vld [vmem:[%s5] sm:$0xff]
  %v1758 = vld [vmem:[%s5 + $0x8] sm:$0xff]
  %v1759 = vld [vmem:[%s5 + $0x10] sm:$0xff]
  %v1760 = vld [vmem:[%s5 + $0x18] sm:$0xff]
  %v1761 = vld [vmem:[%s5 + $0x20] sm:$0xff]
  %v1762 = vld [vmem:[%s5 + $0x28] sm:$0xff]
  %v1763 = vld [vmem:[%s5 + $0x30] sm:$0xff]
  %v1764 = vld [vmem:[%s5 + $0x38] sm:$0xff]
  %v1765 = vld [vmem:[%s5 + $0x40] sm:$0xff]
  %v1766 = vld [vmem:[%s5 + $0x48] sm:$0xff]
  %v1767 = vld [vmem:[%s5 + $0x50] sm:$0xff]
  %v1768 = vld [vmem:[%s5 + $0x58] sm:$0xff]
  %v1769 = vld [vmem:[%s5 + $0x60] sm:$0xff]
  %v1770 = vld [vmem:[%s5 + $0x68] sm:$0xff]
  %v1771 = vld [vmem:[%s5 + $0x70] sm:$0xff]
  %v1772 = vld [vmem:[%s5 + $0x78] sm:$0xff]
  %1773 = vmatpush.msra.mxu0 %v1756
  %1774 = vmatpush.msra.mxu0 %v1755
  %1775 = vmatpush.msra.mxu0 %v1754
  %1776 = vmatpush.msra.mxu0 %v1753
  %1777 = vmatpush.msra.mxu0 %v1752
  %1778 = vmatpush.msra.mxu0 %v1751
  %1779 = vmatpush.msra.mxu0 %v1750
  %1780 = vmatpush.msra.mxu0 %v1749
  %1781 = vmatpush.msra.mxu0 %v1748
  %1782 = vmatpush.msra.mxu0 %v1747
  %1783 = vmatpush.msra.mxu0 %v1746
  %1784 = vmatpush.msra.mxu0 %v1745
  %1785 = vmatpush.msra.mxu0 %v1744
  %1786 = vmatpush.msra.mxu0 %v1743
  %1787 = vmatpush.msra.mxu0 %v1742
  %1788 = vmatpush.msra.mxu0 %v1741
  %1789 = vmatmul.f32.gmra.mxu0 %v1757
  %v1790 = vpop.f32.mrf.mxu0
  %v1791 = vadd.f32 0.0, %v1790
  %1792 = vmatmul.f32.gmra.mxu0 %v1758
  %v1793 = vpop.f32.mrf.mxu0
  %v1794 = vadd.f32 0.0, %v1793
  %1795 = vmatmul.f32.gmra.mxu0 %v1759
  %v1796 = vpop.f32.mrf.mxu0
  %v1797 = vadd.f32 0.0, %v1796
  %1798 = vmatmul.f32.gmra.mxu0 %v1760
  %v1799 = vpop.f32.mrf.mxu0
  %v1800 = vadd.f32 0.0, %v1799
  %1801 = vmatmul.f32.gmra.mxu0 %v1761
  %v1802 = vpop.f32.mrf.mxu0
  %v1803 = vadd.f32 0.0, %v1802
  %1804 = vmatmul.f32.gmra.mxu0 %v1762
  %v1805 = vpop.f32.mrf.mxu0
  %v1806 = vadd.f32 0.0, %v1805
  %1807 = vmatmul.f32.gmra.mxu0 %v1763
  %v1808 = vpop.f32.mrf.mxu0
  %v1809 = vadd.f32 0.0, %v1808
  %1810 = vmatmul.f32.gmra.mxu0 %v1764
  %v1811 = vpop.f32.mrf.mxu0
  %v1812 = vadd.f32 0.0, %v1811
  %1813 = vmatmul.f32.gmra.mxu0 %v1765
  %v1814 = vpop.f32.mrf.mxu0
  %v1815 = vadd.f32 0.0, %v1814
  %1816 = vmatmul.f32.gmra.mxu0 %v1766
  %v1817 = vpop.f32.mrf.mxu0
  %v1818 = vadd.f32 0.0, %v1817
  %1819 = vmatmul.f32.gmra.mxu0 %v1767
  %v1820 = vpop.f32.mrf.mxu0
  %v1821 = vadd.f32 0.0, %v1820
  %1822 = vmatmul.f32.gmra.mxu0 %v1768
  %v1823 = vpop.f32.mrf.mxu0
  %v1824 = vadd.f32 0.0, %v1823
  %1825 = vmatmul.f32.gmra.mxu0 %v1769
  %v1826 = vpop.f32.mrf.mxu0
  %v1827 = vadd.f32 0.0, %v1826
  %1828 = vmatmul.f32.gmra.mxu0 %v1770
  %v1829 = vpop.f32.mrf.mxu0
  %v1830 = vadd.f32 0.0, %v1829
  %1831 = vmatmul.f32.gmra.mxu0 %v1771
  %v1832 = vpop.f32.mrf.mxu0
  %v1833 = vadd.f32 0.0, %v1832
  %1834 = vmatmul.f32.gmra.mxu0 %v1772
  %v1835 = vpop.f32.mrf.mxu0
  %v1836 = vadd.f32 0.0, %v1835
  %1837 = vdwg.mxu0
  %v1838 = vmul.f32 %v1791, %v1791
  %v1839 = vmul.f32 %v1794, %v1794
  %v1840 = vmul.f32 %v1797, %v1797
  %v1841 = vmul.f32 %v1800, %v1800
  %v1842 = vmul.f32 %v1803, %v1803
  %v1843 = vmul.f32 %v1806, %v1806
  %v1844 = vmul.f32 %v1809, %v1809
  %v1845 = vmul.f32 %v1812, %v1812
  %v1846 = vmul.f32 %v1815, %v1815
  %v1847 = vmul.f32 %v1818, %v1818
  %v1848 = vmul.f32 %v1821, %v1821
  %v1849 = vmul.f32 %v1824, %v1824
  %v1850 = vmul.f32 %v1827, %v1827
  %v1851 = vmul.f32 %v1830, %v1830
  %v1852 = vmul.f32 %v1833, %v1833
  %v1853 = vmul.f32 %v1836, %v1836
  %1870 = vrot.lane.b32.xlu0 %v1838, 1
  %v1871 = vpop.permute.xlu0 %1870
  %1872 = vrot.lane.b32.xlu0 %v1839, 1
  %v1873 = vpop.permute.xlu0 %1872
  %1874 = vrot.lane.b32.xlu0 %v1840, 1
  %v1875 = vpop.permute.xlu0 %1874
  %1876 = vrot.lane.b32.xlu0 %v1841, 1
  %v1877 = vpop.permute.xlu0 %1876
  %1878 = vrot.lane.b32.xlu0 %v1842, 1
  %v1879 = vpop.permute.xlu0 %1878
  %1880 = vrot.lane.b32.xlu0 %v1843, 1
  %v1881 = vpop.permute.xlu0 %1880
  %1882 = vrot.lane.b32.xlu0 %v1844, 1
  %v1883 = vpop.permute.xlu0 %1882
  %1884 = vrot.lane.b32.xlu0 %v1845, 1
  %v1885 = vpop.permute.xlu0 %1884
  %1886 = vrot.lane.b32.xlu0 %v1846, 1
  %v1887 = vpop.permute.xlu0 %1886
  %1888 = vrot.lane.b32.xlu0 %v1847, 1
  %v1889 = vpop.permute.xlu0 %1888
  %1890 = vrot.lane.b32.xlu0 %v1848, 1
  %v1891 = vpop.permute.xlu0 %1890
  %1892 = vrot.lane.b32.xlu0 %v1849, 1
  %v1893 = vpop.permute.xlu0 %1892
  %1894 = vrot.lane.b32.xlu0 %v1850, 1
  %v1895 = vpop.permute.xlu0 %1894
  %1896 = vrot.lane.b32.xlu0 %v1851, 1
  %v1897 = vpop.permute.xlu0 %1896
  %1898 = vrot.lane.b32.xlu0 %v1852, 1
  %v1899 = vpop.permute.xlu0 %1898
  %1900 = vrot.lane.b32.xlu0 %v1853, 1
  %v1901 = vpop.permute.xlu0 %1900
  %v1918 = vsub.f32 %v1791, %v1871
  %v1919 = vsub.f32 %v1794, %v1873
  %v1920 = vsub.f32 %v1797, %v1875
  %v1921 = vsub.f32 %v1800, %v1877
  %v1922 = vsub.f32 %v1803, %v1879
  %v1923 = vsub.f32 %v1806, %v1881
  %v1924 = vsub.f32 %v1809, %v1883
  %v1925 = vsub.f32 %v1812, %v1885
  %v1926 = vsub.f32 %v1815, %v1887
  %v1927 = vsub.f32 %v1818, %v1889
  %v1928 = vsub.f32 %v1821, %v1891
  %v1929 = vsub.f32 %v1824, %v1893
  %v1930 = vsub.f32 %v1827, %v1895
  %v1931 = vsub.f32 %v1830, %v1897
  %v1932 = vsub.f32 %v1833, %v1899
  %v1933 = vsub.f32 %v1836, %v1901
  %v1934 = vmax.f32 %v1918, 0.0
  %v1935 = vmax.f32 %v1919, 0.0
  %v1936 = vmax.f32 %v1920, 0.0
  %v1937 = vmax.f32 %v1921, 0.0
  %v1938 = vmax.f32 %v1922, 0.0
  %v1939 = vmax.f32 %v1923, 0.0
  %v1940 = vmax.f32 %v1924, 0.0
  %v1941 = vmax.f32 %v1925, 0.0
  %v1942 = vmax.f32 %v1926, 0.0
  %v1943 = vmax.f32 %v1927, 0.0
  %v1944 = vmax.f32 %v1928, 0.0
  %v1945 = vmax.f32 %v1929, 0.0
  %v1946 = vmax.f32 %v1930, 0.0
  %v1947 = vmax.f32 %v1931, 0.0
  %v1948 = vmax.f32 %v1932, 0.0
  %v1949 = vmax.f32 %v1933, 0.0
  %v1950 = vld [vmem:[%s3] sm:$0xff]
  %v1951 = vld [vmem:[%s3 + $0x8] sm:$0xff]
  %v1952 = vld [vmem:[%s3 + $0x10] sm:$0xff]
  %v1953 = vld [vmem:[%s3 + $0x18] sm:$0xff]
  %v1954 = vld [vmem:[%s3 + $0x20] sm:$0xff]
  %v1955 = vld [vmem:[%s3 + $0x28] sm:$0xff]
  %v1956 = vld [vmem:[%s3 + $0x30] sm:$0xff]
  %v1957 = vld [vmem:[%s3 + $0x38] sm:$0xff]
  %v1958 = vld [vmem:[%s3 + $0x40] sm:$0xff]
  %v1959 = vld [vmem:[%s3 + $0x48] sm:$0xff]
  %v1960 = vld [vmem:[%s3 + $0x50] sm:$0xff]
  %v1961 = vld [vmem:[%s3 + $0x58] sm:$0xff]
  %v1962 = vld [vmem:[%s3 + $0x60] sm:$0xff]
  %v1963 = vld [vmem:[%s3 + $0x68] sm:$0xff]
  %v1964 = vld [vmem:[%s3 + $0x70] sm:$0xff]
  %v1965 = vld [vmem:[%s3 + $0x78] sm:$0xff]
  %v1966 = vadd.f32 %v1934, 1e-05
  %v1967 = vadd.f32 %v1935, 1e-05
  %v1968 = vadd.f32 %v1936, 1e-05
  %v1969 = vadd.f32 %v1937, 1e-05
  %v1970 = vadd.f32 %v1938, 1e-05
  %v1971 = vadd.f32 %v1939, 1e-05
  %v1972 = vadd.f32 %v1940, 1e-05
  %v1973 = vadd.f32 %v1941, 1e-05
  %v1974 = vadd.f32 %v1942, 1e-05
  %v1975 = vadd.f32 %v1943, 1e-05
  %v1976 = vadd.f32 %v1944, 1e-05
  %v1977 = vadd.f32 %v1945, 1e-05
  %v1978 = vadd.f32 %v1946, 1e-05
  %v1979 = vadd.f32 %v1947, 1e-05
  %v1980 = vadd.f32 %v1948, 1e-05
  %v1981 = vadd.f32 %v1949, 1e-05
  %v1982 = vrsqrt.pop %v1966
  %v1983 = vmul.f32 %v1982, %v1966
  %v1984 = vmul.f32 %v1983, %v1982
  %v1985 = vmul.f32 0.5, %v1984
  %v1986 = vsub.f32 1.5, %v1985
  %v1987 = vmul.f32 %v1982, %v1986
  %vm1988 = vweird.f32 %v1966
  %vm1989 = vweird.f32 %v1982
  %vm1990 = vmor %vm1988, %vm1989
  %v1991 = vsel %vm1990, %v1982, %v1987
  %v1992 = vrsqrt.pop %v1967
  %v1993 = vmul.f32 %v1992, %v1967
  %v1994 = vmul.f32 %v1993, %v1992
  %v1995 = vmul.f32 0.5, %v1994
  %v1996 = vsub.f32 1.5, %v1995
  %v1997 = vmul.f32 %v1992, %v1996
  %vm1998 = vweird.f32 %v1967
  %vm1999 = vweird.f32 %v1992
  %vm2000 = vmor %vm1998, %vm1999
  %v2001 = vsel %vm2000, %v1992, %v1997
  %v2002 = vrsqrt.pop %v1968
  %v2003 = vmul.f32 %v2002, %v1968
  %v2004 = vmul.f32 %v2003, %v2002
  %v2005 = vmul.f32 0.5, %v2004
  %v2006 = vsub.f32 1.5, %v2005
  %v2007 = vmul.f32 %v2002, %v2006
  %vm2008 = vweird.f32 %v1968
  %vm2009 = vweird.f32 %v2002
  %vm2010 = vmor %vm2008, %vm2009
  %v2011 = vsel %vm2010, %v2002, %v2007
  %v2012 = vrsqrt.pop %v1969
  %v2013 = vmul.f32 %v2012, %v1969
  %v2014 = vmul.f32 %v2013, %v2012
  %v2015 = vmul.f32 0.5, %v2014
  %v2016 = vsub.f32 1.5, %v2015
  %v2017 = vmul.f32 %v2012, %v2016
  %vm2018 = vweird.f32 %v1969
  %vm2019 = vweird.f32 %v2012
  %vm2020 = vmor %vm2018, %vm2019
  %v2021 = vsel %vm2020, %v2012, %v2017
  %v2022 = vrsqrt.pop %v1970
  %v2023 = vmul.f32 %v2022, %v1970
  %v2024 = vmul.f32 %v2023, %v2022
  %v2025 = vmul.f32 0.5, %v2024
  %v2026 = vsub.f32 1.5, %v2025
  %v2027 = vmul.f32 %v2022, %v2026
  %vm2028 = vweird.f32 %v1970
  %vm2029 = vweird.f32 %v2022
  %vm2030 = vmor %vm2028, %vm2029
  %v2031 = vsel %vm2030, %v2022, %v2027
  %v2032 = vrsqrt.pop %v1971
  %v2033 = vmul.f32 %v2032, %v1971
  %v2034 = vmul.f32 %v2033, %v2032
  %v2035 = vmul.f32 0.5, %v2034
  %v2036 = vsub.f32 1.5, %v2035
  %v2037 = vmul.f32 %v2032, %v2036
  %vm2038 = vweird.f32 %v1971
  %vm2039 = vweird.f32 %v2032
  %vm2040 = vmor %vm2038, %vm2039
  %v2041 = vsel %vm2040, %v2032, %v2037
  %v2042 = vrsqrt.pop %v1972
  %v2043 = vmul.f32 %v2042, %v1972
  %v2044 = vmul.f32 %v2043, %v2042
  %v2045 = vmul.f32 0.5, %v2044
  %v2046 = vsub.f32 1.5, %v2045
  %v2047 = vmul.f32 %v2042, %v2046
  %vm2048 = vweird.f32 %v1972
  %vm2049 = vweird.f32 %v2042
  %vm2050 = vmor %vm2048, %vm2049
  %v2051 = vsel %vm2050, %v2042, %v2047
  %v2052 = vrsqrt.pop %v1973
  %v2053 = vmul.f32 %v2052, %v1973
  %v2054 = vmul.f32 %v2053, %v2052
  %v2055 = vmul.f32 0.5, %v2054
  %v2056 = vsub.f32 1.5, %v2055
  %v2057 = vmul.f32 %v2052, %v2056
  %vm2058 = vweird.f32 %v1973
  %vm2059 = vweird.f32 %v2052
  %vm2060 = vmor %vm2058, %vm2059
  %v2061 = vsel %vm2060, %v2052, %v2057
  %v2062 = vrsqrt.pop %v1974
  %v2063 = vmul.f32 %v2062, %v1974
  %v2064 = vmul.f32 %v2063, %v2062
  %v2065 = vmul.f32 0.5, %v2064
  %v2066 = vsub.f32 1.5, %v2065
  %v2067 = vmul.f32 %v2062, %v2066
  %vm2068 = vweird.f32 %v1974
  %vm2069 = vweird.f32 %v2062
  %vm2070 = vmor %vm2068, %vm2069
  %v2071 = vsel %vm2070, %v2062, %v2067
  %v2072 = vrsqrt.pop %v1975
  %v2073 = vmul.f32 %v2072, %v1975
  %v2074 = vmul.f32 %v2073, %v2072
  %v2075 = vmul.f32 0.5, %v2074
  %v2076 = vsub.f32 1.5, %v2075
  %v2077 = vmul.f32 %v2072, %v2076
  %vm2078 = vweird.f32 %v1975
  %vm2079 = vweird.f32 %v2072
  %vm2080 = vmor %vm2078, %vm2079
  %v2081 = vsel %vm2080, %v2072, %v2077
  %v2082 = vrsqrt.pop %v1976
  %v2083 = vmul.f32 %v2082, %v1976
  %v2084 = vmul.f32 %v2083, %v2082
  %v2085 = vmul.f32 0.5, %v2084
  %v2086 = vsub.f32 1.5, %v2085
  %v2087 = vmul.f32 %v2082, %v2086
  %vm2088 = vweird.f32 %v1976
  %vm2089 = vweird.f32 %v2082
  %vm2090 = vmor %vm2088, %vm2089
  %v2091 = vsel %vm2090, %v2082, %v2087
  %v2092 = vrsqrt.pop %v1977
  %v2093 = vmul.f32 %v2092, %v1977
  %v2094 = vmul.f32 %v2093, %v2092
  %v2095 = vmul.f32 0.5, %v2094
  %v2096 = vsub.f32 1.5, %v2095
  %v2097 = vmul.f32 %v2092, %v2096
  %vm2098 = vweird.f32 %v1977
  %vm2099 = vweird.f32 %v2092
  %vm2100 = vmor %vm2098, %vm2099
  %v2101 = vsel %vm2100, %v2092, %v2097
  %v2102 = vrsqrt.pop %v1978
  %v2103 = vmul.f32 %v2102, %v1978
  %v2104 = vmul.f32 %v2103, %v2102
  %v2105 = vmul.f32 0.5, %v2104
  %v2106 = vsub.f32 1.5, %v2105
  %v2107 = vmul.f32 %v2102, %v2106
  %vm2108 = vweird.f32 %v1978
  %vm2109 = vweird.f32 %v2102
  %vm2110 = vmor %vm2108, %vm2109
  %v2111 = vsel %vm2110, %v2102, %v2107
  %v2112 = vrsqrt.pop %v1979
  %v2113 = vmul.f32 %v2112, %v1979
  %v2114 = vmul.f32 %v2113, %v2112
  %v2115 = vmul.f32 0.5, %v2114
  %v2116 = vsub.f32 1.5, %v2115
  %v2117 = vmul.f32 %v2112, %v2116
  %vm2118 = vweird.f32 %v1979
  %vm2119 = vweird.f32 %v2112
  %vm2120 = vmor %vm2118, %vm2119
  %v2121 = vsel %vm2120, %v2112, %v2117
  %v2122 = vrsqrt.pop %v1980
  %v2123 = vmul.f32 %v2122, %v1980
  %v2124 = vmul.f32 %v2123, %v2122
  %v2125 = vmul.f32 0.5, %v2124
  %v2126 = vsub.f32 1.5, %v2125
  %v2127 = vmul.f32 %v2122, %v2126
  %vm2128 = vweird.f32 %v1980
  %vm2129 = vweird.f32 %v2122
  %vm2130 = vmor %vm2128, %vm2129
  %v2131 = vsel %vm2130, %v2122, %v2127
  %v2132 = vrsqrt.pop %v1981
  %v2133 = vmul.f32 %v2132, %v1981
  %v2134 = vmul.f32 %v2133, %v2132
  %v2135 = vmul.f32 0.5, %v2134
  %v2136 = vsub.f32 1.5, %v2135
  %v2137 = vmul.f32 %v2132, %v2136
  %vm2138 = vweird.f32 %v1981
  %vm2139 = vweird.f32 %v2132
  %vm2140 = vmor %vm2138, %vm2139
  %v2141 = vsel %vm2140, %v2132, %v2137
  %2158 = vrot.lane.b32.xlu0 %v1991, 127
  %v2159 = vpop.permute.xlu0 %2158
  %2160 = vrot.lane.b32.xlu0 %v2001, 127
  %v2161 = vpop.permute.xlu0 %2160
  %2162 = vrot.lane.b32.xlu0 %v2011, 127
  %v2163 = vpop.permute.xlu0 %2162
  %2164 = vrot.lane.b32.xlu0 %v2021, 127
  %v2165 = vpop.permute.xlu0 %2164
  %2166 = vrot.lane.b32.xlu0 %v2031, 127
  %v2167 = vpop.permute.xlu0 %2166
  %2168 = vrot.lane.b32.xlu0 %v2041, 127
  %v2169 = vpop.permute.xlu0 %2168
  %2170 = vrot.lane.b32.xlu0 %v2051, 127
  %v2171 = vpop.permute.xlu0 %2170
  %2172 = vrot.lane.b32.xlu0 %v2061, 127
  %v2173 = vpop.permute.xlu0 %2172
  %2174 = vrot.lane.b32.xlu0 %v2071, 127
  %v2175 = vpop.permute.xlu0 %2174
  %2176 = vrot.lane.b32.xlu0 %v2081, 127
  %v2177 = vpop.permute.xlu0 %2176
  %2178 = vrot.lane.b32.xlu0 %v2091, 127
  %v2179 = vpop.permute.xlu0 %2178
  %2180 = vrot.lane.b32.xlu0 %v2101, 127
  %v2181 = vpop.permute.xlu0 %2180
  %2182 = vrot.lane.b32.xlu0 %v2111, 127
  %v2183 = vpop.permute.xlu0 %2182
  %2184 = vrot.lane.b32.xlu0 %v2121, 127
  %v2185 = vpop.permute.xlu0 %2184
  %2186 = vrot.lane.b32.xlu0 %v2131, 127
  %v2187 = vpop.permute.xlu0 %2186
  %2188 = vrot.lane.b32.xlu0 %v2141, 127
  %v2189 = vpop.permute.xlu0 %2188
  %v2206 = vmul.f32 %v1950, %v2159
  %v2207 = vmul.f32 %v1951, %v2161
  %v2208 = vmul.f32 %v1952, %v2163
  %v2209 = vmul.f32 %v1953, %v2165
  %v2210 = vmul.f32 %v1954, %v2167
  %v2211 = vmul.f32 %v1955, %v2169
  %v2212 = vmul.f32 %v1956, %v2171
  %v2213 = vmul.f32 %v1957, %v2173
  %v2214 = vmul.f32 %v1958, %v2175
  %v2215 = vmul.f32 %v1959, %v2177
  %v2216 = vmul.f32 %v1960, %v2179
  %v2217 = vmul.f32 %v1961, %v2181
  %v2218 = vmul.f32 %v1962, %v2183
  %v2219 = vmul.f32 %v1963, %v2185
  %v2220 = vmul.f32 %v1964, %v2187
  %v2221 = vmul.f32 %v1965, %v2189
  %v2222 = vld [vmem:[%s4] sm:$0xff]
  %v2223 = vld [vmem:[%s4 + $0x8] sm:$0xff]
  %v2224 = vld [vmem:[%s4 + $0x10] sm:$0xff]
  %v2225 = vld [vmem:[%s4 + $0x18] sm:$0xff]
  %v2226 = vld [vmem:[%s4 + $0x20] sm:$0xff]
  %v2227 = vld [vmem:[%s4 + $0x28] sm:$0xff]
  %v2228 = vld [vmem:[%s4 + $0x30] sm:$0xff]
  %v2229 = vld [vmem:[%s4 + $0x38] sm:$0xff]
  %v2230 = vld [vmem:[%s4 + $0x40] sm:$0xff]
  %v2231 = vld [vmem:[%s4 + $0x48] sm:$0xff]
  %v2232 = vld [vmem:[%s4 + $0x50] sm:$0xff]
  %v2233 = vld [vmem:[%s4 + $0x58] sm:$0xff]
  %v2234 = vld [vmem:[%s4 + $0x60] sm:$0xff]
  %v2235 = vld [vmem:[%s4 + $0x68] sm:$0xff]
  %v2236 = vld [vmem:[%s4 + $0x70] sm:$0xff]
  %v2237 = vld [vmem:[%s4 + $0x78] sm:$0xff]
  %v2238 = vmul.f32 %v1791, %v2206
  %v2239 = vmul.f32 %v1794, %v2207
  %v2240 = vmul.f32 %v1797, %v2208
  %v2241 = vmul.f32 %v1800, %v2209
  %v2242 = vmul.f32 %v1803, %v2210
  %v2243 = vmul.f32 %v1806, %v2211
  %v2244 = vmul.f32 %v1809, %v2212
  %v2245 = vmul.f32 %v1812, %v2213
  %v2246 = vmul.f32 %v1815, %v2214
  %v2247 = vmul.f32 %v1818, %v2215
  %v2248 = vmul.f32 %v1821, %v2216
  %v2249 = vmul.f32 %v1824, %v2217
  %v2250 = vmul.f32 %v1827, %v2218
  %v2251 = vmul.f32 %v1830, %v2219
  %v2252 = vmul.f32 %v1833, %v2220
  %v2253 = vmul.f32 %v1836, %v2221
  %v2254 = vsub.f32 %v2222, %v2238
  %v2255 = vsub.f32 %v2223, %v2239
  %v2256 = vsub.f32 %v2224, %v2240
  %v2257 = vsub.f32 %v2225, %v2241
  %v2258 = vsub.f32 %v2226, %v2242
  %v2259 = vsub.f32 %v2227, %v2243
  %v2260 = vsub.f32 %v2228, %v2244
  %v2261 = vsub.f32 %v2229, %v2245
  %v2262 = vsub.f32 %v2230, %v2246
  %v2263 = vsub.f32 %v2231, %v2247
  %v2264 = vsub.f32 %v2232, %v2248
  %v2265 = vsub.f32 %v2233, %v2249
  %v2266 = vsub.f32 %v2234, %v2250
  %v2267 = vsub.f32 %v2235, %v2251
  %v2268 = vsub.f32 %v2236, %v2252
  %v2269 = vsub.f32 %v2237, %v2253
  %2271 = vset.pattern.permute.xlu0 0
  %2272 = vperm.xlu0 %2271, %v2206
  %v2273 = vpop.permute.xlu0 %2272
  %2276 = vset.pattern.permute.xlu0 0
  %2277 = vperm.xlu0 %2276, %v2207
  %v2278 = vpop.permute.xlu0 %2277
  %2281 = vset.pattern.permute.xlu0 0
  %2282 = vperm.xlu0 %2281, %v2208
  %v2283 = vpop.permute.xlu0 %2282
  %2286 = vset.pattern.permute.xlu0 0
  %2287 = vperm.xlu0 %2286, %v2209
  %v2288 = vpop.permute.xlu0 %2287
  %2291 = vset.pattern.permute.xlu0 0
  %2292 = vperm.xlu0 %2291, %v2210
  %v2293 = vpop.permute.xlu0 %2292
  %2296 = vset.pattern.permute.xlu0 0
  %2297 = vperm.xlu0 %2296, %v2211
  %v2298 = vpop.permute.xlu0 %2297
  %2301 = vset.pattern.permute.xlu0 0
  %2302 = vperm.xlu0 %2301, %v2212
  %v2303 = vpop.permute.xlu0 %2302
  %2306 = vset.pattern.permute.xlu0 0
  %2307 = vperm.xlu0 %2306, %v2213
  %v2308 = vpop.permute.xlu0 %2307
  %2311 = vset.pattern.permute.xlu0 0
  %2312 = vperm.xlu0 %2311, %v2214
  %v2313 = vpop.permute.xlu0 %2312
  %2316 = vset.pattern.permute.xlu0 0
  %2317 = vperm.xlu0 %2316, %v2215
  %v2318 = vpop.permute.xlu0 %2317
  %2321 = vset.pattern.permute.xlu0 0
  %2322 = vperm.xlu0 %2321, %v2216
  %v2323 = vpop.permute.xlu0 %2322
  %2326 = vset.pattern.permute.xlu0 0
  %2327 = vperm.xlu0 %2326, %v2217
  %v2328 = vpop.permute.xlu0 %2327
  %2331 = vset.pattern.permute.xlu0 0
  %2332 = vperm.xlu0 %2331, %v2218
  %v2333 = vpop.permute.xlu0 %2332
  %2336 = vset.pattern.permute.xlu0 0
  %2337 = vperm.xlu0 %2336, %v2219
  %v2338 = vpop.permute.xlu0 %2337
  %2341 = vset.pattern.permute.xlu0 0
  %2342 = vperm.xlu0 %2341, %v2220
  %v2343 = vpop.permute.xlu0 %2342
  %2346 = vset.pattern.permute.xlu0 0
  %2347 = vperm.xlu0 %2346, %v2221
  %v2348 = vpop.permute.xlu0 %2347
  %v2350 = vmul.f32 %v1580, %v2273
  %v2351 = vmul.f32 %v1583, %v2278
  %v2352 = vmul.f32 %v1586, %v2283
  %v2353 = vmul.f32 %v1589, %v2288
  %v2354 = vmul.f32 %v1592, %v2293
  %v2355 = vmul.f32 %v1595, %v2298
  %v2356 = vmul.f32 %v1598, %v2303
  %v2357 = vmul.f32 %v1601, %v2308
  %v2358 = vmul.f32 %v1604, %v2313
  %v2359 = vmul.f32 %v1607, %v2318
  %v2360 = vmul.f32 %v1610, %v2323
  %v2361 = vmul.f32 %v1613, %v2328
  %v2362 = vmul.f32 %v1616, %v2333
  %v2363 = vmul.f32 %v1619, %v2338
  %v2364 = vmul.f32 %v1622, %v2343
  %v2365 = vmul.f32 %v1625, %v2348
  %2367 = vset.pattern.permute.xlu0 0
  %2368 = vperm.xlu0 %2367, %v2254
  %v2369 = vpop.permute.xlu0 %2368
  %2372 = vset.pattern.permute.xlu0 0
  %2373 = vperm.xlu0 %2372, %v2255
  %v2374 = vpop.permute.xlu0 %2373
  %2377 = vset.pattern.permute.xlu0 0
  %2378 = vperm.xlu0 %2377, %v2256
  %v2379 = vpop.permute.xlu0 %2378
  %2382 = vset.pattern.permute.xlu0 0
  %2383 = vperm.xlu0 %2382, %v2257
  %v2384 = vpop.permute.xlu0 %2383
  %2387 = vset.pattern.permute.xlu0 0
  %2388 = vperm.xlu0 %2387, %v2258
  %v2389 = vpop.permute.xlu0 %2388
  %2392 = vset.pattern.permute.xlu0 0
  %2393 = vperm.xlu0 %2392, %v2259
  %v2394 = vpop.permute.xlu0 %2393
  %2397 = vset.pattern.permute.xlu0 0
  %2398 = vperm.xlu0 %2397, %v2260
  %v2399 = vpop.permute.xlu0 %2398
  %2402 = vset.pattern.permute.xlu0 0
  %2403 = vperm.xlu0 %2402, %v2261
  %v2404 = vpop.permute.xlu0 %2403
  %2407 = vset.pattern.permute.xlu0 0
  %2408 = vperm.xlu0 %2407, %v2262
  %v2409 = vpop.permute.xlu0 %2408
  %2412 = vset.pattern.permute.xlu0 0
  %2413 = vperm.xlu0 %2412, %v2263
  %v2414 = vpop.permute.xlu0 %2413
  %2417 = vset.pattern.permute.xlu0 0
  %2418 = vperm.xlu0 %2417, %v2264
  %v2419 = vpop.permute.xlu0 %2418
  %2422 = vset.pattern.permute.xlu0 0
  %2423 = vperm.xlu0 %2422, %v2265
  %v2424 = vpop.permute.xlu0 %2423
  %2427 = vset.pattern.permute.xlu0 0
  %2428 = vperm.xlu0 %2427, %v2266
  %v2429 = vpop.permute.xlu0 %2428
  %2432 = vset.pattern.permute.xlu0 0
  %2433 = vperm.xlu0 %2432, %v2267
  %v2434 = vpop.permute.xlu0 %2433
  %2437 = vset.pattern.permute.xlu0 0
  %2438 = vperm.xlu0 %2437, %v2268
  %v2439 = vpop.permute.xlu0 %2438
  %2442 = vset.pattern.permute.xlu0 0
  %2443 = vperm.xlu0 %2442, %v2269
  %v2444 = vpop.permute.xlu0 %2443
  %v2446 = vadd.f32 %v2350, %v2369
  %v2447 = vadd.f32 %v2351, %v2374
  %v2448 = vadd.f32 %v2352, %v2379
  %v2449 = vadd.f32 %v2353, %v2384
  %v2450 = vadd.f32 %v2354, %v2389
  %v2451 = vadd.f32 %v2355, %v2394
  %v2452 = vadd.f32 %v2356, %v2399
  %v2453 = vadd.f32 %v2357, %v2404
  %v2454 = vadd.f32 %v2358, %v2409
  %v2455 = vadd.f32 %v2359, %v2414
  %v2456 = vadd.f32 %v2360, %v2419
  %v2457 = vadd.f32 %v2361, %v2424
  %v2458 = vadd.f32 %v2362, %v2429
  %v2459 = vadd.f32 %v2363, %v2434
  %v2460 = vadd.f32 %v2364, %v2439
  %v2461 = vadd.f32 %v2365, %v2444
  %v2462 = vmax.f32 %v2446, 0.0
  %v2463 = vmax.f32 %v2447, 0.0
  %v2464 = vmax.f32 %v2448, 0.0
  %v2465 = vmax.f32 %v2449, 0.0
  %v2466 = vmax.f32 %v2450, 0.0
  %v2467 = vmax.f32 %v2451, 0.0
  %v2468 = vmax.f32 %v2452, 0.0
  %v2469 = vmax.f32 %v2453, 0.0
  %v2470 = vmax.f32 %v2454, 0.0
  %v2471 = vmax.f32 %v2455, 0.0
  %v2472 = vmax.f32 %v2456, 0.0
  %v2473 = vmax.f32 %v2457, 0.0
  %v2474 = vmax.f32 %v2458, 0.0
  %v2475 = vmax.f32 %v2459, 0.0
  %v2476 = vmax.f32 %v2460, 0.0
  %v2477 = vmax.f32 %v2461, 0.0
  %v2478 = vld [vmem:[%s6] sm:$0xff]
  %v2479 = vld [vmem:[%s6 + $0x8] sm:$0xff]
  %v2480 = vld [vmem:[%s6 + $0x10] sm:$0xff]
  %v2481 = vld [vmem:[%s6 + $0x18] sm:$0xff]
  %v2482 = vld [vmem:[%s6 + $0x20] sm:$0xff]
  %v2483 = vld [vmem:[%s6 + $0x28] sm:$0xff]
  %v2484 = vld [vmem:[%s6 + $0x30] sm:$0xff]
  %v2485 = vld [vmem:[%s6 + $0x38] sm:$0xff]
  %v2487 = vsel %vm1627, %v2462, 0
  %v2490 = vsel %vm1627, %v2463, 0
  %v2493 = vsel %vm1627, %v2464, 0
  %v2496 = vsel %vm1627, %v2465, 0
  %v2499 = vsel %vm1627, %v2466, 0
  %v2502 = vsel %vm1627, %v2467, 0
  %v2505 = vsel %vm1627, %v2468, 0
  %v2508 = vsel %vm1627, %v2469, 0
  %v2511 = vsel %vm1627, %v2470, 0
  %v2514 = vsel %vm1627, %v2471, 0
  %v2517 = vsel %vm1627, %v2472, 0
  %v2520 = vsel %vm1627, %v2473, 0
  %v2523 = vsel %vm1627, %v2474, 0
  %v2526 = vsel %vm1627, %v2475, 0
  %v2529 = vsel %vm1627, %v2476, 0
  %v2532 = vsel %vm1627, %v2477, 0
  %2534 = vmatpush.msra.mxu0 0.0
  %2535 = vmatpush.msra.mxu0 0.0
  %2536 = vmatpush.msra.mxu0 0.0
  %2537 = vmatpush.msra.mxu0 0.0
  %2538 = vmatpush.msra.mxu0 0.0
  %2539 = vmatpush.msra.mxu0 0.0
  %2540 = vmatpush.msra.mxu0 0.0
  %2541 = vmatpush.msra.mxu0 0.0
  %2542 = vmatpush.msra.mxu0 %v2485
  %2543 = vmatpush.msra.mxu0 %v2484
  %2544 = vmatpush.msra.mxu0 %v2483
  %2545 = vmatpush.msra.mxu0 %v2482
  %2546 = vmatpush.msra.mxu0 %v2481
  %2547 = vmatpush.msra.mxu0 %v2480
  %2548 = vmatpush.msra.mxu0 %v2479
  %2549 = vmatpush.msra.mxu0 %v2478
  %2550 = vmatmul.f32.gmra.mxu0 %v2487
  %v2551 = vpop.f32.mrf.mxu0
  %v2552 = vadd.f32 0.0, %v2551
  %2553 = vmatmul.f32.gmra.mxu0 %v2490
  %v2554 = vpop.f32.mrf.mxu0
  %v2555 = vadd.f32 0.0, %v2554
  %2556 = vmatmul.f32.gmra.mxu0 %v2493
  %v2557 = vpop.f32.mrf.mxu0
  %v2558 = vadd.f32 0.0, %v2557
  %2559 = vmatmul.f32.gmra.mxu0 %v2496
  %v2560 = vpop.f32.mrf.mxu0
  %v2561 = vadd.f32 0.0, %v2560
  %2562 = vmatmul.f32.gmra.mxu0 %v2499
  %v2563 = vpop.f32.mrf.mxu0
  %v2564 = vadd.f32 0.0, %v2563
  %2565 = vmatmul.f32.gmra.mxu0 %v2502
  %v2566 = vpop.f32.mrf.mxu0
  %v2567 = vadd.f32 0.0, %v2566
  %2568 = vmatmul.f32.gmra.mxu0 %v2505
  %v2569 = vpop.f32.mrf.mxu0
  %v2570 = vadd.f32 0.0, %v2569
  %2571 = vmatmul.f32.gmra.mxu0 %v2508
  %v2572 = vpop.f32.mrf.mxu0
  %v2573 = vadd.f32 0.0, %v2572
  %2574 = vmatmul.f32.gmra.mxu0 %v2511
  %v2575 = vpop.f32.mrf.mxu0
  %v2576 = vadd.f32 0.0, %v2575
  %2577 = vmatmul.f32.gmra.mxu0 %v2514
  %v2578 = vpop.f32.mrf.mxu0
  %v2579 = vadd.f32 0.0, %v2578
  %2580 = vmatmul.f32.gmra.mxu0 %v2517
  %v2581 = vpop.f32.mrf.mxu0
  %v2582 = vadd.f32 0.0, %v2581
  %2583 = vmatmul.f32.gmra.mxu0 %v2520
  %v2584 = vpop.f32.mrf.mxu0
  %v2585 = vadd.f32 0.0, %v2584
  %2586 = vmatmul.f32.gmra.mxu0 %v2523
  %v2587 = vpop.f32.mrf.mxu0
  %v2588 = vadd.f32 0.0, %v2587
  %2589 = vmatmul.f32.gmra.mxu0 %v2526
  %v2590 = vpop.f32.mrf.mxu0
  %v2591 = vadd.f32 0.0, %v2590
  %2592 = vmatmul.f32.gmra.mxu0 %v2529
  %v2593 = vpop.f32.mrf.mxu0
  %v2594 = vadd.f32 0.0, %v2593
  %2595 = vmatmul.f32.gmra.mxu0 %v2532
  %v2596 = vpop.f32.mrf.mxu0
  %v2597 = vadd.f32 0.0, %v2596
  %2598 = vdwg.mxu0
  %v2599 = vld [vmem:[%s7] sm:$0xff]
  %v2600 = vld [vmem:[%s7 + $0x8] sm:$0xff]
  %v2601 = vld [vmem:[%s7 + $0x10] sm:$0xff]
  %v2602 = vld [vmem:[%s7 + $0x18] sm:$0xff]
  %v2603 = vld [vmem:[%s7 + $0x20] sm:$0xff]
  %v2604 = vld [vmem:[%s7 + $0x28] sm:$0xff]
  %v2605 = vld [vmem:[%s7 + $0x30] sm:$0xff]
  %v2606 = vld [vmem:[%s7 + $0x38] sm:$0xff]
  %v2607 = vld [vmem:[%s7 + $0x40] sm:$0xff]
  %v2608 = vld [vmem:[%s7 + $0x48] sm:$0xff]
  %v2609 = vld [vmem:[%s7 + $0x50] sm:$0xff]
  %v2610 = vld [vmem:[%s7 + $0x58] sm:$0xff]
  %v2611 = vld [vmem:[%s7 + $0x60] sm:$0xff]
  %v2612 = vld [vmem:[%s7 + $0x68] sm:$0xff]
  %v2613 = vld [vmem:[%s7 + $0x70] sm:$0xff]
  %v2614 = vld [vmem:[%s7 + $0x78] sm:$0xff]
  %v2615 = vld [vmem:[%s7 + $0x80] sm:$0xff]
  %v2616 = vld [vmem:[%s7 + $0x88] sm:$0xff]
  %v2617 = vld [vmem:[%s7 + $0x90] sm:$0xff]
  %v2618 = vld [vmem:[%s7 + $0x98] sm:$0xff]
  %v2619 = vld [vmem:[%s7 + $0xa0] sm:$0xff]
  %v2620 = vld [vmem:[%s7 + $0xa8] sm:$0xff]
  %v2621 = vld [vmem:[%s7 + $0xb0] sm:$0xff]
  %v2622 = vld [vmem:[%s7 + $0xb8] sm:$0xff]
  %v2623 = vld [vmem:[%s7 + $0xc0] sm:$0xff]
  %v2624 = vld [vmem:[%s7 + $0xc8] sm:$0xff]
  %v2625 = vld [vmem:[%s7 + $0xd0] sm:$0xff]
  %v2626 = vld [vmem:[%s7 + $0xd8] sm:$0xff]
  %v2627 = vld [vmem:[%s7 + $0xe0] sm:$0xff]
  %v2628 = vld [vmem:[%s7 + $0xe8] sm:$0xff]
  %v2629 = vld [vmem:[%s7 + $0xf0] sm:$0xff]
  %v2630 = vld [vmem:[%s7 + $0xf8] sm:$0xff]
  %2631 = vmatpush.msra.mxu0 %v2597
  %2632 = vmatpush.msra.mxu0 %v2594
  %2633 = vmatpush.msra.mxu0 %v2591
  %2634 = vmatpush.msra.mxu0 %v2588
  %2635 = vmatpush.msra.mxu0 %v2585
  %2636 = vmatpush.msra.mxu0 %v2582
  %2637 = vmatpush.msra.mxu0 %v2579
  %2638 = vmatpush.msra.mxu0 %v2576
  %2639 = vmatpush.msra.mxu0 %v2573
  %2640 = vmatpush.msra.mxu0 %v2570
  %2641 = vmatpush.msra.mxu0 %v2567
  %2642 = vmatpush.msra.mxu0 %v2564
  %2643 = vmatpush.msra.mxu0 %v2561
  %2644 = vmatpush.msra.mxu0 %v2558
  %2645 = vmatpush.msra.mxu0 %v2555
  %2646 = vmatpush.msra.mxu0 %v2552
  %2647 = vmatmul.f32.gmra.mxu0 %v2599
  %v2648 = vpop.f32.mrf.mxu0
  %v2649 = vadd.f32 0.0, %v2648
  %2650 = vmatmul.f32.gmra.mxu0 %v2600
  %v2651 = vpop.f32.mrf.mxu0
  %v2652 = vadd.f32 0.0, %v2651
  %2653 = vmatmul.f32.gmra.mxu0 %v2601
  %v2654 = vpop.f32.mrf.mxu0
  %v2655 = vadd.f32 0.0, %v2654
  %2656 = vmatmul.f32.gmra.mxu0 %v2602
  %v2657 = vpop.f32.mrf.mxu0
  %v2658 = vadd.f32 0.0, %v2657
  %2659 = vmatmul.f32.gmra.mxu0 %v2603
  %v2660 = vpop.f32.mrf.mxu0
  %v2661 = vadd.f32 0.0, %v2660
  %2662 = vmatmul.f32.gmra.mxu0 %v2604
  %v2663 = vpop.f32.mrf.mxu0
  %v2664 = vadd.f32 0.0, %v2663
  %2665 = vmatmul.f32.gmra.mxu0 %v2605
  %v2666 = vpop.f32.mrf.mxu0
  %v2667 = vadd.f32 0.0, %v2666
  %2668 = vmatmul.f32.gmra.mxu0 %v2606
  %v2669 = vpop.f32.mrf.mxu0
  %v2670 = vadd.f32 0.0, %v2669
  %2671 = vmatmul.f32.gmra.mxu0 %v2607
  %v2672 = vpop.f32.mrf.mxu0
  %v2673 = vadd.f32 0.0, %v2672
  %2674 = vmatmul.f32.gmra.mxu0 %v2608
  %v2675 = vpop.f32.mrf.mxu0
  %v2676 = vadd.f32 0.0, %v2675
  %2677 = vmatmul.f32.gmra.mxu0 %v2609
  %v2678 = vpop.f32.mrf.mxu0
  %v2679 = vadd.f32 0.0, %v2678
  %2680 = vmatmul.f32.gmra.mxu0 %v2610
  %v2681 = vpop.f32.mrf.mxu0
  %v2682 = vadd.f32 0.0, %v2681
  %2683 = vmatmul.f32.gmra.mxu0 %v2611
  %v2684 = vpop.f32.mrf.mxu0
  %v2685 = vadd.f32 0.0, %v2684
  %2686 = vmatmul.f32.gmra.mxu0 %v2612
  %v2687 = vpop.f32.mrf.mxu0
  %v2688 = vadd.f32 0.0, %v2687
  %2689 = vmatmul.f32.gmra.mxu0 %v2613
  %v2690 = vpop.f32.mrf.mxu0
  %v2691 = vadd.f32 0.0, %v2690
  %2692 = vmatmul.f32.gmra.mxu0 %v2614
  %v2693 = vpop.f32.mrf.mxu0
  %v2694 = vadd.f32 0.0, %v2693
  %2695 = vmatmul.f32.gmra.mxu0 %v2615
  %v2696 = vpop.f32.mrf.mxu0
  %v2697 = vadd.f32 0.0, %v2696
  %2698 = vmatmul.f32.gmra.mxu0 %v2616
  %v2699 = vpop.f32.mrf.mxu0
  %v2700 = vadd.f32 0.0, %v2699
  %2701 = vmatmul.f32.gmra.mxu0 %v2617
  %v2702 = vpop.f32.mrf.mxu0
  %v2703 = vadd.f32 0.0, %v2702
  %2704 = vmatmul.f32.gmra.mxu0 %v2618
  %v2705 = vpop.f32.mrf.mxu0
  %v2706 = vadd.f32 0.0, %v2705
  %2707 = vmatmul.f32.gmra.mxu0 %v2619
  %v2708 = vpop.f32.mrf.mxu0
  %v2709 = vadd.f32 0.0, %v2708
  %2710 = vmatmul.f32.gmra.mxu0 %v2620
  %v2711 = vpop.f32.mrf.mxu0
  %v2712 = vadd.f32 0.0, %v2711
  %2713 = vmatmul.f32.gmra.mxu0 %v2621
  %v2714 = vpop.f32.mrf.mxu0
  %v2715 = vadd.f32 0.0, %v2714
  %2716 = vmatmul.f32.gmra.mxu0 %v2622
  %v2717 = vpop.f32.mrf.mxu0
  %v2718 = vadd.f32 0.0, %v2717
  %2719 = vmatmul.f32.gmra.mxu0 %v2623
  %v2720 = vpop.f32.mrf.mxu0
  %v2721 = vadd.f32 0.0, %v2720
  %2722 = vmatmul.f32.gmra.mxu0 %v2624
  %v2723 = vpop.f32.mrf.mxu0
  %v2724 = vadd.f32 0.0, %v2723
  %2725 = vmatmul.f32.gmra.mxu0 %v2625
  %v2726 = vpop.f32.mrf.mxu0
  %v2727 = vadd.f32 0.0, %v2726
  %2728 = vmatmul.f32.gmra.mxu0 %v2626
  %v2729 = vpop.f32.mrf.mxu0
  %v2730 = vadd.f32 0.0, %v2729
  %2731 = vmatmul.f32.gmra.mxu0 %v2627
  %v2732 = vpop.f32.mrf.mxu0
  %v2733 = vadd.f32 0.0, %v2732
  %2734 = vmatmul.f32.gmra.mxu0 %v2628
  %v2735 = vpop.f32.mrf.mxu0
  %v2736 = vadd.f32 0.0, %v2735
  %2737 = vmatmul.f32.gmra.mxu0 %v2629
  %v2738 = vpop.f32.mrf.mxu0
  %v2739 = vadd.f32 0.0, %v2738
  %2740 = vmatmul.f32.gmra.mxu0 %v2630
  %v2741 = vpop.f32.mrf.mxu0
  %v2742 = vadd.f32 0.0, %v2741
  %2743 = vdwg.mxu0
  %2744 = vst [vmem:[%s8] sm:$0xff] %v2649
  %2745 = vst [vmem:[%s8 + $0x8] sm:$0xff] %v2652
  %2746 = vst [vmem:[%s8 + $0x10] sm:$0xff] %v2655
  %2747 = vst [vmem:[%s8 + $0x18] sm:$0xff] %v2658
  %2748 = vst [vmem:[%s8 + $0x20] sm:$0xff] %v2661
  %2749 = vst [vmem:[%s8 + $0x28] sm:$0xff] %v2664
  %2750 = vst [vmem:[%s8 + $0x30] sm:$0xff] %v2667
  %2751 = vst [vmem:[%s8 + $0x38] sm:$0xff] %v2670
  %2752 = vst [vmem:[%s8 + $0x40] sm:$0xff] %v2673
  %2753 = vst [vmem:[%s8 + $0x48] sm:$0xff] %v2676
  %2754 = vst [vmem:[%s8 + $0x50] sm:$0xff] %v2679
  %2755 = vst [vmem:[%s8 + $0x58] sm:$0xff] %v2682
  %2756 = vst [vmem:[%s8 + $0x60] sm:$0xff] %v2685
  %2757 = vst [vmem:[%s8 + $0x68] sm:$0xff] %v2688
  %2758 = vst [vmem:[%s8 + $0x70] sm:$0xff] %v2691
  %2759 = vst [vmem:[%s8 + $0x78] sm:$0xff] %v2694
  %2760 = vst [vmem:[%s8 + $0x80] sm:$0xff] %v2697
  %2761 = vst [vmem:[%s8 + $0x88] sm:$0xff] %v2700
  %2762 = vst [vmem:[%s8 + $0x90] sm:$0xff] %v2703
  %2763 = vst [vmem:[%s8 + $0x98] sm:$0xff] %v2706
  %2764 = vst [vmem:[%s8 + $0xa0] sm:$0xff] %v2709
  %2765 = vst [vmem:[%s8 + $0xa8] sm:$0xff] %v2712
  %2766 = vst [vmem:[%s8 + $0xb0] sm:$0xff] %v2715
  %2767 = vst [vmem:[%s8 + $0xb8] sm:$0xff] %v2718
  %2768 = vst [vmem:[%s8 + $0xc0] sm:$0xff] %v2721
  %2769 = vst [vmem:[%s8 + $0xc8] sm:$0xff] %v2724
  %2770 = vst [vmem:[%s8 + $0xd0] sm:$0xff] %v2727
  %2771 = vst [vmem:[%s8 + $0xd8] sm:$0xff] %v2730
  %2772 = vst [vmem:[%s8 + $0xe0] sm:$0xff] %v2733
  %2773 = vst [vmem:[%s8 + $0xe8] sm:$0xff] %v2736
  %2774 = vst [vmem:[%s8 + $0xf0] sm:$0xff] %v2739
  %2775 = vst [vmem:[%s8 + $0xf8] sm:$0xff] %v2742
  // Predicated region
  $region34: #{dip_forward.6} parent=0 // pred_check
    _
  $region35: #{dip_forward.6} parent=0 // pred_check_branch
    %2777 = sbr.rel (0) target = $region37
  $region36: #{dip_forward.6} parent=0 // pred_region
    _
  $region37: #{dip_forward.6} parent=0 // pred_fallthru
    _
  // Predicated region
  $region38: #{dip_forward.6} parent=0 // pred_check
    _
  $region39: #{dip_forward.6} parent=0 // pred_check_branch
    %2779 = sbr.rel (0) target = $region41
  $region40: #{dip_forward.6} parent=0 // pred_region
    _
  $region41: #{dip_forward.6} parent=0 // pred_fallthru
    _

// kernel: dip_forward.7
$region0: #{dip_forward.7}
  #allocation0 [shape = 'u32[]', space=smem, size = 0x4, offset = 0x4, fixed_abs, tag = 'smem constant byte address 0x4 - core index']
  #allocation1 [shape = 'u32[72,128]{1,0:T(1,128)}', space=vmem, size = 0x9000, scoped, tag = 'internal scratch']
  #allocation2 [shape = 'f32[1]{0:T(128)S(6)}', space=smem, size = 0x200, scoped, tag = 'scoped memory for dip_forward.7']
  #allocation3 [shape = 'f32[1]{0:T(128)S(6)}', space=smem, size = 0x200, scoped, tag = 'scoped memory for dip_forward.7']
  %s0 = inlined_call_operand.vmem [shape: f32[2,264,66], index: 0, kind: input, shape index: {}]
  %s1 = inlined_call_operand.vmem [shape: f32[64,792], index: 1, kind: input, shape index: {}]
  %s2 = inlined_call_operand.vmem [shape: f32[64,1], index: 2, kind: input, shape index: {}]
  %s3 = inlined_call_operand.vmem [shape: f32[64,1], index: 3, kind: input, shape index: {}]
  %s4 = inlined_call_operand.vmem [shape: f32[64,1], index: 4, kind: input, shape index: {}]
  %s5 = inlined_call_operand.vmem [shape: f32[64,64], index: 5, kind: input, shape index: {}]
  %s6 = inlined_call_operand.vmem [shape: f32[128,256], index: 6, kind: input, shape index: {}]
  %s7 = inlined_call_operand.vmem [shape: f32[128,64], index: 7, kind: input, shape index: {}]
  %s8 = inlined_call_operand.<no memory space> [shape: f32[1], index: 8, kind: input, shape index: {}]
  %s9 = inlined_call_operand.<no memory space> [shape: f32[1], index: 9, kind: input, shape index: {}]
  %s10 = inlined_call_operand.vmem [shape: f32[128,256], index: 10, kind: output, shape index: {}]
  %s11 = sld [smem:[#allocation0]]
  $region50: #{dip_forward.7} parent=0
    _
  %s13 = ssub.s32 1, %s11
  %s14 = scalar_select 0, %s13, %s11
  %15 = sst [smem:[#allocation2]] %s8
  %16 = sst [smem:[#allocation3]] %s9
  // Predicated region
  $region2: #{dip_forward.7} parent=0 // pred_check
    _
  $region3: #{dip_forward.7} parent=0 // pred_check_branch
    %18 = sbr.rel (0) target = $region5
  $region4: #{dip_forward.7} parent=0 // pred_region
    _
  $region5: #{dip_forward.7} parent=0 // pred_fallthru
    _
  // Predicated region
  $region6: #{dip_forward.7} parent=0 // pred_check
    _
  $region7: #{dip_forward.7} parent=0 // pred_check_branch
    %20 = sbr.rel (0) target = $region9
  $region8: #{dip_forward.7} parent=0 // pred_region
    _
  $region9: #{dip_forward.7} parent=0 // pred_fallthru
    _
  // Predicated region
  $region10: #{dip_forward.7} parent=0 // pred_check
    _
  $region11: #{dip_forward.7} parent=0 // pred_check_branch
    %22 = sbr.rel (0) target = $region13
  $region12: #{dip_forward.7} parent=0 // pred_region
    _
  $region13: #{dip_forward.7} parent=0 // pred_fallthru
    _
  // Predicated region
  $region14: #{dip_forward.7} parent=0 // pred_check
    _
  $region15: #{dip_forward.7} parent=0 // pred_check_branch
    %24 = sbr.rel (0) target = $region17
  $region16: #{dip_forward.7} parent=0 // pred_region
    _
  $region17: #{dip_forward.7} parent=0 // pred_fallthru
    _
  // Predicated region
  $region18: #{dip_forward.7} parent=0 // pred_check
    _
  $region19: #{dip_forward.7} parent=0 // pred_check_branch
    %26 = sbr.rel (0) target = $region21
  $region20: #{dip_forward.7} parent=0 // pred_region
    _
  $region21: #{dip_forward.7} parent=0 // pred_fallthru
    _
  // Predicated region
  $region22: #{dip_forward.7} parent=0 // pred_check
    _
  $region23: #{dip_forward.7} parent=0 // pred_check_branch
    %28 = sbr.rel (0) target = $region25
  $region24: #{dip_forward.7} parent=0 // pred_region
    _
  $region25: #{dip_forward.7} parent=0 // pred_fallthru
    _
  // Predicated region
  $region26: #{dip_forward.7} parent=0 // pred_check
    _
  $region27: #{dip_forward.7} parent=0 // pred_check_branch
    %30 = sbr.rel (0) target = $region29
  $region28: #{dip_forward.7} parent=0 // pred_region
    _
  $region29: #{dip_forward.7} parent=0 // pred_fallthru
    _
  // Predicated region
  $region30: #{dip_forward.7} parent=0 // pred_check
    _
  $region31: #{dip_forward.7} parent=0 // pred_check_branch
    %32 = sbr.rel (0) target = $region33
  $region32: #{dip_forward.7} parent=0 // pred_region
    _
  $region33: #{dip_forward.7} parent=0 // pred_fallthru
    _
  // Predicated region
  $region34: #{dip_forward.7} parent=0 // pred_check
    _
  $region35: #{dip_forward.7} parent=0 // pred_check_branch
    %34 = sbr.rel (0) target = $region37
  $region36: #{dip_forward.7} parent=0 // pred_region
    _
  $region37: #{dip_forward.7} parent=0 // pred_fallthru
    _
  // Predicated region
  $region38: #{dip_forward.7} parent=0 // pred_check
    _
  $region39: #{dip_forward.7} parent=0 // pred_check_branch
    %36 = sbr.rel (0) target = $region41
  $region40: #{dip_forward.7} parent=0 // pred_region
    _
  $region41: #{dip_forward.7} parent=0 // pred_fallthru
    _
  %v37 = vld [vmem:[%s0] sm:$0xff]
  %v38 = vld [vmem:[%s0 + $0x8] sm:$0xff]
  %v39 = vld [vmem:[%s0 + $0x10] sm:$0xff]
  %v40 = vld [vmem:[%s0 + $0x18] sm:$0xff]
  %v41 = vld [vmem:[%s0 + $0x20] sm:$0xff]
  %v42 = vld [vmem:[%s0 + $0x28] sm:$0xff]
  %v43 = vld [vmem:[%s0 + $0x30] sm:$0xff]
  %v44 = vld [vmem:[%s0 + $0x38] sm:$0xff]
  %v45 = vld [vmem:[%s0 + $0x40] sm:$0xff]
  %v46 = vld [vmem:[%s0 + $0x48] sm:$0xff]
  %v47 = vld [vmem:[%s0 + $0x50] sm:$0xff]
  %v48 = vld [vmem:[%s0 + $0x58] sm:$0xff]
  %v49 = vld [vmem:[%s0 + $0x60] sm:$0xff]
  %v50 = vld [vmem:[%s0 + $0x68] sm:$0xff]
  %v51 = vld [vmem:[%s0 + $0x70] sm:$0xff]
  %v52 = vld [vmem:[%s0 + $0x78] sm:$0xff]
  %v53 = vld [vmem:[%s0 + $0x80] sm:$0xff]
  %v54 = vld [vmem:[%s0 + $0x88] sm:$0xff]
  %v55 = vld [vmem:[%s0 + $0x90] sm:$0xff]
  %v56 = vld [vmem:[%s0 + $0x98] sm:$0xff]
  %v57 = vld [vmem:[%s0 + $0xa0] sm:$0xff]
  %v58 = vld [vmem:[%s0 + $0xa8] sm:$0xff]
  %v59 = vld [vmem:[%s0 + $0xb0] sm:$0xff]
  %v60 = vld [vmem:[%s0 + $0xb8] sm:$0xff]
  %v61 = vld [vmem:[%s0 + $0xc0] sm:$0xff]
  %v62 = vld [vmem:[%s0 + $0xc8] sm:$0xff]
  %v63 = vld [vmem:[%s0 + $0xd0] sm:$0xff]
  %v64 = vld [vmem:[%s0 + $0xd8] sm:$0xff]
  %v65 = vld [vmem:[%s0 + $0xe0] sm:$0xff]
  %v66 = vld [vmem:[%s0 + $0xe8] sm:$0xff]
  %v67 = vld [vmem:[%s0 + $0xf0] sm:$0xff]
  %v68 = vld [vmem:[%s0 + $0xf8] sm:$0xff]
  %v69 = vld [vmem:[%s0 + $0x100] sm:$0xff]
  %103 = vrot.lane.b32.xlu0 %v37, 127
  %v104 = vpop.permute.xlu0 %103
  %105 = vrot.lane.b32.xlu0 %v38, 127
  %v106 = vpop.permute.xlu0 %105
  %107 = vrot.lane.b32.xlu0 %v39, 127
  %v108 = vpop.permute.xlu0 %107
  %109 = vrot.lane.b32.xlu0 %v40, 127
  %v110 = vpop.permute.xlu0 %109
  %111 = vrot.lane.b32.xlu0 %v41, 127
  %v112 = vpop.permute.xlu0 %111
  %113 = vrot.lane.b32.xlu0 %v42, 127
  %v114 = vpop.permute.xlu0 %113
  %115 = vrot.lane.b32.xlu0 %v43, 127
  %v116 = vpop.permute.xlu0 %115
  %117 = vrot.lane.b32.xlu0 %v44, 127
  %v118 = vpop.permute.xlu0 %117
  %119 = vrot.lane.b32.xlu0 %v45, 127
  %v120 = vpop.permute.xlu0 %119
  %121 = vrot.lane.b32.xlu0 %v46, 127
  %v122 = vpop.permute.xlu0 %121
  %123 = vrot.lane.b32.xlu0 %v47, 127
  %v124 = vpop.permute.xlu0 %123
  %125 = vrot.lane.b32.xlu0 %v48, 127
  %v126 = vpop.permute.xlu0 %125
  %127 = vrot.lane.b32.xlu0 %v49, 127
  %v128 = vpop.permute.xlu0 %127
  %129 = vrot.lane.b32.xlu0 %v50, 127
  %v130 = vpop.permute.xlu0 %129
  %131 = vrot.lane.b32.xlu0 %v51, 127
  %v132 = vpop.permute.xlu0 %131
  %133 = vrot.lane.b32.xlu0 %v52, 127
  %v134 = vpop.permute.xlu0 %133
  %135 = vrot.lane.b32.xlu0 %v53, 127
  %v136 = vpop.permute.xlu0 %135
  %137 = vrot.lane.b32.xlu0 %v54, 127
  %v138 = vpop.permute.xlu0 %137
  %139 = vrot.lane.b32.xlu0 %v55, 127
  %v140 = vpop.permute.xlu0 %139
  %141 = vrot.lane.b32.xlu0 %v56, 127
  %v142 = vpop.permute.xlu0 %141
  %143 = vrot.lane.b32.xlu0 %v57, 127
  %v144 = vpop.permute.xlu0 %143
  %145 = vrot.lane.b32.xlu0 %v58, 127
  %v146 = vpop.permute.xlu0 %145
  %147 = vrot.lane.b32.xlu0 %v59, 127
  %v148 = vpop.permute.xlu0 %147
  %149 = vrot.lane.b32.xlu0 %v60, 127
  %v150 = vpop.permute.xlu0 %149
  %151 = vrot.lane.b32.xlu0 %v61, 127
  %v152 = vpop.permute.xlu0 %151
  %153 = vrot.lane.b32.xlu0 %v62, 127
  %v154 = vpop.permute.xlu0 %153
  %155 = vrot.lane.b32.xlu0 %v63, 127
  %v156 = vpop.permute.xlu0 %155
  %157 = vrot.lane.b32.xlu0 %v64, 127
  %v158 = vpop.permute.xlu0 %157
  %159 = vrot.lane.b32.xlu0 %v65, 127
  %v160 = vpop.permute.xlu0 %159
  %161 = vrot.lane.b32.xlu0 %v66, 127
  %v162 = vpop.permute.xlu0 %161
  %163 = vrot.lane.b32.xlu0 %v67, 127
  %v164 = vpop.permute.xlu0 %163
  %165 = vrot.lane.b32.xlu0 %v68, 127
  %v166 = vpop.permute.xlu0 %165
  %167 = vrot.lane.b32.xlu0 %v69, 127
  %v168 = vpop.permute.xlu0 %167
  %202 = vrot.lane.b32.xlu0 %v37, 126
  %v203 = vpop.permute.xlu0 %202
  %204 = vrot.lane.b32.xlu0 %v38, 126
  %v205 = vpop.permute.xlu0 %204
  %206 = vrot.lane.b32.xlu0 %v39, 126
  %v207 = vpop.permute.xlu0 %206
  %208 = vrot.lane.b32.xlu0 %v40, 126
  %v209 = vpop.permute.xlu0 %208
  %210 = vrot.lane.b32.xlu0 %v41, 126
  %v211 = vpop.permute.xlu0 %210
  %212 = vrot.lane.b32.xlu0 %v42, 126
  %v213 = vpop.permute.xlu0 %212
  %214 = vrot.lane.b32.xlu0 %v43, 126
  %v215 = vpop.permute.xlu0 %214
  %216 = vrot.lane.b32.xlu0 %v44, 126
  %v217 = vpop.permute.xlu0 %216
  %218 = vrot.lane.b32.xlu0 %v45, 126
  %v219 = vpop.permute.xlu0 %218
  %220 = vrot.lane.b32.xlu0 %v46, 126
  %v221 = vpop.permute.xlu0 %220
  %222 = vrot.lane.b32.xlu0 %v47, 126
  %v223 = vpop.permute.xlu0 %222
  %224 = vrot.lane.b32.xlu0 %v48, 126
  %v225 = vpop.permute.xlu0 %224
  %226 = vrot.lane.b32.xlu0 %v49, 126
  %v227 = vpop.permute.xlu0 %226
  %228 = vrot.lane.b32.xlu0 %v50, 126
  %v229 = vpop.permute.xlu0 %228
  %230 = vrot.lane.b32.xlu0 %v51, 126
  %v231 = vpop.permute.xlu0 %230
  %232 = vrot.lane.b32.xlu0 %v52, 126
  %v233 = vpop.permute.xlu0 %232
  %234 = vrot.lane.b32.xlu0 %v53, 126
  %v235 = vpop.permute.xlu0 %234
  %236 = vrot.lane.b32.xlu0 %v54, 126
  %v237 = vpop.permute.xlu0 %236
  %238 = vrot.lane.b32.xlu0 %v55, 126
  %v239 = vpop.permute.xlu0 %238
  %240 = vrot.lane.b32.xlu0 %v56, 126
  %v241 = vpop.permute.xlu0 %240
  %242 = vrot.lane.b32.xlu0 %v57, 126
  %v243 = vpop.permute.xlu0 %242
  %244 = vrot.lane.b32.xlu0 %v58, 126
  %v245 = vpop.permute.xlu0 %244
  %246 = vrot.lane.b32.xlu0 %v59, 126
  %v247 = vpop.permute.xlu0 %246
  %248 = vrot.lane.b32.xlu0 %v60, 126
  %v249 = vpop.permute.xlu0 %248
  %250 = vrot.lane.b32.xlu0 %v61, 126
  %v251 = vpop.permute.xlu0 %250
  %252 = vrot.lane.b32.xlu0 %v62, 126
  %v253 = vpop.permute.xlu0 %252
  %254 = vrot.lane.b32.xlu0 %v63, 126
  %v255 = vpop.permute.xlu0 %254
  %256 = vrot.lane.b32.xlu0 %v64, 126
  %v257 = vpop.permute.xlu0 %256
  %258 = vrot.lane.b32.xlu0 %v65, 126
  %v259 = vpop.permute.xlu0 %258
  %260 = vrot.lane.b32.xlu0 %v66, 126
  %v261 = vpop.permute.xlu0 %260
  %262 = vrot.lane.b32.xlu0 %v67, 126
  %v263 = vpop.permute.xlu0 %262
  %264 = vrot.lane.b32.xlu0 %v68, 126
  %v265 = vpop.permute.xlu0 %264
  %266 = vrot.lane.b32.xlu0 %v69, 126
  %v267 = vpop.permute.xlu0 %266
  %s301 = scalar_lea.vmem %s0, 264
  %v302 = vld [vmem:[%s301] sm:$0xff]
  %v303 = vld [vmem:[%s301 + $0x8] sm:$0xff]
  %v304 = vld [vmem:[%s301 + $0x10] sm:$0xff]
  %v305 = vld [vmem:[%s301 + $0x18] sm:$0xff]
  %v306 = vld [vmem:[%s301 + $0x20] sm:$0xff]
  %v307 = vld [vmem:[%s301 + $0x28] sm:$0xff]
  %v308 = vld [vmem:[%s301 + $0x30] sm:$0xff]
  %v309 = vld [vmem:[%s301 + $0x38] sm:$0xff]
  %v310 = vld [vmem:[%s301 + $0x40] sm:$0xff]
  %v311 = vld [vmem:[%s301 + $0x48] sm:$0xff]
  %v312 = vld [vmem:[%s301 + $0x50] sm:$0xff]
  %v313 = vld [vmem:[%s301 + $0x58] sm:$0xff]
  %v314 = vld [vmem:[%s301 + $0x60] sm:$0xff]
  %v315 = vld [vmem:[%s301 + $0x68] sm:$0xff]
  %v316 = vld [vmem:[%s301 + $0x70] sm:$0xff]
  %v317 = vld [vmem:[%s301 + $0x78] sm:$0xff]
  %v318 = vld [vmem:[%s301 + $0x80] sm:$0xff]
  %v319 = vld [vmem:[%s301 + $0x88] sm:$0xff]
  %v320 = vld [vmem:[%s301 + $0x90] sm:$0xff]
  %v321 = vld [vmem:[%s301 + $0x98] sm:$0xff]
  %v322 = vld [vmem:[%s301 + $0xa0] sm:$0xff]
  %v323 = vld [vmem:[%s301 + $0xa8] sm:$0xff]
  %v324 = vld [vmem:[%s301 + $0xb0] sm:$0xff]
  %v325 = vld [vmem:[%s301 + $0xb8] sm:$0xff]
  %v326 = vld [vmem:[%s301 + $0xc0] sm:$0xff]
  %v327 = vld [vmem:[%s301 + $0xc8] sm:$0xff]
  %v328 = vld [vmem:[%s301 + $0xd0] sm:$0xff]
  %v329 = vld [vmem:[%s301 + $0xd8] sm:$0xff]
  %v330 = vld [vmem:[%s301 + $0xe0] sm:$0xff]
  %v331 = vld [vmem:[%s301 + $0xe8] sm:$0xff]
  %v332 = vld [vmem:[%s301 + $0xf0] sm:$0xff]
  %v333 = vld [vmem:[%s301 + $0xf8] sm:$0xff]
  %v334 = vld [vmem:[%s301 + $0x100] sm:$0xff]
  %368 = vrot.lane.b32.xlu0 %v302, 127
  %v369 = vpop.permute.xlu0 %368
  %370 = vrot.lane.b32.xlu0 %v303, 127
  %v371 = vpop.permute.xlu0 %370
  %372 = vrot.lane.b32.xlu0 %v304, 127
  %v373 = vpop.permute.xlu0 %372
  %374 = vrot.lane.b32.xlu0 %v305, 127
  %v375 = vpop.permute.xlu0 %374
  %376 = vrot.lane.b32.xlu0 %v306, 127
  %v377 = vpop.permute.xlu0 %376
  %378 = vrot.lane.b32.xlu0 %v307, 127
  %v379 = vpop.permute.xlu0 %378
  %380 = vrot.lane.b32.xlu0 %v308, 127
  %v381 = vpop.permute.xlu0 %380
  %382 = vrot.lane.b32.xlu0 %v309, 127
  %v383 = vpop.permute.xlu0 %382
  %384 = vrot.lane.b32.xlu0 %v310, 127
  %v385 = vpop.permute.xlu0 %384
  %386 = vrot.lane.b32.xlu0 %v311, 127
  %v387 = vpop.permute.xlu0 %386
  %388 = vrot.lane.b32.xlu0 %v312, 127
  %v389 = vpop.permute.xlu0 %388
  %390 = vrot.lane.b32.xlu0 %v313, 127
  %v391 = vpop.permute.xlu0 %390
  %392 = vrot.lane.b32.xlu0 %v314, 127
  %v393 = vpop.permute.xlu0 %392
  %394 = vrot.lane.b32.xlu0 %v315, 127
  %v395 = vpop.permute.xlu0 %394
  %396 = vrot.lane.b32.xlu0 %v316, 127
  %v397 = vpop.permute.xlu0 %396
  %398 = vrot.lane.b32.xlu0 %v317, 127
  %v399 = vpop.permute.xlu0 %398
  %400 = vrot.lane.b32.xlu0 %v318, 127
  %v401 = vpop.permute.xlu0 %400
  %402 = vrot.lane.b32.xlu0 %v319, 127
  %v403 = vpop.permute.xlu0 %402
  %404 = vrot.lane.b32.xlu0 %v320, 127
  %v405 = vpop.permute.xlu0 %404
  %406 = vrot.lane.b32.xlu0 %v321, 127
  %v407 = vpop.permute.xlu0 %406
  %408 = vrot.lane.b32.xlu0 %v322, 127
  %v409 = vpop.permute.xlu0 %408
  %410 = vrot.lane.b32.xlu0 %v323, 127
  %v411 = vpop.permute.xlu0 %410
  %412 = vrot.lane.b32.xlu0 %v324, 127
  %v413 = vpop.permute.xlu0 %412
  %414 = vrot.lane.b32.xlu0 %v325, 127
  %v415 = vpop.permute.xlu0 %414
  %416 = vrot.lane.b32.xlu0 %v326, 127
  %v417 = vpop.permute.xlu0 %416
  %418 = vrot.lane.b32.xlu0 %v327, 127
  %v419 = vpop.permute.xlu0 %418
  %420 = vrot.lane.b32.xlu0 %v328, 127
  %v421 = vpop.permute.xlu0 %420
  %422 = vrot.lane.b32.xlu0 %v329, 127
  %v423 = vpop.permute.xlu0 %422
  %424 = vrot.lane.b32.xlu0 %v330, 127
  %v425 = vpop.permute.xlu0 %424
  %426 = vrot.lane.b32.xlu0 %v331, 127
  %v427 = vpop.permute.xlu0 %426
  %428 = vrot.lane.b32.xlu0 %v332, 127
  %v429 = vpop.permute.xlu0 %428
  %430 = vrot.lane.b32.xlu0 %v333, 127
  %v431 = vpop.permute.xlu0 %430
  %432 = vrot.lane.b32.xlu0 %v334, 127
  %v433 = vpop.permute.xlu0 %432
  %434 = vrot.lane.b32.xlu0 %v302, 126
  %v435 = vpop.permute.xlu0 %434
  %436 = vrot.lane.b32.xlu0 %v303, 126
  %v437 = vpop.permute.xlu0 %436
  %438 = vrot.lane.b32.xlu0 %v304, 126
  %v439 = vpop.permute.xlu0 %438
  %440 = vrot.lane.b32.xlu0 %v305, 126
  %v441 = vpop.permute.xlu0 %440
  %442 = vrot.lane.b32.xlu0 %v306, 126
  %v443 = vpop.permute.xlu0 %442
  %444 = vrot.lane.b32.xlu0 %v307, 126
  %v445 = vpop.permute.xlu0 %444
  %446 = vrot.lane.b32.xlu0 %v308, 126
  %v447 = vpop.permute.xlu0 %446
  %448 = vrot.lane.b32.xlu0 %v309, 126
  %v449 = vpop.permute.xlu0 %448
  %450 = vrot.lane.b32.xlu0 %v310, 126
  %v451 = vpop.permute.xlu0 %450
  %452 = vrot.lane.b32.xlu0 %v311, 126
  %v453 = vpop.permute.xlu0 %452
  %454 = vrot.lane.b32.xlu0 %v312, 126
  %v455 = vpop.permute.xlu0 %454
  %456 = vrot.lane.b32.xlu0 %v313, 126
  %v457 = vpop.permute.xlu0 %456
  %458 = vrot.lane.b32.xlu0 %v314, 126
  %v459 = vpop.permute.xlu0 %458
  %460 = vrot.lane.b32.xlu0 %v315, 126
  %v461 = vpop.permute.xlu0 %460
  %462 = vrot.lane.b32.xlu0 %v316, 126
  %v463 = vpop.permute.xlu0 %462
  %464 = vrot.lane.b32.xlu0 %v317, 126
  %v465 = vpop.permute.xlu0 %464
  %466 = vrot.lane.b32.xlu0 %v318, 126
  %v467 = vpop.permute.xlu0 %466
  %468 = vrot.lane.b32.xlu0 %v319, 126
  %v469 = vpop.permute.xlu0 %468
  %470 = vrot.lane.b32.xlu0 %v320, 126
  %v471 = vpop.permute.xlu0 %470
  %472 = vrot.lane.b32.xlu0 %v321, 126
  %v473 = vpop.permute.xlu0 %472
  %474 = vrot.lane.b32.xlu0 %v322, 126
  %v475 = vpop.permute.xlu0 %474
  %476 = vrot.lane.b32.xlu0 %v323, 126
  %v477 = vpop.permute.xlu0 %476
  %478 = vrot.lane.b32.xlu0 %v324, 126
  %v479 = vpop.permute.xlu0 %478
  %480 = vrot.lane.b32.xlu0 %v325, 126
  %v481 = vpop.permute.xlu0 %480
  %482 = vrot.lane.b32.xlu0 %v326, 126
  %v483 = vpop.permute.xlu0 %482
  %484 = vrot.lane.b32.xlu0 %v327, 126
  %v485 = vpop.permute.xlu0 %484
  %486 = vrot.lane.b32.xlu0 %v328, 126
  %v487 = vpop.permute.xlu0 %486
  %488 = vrot.lane.b32.xlu0 %v329, 126
  %v489 = vpop.permute.xlu0 %488
  %490 = vrot.lane.b32.xlu0 %v330, 126
  %v491 = vpop.permute.xlu0 %490
  %492 = vrot.lane.b32.xlu0 %v331, 126
  %v493 = vpop.permute.xlu0 %492
  %494 = vrot.lane.b32.xlu0 %v332, 126
  %v495 = vpop.permute.xlu0 %494
  %496 = vrot.lane.b32.xlu0 %v333, 126
  %v497 = vpop.permute.xlu0 %496
  %498 = vrot.lane.b32.xlu0 %v334, 126
  %v499 = vpop.permute.xlu0 %498
  %500 = vrot.lane.b32.xlu0 %v302, 64
  %v501 = vpop.permute.xlu0 %500
  %502 = vrot.lane.b32.xlu0 %v303, 64
  %v503 = vpop.permute.xlu0 %502
  %504 = vrot.lane.b32.xlu0 %v304, 64
  %v505 = vpop.permute.xlu0 %504
  %506 = vrot.lane.b32.xlu0 %v305, 64
  %v507 = vpop.permute.xlu0 %506
  %508 = vrot.lane.b32.xlu0 %v306, 64
  %v509 = vpop.permute.xlu0 %508
  %510 = vrot.lane.b32.xlu0 %v307, 64
  %v511 = vpop.permute.xlu0 %510
  %512 = vrot.lane.b32.xlu0 %v308, 64
  %v513 = vpop.permute.xlu0 %512
  %514 = vrot.lane.b32.xlu0 %v309, 64
  %v515 = vpop.permute.xlu0 %514
  %516 = vrot.lane.b32.xlu0 %v310, 64
  %v517 = vpop.permute.xlu0 %516
  %518 = vrot.lane.b32.xlu0 %v311, 64
  %v519 = vpop.permute.xlu0 %518
  %520 = vrot.lane.b32.xlu0 %v312, 64
  %v521 = vpop.permute.xlu0 %520
  %522 = vrot.lane.b32.xlu0 %v313, 64
  %v523 = vpop.permute.xlu0 %522
  %524 = vrot.lane.b32.xlu0 %v314, 64
  %v525 = vpop.permute.xlu0 %524
  %526 = vrot.lane.b32.xlu0 %v315, 64
  %v527 = vpop.permute.xlu0 %526
  %528 = vrot.lane.b32.xlu0 %v316, 64
  %v529 = vpop.permute.xlu0 %528
  %530 = vrot.lane.b32.xlu0 %v317, 64
  %v531 = vpop.permute.xlu0 %530
  %532 = vrot.lane.b32.xlu0 %v318, 64
  %v533 = vpop.permute.xlu0 %532
  %534 = vrot.lane.b32.xlu0 %v319, 64
  %v535 = vpop.permute.xlu0 %534
  %536 = vrot.lane.b32.xlu0 %v320, 64
  %v537 = vpop.permute.xlu0 %536
  %538 = vrot.lane.b32.xlu0 %v321, 64
  %v539 = vpop.permute.xlu0 %538
  %540 = vrot.lane.b32.xlu0 %v322, 64
  %v541 = vpop.permute.xlu0 %540
  %542 = vrot.lane.b32.xlu0 %v323, 64
  %v543 = vpop.permute.xlu0 %542
  %544 = vrot.lane.b32.xlu0 %v324, 64
  %v545 = vpop.permute.xlu0 %544
  %546 = vrot.lane.b32.xlu0 %v325, 64
  %v547 = vpop.permute.xlu0 %546
  %548 = vrot.lane.b32.xlu0 %v326, 64
  %v549 = vpop.permute.xlu0 %548
  %550 = vrot.lane.b32.xlu0 %v327, 64
  %v551 = vpop.permute.xlu0 %550
  %552 = vrot.lane.b32.xlu0 %v328, 64
  %v553 = vpop.permute.xlu0 %552
  %554 = vrot.lane.b32.xlu0 %v329, 64
  %v555 = vpop.permute.xlu0 %554
  %556 = vrot.lane.b32.xlu0 %v330, 64
  %v557 = vpop.permute.xlu0 %556
  %558 = vrot.lane.b32.xlu0 %v331, 64
  %v559 = vpop.permute.xlu0 %558
  %560 = vrot.lane.b32.xlu0 %v332, 64
  %v561 = vpop.permute.xlu0 %560
  %562 = vrot.lane.b32.xlu0 %v333, 64
  %v563 = vpop.permute.xlu0 %562
  %564 = vrot.lane.b32.xlu0 %v334, 64
  %v565 = vpop.permute.xlu0 %564
  %566 = vrot.lane.b32.xlu0 %v369, 64
  %v567 = vpop.permute.xlu0 %566
  %568 = vrot.lane.b32.xlu0 %v371, 64
  %v569 = vpop.permute.xlu0 %568
  %570 = vrot.lane.b32.xlu0 %v373, 64
  %v571 = vpop.permute.xlu0 %570
  %572 = vrot.lane.b32.xlu0 %v375, 64
  %v573 = vpop.permute.xlu0 %572
  %574 = vrot.lane.b32.xlu0 %v377, 64
  %v575 = vpop.permute.xlu0 %574
  %576 = vrot.lane.b32.xlu0 %v379, 64
  %v577 = vpop.permute.xlu0 %576
  %578 = vrot.lane.b32.xlu0 %v381, 64
  %v579 = vpop.permute.xlu0 %578
  %580 = vrot.lane.b32.xlu0 %v383, 64
  %v581 = vpop.permute.xlu0 %580
  %582 = vrot.lane.b32.xlu0 %v385, 64
  %v583 = vpop.permute.xlu0 %582
  %584 = vrot.lane.b32.xlu0 %v387, 64
  %v585 = vpop.permute.xlu0 %584
  %586 = vrot.lane.b32.xlu0 %v389, 64
  %v587 = vpop.permute.xlu0 %586
  %588 = vrot.lane.b32.xlu0 %v391, 64
  %v589 = vpop.permute.xlu0 %588
  %590 = vrot.lane.b32.xlu0 %v393, 64
  %v591 = vpop.permute.xlu0 %590
  %592 = vrot.lane.b32.xlu0 %v395, 64
  %v593 = vpop.permute.xlu0 %592
  %594 = vrot.lane.b32.xlu0 %v397, 64
  %v595 = vpop.permute.xlu0 %594
  %596 = vrot.lane.b32.xlu0 %v399, 64
  %v597 = vpop.permute.xlu0 %596
  %598 = vrot.lane.b32.xlu0 %v401, 64
  %v599 = vpop.permute.xlu0 %598
  %600 = vrot.lane.b32.xlu0 %v403, 64
  %v601 = vpop.permute.xlu0 %600
  %602 = vrot.lane.b32.xlu0 %v405, 64
  %v603 = vpop.permute.xlu0 %602
  %604 = vrot.lane.b32.xlu0 %v407, 64
  %v605 = vpop.permute.xlu0 %604
  %606 = vrot.lane.b32.xlu0 %v409, 64
  %v607 = vpop.permute.xlu0 %606
  %608 = vrot.lane.b32.xlu0 %v411, 64
  %v609 = vpop.permute.xlu0 %608
  %610 = vrot.lane.b32.xlu0 %v413, 64
  %v611 = vpop.permute.xlu0 %610
  %612 = vrot.lane.b32.xlu0 %v415, 64
  %v613 = vpop.permute.xlu0 %612
  %614 = vrot.lane.b32.xlu0 %v417, 64
  %v615 = vpop.permute.xlu0 %614
  %616 = vrot.lane.b32.xlu0 %v419, 64
  %v617 = vpop.permute.xlu0 %616
  %618 = vrot.lane.b32.xlu0 %v421, 64
  %v619 = vpop.permute.xlu0 %618
  %620 = vrot.lane.b32.xlu0 %v423, 64
  %v621 = vpop.permute.xlu0 %620
  %622 = vrot.lane.b32.xlu0 %v425, 64
  %v623 = vpop.permute.xlu0 %622
  %624 = vrot.lane.b32.xlu0 %v427, 64
  %v625 = vpop.permute.xlu0 %624
  %626 = vrot.lane.b32.xlu0 %v429, 64
  %v627 = vpop.permute.xlu0 %626
  %628 = vrot.lane.b32.xlu0 %v431, 64
  %v629 = vpop.permute.xlu0 %628
  %630 = vrot.lane.b32.xlu0 %v433, 64
  %v631 = vpop.permute.xlu0 %630
  %632 = vrot.lane.b32.xlu0 %v435, 64
  %v633 = vpop.permute.xlu0 %632
  %634 = vrot.lane.b32.xlu0 %v437, 64
  %v635 = vpop.permute.xlu0 %634
  %636 = vrot.lane.b32.xlu0 %v439, 64
  %v637 = vpop.permute.xlu0 %636
  %638 = vrot.lane.b32.xlu0 %v441, 64
  %v639 = vpop.permute.xlu0 %638
  %640 = vrot.lane.b32.xlu0 %v443, 64
  %v641 = vpop.permute.xlu0 %640
  %642 = vrot.lane.b32.xlu0 %v445, 64
  %v643 = vpop.permute.xlu0 %642
  %644 = vrot.lane.b32.xlu0 %v447, 64
  %v645 = vpop.permute.xlu0 %644
  %646 = vrot.lane.b32.xlu0 %v449, 64
  %v647 = vpop.permute.xlu0 %646
  %648 = vrot.lane.b32.xlu0 %v451, 64
  %v649 = vpop.permute.xlu0 %648
  %650 = vrot.lane.b32.xlu0 %v453, 64
  %v651 = vpop.permute.xlu0 %650
  %652 = vrot.lane.b32.xlu0 %v455, 64
  %v653 = vpop.permute.xlu0 %652
  %654 = vrot.lane.b32.xlu0 %v457, 64
  %v655 = vpop.permute.xlu0 %654
  %656 = vrot.lane.b32.xlu0 %v459, 64
  %v657 = vpop.permute.xlu0 %656
  %658 = vrot.lane.b32.xlu0 %v461, 64
  %v659 = vpop.permute.xlu0 %658
  %660 = vrot.lane.b32.xlu0 %v463, 64
  %v661 = vpop.permute.xlu0 %660
  %662 = vrot.lane.b32.xlu0 %v465, 64
  %v663 = vpop.permute.xlu0 %662
  %664 = vrot.lane.b32.xlu0 %v467, 64
  %v665 = vpop.permute.xlu0 %664
  %666 = vrot.lane.b32.xlu0 %v469, 64
  %v667 = vpop.permute.xlu0 %666
  %668 = vrot.lane.b32.xlu0 %v471, 64
  %v669 = vpop.permute.xlu0 %668
  %670 = vrot.lane.b32.xlu0 %v473, 64
  %v671 = vpop.permute.xlu0 %670
  %672 = vrot.lane.b32.xlu0 %v475, 64
  %v673 = vpop.permute.xlu0 %672
  %674 = vrot.lane.b32.xlu0 %v477, 64
  %v675 = vpop.permute.xlu0 %674
  %676 = vrot.lane.b32.xlu0 %v479, 64
  %v677 = vpop.permute.xlu0 %676
  %678 = vrot.lane.b32.xlu0 %v481, 64
  %v679 = vpop.permute.xlu0 %678
  %680 = vrot.lane.b32.xlu0 %v483, 64
  %v681 = vpop.permute.xlu0 %680
  %682 = vrot.lane.b32.xlu0 %v485, 64
  %v683 = vpop.permute.xlu0 %682
  %684 = vrot.lane.b32.xlu0 %v487, 64
  %v685 = vpop.permute.xlu0 %684
  %686 = vrot.lane.b32.xlu0 %v489, 64
  %v687 = vpop.permute.xlu0 %686
  %688 = vrot.lane.b32.xlu0 %v491, 64
  %v689 = vpop.permute.xlu0 %688
  %690 = vrot.lane.b32.xlu0 %v493, 64
  %v691 = vpop.permute.xlu0 %690
  %692 = vrot.lane.b32.xlu0 %v495, 64
  %v693 = vpop.permute.xlu0 %692
  %694 = vrot.lane.b32.xlu0 %v497, 64
  %v695 = vpop.permute.xlu0 %694
  %696 = vrot.lane.b32.xlu0 %v499, 64
  %v697 = vpop.permute.xlu0 %696
  %vm797 = vcmask 523264
  %v798 = vsel %vm797, %v37, %v501
  %v799 = vsel %vm797, %v38, %v503
  %v800 = vsel %vm797, %v39, %v505
  %v801 = vsel %vm797, %v40, %v507
  %v802 = vsel %vm797, %v41, %v509
  %v803 = vsel %vm797, %v42, %v511
  %v804 = vsel %vm797, %v43, %v513
  %v805 = vsel %vm797, %v44, %v515
  %v806 = vsel %vm797, %v45, %v517
  %v807 = vsel %vm797, %v46, %v519
  %v808 = vsel %vm797, %v47, %v521
  %v809 = vsel %vm797, %v48, %v523
  %v810 = vsel %vm797, %v49, %v525
  %v811 = vsel %vm797, %v50, %v527
  %v812 = vsel %vm797, %v51, %v529
  %v813 = vsel %vm797, %v52, %v531
  %v814 = vsel %vm797, %v53, %v533
  %v815 = vsel %vm797, %v54, %v535
  %v816 = vsel %vm797, %v55, %v537
  %v817 = vsel %vm797, %v56, %v539
  %v818 = vsel %vm797, %v57, %v541
  %v819 = vsel %vm797, %v58, %v543
  %v820 = vsel %vm797, %v59, %v545
  %v821 = vsel %vm797, %v60, %v547
  %v822 = vsel %vm797, %v61, %v549
  %v823 = vsel %vm797, %v62, %v551
  %v824 = vsel %vm797, %v63, %v553
  %v825 = vsel %vm797, %v64, %v555
  %v826 = vsel %vm797, %v65, %v557
  %v827 = vsel %vm797, %v66, %v559
  %v828 = vsel %vm797, %v67, %v561
  %v829 = vsel %vm797, %v68, %v563
  %v830 = vsel %vm797, %v69, %v565
  %v831 = vsel %vm797, %v104, %v567
  %v832 = vsel %vm797, %v106, %v569
  %v833 = vsel %vm797, %v108, %v571
  %v834 = vsel %vm797, %v110, %v573
  %v835 = vsel %vm797, %v112, %v575
  %v836 = vsel %vm797, %v114, %v577
  %v837 = vsel %vm797, %v116, %v579
  %v838 = vsel %vm797, %v118, %v581
  %v839 = vsel %vm797, %v120, %v583
  %v840 = vsel %vm797, %v122, %v585
  %v841 = vsel %vm797, %v124, %v587
  %v842 = vsel %vm797, %v126, %v589
  %v843 = vsel %vm797, %v128, %v591
  %v844 = vsel %vm797, %v130, %v593
  %v845 = vsel %vm797, %v132, %v595
  %v846 = vsel %vm797, %v134, %v597
  %v847 = vsel %vm797, %v136, %v599
  %v848 = vsel %vm797, %v138, %v601
  %v849 = vsel %vm797, %v140, %v603
  %v850 = vsel %vm797, %v142, %v605
  %v851 = vsel %vm797, %v144, %v607
  %v852 = vsel %vm797, %v146, %v609
  %v853 = vsel %vm797, %v148, %v611
  %v854 = vsel %vm797, %v150, %v613
  %v855 = vsel %vm797, %v152, %v615
  %v856 = vsel %vm797, %v154, %v617
  %v857 = vsel %vm797, %v156, %v619
  %v858 = vsel %vm797, %v158, %v621
  %v859 = vsel %vm797, %v160, %v623
  %v860 = vsel %vm797, %v162, %v625
  %v861 = vsel %vm797, %v164, %v627
  %v862 = vsel %vm797, %v166, %v629
  %v863 = vsel %vm797, %v168, %v631
  %v864 = vsel %vm797, %v203, %v633
  %v865 = vsel %vm797, %v205, %v635
  %v866 = vsel %vm797, %v207, %v637
  %v867 = vsel %vm797, %v209, %v639
  %v868 = vsel %vm797, %v211, %v641
  %v869 = vsel %vm797, %v213, %v643
  %v870 = vsel %vm797, %v215, %v645
  %v871 = vsel %vm797, %v217, %v647
  %v872 = vsel %vm797, %v219, %v649
  %v873 = vsel %vm797, %v221, %v651
  %v874 = vsel %vm797, %v223, %v653
  %v875 = vsel %vm797, %v225, %v655
  %v876 = vsel %vm797, %v227, %v657
  %v877 = vsel %vm797, %v229, %v659
  %v878 = vsel %vm797, %v231, %v661
  %v879 = vsel %vm797, %v233, %v663
  %v880 = vsel %vm797, %v235, %v665
  %v881 = vsel %vm797, %v237, %v667
  %v882 = vsel %vm797, %v239, %v669
  %v883 = vsel %vm797, %v241, %v671
  %v884 = vsel %vm797, %v243, %v673
  %v885 = vsel %vm797, %v245, %v675
  %v886 = vsel %vm797, %v247, %v677
  %v887 = vsel %vm797, %v249, %v679
  %v888 = vsel %vm797, %v251, %v681
  %v889 = vsel %vm797, %v253, %v683
  %v890 = vsel %vm797, %v255, %v685
  %v891 = vsel %vm797, %v257, %v687
  %v892 = vsel %vm797, %v259, %v689
  %v893 = vsel %vm797, %v261, %v691
  %v894 = vsel %vm797, %v263, %v693
  %v895 = vsel %vm797, %v265, %v695
  %v896 = vsel %vm797, %v267, %v697
  %v897 = vld [vmem:[%s1] sm:$0xff]
  %v898 = vld [vmem:[%s1 + $0x8] sm:$0xff]
  %v899 = vld [vmem:[%s1 + $0x10] sm:$0xff]
  %v900 = vld [vmem:[%s1 + $0x18] sm:$0xff]
  %v901 = vld [vmem:[%s1 + $0x20] sm:$0xff]
  %v902 = vld [vmem:[%s1 + $0x28] sm:$0xff]
  %v903 = vld [vmem:[%s1 + $0x30] sm:$0xff]
  %v904 = vld [vmem:[%s1 + $0x38] sm:$0xff]
  %v905 = vld [vmem:[%s1 + $0x40] sm:$0xff]
  %v906 = vld [vmem:[%s1 + $0x48] sm:$0xff]
  %v907 = vld [vmem:[%s1 + $0x50] sm:$0xff]
  %v908 = vld [vmem:[%s1 + $0x58] sm:$0xff]
  %v909 = vld [vmem:[%s1 + $0x60] sm:$0xff]
  %v910 = vld [vmem:[%s1 + $0x68] sm:$0xff]
  %v911 = vld [vmem:[%s1 + $0x70] sm:$0xff]
  %v912 = vld [vmem:[%s1 + $0x78] sm:$0xff]
  %v913 = vld [vmem:[%s1 + $0x80] sm:$0xff]
  %v914 = vld [vmem:[%s1 + $0x88] sm:$0xff]
  %v915 = vld [vmem:[%s1 + $0x90] sm:$0xff]
  %v916 = vld [vmem:[%s1 + $0x98] sm:$0xff]
  %v917 = vld [vmem:[%s1 + $0xa0] sm:$0xff]
  %v918 = vld [vmem:[%s1 + $0xa8] sm:$0xff]
  %v919 = vld [vmem:[%s1 + $0xb0] sm:$0xff]
  %v920 = vld [vmem:[%s1 + $0xb8] sm:$0xff]
  %v921 = vld [vmem:[%s1 + $0xc0] sm:$0xff]
  %v922 = vld [vmem:[%s1 + $0xc8] sm:$0xff]
  %v923 = vld [vmem:[%s1 + $0xd0] sm:$0xff]
  %v924 = vld [vmem:[%s1 + $0xd8] sm:$0xff]
  %v925 = vld [vmem:[%s1 + $0xe0] sm:$0xff]
  %v926 = vld [vmem:[%s1 + $0xe8] sm:$0xff]
  %v927 = vld [vmem:[%s1 + $0xf0] sm:$0xff]
  %v928 = vld [vmem:[%s1 + $0xf8] sm:$0xff]
  %v929 = vld [vmem:[%s1 + $0x100] sm:$0xff]
  %v930 = vld [vmem:[%s1 + $0x108] sm:$0xff]
  %v931 = vld [vmem:[%s1 + $0x110] sm:$0xff]
  %v932 = vld [vmem:[%s1 + $0x118] sm:$0xff]
  %v933 = vld [vmem:[%s1 + $0x120] sm:$0xff]
  %v934 = vld [vmem:[%s1 + $0x128] sm:$0xff]
  %v935 = vld [vmem:[%s1 + $0x130] sm:$0xff]
  %v936 = vld [vmem:[%s1 + $0x138] sm:$0xff]
  %v937 = vld [vmem:[%s1 + $0x140] sm:$0xff]
  %v938 = vld [vmem:[%s1 + $0x148] sm:$0xff]
  %v939 = vld [vmem:[%s1 + $0x150] sm:$0xff]
  %v940 = vld [vmem:[%s1 + $0x158] sm:$0xff]
  %v941 = vld [vmem:[%s1 + $0x160] sm:$0xff]
  %v942 = vld [vmem:[%s1 + $0x168] sm:$0xff]
  %v943 = vld [vmem:[%s1 + $0x170] sm:$0xff]
  %v944 = vld [vmem:[%s1 + $0x178] sm:$0xff]
  %v945 = vld [vmem:[%s1 + $0x180] sm:$0xff]
  %v946 = vld [vmem:[%s1 + $0x188] sm:$0xff]
  %v947 = vld [vmem:[%s1 + $0x190] sm:$0xff]
  %v948 = vld [vmem:[%s1 + $0x198] sm:$0xff]
  %v949 = vld [vmem:[%s1 + $0x1a0] sm:$0xff]
  %v950 = vld [vmem:[%s1 + $0x1a8] sm:$0xff]
  %v951 = vld [vmem:[%s1 + $0x1b0] sm:$0xff]
  %v952 = vld [vmem:[%s1 + $0x1b8] sm:$0xff]
  %v953 = vld [vmem:[%s2] sm:$0xff]
  %v954 = vld [vmem:[%s2 + $0x8] sm:$0xff]
  %v955 = vld [vmem:[%s2 + $0x10] sm:$0xff]
  %v956 = vld [vmem:[%s2 + $0x18] sm:$0xff]
  %v957 = vld [vmem:[%s2 + $0x20] sm:$0xff]
  %v958 = vld [vmem:[%s2 + $0x28] sm:$0xff]
  %v959 = vld [vmem:[%s2 + $0x30] sm:$0xff]
  %v960 = vld [vmem:[%s2 + $0x38] sm:$0xff]
  %962 = vset.pattern.permute.xlu0 0
  %963 = vperm.xlu0 %962, %v953
  %v964 = vpop.permute.xlu0 %963
  %967 = vset.pattern.permute.xlu0 0
  %968 = vperm.xlu0 %967, %v954
  %v969 = vpop.permute.xlu0 %968
  %972 = vset.pattern.permute.xlu0 0
  %973 = vperm.xlu0 %972, %v955
  %v974 = vpop.permute.xlu0 %973
  %977 = vset.pattern.permute.xlu0 0
  %978 = vperm.xlu0 %977, %v956
  %v979 = vpop.permute.xlu0 %978
  %982 = vset.pattern.permute.xlu0 0
  %983 = vperm.xlu0 %982, %v957
  %v984 = vpop.permute.xlu0 %983
  %987 = vset.pattern.permute.xlu0 0
  %988 = vperm.xlu0 %987, %v958
  %v989 = vpop.permute.xlu0 %988
  %992 = vset.pattern.permute.xlu0 0
  %993 = vperm.xlu0 %992, %v959
  %v994 = vpop.permute.xlu0 %993
  %997 = vset.pattern.permute.xlu0 0
  %998 = vperm.xlu0 %997, %v960
  %v999 = vpop.permute.xlu0 %998
  %vm1001 = vcmask 195584
  %v1003 = vsel %vm1001, %v903, 0
  %v1006 = vsel %vm1001, %v910, 0
  %v1009 = vsel %vm1001, %v917, 0
  %v1012 = vsel %vm1001, %v924, 0
  %v1015 = vsel %vm1001, %v931, 0
  %v1018 = vsel %vm1001, %v938, 0
  %v1021 = vsel %vm1001, %v945, 0
  %v1024 = vsel %vm1001, %v952, 0
  %1026 = vmatpush.msra.mxu0 %v813
  %1027 = vmatpush.msra.mxu0 %v812
  %1028 = vmatpush.msra.mxu0 %v811
  %1029 = vmatpush.msra.mxu0 %v810
  %1030 = vmatpush.msra.mxu0 %v809
  %1031 = vmatpush.msra.mxu0 %v808
  %1032 = vmatpush.msra.mxu0 %v807
  %1033 = vmatpush.msra.mxu0 %v806
  %1034 = vmatpush.msra.mxu0 %v805
  %1035 = vmatpush.msra.mxu0 %v804
  %1036 = vmatpush.msra.mxu0 %v803
  %1037 = vmatpush.msra.mxu0 %v802
  %1038 = vmatpush.msra.mxu0 %v801
  %1039 = vmatpush.msra.mxu0 %v800
  %1040 = vmatpush.msra.mxu0 %v799
  %1041 = vmatpush.msra.mxu0 %v798
  %1042 = vmatmul.f32.gmra.mxu0 %v897
  %v1043 = vpop.f32.mrf.mxu0
  %v1044 = vadd.f32 %v964, %v1043
  %1045 = vmatmul.f32.gmra.mxu0 %v904
  %v1046 = vpop.f32.mrf.mxu0
  %v1047 = vadd.f32 %v969, %v1046
  %1048 = vmatmul.f32.gmra.mxu0 %v911
  %v1049 = vpop.f32.mrf.mxu0
  %v1050 = vadd.f32 %v974, %v1049
  %1051 = vmatmul.f32.gmra.mxu0 %v918
  %v1052 = vpop.f32.mrf.mxu0
  %v1053 = vadd.f32 %v979, %v1052
  %1054 = vmatmul.f32.gmra.mxu0 %v925
  %v1055 = vpop.f32.mrf.mxu0
  %v1056 = vadd.f32 %v984, %v1055
  %1057 = vmatmul.f32.gmra.mxu0 %v932
  %v1058 = vpop.f32.mrf.mxu0
  %v1059 = vadd.f32 %v989, %v1058
  %1060 = vmatmul.f32.gmra.mxu0 %v939
  %v1061 = vpop.f32.mrf.mxu0
  %v1062 = vadd.f32 %v994, %v1061
  %1063 = vmatmul.f32.gmra.mxu0 %v946
  %v1064 = vpop.f32.mrf.mxu0
  %v1065 = vadd.f32 %v999, %v1064
  %1066 = vdwg.mxu0
  %1067 = vmatpush.msra.mxu0 %v829
  %1068 = vmatpush.msra.mxu0 %v828
  %1069 = vmatpush.msra.mxu0 %v827
  %1070 = vmatpush.msra.mxu0 %v826
  %1071 = vmatpush.msra.mxu0 %v825
  %1072 = vmatpush.msra.mxu0 %v824
  %1073 = vmatpush.msra.mxu0 %v823
  %1074 = vmatpush.msra.mxu0 %v822
  %1075 = vmatpush.msra.mxu0 %v821
  %1076 = vmatpush.msra.mxu0 %v820
  %1077 = vmatpush.msra.mxu0 %v819
  %1078 = vmatpush.msra.mxu0 %v818
  %1079 = vmatpush.msra.mxu0 %v817
  %1080 = vmatpush.msra.mxu0 %v816
  %1081 = vmatpush.msra.mxu0 %v815
  %1082 = vmatpush.msra.mxu0 %v814
  %1083 = vmatmul.f32.gmra.mxu0 %v898
  %v1084 = vpop.f32.mrf.mxu0
  %v1085 = vadd.f32 %v1044, %v1084
  %1086 = vmatmul.f32.gmra.mxu0 %v905
  %v1087 = vpop.f32.mrf.mxu0
  %v1088 = vadd.f32 %v1047, %v1087
  %1089 = vmatmul.f32.gmra.mxu0 %v912
  %v1090 = vpop.f32.mrf.mxu0
  %v1091 = vadd.f32 %v1050, %v1090
  %1092 = vmatmul.f32.gmra.mxu0 %v919
  %v1093 = vpop.f32.mrf.mxu0
  %v1094 = vadd.f32 %v1053, %v1093
  %1095 = vmatmul.f32.gmra.mxu0 %v926
  %v1096 = vpop.f32.mrf.mxu0
  %v1097 = vadd.f32 %v1056, %v1096
  %1098 = vmatmul.f32.gmra.mxu0 %v933
  %v1099 = vpop.f32.mrf.mxu0
  %v1100 = vadd.f32 %v1059, %v1099
  %1101 = vmatmul.f32.gmra.mxu0 %v940
  %v1102 = vpop.f32.mrf.mxu0
  %v1103 = vadd.f32 %v1062, %v1102
  %1104 = vmatmul.f32.gmra.mxu0 %v947
  %v1105 = vpop.f32.mrf.mxu0
  %v1106 = vadd.f32 %v1065, %v1105
  %1107 = vdwg.mxu0
  %1108 = vmatpush.msra.mxu0 %v845
  %1109 = vmatpush.msra.mxu0 %v844
  %1110 = vmatpush.msra.mxu0 %v843
  %1111 = vmatpush.msra.mxu0 %v842
  %1112 = vmatpush.msra.mxu0 %v841
  %1113 = vmatpush.msra.mxu0 %v840
  %1114 = vmatpush.msra.mxu0 %v839
  %1115 = vmatpush.msra.mxu0 %v838
  %1116 = vmatpush.msra.mxu0 %v837
  %1117 = vmatpush.msra.mxu0 %v836
  %1118 = vmatpush.msra.mxu0 %v835
  %1119 = vmatpush.msra.mxu0 %v834
  %1120 = vmatpush.msra.mxu0 %v833
  %1121 = vmatpush.msra.mxu0 %v832
  %1122 = vmatpush.msra.mxu0 %v831
  %1123 = vmatpush.msra.mxu0 %v830
  %1124 = vmatmul.f32.gmra.mxu0 %v899
  %v1125 = vpop.f32.mrf.mxu0
  %v1126 = vadd.f32 %v1085, %v1125
  %1127 = vmatmul.f32.gmra.mxu0 %v906
  %v1128 = vpop.f32.mrf.mxu0
  %v1129 = vadd.f32 %v1088, %v1128
  %1130 = vmatmul.f32.gmra.mxu0 %v913
  %v1131 = vpop.f32.mrf.mxu0
  %v1132 = vadd.f32 %v1091, %v1131
  %1133 = vmatmul.f32.gmra.mxu0 %v920
  %v1134 = vpop.f32.mrf.mxu0
  %v1135 = vadd.f32 %v1094, %v1134
  %1136 = vmatmul.f32.gmra.mxu0 %v927
  %v1137 = vpop.f32.mrf.mxu0
  %v1138 = vadd.f32 %v1097, %v1137
  %1139 = vmatmul.f32.gmra.mxu0 %v934
  %v1140 = vpop.f32.mrf.mxu0
  %v1141 = vadd.f32 %v1100, %v1140
  %1142 = vmatmul.f32.gmra.mxu0 %v941
  %v1143 = vpop.f32.mrf.mxu0
  %v1144 = vadd.f32 %v1103, %v1143
  %1145 = vmatmul.f32.gmra.mxu0 %v948
  %v1146 = vpop.f32.mrf.mxu0
  %v1147 = vadd.f32 %v1106, %v1146
  %1148 = vdwg.mxu0
  %1149 = vmatpush.msra.mxu0 %v861
  %1150 = vmatpush.msra.mxu0 %v860
  %1151 = vmatpush.msra.mxu0 %v859
  %1152 = vmatpush.msra.mxu0 %v858
  %1153 = vmatpush.msra.mxu0 %v857
  %1154 = vmatpush.msra.mxu0 %v856
  %1155 = vmatpush.msra.mxu0 %v855
  %1156 = vmatpush.msra.mxu0 %v854
  %1157 = vmatpush.msra.mxu0 %v853
  %1158 = vmatpush.msra.mxu0 %v852
  %1159 = vmatpush.msra.mxu0 %v851
  %1160 = vmatpush.msra.mxu0 %v850
  %1161 = vmatpush.msra.mxu0 %v849
  %1162 = vmatpush.msra.mxu0 %v848
  %1163 = vmatpush.msra.mxu0 %v847
  %1164 = vmatpush.msra.mxu0 %v846
  %1165 = vmatmul.f32.gmra.mxu0 %v900
  %v1166 = vpop.f32.mrf.mxu0
  %v1167 = vadd.f32 %v1126, %v1166
  %1168 = vmatmul.f32.gmra.mxu0 %v907
  %v1169 = vpop.f32.mrf.mxu0
  %v1170 = vadd.f32 %v1129, %v1169
  %1171 = vmatmul.f32.gmra.mxu0 %v914
  %v1172 = vpop.f32.mrf.mxu0
  %v1173 = vadd.f32 %v1132, %v1172
  %1174 = vmatmul.f32.gmra.mxu0 %v921
  %v1175 = vpop.f32.mrf.mxu0
  %v1176 = vadd.f32 %v1135, %v1175
  %1177 = vmatmul.f32.gmra.mxu0 %v928
  %v1178 = vpop.f32.mrf.mxu0
  %v1179 = vadd.f32 %v1138, %v1178
  %1180 = vmatmul.f32.gmra.mxu0 %v935
  %v1181 = vpop.f32.mrf.mxu0
  %v1182 = vadd.f32 %v1141, %v1181
  %1183 = vmatmul.f32.gmra.mxu0 %v942
  %v1184 = vpop.f32.mrf.mxu0
  %v1185 = vadd.f32 %v1144, %v1184
  %1186 = vmatmul.f32.gmra.mxu0 %v949
  %v1187 = vpop.f32.mrf.mxu0
  %v1188 = vadd.f32 %v1147, %v1187
  %1189 = vdwg.mxu0
  %1190 = vmatpush.msra.mxu0 %v877
  %1191 = vmatpush.msra.mxu0 %v876
  %1192 = vmatpush.msra.mxu0 %v875
  %1193 = vmatpush.msra.mxu0 %v874
  %1194 = vmatpush.msra.mxu0 %v873
  %1195 = vmatpush.msra.mxu0 %v872
  %1196 = vmatpush.msra.mxu0 %v871
  %1197 = vmatpush.msra.mxu0 %v870
  %1198 = vmatpush.msra.mxu0 %v869
  %1199 = vmatpush.msra.mxu0 %v868
  %1200 = vmatpush.msra.mxu0 %v867
  %1201 = vmatpush.msra.mxu0 %v866
  %1202 = vmatpush.msra.mxu0 %v865
  %1203 = vmatpush.msra.mxu0 %v864
  %1204 = vmatpush.msra.mxu0 %v863
  %1205 = vmatpush.msra.mxu0 %v862
  %1206 = vmatmul.f32.gmra.mxu0 %v901
  %v1207 = vpop.f32.mrf.mxu0
  %v1208 = vadd.f32 %v1167, %v1207
  %1209 = vmatmul.f32.gmra.mxu0 %v908
  %v1210 = vpop.f32.mrf.mxu0
  %v1211 = vadd.f32 %v1170, %v1210
  %1212 = vmatmul.f32.gmra.mxu0 %v915
  %v1213 = vpop.f32.mrf.mxu0
  %v1214 = vadd.f32 %v1173, %v1213
  %1215 = vmatmul.f32.gmra.mxu0 %v922
  %v1216 = vpop.f32.mrf.mxu0
  %v1217 = vadd.f32 %v1176, %v1216
  %1218 = vmatmul.f32.gmra.mxu0 %v929
  %v1219 = vpop.f32.mrf.mxu0
  %v1220 = vadd.f32 %v1179, %v1219
  %1221 = vmatmul.f32.gmra.mxu0 %v936
  %v1222 = vpop.f32.mrf.mxu0
  %v1223 = vadd.f32 %v1182, %v1222
  %1224 = vmatmul.f32.gmra.mxu0 %v943
  %v1225 = vpop.f32.mrf.mxu0
  %v1226 = vadd.f32 %v1185, %v1225
  %1227 = vmatmul.f32.gmra.mxu0 %v950
  %v1228 = vpop.f32.mrf.mxu0
  %v1229 = vadd.f32 %v1188, %v1228
  %1230 = vdwg.mxu0
  %1231 = vmatpush.msra.mxu0 %v893
  %1232 = vmatpush.msra.mxu0 %v892
  %1233 = vmatpush.msra.mxu0 %v891
  %1234 = vmatpush.msra.mxu0 %v890
  %1235 = vmatpush.msra.mxu0 %v889
  %1236 = vmatpush.msra.mxu0 %v888
  %1237 = vmatpush.msra.mxu0 %v887
  %1238 = vmatpush.msra.mxu0 %v886
  %1239 = vmatpush.msra.mxu0 %v885
  %1240 = vmatpush.msra.mxu0 %v884
  %1241 = vmatpush.msra.mxu0 %v883
  %1242 = vmatpush.msra.mxu0 %v882
  %1243 = vmatpush.msra.mxu0 %v881
  %1244 = vmatpush.msra.mxu0 %v880
  %1245 = vmatpush.msra.mxu0 %v879
  %1246 = vmatpush.msra.mxu0 %v878
  %1247 = vmatmul.f32.gmra.mxu0 %v902
  %v1248 = vpop.f32.mrf.mxu0
  %v1249 = vadd.f32 %v1208, %v1248
  %1250 = vmatmul.f32.gmra.mxu0 %v909
  %v1251 = vpop.f32.mrf.mxu0
  %v1252 = vadd.f32 %v1211, %v1251
  %1253 = vmatmul.f32.gmra.mxu0 %v916
  %v1254 = vpop.f32.mrf.mxu0
  %v1255 = vadd.f32 %v1214, %v1254
  %1256 = vmatmul.f32.gmra.mxu0 %v923
  %v1257 = vpop.f32.mrf.mxu0
  %v1258 = vadd.f32 %v1217, %v1257
  %1259 = vmatmul.f32.gmra.mxu0 %v930
  %v1260 = vpop.f32.mrf.mxu0
  %v1261 = vadd.f32 %v1220, %v1260
  %1262 = vmatmul.f32.gmra.mxu0 %v937
  %v1263 = vpop.f32.mrf.mxu0
  %v1264 = vadd.f32 %v1223, %v1263
  %1265 = vmatmul.f32.gmra.mxu0 %v944
  %v1266 = vpop.f32.mrf.mxu0
  %v1267 = vadd.f32 %v1226, %v1266
  %1268 = vmatmul.f32.gmra.mxu0 %v951
  %v1269 = vpop.f32.mrf.mxu0
  %v1270 = vadd.f32 %v1229, %v1269
  %1271 = vdwg.mxu0
  %1272 = vmatpush.msra.mxu0 0.0
  %1273 = vmatpush.msra.mxu0 0.0
  %1274 = vmatpush.msra.mxu0 0.0
  %1275 = vmatpush.msra.mxu0 0.0
  %1276 = vmatpush.msra.mxu0 0.0
  %1277 = vmatpush.msra.mxu0 0.0
  %1278 = vmatpush.msra.mxu0 0.0
  %1279 = vmatpush.msra.mxu0 0.0
  %1280 = vmatpush.msra.mxu0 0.0
  %1281 = vmatpush.msra.mxu0 0.0
  %1282 = vmatpush.msra.mxu0 0.0
  %1283 = vmatpush.msra.mxu0 0.0
  %1284 = vmatpush.msra.mxu0 0.0
  %1285 = vmatpush.msra.mxu0 %v896
  %1286 = vmatpush.msra.mxu0 %v895
  %1287 = vmatpush.msra.mxu0 %v894
  %1288 = vmatmul.f32.gmra.mxu0 %v1003
  %v1289 = vpop.f32.mrf.mxu0
  %v1290 = vadd.f32 %v1249, %v1289
  %1291 = vmatmul.f32.gmra.mxu0 %v1006
  %v1292 = vpop.f32.mrf.mxu0
  %v1293 = vadd.f32 %v1252, %v1292
  %1294 = vmatmul.f32.gmra.mxu0 %v1009
  %v1295 = vpop.f32.mrf.mxu0
  %v1296 = vadd.f32 %v1255, %v1295
  %1297 = vmatmul.f32.gmra.mxu0 %v1012
  %v1298 = vpop.f32.mrf.mxu0
  %v1299 = vadd.f32 %v1258, %v1298
  %1300 = vmatmul.f32.gmra.mxu0 %v1015
  %v1301 = vpop.f32.mrf.mxu0
  %v1302 = vadd.f32 %v1261, %v1301
  %1303 = vmatmul.f32.gmra.mxu0 %v1018
  %v1304 = vpop.f32.mrf.mxu0
  %v1305 = vadd.f32 %v1264, %v1304
  %1306 = vmatmul.f32.gmra.mxu0 %v1021
  %v1307 = vpop.f32.mrf.mxu0
  %v1308 = vadd.f32 %v1267, %v1307
  %1309 = vmatmul.f32.gmra.mxu0 %v1024
  %v1310 = vpop.f32.mrf.mxu0
  %v1311 = vadd.f32 %v1270, %v1310
  %1312 = vdwg.mxu0
  %1313 = vadd.xlane.f32.xlu0 %v1290
  %v1314 = vpop.xlane.xlu0 %1313
  %1315 = vadd.xlane.f32.xlu0 %v1293
  %v1316 = vpop.xlane.xlu0 %1315
  %1317 = vadd.xlane.f32.xlu0 %v1296
  %v1318 = vpop.xlane.xlu0 %1317
  %1319 = vadd.xlane.f32.xlu0 %v1299
  %v1320 = vpop.xlane.xlu0 %1319
  %1321 = vadd.xlane.f32.xlu0 %v1302
  %v1322 = vpop.xlane.xlu0 %1321
  %1323 = vadd.xlane.f32.xlu0 %v1305
  %v1324 = vpop.xlane.xlu0 %1323
  %1325 = vadd.xlane.f32.xlu0 %v1308
  %v1326 = vpop.xlane.xlu0 %1325
  %1327 = vadd.xlane.f32.xlu0 %v1311
  %v1328 = vpop.xlane.xlu0 %1327
  %v1329 = vmul.f32 %v1290, %v1290
  %v1330 = vmul.f32 %v1293, %v1293
  %v1331 = vmul.f32 %v1296, %v1296
  %v1332 = vmul.f32 %v1299, %v1299
  %v1333 = vmul.f32 %v1302, %v1302
  %v1334 = vmul.f32 %v1305, %v1305
  %v1335 = vmul.f32 %v1308, %v1308
  %v1336 = vmul.f32 %v1311, %v1311
  %1337 = vadd.xlane.f32.xlu0 %v1329
  %v1338 = vpop.xlane.xlu0 %1337
  %1339 = vadd.xlane.f32.xlu0 %v1330
  %v1340 = vpop.xlane.xlu0 %1339
  %1341 = vadd.xlane.f32.xlu0 %v1331
  %v1342 = vpop.xlane.xlu0 %1341
  %1343 = vadd.xlane.f32.xlu0 %v1332
  %v1344 = vpop.xlane.xlu0 %1343
  %1345 = vadd.xlane.f32.xlu0 %v1333
  %v1346 = vpop.xlane.xlu0 %1345
  %1347 = vadd.xlane.f32.xlu0 %v1334
  %v1348 = vpop.xlane.xlu0 %1347
  %1349 = vadd.xlane.f32.xlu0 %v1335
  %v1350 = vpop.xlane.xlu0 %1349
  %1351 = vadd.xlane.f32.xlu0 %v1336
  %v1352 = vpop.xlane.xlu0 %1351
  %vm1353 = vcmask 7168
  %v1354 = vsel %vm1353, %v1314, %v1338
  %v1355 = vsel %vm1353, %v1316, %v1340
  %v1356 = vsel %vm1353, %v1318, %v1342
  %v1357 = vsel %vm1353, %v1320, %v1344
  %v1358 = vsel %vm1353, %v1322, %v1346
  %v1359 = vsel %vm1353, %v1324, %v1348
  %v1360 = vsel %vm1353, %v1326, %v1350
  %v1361 = vsel %vm1353, %v1328, %v1352
  %v1362 = vld [vmem:[%s5] sm:$0xff]
  %v1363 = vld [vmem:[%s5 + $0x8] sm:$0xff]
  %v1364 = vld [vmem:[%s5 + $0x10] sm:$0xff]
  %v1365 = vld [vmem:[%s5 + $0x18] sm:$0xff]
  %v1366 = vld [vmem:[%s5 + $0x20] sm:$0xff]
  %v1367 = vld [vmem:[%s5 + $0x28] sm:$0xff]
  %v1368 = vld [vmem:[%s5 + $0x30] sm:$0xff]
  %v1369 = vld [vmem:[%s5 + $0x38] sm:$0xff]
  %v1371 = vsel %vm797, %v1362, 0
  %v1374 = vsel %vm797, %v1363, 0
  %v1377 = vsel %vm797, %v1364, 0
  %v1380 = vsel %vm797, %v1365, 0
  %v1383 = vsel %vm797, %v1366, 0
  %v1386 = vsel %vm797, %v1367, 0
  %v1389 = vsel %vm797, %v1368, 0
  %v1392 = vsel %vm797, %v1369, 0
  %1394 = vmatpush.msra.mxu0 0.0
  %1395 = vmatpush.msra.mxu0 0.0
  %1396 = vmatpush.msra.mxu0 0.0
  %1397 = vmatpush.msra.mxu0 0.0
  %1398 = vmatpush.msra.mxu0 0.0
  %1399 = vmatpush.msra.mxu0 0.0
  %1400 = vmatpush.msra.mxu0 0.0
  %1401 = vmatpush.msra.mxu0 0.0
  %1402 = vmatpush.msra.mxu0 %v1361
  %1403 = vmatpush.msra.mxu0 %v1360
  %1404 = vmatpush.msra.mxu0 %v1359
  %1405 = vmatpush.msra.mxu0 %v1358
  %1406 = vmatpush.msra.mxu0 %v1357
  %1407 = vmatpush.msra.mxu0 %v1356
  %1408 = vmatpush.msra.mxu0 %v1355
  %1409 = vmatpush.msra.mxu0 %v1354
  %1410 = vmatmul.f32.gmra.mxu0 %v1371
  %v1411 = vpop.f32.mrf.mxu0
  %v1412 = vadd.f32 0.0, %v1411
  %1413 = vmatmul.f32.gmra.mxu0 %v1374
  %v1414 = vpop.f32.mrf.mxu0
  %v1415 = vadd.f32 0.0, %v1414
  %1416 = vmatmul.f32.gmra.mxu0 %v1377
  %v1417 = vpop.f32.mrf.mxu0
  %v1418 = vadd.f32 0.0, %v1417
  %1419 = vmatmul.f32.gmra.mxu0 %v1380
  %v1420 = vpop.f32.mrf.mxu0
  %v1421 = vadd.f32 0.0, %v1420
  %1422 = vmatmul.f32.gmra.mxu0 %v1383
  %v1423 = vpop.f32.mrf.mxu0
  %v1424 = vadd.f32 0.0, %v1423
  %1425 = vmatmul.f32.gmra.mxu0 %v1386
  %v1426 = vpop.f32.mrf.mxu0
  %v1427 = vadd.f32 0.0, %v1426
  %1428 = vmatmul.f32.gmra.mxu0 %v1389
  %v1429 = vpop.f32.mrf.mxu0
  %v1430 = vadd.f32 0.0, %v1429
  %1431 = vmatmul.f32.gmra.mxu0 %v1392
  %v1432 = vpop.f32.mrf.mxu0
  %v1433 = vadd.f32 0.0, %v1432
  %1434 = vdwg.mxu0
  %v1435 = vmul.f32 %v1412, %v1412
  %v1436 = vmul.f32 %v1415, %v1415
  %v1437 = vmul.f32 %v1418, %v1418
  %v1438 = vmul.f32 %v1421, %v1421
  %v1439 = vmul.f32 %v1424, %v1424
  %v1440 = vmul.f32 %v1427, %v1427
  %v1441 = vmul.f32 %v1430, %v1430
  %v1442 = vmul.f32 %v1433, %v1433
  %1451 = vrot.lane.b32.xlu0 %v1435, 1
  %v1452 = vpop.permute.xlu0 %1451
  %1453 = vrot.lane.b32.xlu0 %v1436, 1
  %v1454 = vpop.permute.xlu0 %1453
  %1455 = vrot.lane.b32.xlu0 %v1437, 1
  %v1456 = vpop.permute.xlu0 %1455
  %1457 = vrot.lane.b32.xlu0 %v1438, 1
  %v1458 = vpop.permute.xlu0 %1457
  %1459 = vrot.lane.b32.xlu0 %v1439, 1
  %v1460 = vpop.permute.xlu0 %1459
  %1461 = vrot.lane.b32.xlu0 %v1440, 1
  %v1462 = vpop.permute.xlu0 %1461
  %1463 = vrot.lane.b32.xlu0 %v1441, 1
  %v1464 = vpop.permute.xlu0 %1463
  %1465 = vrot.lane.b32.xlu0 %v1442, 1
  %v1466 = vpop.permute.xlu0 %1465
  %v1475 = vsub.f32 %v1412, %v1452
  %v1476 = vsub.f32 %v1415, %v1454
  %v1477 = vsub.f32 %v1418, %v1456
  %v1478 = vsub.f32 %v1421, %v1458
  %v1479 = vsub.f32 %v1424, %v1460
  %v1480 = vsub.f32 %v1427, %v1462
  %v1481 = vsub.f32 %v1430, %v1464
  %v1482 = vsub.f32 %v1433, %v1466
  %v1483 = vmax.f32 %v1475, 0.0
  %v1484 = vmax.f32 %v1476, 0.0
  %v1485 = vmax.f32 %v1477, 0.0
  %v1486 = vmax.f32 %v1478, 0.0
  %v1487 = vmax.f32 %v1479, 0.0
  %v1488 = vmax.f32 %v1480, 0.0
  %v1489 = vmax.f32 %v1481, 0.0
  %v1490 = vmax.f32 %v1482, 0.0
  %v1491 = vld [vmem:[%s3] sm:$0xff]
  %v1492 = vld [vmem:[%s3 + $0x8] sm:$0xff]
  %v1493 = vld [vmem:[%s3 + $0x10] sm:$0xff]
  %v1494 = vld [vmem:[%s3 + $0x18] sm:$0xff]
  %v1495 = vld [vmem:[%s3 + $0x20] sm:$0xff]
  %v1496 = vld [vmem:[%s3 + $0x28] sm:$0xff]
  %v1497 = vld [vmem:[%s3 + $0x30] sm:$0xff]
  %v1498 = vld [vmem:[%s3 + $0x38] sm:$0xff]
  %v1499 = vadd.f32 %v1483, 1e-05
  %v1500 = vadd.f32 %v1484, 1e-05
  %v1501 = vadd.f32 %v1485, 1e-05
  %v1502 = vadd.f32 %v1486, 1e-05
  %v1503 = vadd.f32 %v1487, 1e-05
  %v1504 = vadd.f32 %v1488, 1e-05
  %v1505 = vadd.f32 %v1489, 1e-05
  %v1506 = vadd.f32 %v1490, 1e-05
  %v1507 = vrsqrt.pop %v1499
  %v1508 = vmul.f32 %v1507, %v1499
  %v1509 = vmul.f32 %v1508, %v1507
  %v1510 = vmul.f32 0.5, %v1509
  %v1511 = vsub.f32 1.5, %v1510
  %v1512 = vmul.f32 %v1507, %v1511
  %vm1513 = vweird.f32 %v1499
  %vm1514 = vweird.f32 %v1507
  %vm1515 = vmor %vm1513, %vm1514
  %v1516 = vsel %vm1515, %v1507, %v1512
  %v1517 = vrsqrt.pop %v1500
  %v1518 = vmul.f32 %v1517, %v1500
  %v1519 = vmul.f32 %v1518, %v1517
  %v1520 = vmul.f32 0.5, %v1519
  %v1521 = vsub.f32 1.5, %v1520
  %v1522 = vmul.f32 %v1517, %v1521
  %vm1523 = vweird.f32 %v1500
  %vm1524 = vweird.f32 %v1517
  %vm1525 = vmor %vm1523, %vm1524
  %v1526 = vsel %vm1525, %v1517, %v1522
  %v1527 = vrsqrt.pop %v1501
  %v1528 = vmul.f32 %v1527, %v1501
  %v1529 = vmul.f32 %v1528, %v1527
  %v1530 = vmul.f32 0.5, %v1529
  %v1531 = vsub.f32 1.5, %v1530
  %v1532 = vmul.f32 %v1527, %v1531
  %vm1533 = vweird.f32 %v1501
  %vm1534 = vweird.f32 %v1527
  %vm1535 = vmor %vm1533, %vm1534
  %v1536 = vsel %vm1535, %v1527, %v1532
  %v1537 = vrsqrt.pop %v1502
  %v1538 = vmul.f32 %v1537, %v1502
  %v1539 = vmul.f32 %v1538, %v1537
  %v1540 = vmul.f32 0.5, %v1539
  %v1541 = vsub.f32 1.5, %v1540
  %v1542 = vmul.f32 %v1537, %v1541
  %vm1543 = vweird.f32 %v1502
  %vm1544 = vweird.f32 %v1537
  %vm1545 = vmor %vm1543, %vm1544
  %v1546 = vsel %vm1545, %v1537, %v1542
  %v1547 = vrsqrt.pop %v1503
  %v1548 = vmul.f32 %v1547, %v1503
  %v1549 = vmul.f32 %v1548, %v1547
  %v1550 = vmul.f32 0.5, %v1549
  %v1551 = vsub.f32 1.5, %v1550
  %v1552 = vmul.f32 %v1547, %v1551
  %vm1553 = vweird.f32 %v1503
  %vm1554 = vweird.f32 %v1547
  %vm1555 = vmor %vm1553, %vm1554
  %v1556 = vsel %vm1555, %v1547, %v1552
  %v1557 = vrsqrt.pop %v1504
  %v1558 = vmul.f32 %v1557, %v1504
  %v1559 = vmul.f32 %v1558, %v1557
  %v1560 = vmul.f32 0.5, %v1559
  %v1561 = vsub.f32 1.5, %v1560
  %v1562 = vmul.f32 %v1557, %v1561
  %vm1563 = vweird.f32 %v1504
  %vm1564 = vweird.f32 %v1557
  %vm1565 = vmor %vm1563, %vm1564
  %v1566 = vsel %vm1565, %v1557, %v1562
  %v1567 = vrsqrt.pop %v1505
  %v1568 = vmul.f32 %v1567, %v1505
  %v1569 = vmul.f32 %v1568, %v1567
  %v1570 = vmul.f32 0.5, %v1569
  %v1571 = vsub.f32 1.5, %v1570
  %v1572 = vmul.f32 %v1567, %v1571
  %vm1573 = vweird.f32 %v1505
  %vm1574 = vweird.f32 %v1567
  %vm1575 = vmor %vm1573, %vm1574
  %v1576 = vsel %vm1575, %v1567, %v1572
  %v1577 = vrsqrt.pop %v1506
  %v1578 = vmul.f32 %v1577, %v1506
  %v1579 = vmul.f32 %v1578, %v1577
  %v1580 = vmul.f32 0.5, %v1579
  %v1581 = vsub.f32 1.5, %v1580
  %v1582 = vmul.f32 %v1577, %v1581
  %vm1583 = vweird.f32 %v1506
  %vm1584 = vweird.f32 %v1577
  %vm1585 = vmor %vm1583, %vm1584
  %v1586 = vsel %vm1585, %v1577, %v1582
  %1595 = vrot.lane.b32.xlu0 %v1516, 127
  %v1596 = vpop.permute.xlu0 %1595
  %1597 = vrot.lane.b32.xlu0 %v1526, 127
  %v1598 = vpop.permute.xlu0 %1597
  %1599 = vrot.lane.b32.xlu0 %v1536, 127
  %v1600 = vpop.permute.xlu0 %1599
  %1601 = vrot.lane.b32.xlu0 %v1546, 127
  %v1602 = vpop.permute.xlu0 %1601
  %1603 = vrot.lane.b32.xlu0 %v1556, 127
  %v1604 = vpop.permute.xlu0 %1603
  %1605 = vrot.lane.b32.xlu0 %v1566, 127
  %v1606 = vpop.permute.xlu0 %1605
  %1607 = vrot.lane.b32.xlu0 %v1576, 127
  %v1608 = vpop.permute.xlu0 %1607
  %1609 = vrot.lane.b32.xlu0 %v1586, 127
  %v1610 = vpop.permute.xlu0 %1609
  %v1619 = vmul.f32 %v1491, %v1596
  %v1620 = vmul.f32 %v1492, %v1598
  %v1621 = vmul.f32 %v1493, %v1600
  %v1622 = vmul.f32 %v1494, %v1602
  %v1623 = vmul.f32 %v1495, %v1604
  %v1624 = vmul.f32 %v1496, %v1606
  %v1625 = vmul.f32 %v1497, %v1608
  %v1626 = vmul.f32 %v1498, %v1610
  %v1627 = vld [vmem:[%s4] sm:$0xff]
  %v1628 = vld [vmem:[%s4 + $0x8] sm:$0xff]
  %v1629 = vld [vmem:[%s4 + $0x10] sm:$0xff]
  %v1630 = vld [vmem:[%s4 + $0x18] sm:$0xff]
  %v1631 = vld [vmem:[%s4 + $0x20] sm:$0xff]
  %v1632 = vld [vmem:[%s4 + $0x28] sm:$0xff]
  %v1633 = vld [vmem:[%s4 + $0x30] sm:$0xff]
  %v1634 = vld [vmem:[%s4 + $0x38] sm:$0xff]
  %v1635 = vmul.f32 %v1412, %v1619
  %v1636 = vmul.f32 %v1415, %v1620
  %v1637 = vmul.f32 %v1418, %v1621
  %v1638 = vmul.f32 %v1421, %v1622
  %v1639 = vmul.f32 %v1424, %v1623
  %v1640 = vmul.f32 %v1427, %v1624
  %v1641 = vmul.f32 %v1430, %v1625
  %v1642 = vmul.f32 %v1433, %v1626
  %v1643 = vsub.f32 %v1627, %v1635
  %v1644 = vsub.f32 %v1628, %v1636
  %v1645 = vsub.f32 %v1629, %v1637
  %v1646 = vsub.f32 %v1630, %v1638
  %v1647 = vsub.f32 %v1631, %v1639
  %v1648 = vsub.f32 %v1632, %v1640
  %v1649 = vsub.f32 %v1633, %v1641
  %v1650 = vsub.f32 %v1634, %v1642
  %1652 = vset.pattern.permute.xlu0 0
  %1653 = vperm.xlu0 %1652, %v1619
  %v1654 = vpop.permute.xlu0 %1653
  %1657 = vset.pattern.permute.xlu0 0
  %1658 = vperm.xlu0 %1657, %v1620
  %v1659 = vpop.permute.xlu0 %1658
  %1662 = vset.pattern.permute.xlu0 0
  %1663 = vperm.xlu0 %1662, %v1621
  %v1664 = vpop.permute.xlu0 %1663
  %1667 = vset.pattern.permute.xlu0 0
  %1668 = vperm.xlu0 %1667, %v1622
  %v1669 = vpop.permute.xlu0 %1668
  %1672 = vset.pattern.permute.xlu0 0
  %1673 = vperm.xlu0 %1672, %v1623
  %v1674 = vpop.permute.xlu0 %1673
  %1677 = vset.pattern.permute.xlu0 0
  %1678 = vperm.xlu0 %1677, %v1624
  %v1679 = vpop.permute.xlu0 %1678
  %1682 = vset.pattern.permute.xlu0 0
  %1683 = vperm.xlu0 %1682, %v1625
  %v1684 = vpop.permute.xlu0 %1683
  %1687 = vset.pattern.permute.xlu0 0
  %1688 = vperm.xlu0 %1687, %v1626
  %v1689 = vpop.permute.xlu0 %1688
  %v1691 = vmul.f32 %v1290, %v1654
  %v1692 = vmul.f32 %v1293, %v1659
  %v1693 = vmul.f32 %v1296, %v1664
  %v1694 = vmul.f32 %v1299, %v1669
  %v1695 = vmul.f32 %v1302, %v1674
  %v1696 = vmul.f32 %v1305, %v1679
  %v1697 = vmul.f32 %v1308, %v1684
  %v1698 = vmul.f32 %v1311, %v1689
  %1700 = vset.pattern.permute.xlu0 0
  %1701 = vperm.xlu0 %1700, %v1643
  %v1702 = vpop.permute.xlu0 %1701
  %1705 = vset.pattern.permute.xlu0 0
  %1706 = vperm.xlu0 %1705, %v1644
  %v1707 = vpop.permute.xlu0 %1706
  %1710 = vset.pattern.permute.xlu0 0
  %1711 = vperm.xlu0 %1710, %v1645
  %v1712 = vpop.permute.xlu0 %1711
  %1715 = vset.pattern.permute.xlu0 0
  %1716 = vperm.xlu0 %1715, %v1646
  %v1717 = vpop.permute.xlu0 %1716
  %1720 = vset.pattern.permute.xlu0 0
  %1721 = vperm.xlu0 %1720, %v1647
  %v1722 = vpop.permute.xlu0 %1721
  %1725 = vset.pattern.permute.xlu0 0
  %1726 = vperm.xlu0 %1725, %v1648
  %v1727 = vpop.permute.xlu0 %1726
  %1730 = vset.pattern.permute.xlu0 0
  %1731 = vperm.xlu0 %1730, %v1649
  %v1732 = vpop.permute.xlu0 %1731
  %1735 = vset.pattern.permute.xlu0 0
  %1736 = vperm.xlu0 %1735, %v1650
  %v1737 = vpop.permute.xlu0 %1736
  %v1739 = vadd.f32 %v1691, %v1702
  %v1740 = vadd.f32 %v1692, %v1707
  %v1741 = vadd.f32 %v1693, %v1712
  %v1742 = vadd.f32 %v1694, %v1717
  %v1743 = vadd.f32 %v1695, %v1722
  %v1744 = vadd.f32 %v1696, %v1727
  %v1745 = vadd.f32 %v1697, %v1732
  %v1746 = vadd.f32 %v1698, %v1737
  %v1747 = vmax.f32 %v1739, 0.0
  %v1748 = vmax.f32 %v1740, 0.0
  %v1749 = vmax.f32 %v1741, 0.0
  %v1750 = vmax.f32 %v1742, 0.0
  %v1751 = vmax.f32 %v1743, 0.0
  %v1752 = vmax.f32 %v1744, 0.0
  %v1753 = vmax.f32 %v1745, 0.0
  %v1754 = vmax.f32 %v1746, 0.0
  %v1755 = vld [vmem:[%s6] sm:$0xff]
  %v1756 = vld [vmem:[%s6 + $0x8] sm:$0xff]
  %v1757 = vld [vmem:[%s6 + $0x10] sm:$0xff]
  %v1758 = vld [vmem:[%s6 + $0x18] sm:$0xff]
  %v1759 = vld [vmem:[%s6 + $0x20] sm:$0xff]
  %v1760 = vld [vmem:[%s6 + $0x28] sm:$0xff]
  %v1761 = vld [vmem:[%s6 + $0x30] sm:$0xff]
  %v1762 = vld [vmem:[%s6 + $0x38] sm:$0xff]
  %v1763 = vld [vmem:[%s6 + $0x40] sm:$0xff]
  %v1764 = vld [vmem:[%s6 + $0x48] sm:$0xff]
  %v1765 = vld [vmem:[%s6 + $0x50] sm:$0xff]
  %v1766 = vld [vmem:[%s6 + $0x58] sm:$0xff]
  %v1767 = vld [vmem:[%s6 + $0x60] sm:$0xff]
  %v1768 = vld [vmem:[%s6 + $0x68] sm:$0xff]
  %v1769 = vld [vmem:[%s6 + $0x70] sm:$0xff]
  %v1770 = vld [vmem:[%s6 + $0x78] sm:$0xff]
  %v1771 = vld [vmem:[%s6 + $0x80] sm:$0xff]
  %v1772 = vld [vmem:[%s6 + $0x88] sm:$0xff]
  %v1773 = vld [vmem:[%s6 + $0x90] sm:$0xff]
  %v1774 = vld [vmem:[%s6 + $0x98] sm:$0xff]
  %v1775 = vld [vmem:[%s6 + $0xa0] sm:$0xff]
  %v1776 = vld [vmem:[%s6 + $0xa8] sm:$0xff]
  %v1777 = vld [vmem:[%s6 + $0xb0] sm:$0xff]
  %v1778 = vld [vmem:[%s6 + $0xb8] sm:$0xff]
  %v1779 = vld [vmem:[%s6 + $0xc0] sm:$0xff]
  %v1780 = vld [vmem:[%s6 + $0xc8] sm:$0xff]
  %v1781 = vld [vmem:[%s6 + $0xd0] sm:$0xff]
  %v1782 = vld [vmem:[%s6 + $0xd8] sm:$0xff]
  %v1783 = vld [vmem:[%s6 + $0xe0] sm:$0xff]
  %v1784 = vld [vmem:[%s6 + $0xe8] sm:$0xff]
  %v1785 = vld [vmem:[%s6 + $0xf0] sm:$0xff]
  %v1786 = vld [vmem:[%s6 + $0xf8] sm:$0xff]
  %1787 = vmatpush.msra.mxu0 %v1785
  %1788 = vmatpush.msra.mxu0 %v1783
  %1789 = vmatpush.msra.mxu0 %v1781
  %1790 = vmatpush.msra.mxu0 %v1779
  %1791 = vmatpush.msra.mxu0 %v1777
  %1792 = vmatpush.msra.mxu0 %v1775
  %1793 = vmatpush.msra.mxu0 %v1773
  %1794 = vmatpush.msra.mxu0 %v1771
  %1795 = vmatpush.msra.mxu0 %v1769
  %1796 = vmatpush.msra.mxu0 %v1767
  %1797 = vmatpush.msra.mxu0 %v1765
  %1798 = vmatpush.msra.mxu0 %v1763
  %1799 = vmatpush.msra.mxu0 %v1761
  %1800 = vmatpush.msra.mxu0 %v1759
  %1801 = vmatpush.msra.mxu0 %v1757
  %1802 = vmatpush.msra.mxu0 %v1755
  %1803 = vmatmul.f32.gmra.mxu0 %v1747
  %v1804 = vpop.f32.mrf.mxu0
  %v1805 = vadd.f32 0.0, %v1804
  %1806 = vmatmul.f32.gmra.mxu0 %v1748
  %v1807 = vpop.f32.mrf.mxu0
  %v1808 = vadd.f32 0.0, %v1807
  %1809 = vmatmul.f32.gmra.mxu0 %v1749
  %v1810 = vpop.f32.mrf.mxu0
  %v1811 = vadd.f32 0.0, %v1810
  %1812 = vmatmul.f32.gmra.mxu0 %v1750
  %v1813 = vpop.f32.mrf.mxu0
  %v1814 = vadd.f32 0.0, %v1813
  %1815 = vmatmul.f32.gmra.mxu0 %v1751
  %v1816 = vpop.f32.mrf.mxu0
  %v1817 = vadd.f32 0.0, %v1816
  %1818 = vmatmul.f32.gmra.mxu0 %v1752
  %v1819 = vpop.f32.mrf.mxu0
  %v1820 = vadd.f32 0.0, %v1819
  %1821 = vmatmul.f32.gmra.mxu0 %v1753
  %v1822 = vpop.f32.mrf.mxu0
  %v1823 = vadd.f32 0.0, %v1822
  %1824 = vmatmul.f32.gmra.mxu0 %v1754
  %v1825 = vpop.f32.mrf.mxu0
  %v1826 = vadd.f32 0.0, %v1825
  %1827 = vdwg.mxu0
  %1828 = vmatpush.msra.mxu0 %v1786
  %1829 = vmatpush.msra.mxu0 %v1784
  %1830 = vmatpush.msra.mxu0 %v1782
  %1831 = vmatpush.msra.mxu0 %v1780
  %1832 = vmatpush.msra.mxu0 %v1778
  %1833 = vmatpush.msra.mxu0 %v1776
  %1834 = vmatpush.msra.mxu0 %v1774
  %1835 = vmatpush.msra.mxu0 %v1772
  %1836 = vmatpush.msra.mxu0 %v1770
  %1837 = vmatpush.msra.mxu0 %v1768
  %1838 = vmatpush.msra.mxu0 %v1766
  %1839 = vmatpush.msra.mxu0 %v1764
  %1840 = vmatpush.msra.mxu0 %v1762
  %1841 = vmatpush.msra.mxu0 %v1760
  %1842 = vmatpush.msra.mxu0 %v1758
  %1843 = vmatpush.msra.mxu0 %v1756
  %1844 = vmatmul.f32.gmra.mxu0 %v1747
  %v1845 = vpop.f32.mrf.mxu0
  %v1846 = vadd.f32 0.0, %v1845
  %1847 = vmatmul.f32.gmra.mxu0 %v1748
  %v1848 = vpop.f32.mrf.mxu0
  %v1849 = vadd.f32 0.0, %v1848
  %1850 = vmatmul.f32.gmra.mxu0 %v1749
  %v1851 = vpop.f32.mrf.mxu0
  %v1852 = vadd.f32 0.0, %v1851
  %1853 = vmatmul.f32.gmra.mxu0 %v1750
  %v1854 = vpop.f32.mrf.mxu0
  %v1855 = vadd.f32 0.0, %v1854
  %1856 = vmatmul.f32.gmra.mxu0 %v1751
  %v1857 = vpop.f32.mrf.mxu0
  %v1858 = vadd.f32 0.0, %v1857
  %1859 = vmatmul.f32.gmra.mxu0 %v1752
  %v1860 = vpop.f32.mrf.mxu0
  %v1861 = vadd.f32 0.0, %v1860
  %1862 = vmatmul.f32.gmra.mxu0 %v1753
  %v1863 = vpop.f32.mrf.mxu0
  %v1864 = vadd.f32 0.0, %v1863
  %1865 = vmatmul.f32.gmra.mxu0 %v1754
  %v1866 = vpop.f32.mrf.mxu0
  %v1867 = vadd.f32 0.0, %v1866
  %1868 = vdwg.mxu0
  %v1869 = vld [vmem:[%s7] sm:$0xff]
  %v1870 = vld [vmem:[%s7 + $0x8] sm:$0xff]
  %v1871 = vld [vmem:[%s7 + $0x10] sm:$0xff]
  %v1872 = vld [vmem:[%s7 + $0x18] sm:$0xff]
  %v1873 = vld [vmem:[%s7 + $0x20] sm:$0xff]
  %v1874 = vld [vmem:[%s7 + $0x28] sm:$0xff]
  %v1875 = vld [vmem:[%s7 + $0x30] sm:$0xff]
  %v1876 = vld [vmem:[%s7 + $0x38] sm:$0xff]
  %v1877 = vld [vmem:[%s7 + $0x40] sm:$0xff]
  %v1878 = vld [vmem:[%s7 + $0x48] sm:$0xff]
  %v1879 = vld [vmem:[%s7 + $0x50] sm:$0xff]
  %v1880 = vld [vmem:[%s7 + $0x58] sm:$0xff]
  %v1881 = vld [vmem:[%s7 + $0x60] sm:$0xff]
  %v1882 = vld [vmem:[%s7 + $0x68] sm:$0xff]
  %v1883 = vld [vmem:[%s7 + $0x70] sm:$0xff]
  %v1884 = vld [vmem:[%s7 + $0x78] sm:$0xff]
  %v1886 = vsel %vm797, %v1869, 0
  %v1889 = vsel %vm797, %v1870, 0
  %v1892 = vsel %vm797, %v1871, 0
  %v1895 = vsel %vm797, %v1872, 0
  %v1898 = vsel %vm797, %v1873, 0
  %v1901 = vsel %vm797, %v1874, 0
  %v1904 = vsel %vm797, %v1875, 0
  %v1907 = vsel %vm797, %v1876, 0
  %v1910 = vsel %vm797, %v1877, 0
  %v1913 = vsel %vm797, %v1878, 0
  %v1916 = vsel %vm797, %v1879, 0
  %v1919 = vsel %vm797, %v1880, 0
  %v1922 = vsel %vm797, %v1881, 0
  %v1925 = vsel %vm797, %v1882, 0
  %v1928 = vsel %vm797, %v1883, 0
  %v1931 = vsel %vm797, %v1884, 0
  %1933 = vmatpush.msra.mxu0 0.0
  %1934 = vmatpush.msra.mxu0 0.0
  %1935 = vmatpush.msra.mxu0 0.0
  %1936 = vmatpush.msra.mxu0 0.0
  %1937 = vmatpush.msra.mxu0 0.0
  %1938 = vmatpush.msra.mxu0 0.0
  %1939 = vmatpush.msra.mxu0 0.0
  %1940 = vmatpush.msra.mxu0 0.0
  %1941 = vmatpush.msra.mxu0 %v1826
  %1942 = vmatpush.msra.mxu0 %v1823
  %1943 = vmatpush.msra.mxu0 %v1820
  %1944 = vmatpush.msra.mxu0 %v1817
  %1945 = vmatpush.msra.mxu0 %v1814
  %1946 = vmatpush.msra.mxu0 %v1811
  %1947 = vmatpush.msra.mxu0 %v1808
  %1948 = vmatpush.msra.mxu0 %v1805
  %1949 = vmatmul.f32.gmra.mxu0 %v1886
  %v1950 = vpop.f32.mrf.mxu0
  %v1951 = vadd.f32 0.0, %v1950
  %1952 = vmatmul.f32.gmra.mxu0 %v1889
  %v1953 = vpop.f32.mrf.mxu0
  %v1954 = vadd.f32 0.0, %v1953
  %1955 = vmatmul.f32.gmra.mxu0 %v1892
  %v1956 = vpop.f32.mrf.mxu0
  %v1957 = vadd.f32 0.0, %v1956
  %1958 = vmatmul.f32.gmra.mxu0 %v1895
  %v1959 = vpop.f32.mrf.mxu0
  %v1960 = vadd.f32 0.0, %v1959
  %1961 = vmatmul.f32.gmra.mxu0 %v1898
  %v1962 = vpop.f32.mrf.mxu0
  %v1963 = vadd.f32 0.0, %v1962
  %1964 = vmatmul.f32.gmra.mxu0 %v1901
  %v1965 = vpop.f32.mrf.mxu0
  %v1966 = vadd.f32 0.0, %v1965
  %1967 = vmatmul.f32.gmra.mxu0 %v1904
  %v1968 = vpop.f32.mrf.mxu0
  %v1969 = vadd.f32 0.0, %v1968
  %1970 = vmatmul.f32.gmra.mxu0 %v1907
  %v1971 = vpop.f32.mrf.mxu0
  %v1972 = vadd.f32 0.0, %v1971
  %1973 = vmatmul.f32.gmra.mxu0 %v1910
  %v1974 = vpop.f32.mrf.mxu0
  %v1975 = vadd.f32 0.0, %v1974
  %1976 = vmatmul.f32.gmra.mxu0 %v1913
  %v1977 = vpop.f32.mrf.mxu0
  %v1978 = vadd.f32 0.0, %v1977
  %1979 = vmatmul.f32.gmra.mxu0 %v1916
  %v1980 = vpop.f32.mrf.mxu0
  %v1981 = vadd.f32 0.0, %v1980
  %1982 = vmatmul.f32.gmra.mxu0 %v1919
  %v1983 = vpop.f32.mrf.mxu0
  %v1984 = vadd.f32 0.0, %v1983
  %1985 = vmatmul.f32.gmra.mxu0 %v1922
  %v1986 = vpop.f32.mrf.mxu0
  %v1987 = vadd.f32 0.0, %v1986
  %1988 = vmatmul.f32.gmra.mxu0 %v1925
  %v1989 = vpop.f32.mrf.mxu0
  %v1990 = vadd.f32 0.0, %v1989
  %1991 = vmatmul.f32.gmra.mxu0 %v1928
  %v1992 = vpop.f32.mrf.mxu0
  %v1993 = vadd.f32 0.0, %v1992
  %1994 = vmatmul.f32.gmra.mxu0 %v1931
  %v1995 = vpop.f32.mrf.mxu0
  %v1996 = vadd.f32 0.0, %v1995
  %1997 = vdwg.mxu0
  %1998 = vmatpush.msra.mxu0 0.0
  %1999 = vmatpush.msra.mxu0 0.0
  %2000 = vmatpush.msra.mxu0 0.0
  %2001 = vmatpush.msra.mxu0 0.0
  %2002 = vmatpush.msra.mxu0 0.0
  %2003 = vmatpush.msra.mxu0 0.0
  %2004 = vmatpush.msra.mxu0 0.0
  %2005 = vmatpush.msra.mxu0 0.0
  %2006 = vmatpush.msra.mxu0 %v1867
  %2007 = vmatpush.msra.mxu0 %v1864
  %2008 = vmatpush.msra.mxu0 %v1861
  %2009 = vmatpush.msra.mxu0 %v1858
  %2010 = vmatpush.msra.mxu0 %v1855
  %2011 = vmatpush.msra.mxu0 %v1852
  %2012 = vmatpush.msra.mxu0 %v1849
  %2013 = vmatpush.msra.mxu0 %v1846
  %2014 = vmatmul.f32.gmra.mxu0 %v1886
  %v2015 = vpop.f32.mrf.mxu0
  %v2016 = vadd.f32 0.0, %v2015
  %2017 = vmatmul.f32.gmra.mxu0 %v1889
  %v2018 = vpop.f32.mrf.mxu0
  %v2019 = vadd.f32 0.0, %v2018
  %2020 = vmatmul.f32.gmra.mxu0 %v1892
  %v2021 = vpop.f32.mrf.mxu0
  %v2022 = vadd.f32 0.0, %v2021
  %2023 = vmatmul.f32.gmra.mxu0 %v1895
  %v2024 = vpop.f32.mrf.mxu0
  %v2025 = vadd.f32 0.0, %v2024
  %2026 = vmatmul.f32.gmra.mxu0 %v1898
  %v2027 = vpop.f32.mrf.mxu0
  %v2028 = vadd.f32 0.0, %v2027
  %2029 = vmatmul.f32.gmra.mxu0 %v1901
  %v2030 = vpop.f32.mrf.mxu0
  %v2031 = vadd.f32 0.0, %v2030
  %2032 = vmatmul.f32.gmra.mxu0 %v1904
  %v2033 = vpop.f32.mrf.mxu0
  %v2034 = vadd.f32 0.0, %v2033
  %2035 = vmatmul.f32.gmra.mxu0 %v1907
  %v2036 = vpop.f32.mrf.mxu0
  %v2037 = vadd.f32 0.0, %v2036
  %2038 = vmatmul.f32.gmra.mxu0 %v1910
  %v2039 = vpop.f32.mrf.mxu0
  %v2040 = vadd.f32 0.0, %v2039
  %2041 = vmatmul.f32.gmra.mxu0 %v1913
  %v2042 = vpop.f32.mrf.mxu0
  %v2043 = vadd.f32 0.0, %v2042
  %2044 = vmatmul.f32.gmra.mxu0 %v1916
  %v2045 = vpop.f32.mrf.mxu0
  %v2046 = vadd.f32 0.0, %v2045
  %2047 = vmatmul.f32.gmra.mxu0 %v1919
  %v2048 = vpop.f32.mrf.mxu0
  %v2049 = vadd.f32 0.0, %v2048
  %2050 = vmatmul.f32.gmra.mxu0 %v1922
  %v2051 = vpop.f32.mrf.mxu0
  %v2052 = vadd.f32 0.0, %v2051
  %2053 = vmatmul.f32.gmra.mxu0 %v1925
  %v2054 = vpop.f32.mrf.mxu0
  %v2055 = vadd.f32 0.0, %v2054
  %2056 = vmatmul.f32.gmra.mxu0 %v1928
  %v2057 = vpop.f32.mrf.mxu0
  %v2058 = vadd.f32 0.0, %v2057
  %2059 = vmatmul.f32.gmra.mxu0 %v1931
  %v2060 = vpop.f32.mrf.mxu0
  %v2061 = vadd.f32 0.0, %v2060
  %2062 = vdwg.mxu0
  %s2063 = sld [smem:[#allocation2]]
  %v2064 = vstv %s2063
  %v2065 = vmul.f32 %v1951, %v2064
  %v2066 = vmul.f32 %v2016, %v2064
  %v2067 = vmul.f32 %v1954, %v2064
  %v2068 = vmul.f32 %v2019, %v2064
  %v2069 = vmul.f32 %v1957, %v2064
  %v2070 = vmul.f32 %v2022, %v2064
  %v2071 = vmul.f32 %v1960, %v2064
  %v2072 = vmul.f32 %v2025, %v2064
  %v2073 = vmul.f32 %v1963, %v2064
  %v2074 = vmul.f32 %v2028, %v2064
  %v2075 = vmul.f32 %v1966, %v2064
  %v2076 = vmul.f32 %v2031, %v2064
  %v2077 = vmul.f32 %v1969, %v2064
  %v2078 = vmul.f32 %v2034, %v2064
  %v2079 = vmul.f32 %v1972, %v2064
  %v2080 = vmul.f32 %v2037, %v2064
  %v2081 = vmul.f32 %v1975, %v2064
  %v2082 = vmul.f32 %v2040, %v2064
  %v2083 = vmul.f32 %v1978, %v2064
  %v2084 = vmul.f32 %v2043, %v2064
  %v2085 = vmul.f32 %v1981, %v2064
  %v2086 = vmul.f32 %v2046, %v2064
  %v2087 = vmul.f32 %v1984, %v2064
  %v2088 = vmul.f32 %v2049, %v2064
  %v2089 = vmul.f32 %v1987, %v2064
  %v2090 = vmul.f32 %v2052, %v2064
  %v2091 = vmul.f32 %v1990, %v2064
  %v2092 = vmul.f32 %v2055, %v2064
  %v2093 = vmul.f32 %v1993, %v2064
  %v2094 = vmul.f32 %v2058, %v2064
  %v2095 = vmul.f32 %v1996, %v2064
  %v2096 = vmul.f32 %v2061, %v2064
  %s2097 = sld [smem:[#allocation3]]
  %v2098 = vstv %s2097
  %v2099 = vadd.f32 %v2065, %v2098
  %v2100 = vadd.f32 %v2066, %v2098
  %v2101 = vadd.f32 %v2067, %v2098
  %v2102 = vadd.f32 %v2068, %v2098
  %v2103 = vadd.f32 %v2069, %v2098
  %v2104 = vadd.f32 %v2070, %v2098
  %v2105 = vadd.f32 %v2071, %v2098
  %v2106 = vadd.f32 %v2072, %v2098
  %v2107 = vadd.f32 %v2073, %v2098
  %v2108 = vadd.f32 %v2074, %v2098
  %v2109 = vadd.f32 %v2075, %v2098
  %v2110 = vadd.f32 %v2076, %v2098
  %v2111 = vadd.f32 %v2077, %v2098
  %v2112 = vadd.f32 %v2078, %v2098
  %v2113 = vadd.f32 %v2079, %v2098
  %v2114 = vadd.f32 %v2080, %v2098
  %v2115 = vadd.f32 %v2081, %v2098
  %v2116 = vadd.f32 %v2082, %v2098
  %v2117 = vadd.f32 %v2083, %v2098
  %v2118 = vadd.f32 %v2084, %v2098
  %v2119 = vadd.f32 %v2085, %v2098
  %v2120 = vadd.f32 %v2086, %v2098
  %v2121 = vadd.f32 %v2087, %v2098
  %v2122 = vadd.f32 %v2088, %v2098
  %v2123 = vadd.f32 %v2089, %v2098
  %v2124 = vadd.f32 %v2090, %v2098
  %v2125 = vadd.f32 %v2091, %v2098
  %v2126 = vadd.f32 %v2092, %v2098
  %v2127 = vadd.f32 %v2093, %v2098
  %v2128 = vadd.f32 %v2094, %v2098
  %v2129 = vadd.f32 %v2095, %v2098
  %v2130 = vadd.f32 %v2096, %v2098
  %v2131 = vsub.f32 0.0, %v2099
  %v2132 = vsub.f32 0.0, %v2100
  %v2133 = vsub.f32 0.0, %v2101
  %v2134 = vsub.f32 0.0, %v2102
  %v2135 = vsub.f32 0.0, %v2103
  %v2136 = vsub.f32 0.0, %v2104
  %v2137 = vsub.f32 0.0, %v2105
  %v2138 = vsub.f32 0.0, %v2106
  %v2139 = vsub.f32 0.0, %v2107
  %v2140 = vsub.f32 0.0, %v2108
  %v2141 = vsub.f32 0.0, %v2109
  %v2142 = vsub.f32 0.0, %v2110
  %v2143 = vsub.f32 0.0, %v2111
  %v2144 = vsub.f32 0.0, %v2112
  %v2145 = vsub.f32 0.0, %v2113
  %v2146 = vsub.f32 0.0, %v2114
  %v2147 = vsub.f32 0.0, %v2115
  %v2148 = vsub.f32 0.0, %v2116
  %v2149 = vsub.f32 0.0, %v2117
  %v2150 = vsub.f32 0.0, %v2118
  %v2151 = vsub.f32 0.0, %v2119
  %v2152 = vsub.f32 0.0, %v2120
  %v2153 = vsub.f32 0.0, %v2121
  %v2154 = vsub.f32 0.0, %v2122
  %v2155 = vsub.f32 0.0, %v2123
  %v2156 = vsub.f32 0.0, %v2124
  %v2157 = vsub.f32 0.0, %v2125
  %v2158 = vsub.f32 0.0, %v2126
  %v2159 = vsub.f32 0.0, %v2127
  %v2160 = vsub.f32 0.0, %v2128
  %v2161 = vsub.f32 0.0, %v2129
  %v2162 = vsub.f32 0.0, %v2130
  %v2163 = vmul.f32 %v2131, 1.442695
  %v2164 = vpow.pop %v2163
  %v2165 = vmul.f32 %v2132, 1.442695
  %v2166 = vpow.pop %v2165
  %v2167 = vmul.f32 %v2133, 1.442695
  %v2168 = vpow.pop %v2167
  %v2169 = vmul.f32 %v2134, 1.442695
  %v2170 = vpow.pop %v2169
  %v2171 = vmul.f32 %v2135, 1.442695
  %v2172 = vpow.pop %v2171
  %v2173 = vmul.f32 %v2136, 1.442695
  %v2174 = vpow.pop %v2173
  %v2175 = vmul.f32 %v2137, 1.442695
  %v2176 = vpow.pop %v2175
  %v2177 = vmul.f32 %v2138, 1.442695
  %v2178 = vpow.pop %v2177
  %v2179 = vmul.f32 %v2139, 1.442695
  %v2180 = vpow.pop %v2179
  %v2181 = vmul.f32 %v2140, 1.442695
  %v2182 = vpow.pop %v2181
  %v2183 = vmul.f32 %v2141, 1.442695
  %v2184 = vpow.pop %v2183
  %v2185 = vmul.f32 %v2142, 1.442695
  %v2186 = vpow.pop %v2185
  %v2187 = vmul.f32 %v2143, 1.442695
  %v2188 = vpow.pop %v2187
  %v2189 = vmul.f32 %v2144, 1.442695
  %v2190 = vpow.pop %v2189
  %v2191 = vmul.f32 %v2145, 1.442695
  %v2192 = vpow.pop %v2191
  %v2193 = vmul.f32 %v2146, 1.442695
  %v2194 = vpow.pop %v2193
  %v2195 = vmul.f32 %v2147, 1.442695
  %v2196 = vpow.pop %v2195
  %v2197 = vmul.f32 %v2148, 1.442695
  %v2198 = vpow.pop %v2197
  %v2199 = vmul.f32 %v2149, 1.442695
  %v2200 = vpow.pop %v2199
  %v2201 = vmul.f32 %v2150, 1.442695
  %v2202 = vpow.pop %v2201
  %v2203 = vmul.f32 %v2151, 1.442695
  %v2204 = vpow.pop %v2203
  %v2205 = vmul.f32 %v2152, 1.442695
  %v2206 = vpow.pop %v2205
  %v2207 = vmul.f32 %v2153, 1.442695
  %v2208 = vpow.pop %v2207
  %v2209 = vmul.f32 %v2154, 1.442695
  %v2210 = vpow.pop %v2209
  %v2211 = vmul.f32 %v2155, 1.442695
  %v2212 = vpow.pop %v2211
  %v2213 = vmul.f32 %v2156, 1.442695
  %v2214 = vpow.pop %v2213
  %v2215 = vmul.f32 %v2157, 1.442695
  %v2216 = vpow.pop %v2215
  %v2217 = vmul.f32 %v2158, 1.442695
  %v2218 = vpow.pop %v2217
  %v2219 = vmul.f32 %v2159, 1.442695
  %v2220 = vpow.pop %v2219
  %v2221 = vmul.f32 %v2160, 1.442695
  %v2222 = vpow.pop %v2221
  %v2223 = vmul.f32 %v2161, 1.442695
  %v2224 = vpow.pop %v2223
  %v2225 = vmul.f32 %v2162, 1.442695
  %v2226 = vpow.pop %v2225
  %v2227 = vadd.f32 %v2164, 1.0
  %v2228 = vadd.f32 %v2166, 1.0
  %v2229 = vadd.f32 %v2168, 1.0
  %v2230 = vadd.f32 %v2170, 1.0
  %v2231 = vadd.f32 %v2172, 1.0
  %v2232 = vadd.f32 %v2174, 1.0
  %v2233 = vadd.f32 %v2176, 1.0
  %v2234 = vadd.f32 %v2178, 1.0
  %v2235 = vadd.f32 %v2180, 1.0
  %v2236 = vadd.f32 %v2182, 1.0
  %v2237 = vadd.f32 %v2184, 1.0
  %v2238 = vadd.f32 %v2186, 1.0
  %v2239 = vadd.f32 %v2188, 1.0
  %v2240 = vadd.f32 %v2190, 1.0
  %v2241 = vadd.f32 %v2192, 1.0
  %v2242 = vadd.f32 %v2194, 1.0
  %v2243 = vadd.f32 %v2196, 1.0
  %v2244 = vadd.f32 %v2198, 1.0
  %v2245 = vadd.f32 %v2200, 1.0
  %v2246 = vadd.f32 %v2202, 1.0
  %v2247 = vadd.f32 %v2204, 1.0
  %v2248 = vadd.f32 %v2206, 1.0
  %v2249 = vadd.f32 %v2208, 1.0
  %v2250 = vadd.f32 %v2210, 1.0
  %v2251 = vadd.f32 %v2212, 1.0
  %v2252 = vadd.f32 %v2214, 1.0
  %v2253 = vadd.f32 %v2216, 1.0
  %v2254 = vadd.f32 %v2218, 1.0
  %v2255 = vadd.f32 %v2220, 1.0
  %v2256 = vadd.f32 %v2222, 1.0
  %v2257 = vadd.f32 %v2224, 1.0
  %v2258 = vadd.f32 %v2226, 1.0
  %v2259 = vrcp.pop %v2227
  %v2260 = vrcp.pop %v2228
  %v2261 = vrcp.pop %v2229
  %v2262 = vrcp.pop %v2230
  %v2263 = vrcp.pop %v2231
  %v2264 = vrcp.pop %v2232
  %v2265 = vrcp.pop %v2233
  %v2266 = vrcp.pop %v2234
  %v2267 = vrcp.pop %v2235
  %v2268 = vrcp.pop %v2236
  %v2269 = vrcp.pop %v2237
  %v2270 = vrcp.pop %v2238
  %v2271 = vrcp.pop %v2239
  %v2272 = vrcp.pop %v2240
  %v2273 = vrcp.pop %v2241
  %v2274 = vrcp.pop %v2242
  %v2275 = vrcp.pop %v2243
  %v2276 = vrcp.pop %v2244
  %v2277 = vrcp.pop %v2245
  %v2278 = vrcp.pop %v2246
  %v2279 = vrcp.pop %v2247
  %v2280 = vrcp.pop %v2248
  %v2281 = vrcp.pop %v2249
  %v2282 = vrcp.pop %v2250
  %v2283 = vrcp.pop %v2251
  %v2284 = vrcp.pop %v2252
  %v2285 = vrcp.pop %v2253
  %v2286 = vrcp.pop %v2254
  %v2287 = vrcp.pop %v2255
  %v2288 = vrcp.pop %v2256
  %v2289 = vrcp.pop %v2257
  %v2290 = vrcp.pop %v2258
  %2291 = vst [vmem:[%s10] sm:$0xff] %v2259
  %2292 = vst [vmem:[%s10 + $0x8] sm:$0xff] %v2260
  %2293 = vst [vmem:[%s10 + $0x10] sm:$0xff] %v2261
  %2294 = vst [vmem:[%s10 + $0x18] sm:$0xff] %v2262
  %2295 = vst [vmem:[%s10 + $0x20] sm:$0xff] %v2263
  %2296 = vst [vmem:[%s10 + $0x28] sm:$0xff] %v2264
  %2297 = vst [vmem:[%s10 + $0x30] sm:$0xff] %v2265
  %2298 = vst [vmem:[%s10 + $0x38] sm:$0xff] %v2266
  %2299 = vst [vmem:[%s10 + $0x40] sm:$0xff] %v2267
  %2300 = vst [vmem:[%s10 + $0x48] sm:$0xff] %v2268
  %2301 = vst [vmem:[%s10 + $0x50] sm:$0xff] %v2269
  %2302 = vst [vmem:[%s10 + $0x58] sm:$0xff] %v2270
  %2303 = vst [vmem:[%s10 + $0x60] sm:$0xff] %v2271
  %2304 = vst [vmem:[%s10 + $0x68] sm:$0xff] %v2272
  %2305 = vst [vmem:[%s10 + $0x70] sm:$0xff] %v2273
  %2306 = vst [vmem:[%s10 + $0x78] sm:$0xff] %v2274
  %2307 = vst [vmem:[%s10 + $0x80] sm:$0xff] %v2275
  %2308 = vst [vmem:[%s10 + $0x88] sm:$0xff] %v2276
  %2309 = vst [vmem:[%s10 + $0x90] sm:$0xff] %v2277
  %2310 = vst [vmem:[%s10 + $0x98] sm:$0xff] %v2278
  %2311 = vst [vmem:[%s10 + $0xa0] sm:$0xff] %v2279
  %2312 = vst [vmem:[%s10 + $0xa8] sm:$0xff] %v2280
  %2313 = vst [vmem:[%s10 + $0xb0] sm:$0xff] %v2281
  %2314 = vst [vmem:[%s10 + $0xb8] sm:$0xff] %v2282
  %2315 = vst [vmem:[%s10 + $0xc0] sm:$0xff] %v2283
  %2316 = vst [vmem:[%s10 + $0xc8] sm:$0xff] %v2284
  %2317 = vst [vmem:[%s10 + $0xd0] sm:$0xff] %v2285
  %2318 = vst [vmem:[%s10 + $0xd8] sm:$0xff] %v2286
  %2319 = vst [vmem:[%s10 + $0xe0] sm:$0xff] %v2287
  %2320 = vst [vmem:[%s10 + $0xe8] sm:$0xff] %v2288
  %2321 = vst [vmem:[%s10 + $0xf0] sm:$0xff] %v2289
  %2322 = vst [vmem:[%s10 + $0xf8] sm:$0xff] %v2290
  // Predicated region
  $region42: #{dip_forward.7} parent=0 // pred_check
    _
  $region43: #{dip_forward.7} parent=0 // pred_check_branch
    %2324 = sbr.rel (0) target = $region45
  $region44: #{dip_forward.7} parent=0 // pred_region
    _
  $region45: #{dip_forward.7} parent=0 // pred_fallthru
    _
  // Predicated region
  $region46: #{dip_forward.7} parent=0 // pred_check
    _
  $region47: #{dip_forward.7} parent=0 // pred_check_branch
    %2326 = sbr.rel (0) target = $region49
  $region48: #{dip_forward.7} parent=0 // pred_region
    _
  $region49: #{dip_forward.7} parent=0 // pred_fallthru
    _

</llo_original>
